<compile_context>
chip_gen: v7x
topology: tpu7x:2x2x1
jax: 0.10.0
libtpu: 0.0.40
codegen_flags: <defaults>
</compile_context>

<pallas_src>
import jax
import jax.numpy as jnp
from jax import lax
from jax.experimental import pallas as pl
from jax.experimental.pallas import tpu as pltpu

CP = 128  # padded channel / feature width (lane-dense everywhere)


# ----------------------------- Pallas kernel -------------------------------

def convnet_kernel(x_ref, w1_ref, b1_ref, w2_ref, b2_ref,
                   wf1_ref, bf1_ref, wf2_ref, bf2_ref, wf3_ref, bf3_ref,
                   out_ref, p1_ref, p2_ref, row_ref):
    """Full LeNet forward for ONE image (one grid step == one batch element).

    x_ref   : (1, 32, 28, 15) bf16  input, W-shift expanded: [., h, wo, dj*3+c]
    w1_ref  : (5, 15, CP)  bf16  conv1 taps (per di)        b1_ref : (1, CP) f32
    w2_ref  : (25, CP, CP) bf16  conv2 taps (di*5+dj)       b2_ref : (1, CP) f32
    wf1_ref : (25, CP, CP) bf16  fc1 split per spatial (h*5+w)
    wf2_ref / wf3_ref : (CP, CP) bf16, biases (1, CP) f32
    out_ref : (1, 1, CP) f32
    p1_ref  : (14, 14, CP) f32 scratch  (pooled conv1, HWC, channels padded)
    p2_ref  : (5, 5, CP)   f32 scratch  (pooled conv2)
    row_ref : (28, CP)     f32 scratch  (pre-pool conv row)
    """
    f32 = jnp.float32
    bf16 = jnp.bfloat16

    # ------------- conv1 (5x5 valid) + bias + ReLU + 2x2 max-pool ----------
    def conv1_row(h):                               # -> (28, CP) pre-bias row
        acc = jnp.dot(x_ref[0, h, :, :], w1_ref[0, :, :],
                      preferred_element_type=f32)
        for di in range(1, 5):
            acc = acc + jnp.dot(x_ref[0, h + di, :, :], w1_ref[di, :, :],
                                preferred_element_type=f32)
        return acc

    def pool1_body(po, carry):
        r = jnp.maximum(conv1_row(2 * po), conv1_row(2 * po + 1))   # H-pool
        row_ref[...] = r
        m = jnp.maximum(row_ref[pl.ds(0, 14, 2), :],                # W-pool
                        row_ref[pl.ds(1, 14, 2), :])
        p1_ref[po, :, :] = jnp.maximum(m + b1_ref[...], 0.0)        # bias+ReLU
        return carry

    lax.fori_loop(0, 14, pool1_body, None)

    # ------------- conv2 (5x5 valid) + bias + ReLU + 2x2 max-pool ----------
    def conv2_row(h):                               # -> (10, CP) pre-bias row
        acc = jnp.zeros((10, CP), f32)
        for di in range(5):
            for dj in range(5):
                lhs = p1_ref[h + di, pl.ds(dj, 10), :].astype(bf16)
                acc = acc + jnp.dot(lhs, w2_ref[di * 5 + dj, :, :],
                                    preferred_element_type=f32)
        return acc

    def pool2_body(po, carry):
        r = jnp.maximum(conv2_row(2 * po), conv2_row(2 * po + 1))   # H-pool
        row_ref[pl.ds(0, 10), :] = r
        m = jnp.maximum(row_ref[pl.ds(0, 5, 2), :],                 # W-pool
                        row_ref[pl.ds(1, 5, 2), :])
        p2_ref[po, :, :] = jnp.maximum(m + b2_ref[...], 0.0)        # bias+ReLU
        return carry

    lax.fori_loop(0, 5, pool2_body, None)

    # ------------- fc1 -> ReLU -> fc2 -> ReLU -> fc3 (all in VMEM) ---------
    acc = jnp.zeros((1, CP), f32)
    for h in range(5):
        for w in range(5):
            vec = p2_ref[h, pl.ds(w, 1), :].astype(bf16)            # (1, CP)
            acc = acc + jnp.dot(vec, wf1_ref[h * 5 + w, :, :],
                                preferred_element_type=f32)
    h1 = jnp.maximum(acc + bf1_ref[...], 0.0)
    h2 = jnp.dot(h1.astype(bf16), wf2_ref[...], preferred_element_type=f32)
    h2 = jnp.maximum(h2 + bf2_ref[...], 0.0)
    h3 = jnp.dot(h2.astype(bf16), wf3_ref[...], preferred_element_type=f32)
    out_ref[0, :, :] = h3 + bf3_ref[...]


# ------------------------ parameter / input packing ------------------------

def prepare_params(p):
    """One-time repack of PyTorch-layout params into MXU-friendly tensors."""
    bf16, f32 = jnp.bfloat16, jnp.float32

    # conv1: (6,3,5,5) -> per-di tap matrices (5, 15, CP); K index = dj*3 + c
    w1 = jnp.transpose(p["w1"], (2, 3, 1, 0)).reshape(5, 15, 6)
    w1p = jnp.zeros((5, 15, CP), bf16).at[:, :, :6].set(w1.astype(bf16))
    b1p = jnp.zeros((1, CP), f32).at[0, :6].set(p["b1"])

    # conv2: (16,6,5,5) -> per-tap matrices (25, CP, CP); tap = di*5 + dj
    w2 = jnp.transpose(p["w2"], (2, 3, 1, 0)).reshape(25, 6, 16)
    w2p = jnp.zeros((25, CP, CP), bf16).at[:, :6, :16].set(w2.astype(bf16))
    b2p = jnp.zeros((1, CP), f32).at[0, :16].set(p["b2"])

    # fc1: rows of (400,120) are (c,h,w)-ordered; regroup per spatial (h, w)
    wf1 = p["wf1"].reshape(16, 5, 5, 120).transpose(1, 2, 0, 3).reshape(25, 16, 120)
    wf1p = jnp.zeros((25, CP, CP), bf16).at[:, :16, :120].set(wf1.astype(bf16))
    bf1p = jnp.zeros((1, CP), f32).at[0, :120].set(p["bf1"])

    wf2p = jnp.zeros((CP, CP), bf16).at[:120, :84].set(p["wf2"].astype(bf16))
    bf2p = jnp.zeros((1, CP), f32).at[0, :84].set(p["bf2"])
    wf3p = jnp.zeros((CP, CP), bf16).at[:84, :10].set(p["wf3"].astype(bf16))
    bf3p = jnp.zeros((1, CP), f32).at[0, :10].set(p["bf3"])

    return (w1p, b1p, w2p, b2p, wf1p, bf1p, wf2p, bf2p, wf3p, bf3p)


def convnet_forward(prepped, x):
    """x: (B, 3, 32, 32) NCHW float32 -> logits (B, 10) float32."""
    (w1p, b1p, w2p, b2p, wf1p, bf1p, wf2p, bf2p, wf3p, bf3p) = prepped
    B = x.shape[0]

    # Single layout pass in XLA: NCHW -> NHWC, and expand the 5 W-shifts of
    # conv1 into the channel dim so each in-kernel conv1 tap is a 2-D GEMM.
    x_nhwc = jnp.transpose(x, (0, 2, 3, 1))                        # (B,32,32,3)
    x1e = jnp.concatenate(
        [x_nhwc[:, :, j:j + 28, :] for j in range(5)], axis=-1)    # (B,32,28,15)
    x1e = x1e.astype(jnp.bfloat16)

    const3 = lambda b: (0, 0, 0)
    const2 = lambda b: (0, 0)
    out = pl.pallas_call(
        convnet_kernel,
        grid=(B,),
        out_shape=jax.ShapeDtypeStruct((B, 1, CP), jnp.float32),
        in_specs=[
            pl.BlockSpec((1, 32, 28, 15), lambda b: (b, 0, 0, 0)),
            pl.BlockSpec((5, 15, CP), const3),
            pl.BlockSpec((1, CP), const2),
            pl.BlockSpec((25, CP, CP), const3),
            pl.BlockSpec((1, CP), const2),
            pl.BlockSpec((25, CP, CP), const3),
            pl.BlockSpec((1, CP), const2),
            pl.BlockSpec((CP, CP), const2),
            pl.BlockSpec((1, CP), const2),
            pl.BlockSpec((CP, CP), const2),
            pl.BlockSpec((1, CP), const2),
        ],
        out_specs=pl.BlockSpec((1, 1, CP), lambda b: (b, 0, 0)),
        scratch_shapes=[
            pltpu.VMEM((14, 14, CP), jnp.float32),   # pooled conv1
            pltpu.VMEM((5, 5, CP), jnp.float32),     # pooled conv2
            pltpu.VMEM((28, CP), jnp.float32),       # pre-pool row buffer
        ],
        compiler_params=pltpu.CompilerParams(
            dimension_semantics=("parallel",),
        ),
    )(x1e, w1p, b1p, w2p, b2p, wf1p, bf1p, wf2p, bf2p, wf3p, bf3p)
    return out[:, 0, :10]


# ------------------------------ init / reference ---------------------------

def init_params(key):
    """Deterministic init mimicking PyTorch's default U(-1/sqrt(fan_in), +)."""
    def uni(k, shape, fan_in):
        bound = 1.0 / float(fan_in) ** 0.5
        return jax.random.uniform(k, shape, jnp.float32, -bound, bound)

    ks = jax.random.split(key, 10)
    return {
        "w1": uni(ks[0], (6, 3, 5, 5), 3 * 5 * 5),
        "b1": uni(ks[1], (6,), 3 * 5 * 5),
        "w2": uni(ks[2], (16, 6, 5, 5), 6 * 5 * 5),
        "b2": uni(ks[3], (16,), 6 * 5 * 5),
        "wf1": uni(ks[4], (16 * 5 * 5, 120), 16 * 5 * 5),
        "bf1": uni(ks[5], (120,), 16 * 5 * 5),
        "wf2": uni(ks[6], (120, 84), 120),
        "bf2": uni(ks[7], (84,), 120),
        "wf3": uni(ks[8], (84, 10), 84),
        "bf3": uni(ks[9], (10,), 84),
    }


def reference_forward(params, x):
    """Pure-JAX (XLA) reference matching the PyTorch module."""
    def conv(x, w, b):
        y = lax.conv_general_dilated(
            x, w, window_strides=(1, 1), padding="VALID",
            dimension_numbers=("NCHW", "OIHW", "NCHW"))
        return jax.nn.relu(y + b[None, :, None, None])

    def pool(x):
        return lax.reduce_window(x, -jnp.inf, lax.max,
                                 (1, 1, 2, 2), (1, 1, 2, 2), "VALID")

    x = pool(conv(x, params["w1"], params["b1"]))
    x = pool(conv(x, params["w2"], params["b2"]))
    x = x.reshape(x.shape[0], -1)
    x = jax.nn.relu(x @ params["wf1"] + params["bf1"])
    x = jax.nn.relu(x @ params["wf2"] + params["bf2"])
    return x @ params["wf3"] + params["bf3"]


if __name__ == "__main__":
    key = jax.random.PRNGKey(0)
    pkey, xkey = jax.random.split(key)
    params = init_params(pkey)
    # Spatial size must be 32x32 for the 16*5*5 flatten to hold (as in CIFAR).
    x = jax.random.normal(xkey, (2, 3, 32, 32), jnp.float32)

    prepped = prepare_params(params)
    out = jax.jit(convnet_forward)(prepped, x)
    out = jax.block_until_ready(out)
    assert out.shape == (2, 10) and out.dtype == jnp.float32

    ref = reference_forward(params, x)
    err = float(jnp.max(jnp.abs(out - ref)))
    assert err < 5e-2, f"kernel vs reference max abs err {err}"
    print("KERNEL_OK")
</pallas_src>

<mosaic_0001>
module attributes {stable_mosaic.version = 11 : i64} {
  func.func @convnet_kernel(%arg0: i32, %arg1: memref<1x32x28x15xbf16, #tpu.memory_space<vmem>>, %arg2: memref<5x15x128xbf16, #tpu.memory_space<vmem>>, %arg3: memref<1x128xf32, #tpu.memory_space<vmem>>, %arg4: memref<25x128x128xbf16, #tpu.memory_space<vmem>>, %arg5: memref<1x128xf32, #tpu.memory_space<vmem>>, %arg6: memref<25x128x128xbf16, #tpu.memory_space<vmem>>, %arg7: memref<1x128xf32, #tpu.memory_space<vmem>>, %arg8: memref<128x128xbf16, #tpu.memory_space<vmem>>, %arg9: memref<1x128xf32, #tpu.memory_space<vmem>>, %arg10: memref<128x128xbf16, #tpu.memory_space<vmem>>, %arg11: memref<1x128xf32, #tpu.memory_space<vmem>>, %arg12: memref<1x1x128xf32, #tpu.memory_space<vmem>>, %arg13: memref<14x14x128xf32, #tpu.memory_space<vmem>>, %arg14: memref<5x5x128xf32, #tpu.memory_space<vmem>>, %arg15: memref<28x128xf32, #tpu.memory_space<vmem>>) attributes {dimension_semantics = [#tpu.dimension_semantics<parallel>], iteration_bounds = array<i64: 2>, scalar_prefetch = 0 : i64, scratch_operands = 3 : i64, tpu.core_type = #tpu.core_type<tc>, window_params = [{transform_indices = @transform_0, window_bounds = array<i64: 1, 32, 28, 15>}, {pipeline_mode = #tpu.pipeline_mode<synchronous>, transform_indices = @transform_1, window_bounds = array<i64: 5, 15, 128>}, {pipeline_mode = #tpu.pipeline_mode<synchronous>, transform_indices = @transform_2, window_bounds = array<i64: 1, 128>}, {pipeline_mode = #tpu.pipeline_mode<synchronous>, transform_indices = @transform_3, window_bounds = array<i64: 25, 128, 128>}, {pipeline_mode = #tpu.pipeline_mode<synchronous>, transform_indices = @transform_4, window_bounds = array<i64: 1, 128>}, {pipeline_mode = #tpu.pipeline_mode<synchronous>, transform_indices = @transform_5, window_bounds = array<i64: 25, 128, 128>}, {pipeline_mode = #tpu.pipeline_mode<synchronous>, transform_indices = @transform_6, window_bounds = array<i64: 1, 128>}, {pipeline_mode = #tpu.pipeline_mode<synchronous>, transform_indices = @transform_7, window_bounds = array<i64: 128, 128>}, {pipeline_mode = #tpu.pipeline_mode<synchronous>, transform_indices = @transform_8, window_bounds = array<i64: 1, 128>}, {pipeline_mode = #tpu.pipeline_mode<synchronous>, transform_indices = @transform_9, window_bounds = array<i64: 128, 128>}, {pipeline_mode = #tpu.pipeline_mode<synchronous>, transform_indices = @transform_10, window_bounds = array<i64: 1, 128>}, {transform_indices = @transform_11, window_bounds = array<i64: 1, 1, 128>}]} {
    %c0_i32 = arith.constant 0 : i32
    %c14_i32 = arith.constant 14 : i32
    %0 = arith.addi %c0_i32, %c14_i32 : i32
    %c1_i32 = arith.constant 1 : i32
    scf.for %arg16 = %c0_i32 to %0 step %c1_i32  : i32 {
      %c2_i32 = arith.constant 2 : i32
      %197 = arith.muli %c2_i32, %arg16 : i32
      %c0_171 = arith.constant 0 : index
      %198 = arith.index_cast %197 : i32 to index
      %c0_172 = arith.constant 0 : index
      %c0_173 = arith.constant 0 : index
      %199 = vector.load %arg1[%c0_171, %198, %c0_172, %c0_173] : memref<1x32x28x15xbf16, #tpu.memory_space<vmem>>, vector<1x1x28x15xbf16>
      %200 = vector.shape_cast %199 : vector<1x1x28x15xbf16> to vector<28x15xbf16>
      %c0_174 = arith.constant 0 : index
      %c0_175 = arith.constant 0 : index
      %c0_176 = arith.constant 0 : index
      %201 = vector.load %arg2[%c0_174, %c0_175, %c0_176] : memref<5x15x128xbf16, #tpu.memory_space<vmem>>, vector<1x15x128xbf16>
      %202 = vector.shape_cast %201 : vector<1x15x128xbf16> to vector<15x128xbf16>
      %cst_177 = arith.constant dense<0.000000e+00> : vector<28x128xf32>
      %203 = tpu.matmul %200, %202, %cst_177 {dimension_numbers = #tpu.dot_dimension_numbers<[1], [0], [0], [1], [0, 0, 1, 1], [], []>} : vector<28x15xbf16>, vector<15x128xbf16>, vector<28x128xf32> -> vector<28x128xf32>
      %c1_i32_178 = arith.constant 1 : i32
      %204 = arith.addi %197, %c1_i32_178 : i32
      %c0_179 = arith.constant 0 : index
      %205 = arith.index_cast %204 : i32 to index
      %c0_180 = arith.constant 0 : index
      %c0_181 = arith.constant 0 : index
      %206 = vector.load %arg1[%c0_179, %205, %c0_180, %c0_181] : memref<1x32x28x15xbf16, #tpu.memory_space<vmem>>, vector<1x1x28x15xbf16>
      %207 = vector.shape_cast %206 : vector<1x1x28x15xbf16> to vector<28x15xbf16>
      %c1_182 = arith.constant 1 : index
      %c0_183 = arith.constant 0 : index
      %c0_184 = arith.constant 0 : index
      %208 = vector.load %arg2[%c1_182, %c0_183, %c0_184] : memref<5x15x128xbf16, #tpu.memory_space<vmem>>, vector<1x15x128xbf16>
      %209 = vector.shape_cast %208 : vector<1x15x128xbf16> to vector<15x128xbf16>
      %cst_185 = arith.constant dense<0.000000e+00> : vector<28x128xf32>
      %210 = tpu.matmul %207, %209, %cst_185 {dimension_numbers = #tpu.dot_dimension_numbers<[1], [0], [0], [1], [0, 0, 1, 1], [], []>} : vector<28x15xbf16>, vector<15x128xbf16>, vector<28x128xf32> -> vector<28x128xf32>
      %211 = arith.addf %203, %210 : vector<28x128xf32>
      %c2_i32_186 = arith.constant 2 : i32
      %212 = arith.addi %197, %c2_i32_186 : i32
      %c0_187 = arith.constant 0 : index
      %213 = arith.index_cast %212 : i32 to index
      %c0_188 = arith.constant 0 : index
      %c0_189 = arith.constant 0 : index
      %214 = vector.load %arg1[%c0_187, %213, %c0_188, %c0_189] : memref<1x32x28x15xbf16, #tpu.memory_space<vmem>>, vector<1x1x28x15xbf16>
      %215 = vector.shape_cast %214 : vector<1x1x28x15xbf16> to vector<28x15xbf16>
      %c2_190 = arith.constant 2 : index
      %c0_191 = arith.constant 0 : index
      %c0_192 = arith.constant 0 : index
      %216 = vector.load %arg2[%c2_190, %c0_191, %c0_192] : memref<5x15x128xbf16, #tpu.memory_space<vmem>>, vector<1x15x128xbf16>
      %217 = vector.shape_cast %216 : vector<1x15x128xbf16> to vector<15x128xbf16>
      %cst_193 = arith.constant dense<0.000000e+00> : vector<28x128xf32>
      %218 = tpu.matmul %215, %217, %cst_193 {dimension_numbers = #tpu.dot_dimension_numbers<[1], [0], [0], [1], [0, 0, 1, 1], [], []>} : vector<28x15xbf16>, vector<15x128xbf16>, vector<28x128xf32> -> vector<28x128xf32>
      %219 = arith.addf %211, %218 : vector<28x128xf32>
      %c3_i32 = arith.constant 3 : i32
      %220 = arith.addi %197, %c3_i32 : i32
      %c0_194 = arith.constant 0 : index
      %221 = arith.index_cast %220 : i32 to index
      %c0_195 = arith.constant 0 : index
      %c0_196 = arith.constant 0 : index
      %222 = vector.load %arg1[%c0_194, %221, %c0_195, %c0_196] : memref<1x32x28x15xbf16, #tpu.memory_space<vmem>>, vector<1x1x28x15xbf16>
      %223 = vector.shape_cast %222 : vector<1x1x28x15xbf16> to vector<28x15xbf16>
      %c3_197 = arith.constant 3 : index
      %c0_198 = arith.constant 0 : index
      %c0_199 = arith.constant 0 : index
      %224 = vector.load %arg2[%c3_197, %c0_198, %c0_199] : memref<5x15x128xbf16, #tpu.memory_space<vmem>>, vector<1x15x128xbf16>
      %225 = vector.shape_cast %224 : vector<1x15x128xbf16> to vector<15x128xbf16>
      %cst_200 = arith.constant dense<0.000000e+00> : vector<28x128xf32>
      %226 = tpu.matmul %223, %225, %cst_200 {dimension_numbers = #tpu.dot_dimension_numbers<[1], [0], [0], [1], [0, 0, 1, 1], [], []>} : vector<28x15xbf16>, vector<15x128xbf16>, vector<28x128xf32> -> vector<28x128xf32>
      %227 = arith.addf %219, %226 : vector<28x128xf32>
      %c4_i32 = arith.constant 4 : i32
      %228 = arith.addi %197, %c4_i32 : i32
      %c0_201 = arith.constant 0 : index
      %229 = arith.index_cast %228 : i32 to index
      %c0_202 = arith.constant 0 : index
      %c0_203 = arith.constant 0 : index
      %230 = vector.load %arg1[%c0_201, %229, %c0_202, %c0_203] : memref<1x32x28x15xbf16, #tpu.memory_space<vmem>>, vector<1x1x28x15xbf16>
      %231 = vector.shape_cast %230 : vector<1x1x28x15xbf16> to vector<28x15xbf16>
      %c4_204 = arith.constant 4 : index
      %c0_205 = arith.constant 0 : index
      %c0_206 = arith.constant 0 : index
      %232 = vector.load %arg2[%c4_204, %c0_205, %c0_206] : memref<5x15x128xbf16, #tpu.memory_space<vmem>>, vector<1x15x128xbf16>
      %233 = vector.shape_cast %232 : vector<1x15x128xbf16> to vector<15x128xbf16>
      %cst_207 = arith.constant dense<0.000000e+00> : vector<28x128xf32>
      %234 = tpu.matmul %231, %233, %cst_207 {dimension_numbers = #tpu.dot_dimension_numbers<[1], [0], [0], [1], [0, 0, 1, 1], [], []>} : vector<28x15xbf16>, vector<15x128xbf16>, vector<28x128xf32> -> vector<28x128xf32>
      %235 = arith.addf %227, %234 : vector<28x128xf32>
      %c2_i32_208 = arith.constant 2 : i32
      %236 = arith.muli %c2_i32_208, %arg16 : i32
      %c1_i32_209 = arith.constant 1 : i32
      %237 = arith.addi %236, %c1_i32_209 : i32
      %c0_210 = arith.constant 0 : index
      %238 = arith.index_cast %237 : i32 to index
      %c0_211 = arith.constant 0 : index
      %c0_212 = arith.constant 0 : index
      %239 = vector.load %arg1[%c0_210, %238, %c0_211, %c0_212] : memref<1x32x28x15xbf16, #tpu.memory_space<vmem>>, vector<1x1x28x15xbf16>
      %240 = vector.shape_cast %239 : vector<1x1x28x15xbf16> to vector<28x15xbf16>
      %c0_213 = arith.constant 0 : index
      %c0_214 = arith.constant 0 : index
      %c0_215 = arith.constant 0 : index
      %241 = vector.load %arg2[%c0_213, %c0_214, %c0_215] : memref<5x15x128xbf16, #tpu.memory_space<vmem>>, vector<1x15x128xbf16>
      %242 = vector.shape_cast %241 : vector<1x15x128xbf16> to vector<15x128xbf16>
      %cst_216 = arith.constant dense<0.000000e+00> : vector<28x128xf32>
      %243 = tpu.matmul %240, %242, %cst_216 {dimension_numbers = #tpu.dot_dimension_numbers<[1], [0], [0], [1], [0, 0, 1, 1], [], []>} : vector<28x15xbf16>, vector<15x128xbf16>, vector<28x128xf32> -> vector<28x128xf32>
      %c1_i32_217 = arith.constant 1 : i32
      %244 = arith.addi %237, %c1_i32_217 : i32
      %c0_218 = arith.constant 0 : index
      %245 = arith.index_cast %244 : i32 to index
      %c0_219 = arith.constant 0 : index
      %c0_220 = arith.constant 0 : index
      %246 = vector.load %arg1[%c0_218, %245, %c0_219, %c0_220] : memref<1x32x28x15xbf16, #tpu.memory_space<vmem>>, vector<1x1x28x15xbf16>
      %247 = vector.shape_cast %246 : vector<1x1x28x15xbf16> to vector<28x15xbf16>
      %c1_221 = arith.constant 1 : index
      %c0_222 = arith.constant 0 : index
      %c0_223 = arith.constant 0 : index
      %248 = vector.load %arg2[%c1_221, %c0_222, %c0_223] : memref<5x15x128xbf16, #tpu.memory_space<vmem>>, vector<1x15x128xbf16>
      %249 = vector.shape_cast %248 : vector<1x15x128xbf16> to vector<15x128xbf16>
      %cst_224 = arith.constant dense<0.000000e+00> : vector<28x128xf32>
      %250 = tpu.matmul %247, %249, %cst_224 {dimension_numbers = #tpu.dot_dimension_numbers<[1], [0], [0], [1], [0, 0, 1, 1], [], []>} : vector<28x15xbf16>, vector<15x128xbf16>, vector<28x128xf32> -> vector<28x128xf32>
      %251 = arith.addf %243, %250 : vector<28x128xf32>
      %c2_i32_225 = arith.constant 2 : i32
      %252 = arith.addi %237, %c2_i32_225 : i32
      %c0_226 = arith.constant 0 : index
      %253 = arith.index_cast %252 : i32 to index
      %c0_227 = arith.constant 0 : index
      %c0_228 = arith.constant 0 : index
      %254 = vector.load %arg1[%c0_226, %253, %c0_227, %c0_228] : memref<1x32x28x15xbf16, #tpu.memory_space<vmem>>, vector<1x1x28x15xbf16>
      %255 = vector.shape_cast %254 : vector<1x1x28x15xbf16> to vector<28x15xbf16>
      %c2_229 = arith.constant 2 : index
      %c0_230 = arith.constant 0 : index
      %c0_231 = arith.constant 0 : index
      %256 = vector.load %arg2[%c2_229, %c0_230, %c0_231] : memref<5x15x128xbf16, #tpu.memory_space<vmem>>, vector<1x15x128xbf16>
      %257 = vector.shape_cast %256 : vector<1x15x128xbf16> to vector<15x128xbf16>
      %cst_232 = arith.constant dense<0.000000e+00> : vector<28x128xf32>
      %258 = tpu.matmul %255, %257, %cst_232 {dimension_numbers = #tpu.dot_dimension_numbers<[1], [0], [0], [1], [0, 0, 1, 1], [], []>} : vector<28x15xbf16>, vector<15x128xbf16>, vector<28x128xf32> -> vector<28x128xf32>
      %259 = arith.addf %251, %258 : vector<28x128xf32>
      %c3_i32_233 = arith.constant 3 : i32
      %260 = arith.addi %237, %c3_i32_233 : i32
      %c0_234 = arith.constant 0 : index
      %261 = arith.index_cast %260 : i32 to index
      %c0_235 = arith.constant 0 : index
      %c0_236 = arith.constant 0 : index
      %262 = vector.load %arg1[%c0_234, %261, %c0_235, %c0_236] : memref<1x32x28x15xbf16, #tpu.memory_space<vmem>>, vector<1x1x28x15xbf16>
      %263 = vector.shape_cast %262 : vector<1x1x28x15xbf16> to vector<28x15xbf16>
      %c3_237 = arith.constant 3 : index
      %c0_238 = arith.constant 0 : index
      %c0_239 = arith.constant 0 : index
      %264 = vector.load %arg2[%c3_237, %c0_238, %c0_239] : memref<5x15x128xbf16, #tpu.memory_space<vmem>>, vector<1x15x128xbf16>
      %265 = vector.shape_cast %264 : vector<1x15x128xbf16> to vector<15x128xbf16>
      %cst_240 = arith.constant dense<0.000000e+00> : vector<28x128xf32>
      %266 = tpu.matmul %263, %265, %cst_240 {dimension_numbers = #tpu.dot_dimension_numbers<[1], [0], [0], [1], [0, 0, 1, 1], [], []>} : vector<28x15xbf16>, vector<15x128xbf16>, vector<28x128xf32> -> vector<28x128xf32>
      %267 = arith.addf %259, %266 : vector<28x128xf32>
      %c4_i32_241 = arith.constant 4 : i32
      %268 = arith.addi %237, %c4_i32_241 : i32
      %c0_242 = arith.constant 0 : index
      %269 = arith.index_cast %268 : i32 to index
      %c0_243 = arith.constant 0 : index
      %c0_244 = arith.constant 0 : index
      %270 = vector.load %arg1[%c0_242, %269, %c0_243, %c0_244] : memref<1x32x28x15xbf16, #tpu.memory_space<vmem>>, vector<1x1x28x15xbf16>
      %271 = vector.shape_cast %270 : vector<1x1x28x15xbf16> to vector<28x15xbf16>
      %c4_245 = arith.constant 4 : index
      %c0_246 = arith.constant 0 : index
      %c0_247 = arith.constant 0 : index
      %272 = vector.load %arg2[%c4_245, %c0_246, %c0_247] : memref<5x15x128xbf16, #tpu.memory_space<vmem>>, vector<1x15x128xbf16>
      %273 = vector.shape_cast %272 : vector<1x15x128xbf16> to vector<15x128xbf16>
      %cst_248 = arith.constant dense<0.000000e+00> : vector<28x128xf32>
      %274 = tpu.matmul %271, %273, %cst_248 {dimension_numbers = #tpu.dot_dimension_numbers<[1], [0], [0], [1], [0, 0, 1, 1], [], []>} : vector<28x15xbf16>, vector<15x128xbf16>, vector<28x128xf32> -> vector<28x128xf32>
      %275 = arith.addf %267, %274 : vector<28x128xf32>
      %276 = arith.maximumf %235, %275 : vector<28x128xf32>
      %c0_249 = arith.constant 0 : index
      %c0_250 = arith.constant 0 : index
      %277 = vector.load %arg15[%c0_249, %c0_250] : memref<28x128xf32, #tpu.memory_space<vmem>>, vector<28x128xf32>
      tpu.vector_store %arg15[%c0_249, %c0_250], %276 {strides = array<i32>} : memref<28x128xf32, #tpu.memory_space<vmem>>, vector<28x128xf32>,
      %c0_251 = arith.constant 0 : index
      %c0_252 = arith.constant 0 : index
      %278 = tpu.strided_load %arg15[%c0_251, %c0_252] {strides = array<i32: 2, 1>} : memref<28x128xf32, #tpu.memory_space<vmem>>, vector<14x128xf32>
      %c1_253 = arith.constant 1 : index
      %c0_254 = arith.constant 0 : index
      %279 = tpu.strided_load %arg15[%c1_253, %c0_254] {strides = array<i32: 2, 1>} : memref<28x128xf32, #tpu.memory_space<vmem>>, vector<14x128xf32>
      %280 = arith.maximumf %278, %279 : vector<14x128xf32>
      %c0_255 = arith.constant 0 : index
      %c0_256 = arith.constant 0 : index
      %281 = vector.load %arg3[%c0_255, %c0_256] : memref<1x128xf32, #tpu.memory_space<vmem>>, vector<1x128xf32>
      %282 = vector.broadcast %281 : vector<1x128xf32> to vector<14x128xf32>
      %283 = arith.addf %280, %282 : vector<14x128xf32>
      %cst_257 = arith.constant 0.000000e+00 : f32
      %284 = vector.broadcast %cst_257 : f32 to vector<14x128xf32>
      %285 = arith.maximumf %283, %284 : vector<14x128xf32>
      %286 = arith.index_cast %arg16 : i32 to index
      %c0_258 = arith.constant 0 : index
      %c0_259 = arith.constant 0 : index
      %287 = vector.load %arg13[%286, %c0_258, %c0_259] : memref<14x14x128xf32, #tpu.memory_space<vmem>>, vector<1x14x128xf32>
      %288 = vector.shape_cast %287 : vector<1x14x128xf32> to vector<14x128xf32>
      %289 = vector.shape_cast %285 : vector<14x128xf32> to vector<1x14x128xf32>
      tpu.vector_store %arg13[%286, %c0_258, %c0_259], %289 {strides = array<i32>} : memref<14x14x128xf32, #tpu.memory_space<vmem>>, vector<1x14x128xf32>,
    }
    %c14_i32_0 = arith.constant 14 : i32
    %c0_i32_1 = arith.constant 0 : i32
    %c5_i32 = arith.constant 5 : i32
    %1 = arith.addi %c0_i32_1, %c5_i32 : i32
    %c1_i32_2 = arith.constant 1 : i32
    scf.for %arg16 = %c0_i32_1 to %1 step %c1_i32_2  : i32 {
      %c2_i32 = arith.constant 2 : i32
      %197 = arith.muli %c2_i32, %arg16 : i32
      %cst_171 = arith.constant 0.000000e+00 : f32
      %198 = vector.broadcast %cst_171 : f32 to vector<10x128xf32>
      %c0_i32_172 = arith.constant 0 : i32
      %199 = arith.addi %197, %c0_i32_172 : i32
      %200 = arith.index_cast %199 : i32 to index
      %c0_173 = arith.constant 0 : index
      %c0_174 = arith.constant 0 : index
      %201 = vector.load %arg13[%200, %c0_173, %c0_174] : memref<14x14x128xf32, #tpu.memory_space<vmem>>, vector<1x10x128xf32>
      %202 = vector.shape_cast %201 : vector<1x10x128xf32> to vector<10x128xf32>
      %203 = arith.truncf %202 : vector<10x128xf32> to vector<10x128xbf16>
      %c0_175 = arith.constant 0 : index
      %c0_176 = arith.constant 0 : index
      %c0_177 = arith.constant 0 : index
      %204 = vector.load %arg4[%c0_175, %c0_176, %c0_177] : memref<25x128x128xbf16, #tpu.memory_space<vmem>>, vector<1x128x128xbf16>
      %205 = vector.shape_cast %204 : vector<1x128x128xbf16> to vector<128x128xbf16>
      %cst_178 = arith.constant dense<0.000000e+00> : vector<10x128xf32>
      %206 = tpu.matmul %203, %205, %cst_178 {dimension_numbers = #tpu.dot_dimension_numbers<[1], [0], [0], [1], [0, 0, 1, 1], [], []>} : vector<10x128xbf16>, vector<128x128xbf16>, vector<10x128xf32> -> vector<10x128xf32>
      %207 = arith.addf %198, %206 : vector<10x128xf32>
      %c0_i32_179 = arith.constant 0 : i32
      %208 = arith.addi %197, %c0_i32_179 : i32
      %209 = arith.index_cast %208 : i32 to index
      %c1_180 = arith.constant 1 : index
      %c0_181 = arith.constant 0 : index
      %210 = vector.load %arg13[%209, %c1_180, %c0_181] : memref<14x14x128xf32, #tpu.memory_space<vmem>>, vector<1x10x128xf32>
      %211 = vector.shape_cast %210 : vector<1x10x128xf32> to vector<10x128xf32>
      %212 = arith.truncf %211 : vector<10x128xf32> to vector<10x128xbf16>
      %c1_182 = arith.constant 1 : index
      %c0_183 = arith.constant 0 : index
      %c0_184 = arith.constant 0 : index
      %213 = vector.load %arg4[%c1_182, %c0_183, %c0_184] : memref<25x128x128xbf16, #tpu.memory_space<vmem>>, vector<1x128x128xbf16>
      %214 = vector.shape_cast %213 : vector<1x128x128xbf16> to vector<128x128xbf16>
      %cst_185 = arith.constant dense<0.000000e+00> : vector<10x128xf32>
      %215 = tpu.matmul %212, %214, %cst_185 {dimension_numbers = #tpu.dot_dimension_numbers<[1], [0], [0], [1], [0, 0, 1, 1], [], []>} : vector<10x128xbf16>, vector<128x128xbf16>, vector<10x128xf32> -> vector<10x128xf32>
      %216 = arith.addf %207, %215 : vector<10x128xf32>
      %c0_i32_186 = arith.constant 0 : i32
      %217 = arith.addi %197, %c0_i32_186 : i32
      %218 = arith.index_cast %217 : i32 to index
      %c2_187 = arith.constant 2 : index
      %c0_188 = arith.constant 0 : index
      %219 = vector.load %arg13[%218, %c2_187, %c0_188] : memref<14x14x128xf32, #tpu.memory_space<vmem>>, vector<1x10x128xf32>
      %220 = vector.shape_cast %219 : vector<1x10x128xf32> to vector<10x128xf32>
      %221 = arith.truncf %220 : vector<10x128xf32> to vector<10x128xbf16>
      %c2_189 = arith.constant 2 : index
      %c0_190 = arith.constant 0 : index
      %c0_191 = arith.constant 0 : index
      %222 = vector.load %arg4[%c2_189, %c0_190, %c0_191] : memref<25x128x128xbf16, #tpu.memory_space<vmem>>, vector<1x128x128xbf16>
      %223 = vector.shape_cast %222 : vector<1x128x128xbf16> to vector<128x128xbf16>
      %cst_192 = arith.constant dense<0.000000e+00> : vector<10x128xf32>
      %224 = tpu.matmul %221, %223, %cst_192 {dimension_numbers = #tpu.dot_dimension_numbers<[1], [0], [0], [1], [0, 0, 1, 1], [], []>} : vector<10x128xbf16>, vector<128x128xbf16>, vector<10x128xf32> -> vector<10x128xf32>
      %225 = arith.addf %216, %224 : vector<10x128xf32>
      %c0_i32_193 = arith.constant 0 : i32
      %226 = arith.addi %197, %c0_i32_193 : i32
      %227 = arith.index_cast %226 : i32 to index
      %c3_194 = arith.constant 3 : index
      %c0_195 = arith.constant 0 : index
      %228 = vector.load %arg13[%227, %c3_194, %c0_195] : memref<14x14x128xf32, #tpu.memory_space<vmem>>, vector<1x10x128xf32>
      %229 = vector.shape_cast %228 : vector<1x10x128xf32> to vector<10x128xf32>
      %230 = arith.truncf %229 : vector<10x128xf32> to vector<10x128xbf16>
      %c3_196 = arith.constant 3 : index
      %c0_197 = arith.constant 0 : index
      %c0_198 = arith.constant 0 : index
      %231 = vector.load %arg4[%c3_196, %c0_197, %c0_198] : memref<25x128x128xbf16, #tpu.memory_space<vmem>>, vector<1x128x128xbf16>
      %232 = vector.shape_cast %231 : vector<1x128x128xbf16> to vector<128x128xbf16>
      %cst_199 = arith.constant dense<0.000000e+00> : vector<10x128xf32>
      %233 = tpu.matmul %230, %232, %cst_199 {dimension_numbers = #tpu.dot_dimension_numbers<[1], [0], [0], [1], [0, 0, 1, 1], [], []>} : vector<10x128xbf16>, vector<128x128xbf16>, vector<10x128xf32> -> vector<10x128xf32>
      %234 = arith.addf %225, %233 : vector<10x128xf32>
      %c0_i32_200 = arith.constant 0 : i32
      %235 = arith.addi %197, %c0_i32_200 : i32
      %236 = arith.index_cast %235 : i32 to index
      %c4_201 = arith.constant 4 : index
      %c0_202 = arith.constant 0 : index
      %237 = vector.load %arg13[%236, %c4_201, %c0_202] : memref<14x14x128xf32, #tpu.memory_space<vmem>>, vector<1x10x128xf32>
      %238 = vector.shape_cast %237 : vector<1x10x128xf32> to vector<10x128xf32>
      %239 = arith.truncf %238 : vector<10x128xf32> to vector<10x128xbf16>
      %c4_203 = arith.constant 4 : index
      %c0_204 = arith.constant 0 : index
      %c0_205 = arith.constant 0 : index
      %240 = vector.load %arg4[%c4_203, %c0_204, %c0_205] : memref<25x128x128xbf16, #tpu.memory_space<vmem>>, vector<1x128x128xbf16>
      %241 = vector.shape_cast %240 : vector<1x128x128xbf16> to vector<128x128xbf16>
      %cst_206 = arith.constant dense<0.000000e+00> : vector<10x128xf32>
      %242 = tpu.matmul %239, %241, %cst_206 {dimension_numbers = #tpu.dot_dimension_numbers<[1], [0], [0], [1], [0, 0, 1, 1], [], []>} : vector<10x128xbf16>, vector<128x128xbf16>, vector<10x128xf32> -> vector<10x128xf32>
      %243 = arith.addf %234, %242 : vector<10x128xf32>
      %c1_i32_207 = arith.constant 1 : i32
      %244 = arith.addi %197, %c1_i32_207 : i32
      %245 = arith.index_cast %244 : i32 to index
      %c0_208 = arith.constant 0 : index
      %c0_209 = arith.constant 0 : index
      %246 = vector.load %arg13[%245, %c0_208, %c0_209] : memref<14x14x128xf32, #tpu.memory_space<vmem>>, vector<1x10x128xf32>
      %247 = vector.shape_cast %246 : vector<1x10x128xf32> to vector<10x128xf32>
      %248 = arith.truncf %247 : vector<10x128xf32> to vector<10x128xbf16>
      %c5_210 = arith.constant 5 : index
      %c0_211 = arith.constant 0 : index
      %c0_212 = arith.constant 0 : index
      %249 = vector.load %arg4[%c5_210, %c0_211, %c0_212] : memref<25x128x128xbf16, #tpu.memory_space<vmem>>, vector<1x128x128xbf16>
      %250 = vector.shape_cast %249 : vector<1x128x128xbf16> to vector<128x128xbf16>
      %cst_213 = arith.constant dense<0.000000e+00> : vector<10x128xf32>
      %251 = tpu.matmul %248, %250, %cst_213 {dimension_numbers = #tpu.dot_dimension_numbers<[1], [0], [0], [1], [0, 0, 1, 1], [], []>} : vector<10x128xbf16>, vector<128x128xbf16>, vector<10x128xf32> -> vector<10x128xf32>
      %252 = arith.addf %243, %251 : vector<10x128xf32>
      %c1_i32_214 = arith.constant 1 : i32
      %253 = arith.addi %197, %c1_i32_214 : i32
      %254 = arith.index_cast %253 : i32 to index
      %c1_215 = arith.constant 1 : index
      %c0_216 = arith.constant 0 : index
      %255 = vector.load %arg13[%254, %c1_215, %c0_216] : memref<14x14x128xf32, #tpu.memory_space<vmem>>, vector<1x10x128xf32>
      %256 = vector.shape_cast %255 : vector<1x10x128xf32> to vector<10x128xf32>
      %257 = arith.truncf %256 : vector<10x128xf32> to vector<10x128xbf16>
      %c6_217 = arith.constant 6 : index
      %c0_218 = arith.constant 0 : index
      %c0_219 = arith.constant 0 : index
      %258 = vector.load %arg4[%c6_217, %c0_218, %c0_219] : memref<25x128x128xbf16, #tpu.memory_space<vmem>>, vector<1x128x128xbf16>
      %259 = vector.shape_cast %258 : vector<1x128x128xbf16> to vector<128x128xbf16>
      %cst_220 = arith.constant dense<0.000000e+00> : vector<10x128xf32>
      %260 = tpu.matmul %257, %259, %cst_220 {dimension_numbers = #tpu.dot_dimension_numbers<[1], [0], [0], [1], [0, 0, 1, 1], [], []>} : vector<10x128xbf16>, vector<128x128xbf16>, vector<10x128xf32> -> vector<10x128xf32>
      %261 = arith.addf %252, %260 : vector<10x128xf32>
      %c1_i32_221 = arith.constant 1 : i32
      %262 = arith.addi %197, %c1_i32_221 : i32
      %263 = arith.index_cast %262 : i32 to index
      %c2_222 = arith.constant 2 : index
      %c0_223 = arith.constant 0 : index
      %264 = vector.load %arg13[%263, %c2_222, %c0_223] : memref<14x14x128xf32, #tpu.memory_space<vmem>>, vector<1x10x128xf32>
      %265 = vector.shape_cast %264 : vector<1x10x128xf32> to vector<10x128xf32>
      %266 = arith.truncf %265 : vector<10x128xf32> to vector<10x128xbf16>
      %c7_224 = arith.constant 7 : index
      %c0_225 = arith.constant 0 : index
      %c0_226 = arith.constant 0 : index
      %267 = vector.load %arg4[%c7_224, %c0_225, %c0_226] : memref<25x128x128xbf16, #tpu.memory_space<vmem>>, vector<1x128x128xbf16>
      %268 = vector.shape_cast %267 : vector<1x128x128xbf16> to vector<128x128xbf16>
      %cst_227 = arith.constant dense<0.000000e+00> : vector<10x128xf32>
      %269 = tpu.matmul %266, %268, %cst_227 {dimension_numbers = #tpu.dot_dimension_numbers<[1], [0], [0], [1], [0, 0, 1, 1], [], []>} : vector<10x128xbf16>, vector<128x128xbf16>, vector<10x128xf32> -> vector<10x128xf32>
      %270 = arith.addf %261, %269 : vector<10x128xf32>
      %c1_i32_228 = arith.constant 1 : i32
      %271 = arith.addi %197, %c1_i32_228 : i32
      %272 = arith.index_cast %271 : i32 to index
      %c3_229 = arith.constant 3 : index
      %c0_230 = arith.constant 0 : index
      %273 = vector.load %arg13[%272, %c3_229, %c0_230] : memref<14x14x128xf32, #tpu.memory_space<vmem>>, vector<1x10x128xf32>
      %274 = vector.shape_cast %273 : vector<1x10x128xf32> to vector<10x128xf32>
      %275 = arith.truncf %274 : vector<10x128xf32> to vector<10x128xbf16>
      %c8_231 = arith.constant 8 : index
      %c0_232 = arith.constant 0 : index
      %c0_233 = arith.constant 0 : index
      %276 = vector.load %arg4[%c8_231, %c0_232, %c0_233] : memref<25x128x128xbf16, #tpu.memory_space<vmem>>, vector<1x128x128xbf16>
      %277 = vector.shape_cast %276 : vector<1x128x128xbf16> to vector<128x128xbf16>
      %cst_234 = arith.constant dense<0.000000e+00> : vector<10x128xf32>
      %278 = tpu.matmul %275, %277, %cst_234 {dimension_numbers = #tpu.dot_dimension_numbers<[1], [0], [0], [1], [0, 0, 1, 1], [], []>} : vector<10x128xbf16>, vector<128x128xbf16>, vector<10x128xf32> -> vector<10x128xf32>
      %279 = arith.addf %270, %278 : vector<10x128xf32>
      %c1_i32_235 = arith.constant 1 : i32
      %280 = arith.addi %197, %c1_i32_235 : i32
      %281 = arith.index_cast %280 : i32 to index
      %c4_236 = arith.constant 4 : index
      %c0_237 = arith.constant 0 : index
      %282 = vector.load %arg13[%281, %c4_236, %c0_237] : memref<14x14x128xf32, #tpu.memory_space<vmem>>, vector<1x10x128xf32>
      %283 = vector.shape_cast %282 : vector<1x10x128xf32> to vector<10x128xf32>
      %284 = arith.truncf %283 : vector<10x128xf32> to vector<10x128xbf16>
      %c9_238 = arith.constant 9 : index
      %c0_239 = arith.constant 0 : index
      %c0_240 = arith.constant 0 : index
      %285 = vector.load %arg4[%c9_238, %c0_239, %c0_240] : memref<25x128x128xbf16, #tpu.memory_space<vmem>>, vector<1x128x128xbf16>
      %286 = vector.shape_cast %285 : vector<1x128x128xbf16> to vector<128x128xbf16>
      %cst_241 = arith.constant dense<0.000000e+00> : vector<10x128xf32>
      %287 = tpu.matmul %284, %286, %cst_241 {dimension_numbers = #tpu.dot_dimension_numbers<[1], [0], [0], [1], [0, 0, 1, 1], [], []>} : vector<10x128xbf16>, vector<128x128xbf16>, vector<10x128xf32> -> vector<10x128xf32>
      %288 = arith.addf %279, %287 : vector<10x128xf32>
      %c2_i32_242 = arith.constant 2 : i32
      %289 = arith.addi %197, %c2_i32_242 : i32
      %290 = arith.index_cast %289 : i32 to index
      %c0_243 = arith.constant 0 : index
      %c0_244 = arith.constant 0 : index
      %291 = vector.load %arg13[%290, %c0_243, %c0_244] : memref<14x14x128xf32, #tpu.memory_space<vmem>>, vector<1x10x128xf32>
      %292 = vector.shape_cast %291 : vector<1x10x128xf32> to vector<10x128xf32>
      %293 = arith.truncf %292 : vector<10x128xf32> to vector<10x128xbf16>
      %c10_245 = arith.constant 10 : index
      %c0_246 = arith.constant 0 : index
      %c0_247 = arith.constant 0 : index
      %294 = vector.load %arg4[%c10_245, %c0_246, %c0_247] : memref<25x128x128xbf16, #tpu.memory_space<vmem>>, vector<1x128x128xbf16>
      %295 = vector.shape_cast %294 : vector<1x128x128xbf16> to vector<128x128xbf16>
      %cst_248 = arith.constant dense<0.000000e+00> : vector<10x128xf32>
      %296 = tpu.matmul %293, %295, %cst_248 {dimension_numbers = #tpu.dot_dimension_numbers<[1], [0], [0], [1], [0, 0, 1, 1], [], []>} : vector<10x128xbf16>, vector<128x128xbf16>, vector<10x128xf32> -> vector<10x128xf32>
      %297 = arith.addf %288, %296 : vector<10x128xf32>
      %c2_i32_249 = arith.constant 2 : i32
      %298 = arith.addi %197, %c2_i32_249 : i32
      %299 = arith.index_cast %298 : i32 to index
      %c1_250 = arith.constant 1 : index
      %c0_251 = arith.constant 0 : index
      %300 = vector.load %arg13[%299, %c1_250, %c0_251] : memref<14x14x128xf32, #tpu.memory_space<vmem>>, vector<1x10x128xf32>
      %301 = vector.shape_cast %300 : vector<1x10x128xf32> to vector<10x128xf32>
      %302 = arith.truncf %301 : vector<10x128xf32> to vector<10x128xbf16>
      %c11_252 = arith.constant 11 : index
      %c0_253 = arith.constant 0 : index
      %c0_254 = arith.constant 0 : index
      %303 = vector.load %arg4[%c11_252, %c0_253, %c0_254] : memref<25x128x128xbf16, #tpu.memory_space<vmem>>, vector<1x128x128xbf16>
      %304 = vector.shape_cast %303 : vector<1x128x128xbf16> to vector<128x128xbf16>
      %cst_255 = arith.constant dense<0.000000e+00> : vector<10x128xf32>
      %305 = tpu.matmul %302, %304, %cst_255 {dimension_numbers = #tpu.dot_dimension_numbers<[1], [0], [0], [1], [0, 0, 1, 1], [], []>} : vector<10x128xbf16>, vector<128x128xbf16>, vector<10x128xf32> -> vector<10x128xf32>
      %306 = arith.addf %297, %305 : vector<10x128xf32>
      %c2_i32_256 = arith.constant 2 : i32
      %307 = arith.addi %197, %c2_i32_256 : i32
      %308 = arith.index_cast %307 : i32 to index
      %c2_257 = arith.constant 2 : index
      %c0_258 = arith.constant 0 : index
      %309 = vector.load %arg13[%308, %c2_257, %c0_258] : memref<14x14x128xf32, #tpu.memory_space<vmem>>, vector<1x10x128xf32>
      %310 = vector.shape_cast %309 : vector<1x10x128xf32> to vector<10x128xf32>
      %311 = arith.truncf %310 : vector<10x128xf32> to vector<10x128xbf16>
      %c12_259 = arith.constant 12 : index
      %c0_260 = arith.constant 0 : index
      %c0_261 = arith.constant 0 : index
      %312 = vector.load %arg4[%c12_259, %c0_260, %c0_261] : memref<25x128x128xbf16, #tpu.memory_space<vmem>>, vector<1x128x128xbf16>
      %313 = vector.shape_cast %312 : vector<1x128x128xbf16> to vector<128x128xbf16>
      %cst_262 = arith.constant dense<0.000000e+00> : vector<10x128xf32>
      %314 = tpu.matmul %311, %313, %cst_262 {dimension_numbers = #tpu.dot_dimension_numbers<[1], [0], [0], [1], [0, 0, 1, 1], [], []>} : vector<10x128xbf16>, vector<128x128xbf16>, vector<10x128xf32> -> vector<10x128xf32>
      %315 = arith.addf %306, %314 : vector<10x128xf32>
      %c2_i32_263 = arith.constant 2 : i32
      %316 = arith.addi %197, %c2_i32_263 : i32
      %317 = arith.index_cast %316 : i32 to index
      %c3_264 = arith.constant 3 : index
      %c0_265 = arith.constant 0 : index
      %318 = vector.load %arg13[%317, %c3_264, %c0_265] : memref<14x14x128xf32, #tpu.memory_space<vmem>>, vector<1x10x128xf32>
      %319 = vector.shape_cast %318 : vector<1x10x128xf32> to vector<10x128xf32>
      %320 = arith.truncf %319 : vector<10x128xf32> to vector<10x128xbf16>
      %c13_266 = arith.constant 13 : index
      %c0_267 = arith.constant 0 : index
      %c0_268 = arith.constant 0 : index
      %321 = vector.load %arg4[%c13_266, %c0_267, %c0_268] : memref<25x128x128xbf16, #tpu.memory_space<vmem>>, vector<1x128x128xbf16>
      %322 = vector.shape_cast %321 : vector<1x128x128xbf16> to vector<128x128xbf16>
      %cst_269 = arith.constant dense<0.000000e+00> : vector<10x128xf32>
      %323 = tpu.matmul %320, %322, %cst_269 {dimension_numbers = #tpu.dot_dimension_numbers<[1], [0], [0], [1], [0, 0, 1, 1], [], []>} : vector<10x128xbf16>, vector<128x128xbf16>, vector<10x128xf32> -> vector<10x128xf32>
      %324 = arith.addf %315, %323 : vector<10x128xf32>
      %c2_i32_270 = arith.constant 2 : i32
      %325 = arith.addi %197, %c2_i32_270 : i32
      %326 = arith.index_cast %325 : i32 to index
      %c4_271 = arith.constant 4 : index
      %c0_272 = arith.constant 0 : index
      %327 = vector.load %arg13[%326, %c4_271, %c0_272] : memref<14x14x128xf32, #tpu.memory_space<vmem>>, vector<1x10x128xf32>
      %328 = vector.shape_cast %327 : vector<1x10x128xf32> to vector<10x128xf32>
      %329 = arith.truncf %328 : vector<10x128xf32> to vector<10x128xbf16>
      %c14_273 = arith.constant 14 : index
      %c0_274 = arith.constant 0 : index
      %c0_275 = arith.constant 0 : index
      %330 = vector.load %arg4[%c14_273, %c0_274, %c0_275] : memref<25x128x128xbf16, #tpu.memory_space<vmem>>, vector<1x128x128xbf16>
      %331 = vector.shape_cast %330 : vector<1x128x128xbf16> to vector<128x128xbf16>
      %cst_276 = arith.constant dense<0.000000e+00> : vector<10x128xf32>
      %332 = tpu.matmul %329, %331, %cst_276 {dimension_numbers = #tpu.dot_dimension_numbers<[1], [0], [0], [1], [0, 0, 1, 1], [], []>} : vector<10x128xbf16>, vector<128x128xbf16>, vector<10x128xf32> -> vector<10x128xf32>
      %333 = arith.addf %324, %332 : vector<10x128xf32>
      %c3_i32 = arith.constant 3 : i32
      %334 = arith.addi %197, %c3_i32 : i32
      %335 = arith.index_cast %334 : i32 to index
      %c0_277 = arith.constant 0 : index
      %c0_278 = arith.constant 0 : index
      %336 = vector.load %arg13[%335, %c0_277, %c0_278] : memref<14x14x128xf32, #tpu.memory_space<vmem>>, vector<1x10x128xf32>
      %337 = vector.shape_cast %336 : vector<1x10x128xf32> to vector<10x128xf32>
      %338 = arith.truncf %337 : vector<10x128xf32> to vector<10x128xbf16>
      %c15_279 = arith.constant 15 : index
      %c0_280 = arith.constant 0 : index
      %c0_281 = arith.constant 0 : index
      %339 = vector.load %arg4[%c15_279, %c0_280, %c0_281] : memref<25x128x128xbf16, #tpu.memory_space<vmem>>, vector<1x128x128xbf16>
      %340 = vector.shape_cast %339 : vector<1x128x128xbf16> to vector<128x128xbf16>
      %cst_282 = arith.constant dense<0.000000e+00> : vector<10x128xf32>
      %341 = tpu.matmul %338, %340, %cst_282 {dimension_numbers = #tpu.dot_dimension_numbers<[1], [0], [0], [1], [0, 0, 1, 1], [], []>} : vector<10x128xbf16>, vector<128x128xbf16>, vector<10x128xf32> -> vector<10x128xf32>
      %342 = arith.addf %333, %341 : vector<10x128xf32>
      %c3_i32_283 = arith.constant 3 : i32
      %343 = arith.addi %197, %c3_i32_283 : i32
      %344 = arith.index_cast %343 : i32 to index
      %c1_284 = arith.constant 1 : index
      %c0_285 = arith.constant 0 : index
      %345 = vector.load %arg13[%344, %c1_284, %c0_285] : memref<14x14x128xf32, #tpu.memory_space<vmem>>, vector<1x10x128xf32>
      %346 = vector.shape_cast %345 : vector<1x10x128xf32> to vector<10x128xf32>
      %347 = arith.truncf %346 : vector<10x128xf32> to vector<10x128xbf16>
      %c16_286 = arith.constant 16 : index
      %c0_287 = arith.constant 0 : index
      %c0_288 = arith.constant 0 : index
      %348 = vector.load %arg4[%c16_286, %c0_287, %c0_288] : memref<25x128x128xbf16, #tpu.memory_space<vmem>>, vector<1x128x128xbf16>
      %349 = vector.shape_cast %348 : vector<1x128x128xbf16> to vector<128x128xbf16>
      %cst_289 = arith.constant dense<0.000000e+00> : vector<10x128xf32>
      %350 = tpu.matmul %347, %349, %cst_289 {dimension_numbers = #tpu.dot_dimension_numbers<[1], [0], [0], [1], [0, 0, 1, 1], [], []>} : vector<10x128xbf16>, vector<128x128xbf16>, vector<10x128xf32> -> vector<10x128xf32>
      %351 = arith.addf %342, %350 : vector<10x128xf32>
      %c3_i32_290 = arith.constant 3 : i32
      %352 = arith.addi %197, %c3_i32_290 : i32
      %353 = arith.index_cast %352 : i32 to index
      %c2_291 = arith.constant 2 : index
      %c0_292 = arith.constant 0 : index
      %354 = vector.load %arg13[%353, %c2_291, %c0_292] : memref<14x14x128xf32, #tpu.memory_space<vmem>>, vector<1x10x128xf32>
      %355 = vector.shape_cast %354 : vector<1x10x128xf32> to vector<10x128xf32>
      %356 = arith.truncf %355 : vector<10x128xf32> to vector<10x128xbf16>
      %c17_293 = arith.constant 17 : index
      %c0_294 = arith.constant 0 : index
      %c0_295 = arith.constant 0 : index
      %357 = vector.load %arg4[%c17_293, %c0_294, %c0_295] : memref<25x128x128xbf16, #tpu.memory_space<vmem>>, vector<1x128x128xbf16>
      %358 = vector.shape_cast %357 : vector<1x128x128xbf16> to vector<128x128xbf16>
      %cst_296 = arith.constant dense<0.000000e+00> : vector<10x128xf32>
      %359 = tpu.matmul %356, %358, %cst_296 {dimension_numbers = #tpu.dot_dimension_numbers<[1], [0], [0], [1], [0, 0, 1, 1], [], []>} : vector<10x128xbf16>, vector<128x128xbf16>, vector<10x128xf32> -> vector<10x128xf32>
      %360 = arith.addf %351, %359 : vector<10x128xf32>
      %c3_i32_297 = arith.constant 3 : i32
      %361 = arith.addi %197, %c3_i32_297 : i32
      %362 = arith.index_cast %361 : i32 to index
      %c3_298 = arith.constant 3 : index
      %c0_299 = arith.constant 0 : index
      %363 = vector.load %arg13[%362, %c3_298, %c0_299] : memref<14x14x128xf32, #tpu.memory_space<vmem>>, vector<1x10x128xf32>
      %364 = vector.shape_cast %363 : vector<1x10x128xf32> to vector<10x128xf32>
      %365 = arith.truncf %364 : vector<10x128xf32> to vector<10x128xbf16>
      %c18_300 = arith.constant 18 : index
      %c0_301 = arith.constant 0 : index
      %c0_302 = arith.constant 0 : index
      %366 = vector.load %arg4[%c18_300, %c0_301, %c0_302] : memref<25x128x128xbf16, #tpu.memory_space<vmem>>, vector<1x128x128xbf16>
      %367 = vector.shape_cast %366 : vector<1x128x128xbf16> to vector<128x128xbf16>
      %cst_303 = arith.constant dense<0.000000e+00> : vector<10x128xf32>
      %368 = tpu.matmul %365, %367, %cst_303 {dimension_numbers = #tpu.dot_dimension_numbers<[1], [0], [0], [1], [0, 0, 1, 1], [], []>} : vector<10x128xbf16>, vector<128x128xbf16>, vector<10x128xf32> -> vector<10x128xf32>
      %369 = arith.addf %360, %368 : vector<10x128xf32>
      %c3_i32_304 = arith.constant 3 : i32
      %370 = arith.addi %197, %c3_i32_304 : i32
      %371 = arith.index_cast %370 : i32 to index
      %c4_305 = arith.constant 4 : index
      %c0_306 = arith.constant 0 : index
      %372 = vector.load %arg13[%371, %c4_305, %c0_306] : memref<14x14x128xf32, #tpu.memory_space<vmem>>, vector<1x10x128xf32>
      %373 = vector.shape_cast %372 : vector<1x10x128xf32> to vector<10x128xf32>
      %374 = arith.truncf %373 : vector<10x128xf32> to vector<10x128xbf16>
      %c19_307 = arith.constant 19 : index
      %c0_308 = arith.constant 0 : index
      %c0_309 = arith.constant 0 : index
      %375 = vector.load %arg4[%c19_307, %c0_308, %c0_309] : memref<25x128x128xbf16, #tpu.memory_space<vmem>>, vector<1x128x128xbf16>
      %376 = vector.shape_cast %375 : vector<1x128x128xbf16> to vector<128x128xbf16>
      %cst_310 = arith.constant dense<0.000000e+00> : vector<10x128xf32>
      %377 = tpu.matmul %374, %376, %cst_310 {dimension_numbers = #tpu.dot_dimension_numbers<[1], [0], [0], [1], [0, 0, 1, 1], [], []>} : vector<10x128xbf16>, vector<128x128xbf16>, vector<10x128xf32> -> vector<10x128xf32>
      %378 = arith.addf %369, %377 : vector<10x128xf32>
      %c4_i32 = arith.constant 4 : i32
      %379 = arith.addi %197, %c4_i32 : i32
      %380 = arith.index_cast %379 : i32 to index
      %c0_311 = arith.constant 0 : index
      %c0_312 = arith.constant 0 : index
      %381 = vector.load %arg13[%380, %c0_311, %c0_312] : memref<14x14x128xf32, #tpu.memory_space<vmem>>, vector<1x10x128xf32>
      %382 = vector.shape_cast %381 : vector<1x10x128xf32> to vector<10x128xf32>
      %383 = arith.truncf %382 : vector<10x128xf32> to vector<10x128xbf16>
      %c20_313 = arith.constant 20 : index
      %c0_314 = arith.constant 0 : index
      %c0_315 = arith.constant 0 : index
      %384 = vector.load %arg4[%c20_313, %c0_314, %c0_315] : memref<25x128x128xbf16, #tpu.memory_space<vmem>>, vector<1x128x128xbf16>
      %385 = vector.shape_cast %384 : vector<1x128x128xbf16> to vector<128x128xbf16>
      %cst_316 = arith.constant dense<0.000000e+00> : vector<10x128xf32>
      %386 = tpu.matmul %383, %385, %cst_316 {dimension_numbers = #tpu.dot_dimension_numbers<[1], [0], [0], [1], [0, 0, 1, 1], [], []>} : vector<10x128xbf16>, vector<128x128xbf16>, vector<10x128xf32> -> vector<10x128xf32>
      %387 = arith.addf %378, %386 : vector<10x128xf32>
      %c4_i32_317 = arith.constant 4 : i32
      %388 = arith.addi %197, %c4_i32_317 : i32
      %389 = arith.index_cast %388 : i32 to index
      %c1_318 = arith.constant 1 : index
      %c0_319 = arith.constant 0 : index
      %390 = vector.load %arg13[%389, %c1_318, %c0_319] : memref<14x14x128xf32, #tpu.memory_space<vmem>>, vector<1x10x128xf32>
      %391 = vector.shape_cast %390 : vector<1x10x128xf32> to vector<10x128xf32>
      %392 = arith.truncf %391 : vector<10x128xf32> to vector<10x128xbf16>
      %c21_320 = arith.constant 21 : index
      %c0_321 = arith.constant 0 : index
      %c0_322 = arith.constant 0 : index
      %393 = vector.load %arg4[%c21_320, %c0_321, %c0_322] : memref<25x128x128xbf16, #tpu.memory_space<vmem>>, vector<1x128x128xbf16>
      %394 = vector.shape_cast %393 : vector<1x128x128xbf16> to vector<128x128xbf16>
      %cst_323 = arith.constant dense<0.000000e+00> : vector<10x128xf32>
      %395 = tpu.matmul %392, %394, %cst_323 {dimension_numbers = #tpu.dot_dimension_numbers<[1], [0], [0], [1], [0, 0, 1, 1], [], []>} : vector<10x128xbf16>, vector<128x128xbf16>, vector<10x128xf32> -> vector<10x128xf32>
      %396 = arith.addf %387, %395 : vector<10x128xf32>
      %c4_i32_324 = arith.constant 4 : i32
      %397 = arith.addi %197, %c4_i32_324 : i32
      %398 = arith.index_cast %397 : i32 to index
      %c2_325 = arith.constant 2 : index
      %c0_326 = arith.constant 0 : index
      %399 = vector.load %arg13[%398, %c2_325, %c0_326] : memref<14x14x128xf32, #tpu.memory_space<vmem>>, vector<1x10x128xf32>
      %400 = vector.shape_cast %399 : vector<1x10x128xf32> to vector<10x128xf32>
      %401 = arith.truncf %400 : vector<10x128xf32> to vector<10x128xbf16>
      %c22_327 = arith.constant 22 : index
      %c0_328 = arith.constant 0 : index
      %c0_329 = arith.constant 0 : index
      %402 = vector.load %arg4[%c22_327, %c0_328, %c0_329] : memref<25x128x128xbf16, #tpu.memory_space<vmem>>, vector<1x128x128xbf16>
      %403 = vector.shape_cast %402 : vector<1x128x128xbf16> to vector<128x128xbf16>
      %cst_330 = arith.constant dense<0.000000e+00> : vector<10x128xf32>
      %404 = tpu.matmul %401, %403, %cst_330 {dimension_numbers = #tpu.dot_dimension_numbers<[1], [0], [0], [1], [0, 0, 1, 1], [], []>} : vector<10x128xbf16>, vector<128x128xbf16>, vector<10x128xf32> -> vector<10x128xf32>
      %405 = arith.addf %396, %404 : vector<10x128xf32>
      %c4_i32_331 = arith.constant 4 : i32
      %406 = arith.addi %197, %c4_i32_331 : i32
      %407 = arith.index_cast %406 : i32 to index
      %c3_332 = arith.constant 3 : index
      %c0_333 = arith.constant 0 : index
      %408 = vector.load %arg13[%407, %c3_332, %c0_333] : memref<14x14x128xf32, #tpu.memory_space<vmem>>, vector<1x10x128xf32>
      %409 = vector.shape_cast %408 : vector<1x10x128xf32> to vector<10x128xf32>
      %410 = arith.truncf %409 : vector<10x128xf32> to vector<10x128xbf16>
      %c23_334 = arith.constant 23 : index
      %c0_335 = arith.constant 0 : index
      %c0_336 = arith.constant 0 : index
      %411 = vector.load %arg4[%c23_334, %c0_335, %c0_336] : memref<25x128x128xbf16, #tpu.memory_space<vmem>>, vector<1x128x128xbf16>
      %412 = vector.shape_cast %411 : vector<1x128x128xbf16> to vector<128x128xbf16>
      %cst_337 = arith.constant dense<0.000000e+00> : vector<10x128xf32>
      %413 = tpu.matmul %410, %412, %cst_337 {dimension_numbers = #tpu.dot_dimension_numbers<[1], [0], [0], [1], [0, 0, 1, 1], [], []>} : vector<10x128xbf16>, vector<128x128xbf16>, vector<10x128xf32> -> vector<10x128xf32>
      %414 = arith.addf %405, %413 : vector<10x128xf32>
      %c4_i32_338 = arith.constant 4 : i32
      %415 = arith.addi %197, %c4_i32_338 : i32
      %416 = arith.index_cast %415 : i32 to index
      %c4_339 = arith.constant 4 : index
      %c0_340 = arith.constant 0 : index
      %417 = vector.load %arg13[%416, %c4_339, %c0_340] : memref<14x14x128xf32, #tpu.memory_space<vmem>>, vector<1x10x128xf32>
      %418 = vector.shape_cast %417 : vector<1x10x128xf32> to vector<10x128xf32>
      %419 = arith.truncf %418 : vector<10x128xf32> to vector<10x128xbf16>
      %c24_341 = arith.constant 24 : index
      %c0_342 = arith.constant 0 : index
      %c0_343 = arith.constant 0 : index
      %420 = vector.load %arg4[%c24_341, %c0_342, %c0_343] : memref<25x128x128xbf16, #tpu.memory_space<vmem>>, vector<1x128x128xbf16>
      %421 = vector.shape_cast %420 : vector<1x128x128xbf16> to vector<128x128xbf16>
      %cst_344 = arith.constant dense<0.000000e+00> : vector<10x128xf32>
      %422 = tpu.matmul %419, %421, %cst_344 {dimension_numbers = #tpu.dot_dimension_numbers<[1], [0], [0], [1], [0, 0, 1, 1], [], []>} : vector<10x128xbf16>, vector<128x128xbf16>, vector<10x128xf32> -> vector<10x128xf32>
      %423 = arith.addf %414, %422 : vector<10x128xf32>
      %c2_i32_345 = arith.constant 2 : i32
      %424 = arith.muli %c2_i32_345, %arg16 : i32
      %c1_i32_346 = arith.constant 1 : i32
      %425 = arith.addi %424, %c1_i32_346 : i32
      %cst_347 = arith.constant 0.000000e+00 : f32
      %426 = vector.broadcast %cst_347 : f32 to vector<10x128xf32>
      %c0_i32_348 = arith.constant 0 : i32
      %427 = arith.addi %425, %c0_i32_348 : i32
      %428 = arith.index_cast %427 : i32 to index
      %c0_349 = arith.constant 0 : index
      %c0_350 = arith.constant 0 : index
      %429 = vector.load %arg13[%428, %c0_349, %c0_350] : memref<14x14x128xf32, #tpu.memory_space<vmem>>, vector<1x10x128xf32>
      %430 = vector.shape_cast %429 : vector<1x10x128xf32> to vector<10x128xf32>
      %431 = arith.truncf %430 : vector<10x128xf32> to vector<10x128xbf16>
      %c0_351 = arith.constant 0 : index
      %c0_352 = arith.constant 0 : index
      %c0_353 = arith.constant 0 : index
      %432 = vector.load %arg4[%c0_351, %c0_352, %c0_353] : memref<25x128x128xbf16, #tpu.memory_space<vmem>>, vector<1x128x128xbf16>
      %433 = vector.shape_cast %432 : vector<1x128x128xbf16> to vector<128x128xbf16>
      %cst_354 = arith.constant dense<0.000000e+00> : vector<10x128xf32>
      %434 = tpu.matmul %431, %433, %cst_354 {dimension_numbers = #tpu.dot_dimension_numbers<[1], [0], [0], [1], [0, 0, 1, 1], [], []>} : vector<10x128xbf16>, vector<128x128xbf16>, vector<10x128xf32> -> vector<10x128xf32>
      %435 = arith.addf %426, %434 : vector<10x128xf32>
      %c0_i32_355 = arith.constant 0 : i32
      %436 = arith.addi %425, %c0_i32_355 : i32
      %437 = arith.index_cast %436 : i32 to index
      %c1_356 = arith.constant 1 : index
      %c0_357 = arith.constant 0 : index
      %438 = vector.load %arg13[%437, %c1_356, %c0_357] : memref<14x14x128xf32, #tpu.memory_space<vmem>>, vector<1x10x128xf32>
      %439 = vector.shape_cast %438 : vector<1x10x128xf32> to vector<10x128xf32>
      %440 = arith.truncf %439 : vector<10x128xf32> to vector<10x128xbf16>
      %c1_358 = arith.constant 1 : index
      %c0_359 = arith.constant 0 : index
      %c0_360 = arith.constant 0 : index
      %441 = vector.load %arg4[%c1_358, %c0_359, %c0_360] : memref<25x128x128xbf16, #tpu.memory_space<vmem>>, vector<1x128x128xbf16>
      %442 = vector.shape_cast %441 : vector<1x128x128xbf16> to vector<128x128xbf16>
      %cst_361 = arith.constant dense<0.000000e+00> : vector<10x128xf32>
      %443 = tpu.matmul %440, %442, %cst_361 {dimension_numbers = #tpu.dot_dimension_numbers<[1], [0], [0], [1], [0, 0, 1, 1], [], []>} : vector<10x128xbf16>, vector<128x128xbf16>, vector<10x128xf32> -> vector<10x128xf32>
      %444 = arith.addf %435, %443 : vector<10x128xf32>
      %c0_i32_362 = arith.constant 0 : i32
      %445 = arith.addi %425, %c0_i32_362 : i32
      %446 = arith.index_cast %445 : i32 to index
      %c2_363 = arith.constant 2 : index
      %c0_364 = arith.constant 0 : index
      %447 = vector.load %arg13[%446, %c2_363, %c0_364] : memref<14x14x128xf32, #tpu.memory_space<vmem>>, vector<1x10x128xf32>
      %448 = vector.shape_cast %447 : vector<1x10x128xf32> to vector<10x128xf32>
      %449 = arith.truncf %448 : vector<10x128xf32> to vector<10x128xbf16>
      %c2_365 = arith.constant 2 : index
      %c0_366 = arith.constant 0 : index
      %c0_367 = arith.constant 0 : index
      %450 = vector.load %arg4[%c2_365, %c0_366, %c0_367] : memref<25x128x128xbf16, #tpu.memory_space<vmem>>, vector<1x128x128xbf16>
      %451 = vector.shape_cast %450 : vector<1x128x128xbf16> to vector<128x128xbf16>
      %cst_368 = arith.constant dense<0.000000e+00> : vector<10x128xf32>
      %452 = tpu.matmul %449, %451, %cst_368 {dimension_numbers = #tpu.dot_dimension_numbers<[1], [0], [0], [1], [0, 0, 1, 1], [], []>} : vector<10x128xbf16>, vector<128x128xbf16>, vector<10x128xf32> -> vector<10x128xf32>
      %453 = arith.addf %444, %452 : vector<10x128xf32>
      %c0_i32_369 = arith.constant 0 : i32
      %454 = arith.addi %425, %c0_i32_369 : i32
      %455 = arith.index_cast %454 : i32 to index
      %c3_370 = arith.constant 3 : index
      %c0_371 = arith.constant 0 : index
      %456 = vector.load %arg13[%455, %c3_370, %c0_371] : memref<14x14x128xf32, #tpu.memory_space<vmem>>, vector<1x10x128xf32>
      %457 = vector.shape_cast %456 : vector<1x10x128xf32> to vector<10x128xf32>
      %458 = arith.truncf %457 : vector<10x128xf32> to vector<10x128xbf16>
      %c3_372 = arith.constant 3 : index
      %c0_373 = arith.constant 0 : index
      %c0_374 = arith.constant 0 : index
      %459 = vector.load %arg4[%c3_372, %c0_373, %c0_374] : memref<25x128x128xbf16, #tpu.memory_space<vmem>>, vector<1x128x128xbf16>
      %460 = vector.shape_cast %459 : vector<1x128x128xbf16> to vector<128x128xbf16>
      %cst_375 = arith.constant dense<0.000000e+00> : vector<10x128xf32>
      %461 = tpu.matmul %458, %460, %cst_375 {dimension_numbers = #tpu.dot_dimension_numbers<[1], [0], [0], [1], [0, 0, 1, 1], [], []>} : vector<10x128xbf16>, vector<128x128xbf16>, vector<10x128xf32> -> vector<10x128xf32>
      %462 = arith.addf %453, %461 : vector<10x128xf32>
      %c0_i32_376 = arith.constant 0 : i32
      %463 = arith.addi %425, %c0_i32_376 : i32
      %464 = arith.index_cast %463 : i32 to index
      %c4_377 = arith.constant 4 : index
      %c0_378 = arith.constant 0 : index
      %465 = vector.load %arg13[%464, %c4_377, %c0_378] : memref<14x14x128xf32, #tpu.memory_space<vmem>>, vector<1x10x128xf32>
      %466 = vector.shape_cast %465 : vector<1x10x128xf32> to vector<10x128xf32>
      %467 = arith.truncf %466 : vector<10x128xf32> to vector<10x128xbf16>
      %c4_379 = arith.constant 4 : index
      %c0_380 = arith.constant 0 : index
      %c0_381 = arith.constant 0 : index
      %468 = vector.load %arg4[%c4_379, %c0_380, %c0_381] : memref<25x128x128xbf16, #tpu.memory_space<vmem>>, vector<1x128x128xbf16>
      %469 = vector.shape_cast %468 : vector<1x128x128xbf16> to vector<128x128xbf16>
      %cst_382 = arith.constant dense<0.000000e+00> : vector<10x128xf32>
      %470 = tpu.matmul %467, %469, %cst_382 {dimension_numbers = #tpu.dot_dimension_numbers<[1], [0], [0], [1], [0, 0, 1, 1], [], []>} : vector<10x128xbf16>, vector<128x128xbf16>, vector<10x128xf32> -> vector<10x128xf32>
      %471 = arith.addf %462, %470 : vector<10x128xf32>
      %c1_i32_383 = arith.constant 1 : i32
      %472 = arith.addi %425, %c1_i32_383 : i32
      %473 = arith.index_cast %472 : i32 to index
      %c0_384 = arith.constant 0 : index
      %c0_385 = arith.constant 0 : index
      %474 = vector.load %arg13[%473, %c0_384, %c0_385] : memref<14x14x128xf32, #tpu.memory_space<vmem>>, vector<1x10x128xf32>
      %475 = vector.shape_cast %474 : vector<1x10x128xf32> to vector<10x128xf32>
      %476 = arith.truncf %475 : vector<10x128xf32> to vector<10x128xbf16>
      %c5_386 = arith.constant 5 : index
      %c0_387 = arith.constant 0 : index
      %c0_388 = arith.constant 0 : index
      %477 = vector.load %arg4[%c5_386, %c0_387, %c0_388] : memref<25x128x128xbf16, #tpu.memory_space<vmem>>, vector<1x128x128xbf16>
      %478 = vector.shape_cast %477 : vector<1x128x128xbf16> to vector<128x128xbf16>
      %cst_389 = arith.constant dense<0.000000e+00> : vector<10x128xf32>
      %479 = tpu.matmul %476, %478, %cst_389 {dimension_numbers = #tpu.dot_dimension_numbers<[1], [0], [0], [1], [0, 0, 1, 1], [], []>} : vector<10x128xbf16>, vector<128x128xbf16>, vector<10x128xf32> -> vector<10x128xf32>
      %480 = arith.addf %471, %479 : vector<10x128xf32>
      %c1_i32_390 = arith.constant 1 : i32
      %481 = arith.addi %425, %c1_i32_390 : i32
      %482 = arith.index_cast %481 : i32 to index
      %c1_391 = arith.constant 1 : index
      %c0_392 = arith.constant 0 : index
      %483 = vector.load %arg13[%482, %c1_391, %c0_392] : memref<14x14x128xf32, #tpu.memory_space<vmem>>, vector<1x10x128xf32>
      %484 = vector.shape_cast %483 : vector<1x10x128xf32> to vector<10x128xf32>
      %485 = arith.truncf %484 : vector<10x128xf32> to vector<10x128xbf16>
      %c6_393 = arith.constant 6 : index
      %c0_394 = arith.constant 0 : index
      %c0_395 = arith.constant 0 : index
      %486 = vector.load %arg4[%c6_393, %c0_394, %c0_395] : memref<25x128x128xbf16, #tpu.memory_space<vmem>>, vector<1x128x128xbf16>
      %487 = vector.shape_cast %486 : vector<1x128x128xbf16> to vector<128x128xbf16>
      %cst_396 = arith.constant dense<0.000000e+00> : vector<10x128xf32>
      %488 = tpu.matmul %485, %487, %cst_396 {dimension_numbers = #tpu.dot_dimension_numbers<[1], [0], [0], [1], [0, 0, 1, 1], [], []>} : vector<10x128xbf16>, vector<128x128xbf16>, vector<10x128xf32> -> vector<10x128xf32>
      %489 = arith.addf %480, %488 : vector<10x128xf32>
      %c1_i32_397 = arith.constant 1 : i32
      %490 = arith.addi %425, %c1_i32_397 : i32
      %491 = arith.index_cast %490 : i32 to index
      %c2_398 = arith.constant 2 : index
      %c0_399 = arith.constant 0 : index
      %492 = vector.load %arg13[%491, %c2_398, %c0_399] : memref<14x14x128xf32, #tpu.memory_space<vmem>>, vector<1x10x128xf32>
      %493 = vector.shape_cast %492 : vector<1x10x128xf32> to vector<10x128xf32>
      %494 = arith.truncf %493 : vector<10x128xf32> to vector<10x128xbf16>
      %c7_400 = arith.constant 7 : index
      %c0_401 = arith.constant 0 : index
      %c0_402 = arith.constant 0 : index
      %495 = vector.load %arg4[%c7_400, %c0_401, %c0_402] : memref<25x128x128xbf16, #tpu.memory_space<vmem>>, vector<1x128x128xbf16>
      %496 = vector.shape_cast %495 : vector<1x128x128xbf16> to vector<128x128xbf16>
      %cst_403 = arith.constant dense<0.000000e+00> : vector<10x128xf32>
      %497 = tpu.matmul %494, %496, %cst_403 {dimension_numbers = #tpu.dot_dimension_numbers<[1], [0], [0], [1], [0, 0, 1, 1], [], []>} : vector<10x128xbf16>, vector<128x128xbf16>, vector<10x128xf32> -> vector<10x128xf32>
      %498 = arith.addf %489, %497 : vector<10x128xf32>
      %c1_i32_404 = arith.constant 1 : i32
      %499 = arith.addi %425, %c1_i32_404 : i32
      %500 = arith.index_cast %499 : i32 to index
      %c3_405 = arith.constant 3 : index
      %c0_406 = arith.constant 0 : index
      %501 = vector.load %arg13[%500, %c3_405, %c0_406] : memref<14x14x128xf32, #tpu.memory_space<vmem>>, vector<1x10x128xf32>
      %502 = vector.shape_cast %501 : vector<1x10x128xf32> to vector<10x128xf32>
      %503 = arith.truncf %502 : vector<10x128xf32> to vector<10x128xbf16>
      %c8_407 = arith.constant 8 : index
      %c0_408 = arith.constant 0 : index
      %c0_409 = arith.constant 0 : index
      %504 = vector.load %arg4[%c8_407, %c0_408, %c0_409] : memref<25x128x128xbf16, #tpu.memory_space<vmem>>, vector<1x128x128xbf16>
      %505 = vector.shape_cast %504 : vector<1x128x128xbf16> to vector<128x128xbf16>
      %cst_410 = arith.constant dense<0.000000e+00> : vector<10x128xf32>
      %506 = tpu.matmul %503, %505, %cst_410 {dimension_numbers = #tpu.dot_dimension_numbers<[1], [0], [0], [1], [0, 0, 1, 1], [], []>} : vector<10x128xbf16>, vector<128x128xbf16>, vector<10x128xf32> -> vector<10x128xf32>
      %507 = arith.addf %498, %506 : vector<10x128xf32>
      %c1_i32_411 = arith.constant 1 : i32
      %508 = arith.addi %425, %c1_i32_411 : i32
      %509 = arith.index_cast %508 : i32 to index
      %c4_412 = arith.constant 4 : index
      %c0_413 = arith.constant 0 : index
      %510 = vector.load %arg13[%509, %c4_412, %c0_413] : memref<14x14x128xf32, #tpu.memory_space<vmem>>, vector<1x10x128xf32>
      %511 = vector.shape_cast %510 : vector<1x10x128xf32> to vector<10x128xf32>
      %512 = arith.truncf %511 : vector<10x128xf32> to vector<10x128xbf16>
      %c9_414 = arith.constant 9 : index
      %c0_415 = arith.constant 0 : index
      %c0_416 = arith.constant 0 : index
      %513 = vector.load %arg4[%c9_414, %c0_415, %c0_416] : memref<25x128x128xbf16, #tpu.memory_space<vmem>>, vector<1x128x128xbf16>
      %514 = vector.shape_cast %513 : vector<1x128x128xbf16> to vector<128x128xbf16>
      %cst_417 = arith.constant dense<0.000000e+00> : vector<10x128xf32>
      %515 = tpu.matmul %512, %514, %cst_417 {dimension_numbers = #tpu.dot_dimension_numbers<[1], [0], [0], [1], [0, 0, 1, 1], [], []>} : vector<10x128xbf16>, vector<128x128xbf16>, vector<10x128xf32> -> vector<10x128xf32>
      %516 = arith.addf %507, %515 : vector<10x128xf32>
      %c2_i32_418 = arith.constant 2 : i32
      %517 = arith.addi %425, %c2_i32_418 : i32
      %518 = arith.index_cast %517 : i32 to index
      %c0_419 = arith.constant 0 : index
      %c0_420 = arith.constant 0 : index
      %519 = vector.load %arg13[%518, %c0_419, %c0_420] : memref<14x14x128xf32, #tpu.memory_space<vmem>>, vector<1x10x128xf32>
      %520 = vector.shape_cast %519 : vector<1x10x128xf32> to vector<10x128xf32>
      %521 = arith.truncf %520 : vector<10x128xf32> to vector<10x128xbf16>
      %c10_421 = arith.constant 10 : index
      %c0_422 = arith.constant 0 : index
      %c0_423 = arith.constant 0 : index
      %522 = vector.load %arg4[%c10_421, %c0_422, %c0_423] : memref<25x128x128xbf16, #tpu.memory_space<vmem>>, vector<1x128x128xbf16>
      %523 = vector.shape_cast %522 : vector<1x128x128xbf16> to vector<128x128xbf16>
      %cst_424 = arith.constant dense<0.000000e+00> : vector<10x128xf32>
      %524 = tpu.matmul %521, %523, %cst_424 {dimension_numbers = #tpu.dot_dimension_numbers<[1], [0], [0], [1], [0, 0, 1, 1], [], []>} : vector<10x128xbf16>, vector<128x128xbf16>, vector<10x128xf32> -> vector<10x128xf32>
      %525 = arith.addf %516, %524 : vector<10x128xf32>
      %c2_i32_425 = arith.constant 2 : i32
      %526 = arith.addi %425, %c2_i32_425 : i32
      %527 = arith.index_cast %526 : i32 to index
      %c1_426 = arith.constant 1 : index
      %c0_427 = arith.constant 0 : index
      %528 = vector.load %arg13[%527, %c1_426, %c0_427] : memref<14x14x128xf32, #tpu.memory_space<vmem>>, vector<1x10x128xf32>
      %529 = vector.shape_cast %528 : vector<1x10x128xf32> to vector<10x128xf32>
      %530 = arith.truncf %529 : vector<10x128xf32> to vector<10x128xbf16>
      %c11_428 = arith.constant 11 : index
      %c0_429 = arith.constant 0 : index
      %c0_430 = arith.constant 0 : index
      %531 = vector.load %arg4[%c11_428, %c0_429, %c0_430] : memref<25x128x128xbf16, #tpu.memory_space<vmem>>, vector<1x128x128xbf16>
      %532 = vector.shape_cast %531 : vector<1x128x128xbf16> to vector<128x128xbf16>
      %cst_431 = arith.constant dense<0.000000e+00> : vector<10x128xf32>
      %533 = tpu.matmul %530, %532, %cst_431 {dimension_numbers = #tpu.dot_dimension_numbers<[1], [0], [0], [1], [0, 0, 1, 1], [], []>} : vector<10x128xbf16>, vector<128x128xbf16>, vector<10x128xf32> -> vector<10x128xf32>
      %534 = arith.addf %525, %533 : vector<10x128xf32>
      %c2_i32_432 = arith.constant 2 : i32
      %535 = arith.addi %425, %c2_i32_432 : i32
      %536 = arith.index_cast %535 : i32 to index
      %c2_433 = arith.constant 2 : index
      %c0_434 = arith.constant 0 : index
      %537 = vector.load %arg13[%536, %c2_433, %c0_434] : memref<14x14x128xf32, #tpu.memory_space<vmem>>, vector<1x10x128xf32>
      %538 = vector.shape_cast %537 : vector<1x10x128xf32> to vector<10x128xf32>
      %539 = arith.truncf %538 : vector<10x128xf32> to vector<10x128xbf16>
      %c12_435 = arith.constant 12 : index
      %c0_436 = arith.constant 0 : index
      %c0_437 = arith.constant 0 : index
      %540 = vector.load %arg4[%c12_435, %c0_436, %c0_437] : memref<25x128x128xbf16, #tpu.memory_space<vmem>>, vector<1x128x128xbf16>
      %541 = vector.shape_cast %540 : vector<1x128x128xbf16> to vector<128x128xbf16>
      %cst_438 = arith.constant dense<0.000000e+00> : vector<10x128xf32>
      %542 = tpu.matmul %539, %541, %cst_438 {dimension_numbers = #tpu.dot_dimension_numbers<[1], [0], [0], [1], [0, 0, 1, 1], [], []>} : vector<10x128xbf16>, vector<128x128xbf16>, vector<10x128xf32> -> vector<10x128xf32>
      %543 = arith.addf %534, %542 : vector<10x128xf32>
      %c2_i32_439 = arith.constant 2 : i32
      %544 = arith.addi %425, %c2_i32_439 : i32
      %545 = arith.index_cast %544 : i32 to index
      %c3_440 = arith.constant 3 : index
      %c0_441 = arith.constant 0 : index
      %546 = vector.load %arg13[%545, %c3_440, %c0_441] : memref<14x14x128xf32, #tpu.memory_space<vmem>>, vector<1x10x128xf32>
      %547 = vector.shape_cast %546 : vector<1x10x128xf32> to vector<10x128xf32>
      %548 = arith.truncf %547 : vector<10x128xf32> to vector<10x128xbf16>
      %c13_442 = arith.constant 13 : index
      %c0_443 = arith.constant 0 : index
      %c0_444 = arith.constant 0 : index
      %549 = vector.load %arg4[%c13_442, %c0_443, %c0_444] : memref<25x128x128xbf16, #tpu.memory_space<vmem>>, vector<1x128x128xbf16>
      %550 = vector.shape_cast %549 : vector<1x128x128xbf16> to vector<128x128xbf16>
      %cst_445 = arith.constant dense<0.000000e+00> : vector<10x128xf32>
      %551 = tpu.matmul %548, %550, %cst_445 {dimension_numbers = #tpu.dot_dimension_numbers<[1], [0], [0], [1], [0, 0, 1, 1], [], []>} : vector<10x128xbf16>, vector<128x128xbf16>, vector<10x128xf32> -> vector<10x128xf32>
      %552 = arith.addf %543, %551 : vector<10x128xf32>
      %c2_i32_446 = arith.constant 2 : i32
      %553 = arith.addi %425, %c2_i32_446 : i32
      %554 = arith.index_cast %553 : i32 to index
      %c4_447 = arith.constant 4 : index
      %c0_448 = arith.constant 0 : index
      %555 = vector.load %arg13[%554, %c4_447, %c0_448] : memref<14x14x128xf32, #tpu.memory_space<vmem>>, vector<1x10x128xf32>
      %556 = vector.shape_cast %555 : vector<1x10x128xf32> to vector<10x128xf32>
      %557 = arith.truncf %556 : vector<10x128xf32> to vector<10x128xbf16>
      %c14_449 = arith.constant 14 : index
      %c0_450 = arith.constant 0 : index
      %c0_451 = arith.constant 0 : index
      %558 = vector.load %arg4[%c14_449, %c0_450, %c0_451] : memref<25x128x128xbf16, #tpu.memory_space<vmem>>, vector<1x128x128xbf16>
      %559 = vector.shape_cast %558 : vector<1x128x128xbf16> to vector<128x128xbf16>
      %cst_452 = arith.constant dense<0.000000e+00> : vector<10x128xf32>
      %560 = tpu.matmul %557, %559, %cst_452 {dimension_numbers = #tpu.dot_dimension_numbers<[1], [0], [0], [1], [0, 0, 1, 1], [], []>} : vector<10x128xbf16>, vector<128x128xbf16>, vector<10x128xf32> -> vector<10x128xf32>
      %561 = arith.addf %552, %560 : vector<10x128xf32>
      %c3_i32_453 = arith.constant 3 : i32
      %562 = arith.addi %425, %c3_i32_453 : i32
      %563 = arith.index_cast %562 : i32 to index
      %c0_454 = arith.constant 0 : index
      %c0_455 = arith.constant 0 : index
      %564 = vector.load %arg13[%563, %c0_454, %c0_455] : memref<14x14x128xf32, #tpu.memory_space<vmem>>, vector<1x10x128xf32>
      %565 = vector.shape_cast %564 : vector<1x10x128xf32> to vector<10x128xf32>
      %566 = arith.truncf %565 : vector<10x128xf32> to vector<10x128xbf16>
      %c15_456 = arith.constant 15 : index
      %c0_457 = arith.constant 0 : index
      %c0_458 = arith.constant 0 : index
      %567 = vector.load %arg4[%c15_456, %c0_457, %c0_458] : memref<25x128x128xbf16, #tpu.memory_space<vmem>>, vector<1x128x128xbf16>
      %568 = vector.shape_cast %567 : vector<1x128x128xbf16> to vector<128x128xbf16>
      %cst_459 = arith.constant dense<0.000000e+00> : vector<10x128xf32>
      %569 = tpu.matmul %566, %568, %cst_459 {dimension_numbers = #tpu.dot_dimension_numbers<[1], [0], [0], [1], [0, 0, 1, 1], [], []>} : vector<10x128xbf16>, vector<128x128xbf16>, vector<10x128xf32> -> vector<10x128xf32>
      %570 = arith.addf %561, %569 : vector<10x128xf32>
      %c3_i32_460 = arith.constant 3 : i32
      %571 = arith.addi %425, %c3_i32_460 : i32
      %572 = arith.index_cast %571 : i32 to index
      %c1_461 = arith.constant 1 : index
      %c0_462 = arith.constant 0 : index
      %573 = vector.load %arg13[%572, %c1_461, %c0_462] : memref<14x14x128xf32, #tpu.memory_space<vmem>>, vector<1x10x128xf32>
      %574 = vector.shape_cast %573 : vector<1x10x128xf32> to vector<10x128xf32>
      %575 = arith.truncf %574 : vector<10x128xf32> to vector<10x128xbf16>
      %c16_463 = arith.constant 16 : index
      %c0_464 = arith.constant 0 : index
      %c0_465 = arith.constant 0 : index
      %576 = vector.load %arg4[%c16_463, %c0_464, %c0_465] : memref<25x128x128xbf16, #tpu.memory_space<vmem>>, vector<1x128x128xbf16>
      %577 = vector.shape_cast %576 : vector<1x128x128xbf16> to vector<128x128xbf16>
      %cst_466 = arith.constant dense<0.000000e+00> : vector<10x128xf32>
      %578 = tpu.matmul %575, %577, %cst_466 {dimension_numbers = #tpu.dot_dimension_numbers<[1], [0], [0], [1], [0, 0, 1, 1], [], []>} : vector<10x128xbf16>, vector<128x128xbf16>, vector<10x128xf32> -> vector<10x128xf32>
      %579 = arith.addf %570, %578 : vector<10x128xf32>
      %c3_i32_467 = arith.constant 3 : i32
      %580 = arith.addi %425, %c3_i32_467 : i32
      %581 = arith.index_cast %580 : i32 to index
      %c2_468 = arith.constant 2 : index
      %c0_469 = arith.constant 0 : index
      %582 = vector.load %arg13[%581, %c2_468, %c0_469] : memref<14x14x128xf32, #tpu.memory_space<vmem>>, vector<1x10x128xf32>
      %583 = vector.shape_cast %582 : vector<1x10x128xf32> to vector<10x128xf32>
      %584 = arith.truncf %583 : vector<10x128xf32> to vector<10x128xbf16>
      %c17_470 = arith.constant 17 : index
      %c0_471 = arith.constant 0 : index
      %c0_472 = arith.constant 0 : index
      %585 = vector.load %arg4[%c17_470, %c0_471, %c0_472] : memref<25x128x128xbf16, #tpu.memory_space<vmem>>, vector<1x128x128xbf16>
      %586 = vector.shape_cast %585 : vector<1x128x128xbf16> to vector<128x128xbf16>
      %cst_473 = arith.constant dense<0.000000e+00> : vector<10x128xf32>
      %587 = tpu.matmul %584, %586, %cst_473 {dimension_numbers = #tpu.dot_dimension_numbers<[1], [0], [0], [1], [0, 0, 1, 1], [], []>} : vector<10x128xbf16>, vector<128x128xbf16>, vector<10x128xf32> -> vector<10x128xf32>
      %588 = arith.addf %579, %587 : vector<10x128xf32>
      %c3_i32_474 = arith.constant 3 : i32
      %589 = arith.addi %425, %c3_i32_474 : i32
      %590 = arith.index_cast %589 : i32 to index
      %c3_475 = arith.constant 3 : index
      %c0_476 = arith.constant 0 : index
      %591 = vector.load %arg13[%590, %c3_475, %c0_476] : memref<14x14x128xf32, #tpu.memory_space<vmem>>, vector<1x10x128xf32>
      %592 = vector.shape_cast %591 : vector<1x10x128xf32> to vector<10x128xf32>
      %593 = arith.truncf %592 : vector<10x128xf32> to vector<10x128xbf16>
      %c18_477 = arith.constant 18 : index
      %c0_478 = arith.constant 0 : index
      %c0_479 = arith.constant 0 : index
      %594 = vector.load %arg4[%c18_477, %c0_478, %c0_479] : memref<25x128x128xbf16, #tpu.memory_space<vmem>>, vector<1x128x128xbf16>
      %595 = vector.shape_cast %594 : vector<1x128x128xbf16> to vector<128x128xbf16>
      %cst_480 = arith.constant dense<0.000000e+00> : vector<10x128xf32>
      %596 = tpu.matmul %593, %595, %cst_480 {dimension_numbers = #tpu.dot_dimension_numbers<[1], [0], [0], [1], [0, 0, 1, 1], [], []>} : vector<10x128xbf16>, vector<128x128xbf16>, vector<10x128xf32> -> vector<10x128xf32>
      %597 = arith.addf %588, %596 : vector<10x128xf32>
      %c3_i32_481 = arith.constant 3 : i32
      %598 = arith.addi %425, %c3_i32_481 : i32
      %599 = arith.index_cast %598 : i32 to index
      %c4_482 = arith.constant 4 : index
      %c0_483 = arith.constant 0 : index
      %600 = vector.load %arg13[%599, %c4_482, %c0_483] : memref<14x14x128xf32, #tpu.memory_space<vmem>>, vector<1x10x128xf32>
      %601 = vector.shape_cast %600 : vector<1x10x128xf32> to vector<10x128xf32>
      %602 = arith.truncf %601 : vector<10x128xf32> to vector<10x128xbf16>
      %c19_484 = arith.constant 19 : index
      %c0_485 = arith.constant 0 : index
      %c0_486 = arith.constant 0 : index
      %603 = vector.load %arg4[%c19_484, %c0_485, %c0_486] : memref<25x128x128xbf16, #tpu.memory_space<vmem>>, vector<1x128x128xbf16>
      %604 = vector.shape_cast %603 : vector<1x128x128xbf16> to vector<128x128xbf16>
      %cst_487 = arith.constant dense<0.000000e+00> : vector<10x128xf32>
      %605 = tpu.matmul %602, %604, %cst_487 {dimension_numbers = #tpu.dot_dimension_numbers<[1], [0], [0], [1], [0, 0, 1, 1], [], []>} : vector<10x128xbf16>, vector<128x128xbf16>, vector<10x128xf32> -> vector<10x128xf32>
      %606 = arith.addf %597, %605 : vector<10x128xf32>
      %c4_i32_488 = arith.constant 4 : i32
      %607 = arith.addi %425, %c4_i32_488 : i32
      %608 = arith.index_cast %607 : i32 to index
      %c0_489 = arith.constant 0 : index
      %c0_490 = arith.constant 0 : index
      %609 = vector.load %arg13[%608, %c0_489, %c0_490] : memref<14x14x128xf32, #tpu.memory_space<vmem>>, vector<1x10x128xf32>
      %610 = vector.shape_cast %609 : vector<1x10x128xf32> to vector<10x128xf32>
      %611 = arith.truncf %610 : vector<10x128xf32> to vector<10x128xbf16>
      %c20_491 = arith.constant 20 : index
      %c0_492 = arith.constant 0 : index
      %c0_493 = arith.constant 0 : index
      %612 = vector.load %arg4[%c20_491, %c0_492, %c0_493] : memref<25x128x128xbf16, #tpu.memory_space<vmem>>, vector<1x128x128xbf16>
      %613 = vector.shape_cast %612 : vector<1x128x128xbf16> to vector<128x128xbf16>
      %cst_494 = arith.constant dense<0.000000e+00> : vector<10x128xf32>
      %614 = tpu.matmul %611, %613, %cst_494 {dimension_numbers = #tpu.dot_dimension_numbers<[1], [0], [0], [1], [0, 0, 1, 1], [], []>} : vector<10x128xbf16>, vector<128x128xbf16>, vector<10x128xf32> -> vector<10x128xf32>
      %615 = arith.addf %606, %614 : vector<10x128xf32>
      %c4_i32_495 = arith.constant 4 : i32
      %616 = arith.addi %425, %c4_i32_495 : i32
      %617 = arith.index_cast %616 : i32 to index
      %c1_496 = arith.constant 1 : index
      %c0_497 = arith.constant 0 : index
      %618 = vector.load %arg13[%617, %c1_496, %c0_497] : memref<14x14x128xf32, #tpu.memory_space<vmem>>, vector<1x10x128xf32>
      %619 = vector.shape_cast %618 : vector<1x10x128xf32> to vector<10x128xf32>
      %620 = arith.truncf %619 : vector<10x128xf32> to vector<10x128xbf16>
      %c21_498 = arith.constant 21 : index
      %c0_499 = arith.constant 0 : index
      %c0_500 = arith.constant 0 : index
      %621 = vector.load %arg4[%c21_498, %c0_499, %c0_500] : memref<25x128x128xbf16, #tpu.memory_space<vmem>>, vector<1x128x128xbf16>
      %622 = vector.shape_cast %621 : vector<1x128x128xbf16> to vector<128x128xbf16>
      %cst_501 = arith.constant dense<0.000000e+00> : vector<10x128xf32>
      %623 = tpu.matmul %620, %622, %cst_501 {dimension_numbers = #tpu.dot_dimension_numbers<[1], [0], [0], [1], [0, 0, 1, 1], [], []>} : vector<10x128xbf16>, vector<128x128xbf16>, vector<10x128xf32> -> vector<10x128xf32>
      %624 = arith.addf %615, %623 : vector<10x128xf32>
      %c4_i32_502 = arith.constant 4 : i32
      %625 = arith.addi %425, %c4_i32_502 : i32
      %626 = arith.index_cast %625 : i32 to index
      %c2_503 = arith.constant 2 : index
      %c0_504 = arith.constant 0 : index
      %627 = vector.load %arg13[%626, %c2_503, %c0_504] : memref<14x14x128xf32, #tpu.memory_space<vmem>>, vector<1x10x128xf32>
      %628 = vector.shape_cast %627 : vector<1x10x128xf32> to vector<10x128xf32>
      %629 = arith.truncf %628 : vector<10x128xf32> to vector<10x128xbf16>
      %c22_505 = arith.constant 22 : index
      %c0_506 = arith.constant 0 : index
      %c0_507 = arith.constant 0 : index
      %630 = vector.load %arg4[%c22_505, %c0_506, %c0_507] : memref<25x128x128xbf16, #tpu.memory_space<vmem>>, vector<1x128x128xbf16>
      %631 = vector.shape_cast %630 : vector<1x128x128xbf16> to vector<128x128xbf16>
      %cst_508 = arith.constant dense<0.000000e+00> : vector<10x128xf32>
      %632 = tpu.matmul %629, %631, %cst_508 {dimension_numbers = #tpu.dot_dimension_numbers<[1], [0], [0], [1], [0, 0, 1, 1], [], []>} : vector<10x128xbf16>, vector<128x128xbf16>, vector<10x128xf32> -> vector<10x128xf32>
      %633 = arith.addf %624, %632 : vector<10x128xf32>
      %c4_i32_509 = arith.constant 4 : i32
      %634 = arith.addi %425, %c4_i32_509 : i32
      %635 = arith.index_cast %634 : i32 to index
      %c3_510 = arith.constant 3 : index
      %c0_511 = arith.constant 0 : index
      %636 = vector.load %arg13[%635, %c3_510, %c0_511] : memref<14x14x128xf32, #tpu.memory_space<vmem>>, vector<1x10x128xf32>
      %637 = vector.shape_cast %636 : vector<1x10x128xf32> to vector<10x128xf32>
      %638 = arith.truncf %637 : vector<10x128xf32> to vector<10x128xbf16>
      %c23_512 = arith.constant 23 : index
      %c0_513 = arith.constant 0 : index
      %c0_514 = arith.constant 0 : index
      %639 = vector.load %arg4[%c23_512, %c0_513, %c0_514] : memref<25x128x128xbf16, #tpu.memory_space<vmem>>, vector<1x128x128xbf16>
      %640 = vector.shape_cast %639 : vector<1x128x128xbf16> to vector<128x128xbf16>
      %cst_515 = arith.constant dense<0.000000e+00> : vector<10x128xf32>
      %641 = tpu.matmul %638, %640, %cst_515 {dimension_numbers = #tpu.dot_dimension_numbers<[1], [0], [0], [1], [0, 0, 1, 1], [], []>} : vector<10x128xbf16>, vector<128x128xbf16>, vector<10x128xf32> -> vector<10x128xf32>
      %642 = arith.addf %633, %641 : vector<10x128xf32>
      %c4_i32_516 = arith.constant 4 : i32
      %643 = arith.addi %425, %c4_i32_516 : i32
      %644 = arith.index_cast %643 : i32 to index
      %c4_517 = arith.constant 4 : index
      %c0_518 = arith.constant 0 : index
      %645 = vector.load %arg13[%644, %c4_517, %c0_518] : memref<14x14x128xf32, #tpu.memory_space<vmem>>, vector<1x10x128xf32>
      %646 = vector.shape_cast %645 : vector<1x10x128xf32> to vector<10x128xf32>
      %647 = arith.truncf %646 : vector<10x128xf32> to vector<10x128xbf16>
      %c24_519 = arith.constant 24 : index
      %c0_520 = arith.constant 0 : index
      %c0_521 = arith.constant 0 : index
      %648 = vector.load %arg4[%c24_519, %c0_520, %c0_521] : memref<25x128x128xbf16, #tpu.memory_space<vmem>>, vector<1x128x128xbf16>
      %649 = vector.shape_cast %648 : vector<1x128x128xbf16> to vector<128x128xbf16>
      %cst_522 = arith.constant dense<0.000000e+00> : vector<10x128xf32>
      %650 = tpu.matmul %647, %649, %cst_522 {dimension_numbers = #tpu.dot_dimension_numbers<[1], [0], [0], [1], [0, 0, 1, 1], [], []>} : vector<10x128xbf16>, vector<128x128xbf16>, vector<10x128xf32> -> vector<10x128xf32>
      %651 = arith.addf %642, %650 : vector<10x128xf32>
      %652 = arith.maximumf %423, %651 : vector<10x128xf32>
      %c0_523 = arith.constant 0 : index
      %c0_524 = arith.constant 0 : index
      %653 = vector.load %arg15[%c0_523, %c0_524] : memref<28x128xf32, #tpu.memory_space<vmem>>, vector<10x128xf32>
      tpu.vector_store %arg15[%c0_523, %c0_524], %652 {strides = array<i32>} : memref<28x128xf32, #tpu.memory_space<vmem>>, vector<10x128xf32>,
      %c0_525 = arith.constant 0 : index
      %c0_526 = arith.constant 0 : index
      %654 = tpu.strided_load %arg15[%c0_525, %c0_526] {strides = array<i32: 2, 1>} : memref<28x128xf32, #tpu.memory_space<vmem>>, vector<5x128xf32>
      %c1_527 = arith.constant 1 : index
      %c0_528 = arith.constant 0 : index
      %655 = tpu.strided_load %arg15[%c1_527, %c0_528] {strides = array<i32: 2, 1>} : memref<28x128xf32, #tpu.memory_space<vmem>>, vector<5x128xf32>
      %656 = arith.maximumf %654, %655 : vector<5x128xf32>
      %c0_529 = arith.constant 0 : index
      %c0_530 = arith.constant 0 : index
      %657 = vector.load %arg5[%c0_529, %c0_530] : memref<1x128xf32, #tpu.memory_space<vmem>>, vector<1x128xf32>
      %658 = vector.broadcast %657 : vector<1x128xf32> to vector<5x128xf32>
      %659 = arith.addf %656, %658 : vector<5x128xf32>
      %cst_531 = arith.constant 0.000000e+00 : f32
      %660 = vector.broadcast %cst_531 : f32 to vector<5x128xf32>
      %661 = arith.maximumf %659, %660 : vector<5x128xf32>
      %662 = arith.index_cast %arg16 : i32 to index
      %c0_532 = arith.constant 0 : index
      %c0_533 = arith.constant 0 : index
      %663 = vector.load %arg14[%662, %c0_532, %c0_533] : memref<5x5x128xf32, #tpu.memory_space<vmem>>, vector<1x5x128xf32>
      %664 = vector.shape_cast %663 : vector<1x5x128xf32> to vector<5x128xf32>
      %665 = vector.shape_cast %661 : vector<5x128xf32> to vector<1x5x128xf32>
      tpu.vector_store %arg14[%662, %c0_532, %c0_533], %665 {strides = array<i32>} : memref<5x5x128xf32, #tpu.memory_space<vmem>>, vector<1x5x128xf32>,
    }
    %c5_i32_3 = arith.constant 5 : i32
    %cst = arith.constant 0.000000e+00 : f32
    %2 = vector.broadcast %cst : f32 to vector<1x128xf32>
    %c0 = arith.constant 0 : index
    %c0_4 = arith.constant 0 : index
    %c0_5 = arith.constant 0 : index
    %3 = vector.load %arg14[%c0, %c0_4, %c0_5] : memref<5x5x128xf32, #tpu.memory_space<vmem>>, vector<1x1x128xf32>
    %4 = vector.shape_cast %3 : vector<1x1x128xf32> to vector<1x128xf32>
    %5 = arith.truncf %4 : vector<1x128xf32> to vector<1x128xbf16>
    %c0_6 = arith.constant 0 : index
    %c0_7 = arith.constant 0 : index
    %c0_8 = arith.constant 0 : index
    %6 = vector.load %arg6[%c0_6, %c0_7, %c0_8] : memref<25x128x128xbf16, #tpu.memory_space<vmem>>, vector<1x128x128xbf16>
    %7 = vector.shape_cast %6 : vector<1x128x128xbf16> to vector<128x128xbf16>
    %cst_9 = arith.constant dense<0.000000e+00> : vector<1x128xf32>
    %8 = tpu.matmul %5, %7, %cst_9 {dimension_numbers = #tpu.dot_dimension_numbers<[1], [0], [0], [1], [0, 0, 1, 1], [], []>} : vector<1x128xbf16>, vector<128x128xbf16>, vector<1x128xf32> -> vector<1x128xf32>
    %9 = arith.addf %2, %8 : vector<1x128xf32>
    %c0_10 = arith.constant 0 : index
    %c1 = arith.constant 1 : index
    %c0_11 = arith.constant 0 : index
    %10 = vector.load %arg14[%c0_10, %c1, %c0_11] : memref<5x5x128xf32, #tpu.memory_space<vmem>>, vector<1x1x128xf32>
    %11 = vector.shape_cast %10 : vector<1x1x128xf32> to vector<1x128xf32>
    %12 = arith.truncf %11 : vector<1x128xf32> to vector<1x128xbf16>
    %c1_12 = arith.constant 1 : index
    %c0_13 = arith.constant 0 : index
    %c0_14 = arith.constant 0 : index
    %13 = vector.load %arg6[%c1_12, %c0_13, %c0_14] : memref<25x128x128xbf16, #tpu.memory_space<vmem>>, vector<1x128x128xbf16>
    %14 = vector.shape_cast %13 : vector<1x128x128xbf16> to vector<128x128xbf16>
    %cst_15 = arith.constant dense<0.000000e+00> : vector<1x128xf32>
    %15 = tpu.matmul %12, %14, %cst_15 {dimension_numbers = #tpu.dot_dimension_numbers<[1], [0], [0], [1], [0, 0, 1, 1], [], []>} : vector<1x128xbf16>, vector<128x128xbf16>, vector<1x128xf32> -> vector<1x128xf32>
    %16 = arith.addf %9, %15 : vector<1x128xf32>
    %c0_16 = arith.constant 0 : index
    %c2 = arith.constant 2 : index
    %c0_17 = arith.constant 0 : index
    %17 = vector.load %arg14[%c0_16, %c2, %c0_17] : memref<5x5x128xf32, #tpu.memory_space<vmem>>, vector<1x1x128xf32>
    %18 = vector.shape_cast %17 : vector<1x1x128xf32> to vector<1x128xf32>
    %19 = arith.truncf %18 : vector<1x128xf32> to vector<1x128xbf16>
    %c2_18 = arith.constant 2 : index
    %c0_19 = arith.constant 0 : index
    %c0_20 = arith.constant 0 : index
    %20 = vector.load %arg6[%c2_18, %c0_19, %c0_20] : memref<25x128x128xbf16, #tpu.memory_space<vmem>>, vector<1x128x128xbf16>
    %21 = vector.shape_cast %20 : vector<1x128x128xbf16> to vector<128x128xbf16>
    %cst_21 = arith.constant dense<0.000000e+00> : vector<1x128xf32>
    %22 = tpu.matmul %19, %21, %cst_21 {dimension_numbers = #tpu.dot_dimension_numbers<[1], [0], [0], [1], [0, 0, 1, 1], [], []>} : vector<1x128xbf16>, vector<128x128xbf16>, vector<1x128xf32> -> vector<1x128xf32>
    %23 = arith.addf %16, %22 : vector<1x128xf32>
    %c0_22 = arith.constant 0 : index
    %c3 = arith.constant 3 : index
    %c0_23 = arith.constant 0 : index
    %24 = vector.load %arg14[%c0_22, %c3, %c0_23] : memref<5x5x128xf32, #tpu.memory_space<vmem>>, vector<1x1x128xf32>
    %25 = vector.shape_cast %24 : vector<1x1x128xf32> to vector<1x128xf32>
    %26 = arith.truncf %25 : vector<1x128xf32> to vector<1x128xbf16>
    %c3_24 = arith.constant 3 : index
    %c0_25 = arith.constant 0 : index
    %c0_26 = arith.constant 0 : index
    %27 = vector.load %arg6[%c3_24, %c0_25, %c0_26] : memref<25x128x128xbf16, #tpu.memory_space<vmem>>, vector<1x128x128xbf16>
    %28 = vector.shape_cast %27 : vector<1x128x128xbf16> to vector<128x128xbf16>
    %cst_27 = arith.constant dense<0.000000e+00> : vector<1x128xf32>
    %29 = tpu.matmul %26, %28, %cst_27 {dimension_numbers = #tpu.dot_dimension_numbers<[1], [0], [0], [1], [0, 0, 1, 1], [], []>} : vector<1x128xbf16>, vector<128x128xbf16>, vector<1x128xf32> -> vector<1x128xf32>
    %30 = arith.addf %23, %29 : vector<1x128xf32>
    %c0_28 = arith.constant 0 : index
    %c4 = arith.constant 4 : index
    %c0_29 = arith.constant 0 : index
    %31 = vector.load %arg14[%c0_28, %c4, %c0_29] : memref<5x5x128xf32, #tpu.memory_space<vmem>>, vector<1x1x128xf32>
    %32 = vector.shape_cast %31 : vector<1x1x128xf32> to vector<1x128xf32>
    %33 = arith.truncf %32 : vector<1x128xf32> to vector<1x128xbf16>
    %c4_30 = arith.constant 4 : index
    %c0_31 = arith.constant 0 : index
    %c0_32 = arith.constant 0 : index
    %34 = vector.load %arg6[%c4_30, %c0_31, %c0_32] : memref<25x128x128xbf16, #tpu.memory_space<vmem>>, vector<1x128x128xbf16>
    %35 = vector.shape_cast %34 : vector<1x128x128xbf16> to vector<128x128xbf16>
    %cst_33 = arith.constant dense<0.000000e+00> : vector<1x128xf32>
    %36 = tpu.matmul %33, %35, %cst_33 {dimension_numbers = #tpu.dot_dimension_numbers<[1], [0], [0], [1], [0, 0, 1, 1], [], []>} : vector<1x128xbf16>, vector<128x128xbf16>, vector<1x128xf32> -> vector<1x128xf32>
    %37 = arith.addf %30, %36 : vector<1x128xf32>
    %c1_34 = arith.constant 1 : index
    %c0_35 = arith.constant 0 : index
    %c0_36 = arith.constant 0 : index
    %38 = vector.load %arg14[%c1_34, %c0_35, %c0_36] : memref<5x5x128xf32, #tpu.memory_space<vmem>>, vector<1x1x128xf32>
    %39 = vector.shape_cast %38 : vector<1x1x128xf32> to vector<1x128xf32>
    %40 = arith.truncf %39 : vector<1x128xf32> to vector<1x128xbf16>
    %c5 = arith.constant 5 : index
    %c0_37 = arith.constant 0 : index
    %c0_38 = arith.constant 0 : index
    %41 = vector.load %arg6[%c5, %c0_37, %c0_38] : memref<25x128x128xbf16, #tpu.memory_space<vmem>>, vector<1x128x128xbf16>
    %42 = vector.shape_cast %41 : vector<1x128x128xbf16> to vector<128x128xbf16>
    %cst_39 = arith.constant dense<0.000000e+00> : vector<1x128xf32>
    %43 = tpu.matmul %40, %42, %cst_39 {dimension_numbers = #tpu.dot_dimension_numbers<[1], [0], [0], [1], [0, 0, 1, 1], [], []>} : vector<1x128xbf16>, vector<128x128xbf16>, vector<1x128xf32> -> vector<1x128xf32>
    %44 = arith.addf %37, %43 : vector<1x128xf32>
    %c1_40 = arith.constant 1 : index
    %c1_41 = arith.constant 1 : index
    %c0_42 = arith.constant 0 : index
    %45 = vector.load %arg14[%c1_40, %c1_41, %c0_42] : memref<5x5x128xf32, #tpu.memory_space<vmem>>, vector<1x1x128xf32>
    %46 = vector.shape_cast %45 : vector<1x1x128xf32> to vector<1x128xf32>
    %47 = arith.truncf %46 : vector<1x128xf32> to vector<1x128xbf16>
    %c6 = arith.constant 6 : index
    %c0_43 = arith.constant 0 : index
    %c0_44 = arith.constant 0 : index
    %48 = vector.load %arg6[%c6, %c0_43, %c0_44] : memref<25x128x128xbf16, #tpu.memory_space<vmem>>, vector<1x128x128xbf16>
    %49 = vector.shape_cast %48 : vector<1x128x128xbf16> to vector<128x128xbf16>
    %cst_45 = arith.constant dense<0.000000e+00> : vector<1x128xf32>
    %50 = tpu.matmul %47, %49, %cst_45 {dimension_numbers = #tpu.dot_dimension_numbers<[1], [0], [0], [1], [0, 0, 1, 1], [], []>} : vector<1x128xbf16>, vector<128x128xbf16>, vector<1x128xf32> -> vector<1x128xf32>
    %51 = arith.addf %44, %50 : vector<1x128xf32>
    %c1_46 = arith.constant 1 : index
    %c2_47 = arith.constant 2 : index
    %c0_48 = arith.constant 0 : index
    %52 = vector.load %arg14[%c1_46, %c2_47, %c0_48] : memref<5x5x128xf32, #tpu.memory_space<vmem>>, vector<1x1x128xf32>
    %53 = vector.shape_cast %52 : vector<1x1x128xf32> to vector<1x128xf32>
    %54 = arith.truncf %53 : vector<1x128xf32> to vector<1x128xbf16>
    %c7 = arith.constant 7 : index
    %c0_49 = arith.constant 0 : index
    %c0_50 = arith.constant 0 : index
    %55 = vector.load %arg6[%c7, %c0_49, %c0_50] : memref<25x128x128xbf16, #tpu.memory_space<vmem>>, vector<1x128x128xbf16>
    %56 = vector.shape_cast %55 : vector<1x128x128xbf16> to vector<128x128xbf16>
    %cst_51 = arith.constant dense<0.000000e+00> : vector<1x128xf32>
    %57 = tpu.matmul %54, %56, %cst_51 {dimension_numbers = #tpu.dot_dimension_numbers<[1], [0], [0], [1], [0, 0, 1, 1], [], []>} : vector<1x128xbf16>, vector<128x128xbf16>, vector<1x128xf32> -> vector<1x128xf32>
    %58 = arith.addf %51, %57 : vector<1x128xf32>
    %c1_52 = arith.constant 1 : index
    %c3_53 = arith.constant 3 : index
    %c0_54 = arith.constant 0 : index
    %59 = vector.load %arg14[%c1_52, %c3_53, %c0_54] : memref<5x5x128xf32, #tpu.memory_space<vmem>>, vector<1x1x128xf32>
    %60 = vector.shape_cast %59 : vector<1x1x128xf32> to vector<1x128xf32>
    %61 = arith.truncf %60 : vector<1x128xf32> to vector<1x128xbf16>
    %c8 = arith.constant 8 : index
    %c0_55 = arith.constant 0 : index
    %c0_56 = arith.constant 0 : index
    %62 = vector.load %arg6[%c8, %c0_55, %c0_56] : memref<25x128x128xbf16, #tpu.memory_space<vmem>>, vector<1x128x128xbf16>
    %63 = vector.shape_cast %62 : vector<1x128x128xbf16> to vector<128x128xbf16>
    %cst_57 = arith.constant dense<0.000000e+00> : vector<1x128xf32>
    %64 = tpu.matmul %61, %63, %cst_57 {dimension_numbers = #tpu.dot_dimension_numbers<[1], [0], [0], [1], [0, 0, 1, 1], [], []>} : vector<1x128xbf16>, vector<128x128xbf16>, vector<1x128xf32> -> vector<1x128xf32>
    %65 = arith.addf %58, %64 : vector<1x128xf32>
    %c1_58 = arith.constant 1 : index
    %c4_59 = arith.constant 4 : index
    %c0_60 = arith.constant 0 : index
    %66 = vector.load %arg14[%c1_58, %c4_59, %c0_60] : memref<5x5x128xf32, #tpu.memory_space<vmem>>, vector<1x1x128xf32>
    %67 = vector.shape_cast %66 : vector<1x1x128xf32> to vector<1x128xf32>
    %68 = arith.truncf %67 : vector<1x128xf32> to vector<1x128xbf16>
    %c9 = arith.constant 9 : index
    %c0_61 = arith.constant 0 : index
    %c0_62 = arith.constant 0 : index
    %69 = vector.load %arg6[%c9, %c0_61, %c0_62] : memref<25x128x128xbf16, #tpu.memory_space<vmem>>, vector<1x128x128xbf16>
    %70 = vector.shape_cast %69 : vector<1x128x128xbf16> to vector<128x128xbf16>
    %cst_63 = arith.constant dense<0.000000e+00> : vector<1x128xf32>
    %71 = tpu.matmul %68, %70, %cst_63 {dimension_numbers = #tpu.dot_dimension_numbers<[1], [0], [0], [1], [0, 0, 1, 1], [], []>} : vector<1x128xbf16>, vector<128x128xbf16>, vector<1x128xf32> -> vector<1x128xf32>
    %72 = arith.addf %65, %71 : vector<1x128xf32>
    %c2_64 = arith.constant 2 : index
    %c0_65 = arith.constant 0 : index
    %c0_66 = arith.constant 0 : index
    %73 = vector.load %arg14[%c2_64, %c0_65, %c0_66] : memref<5x5x128xf32, #tpu.memory_space<vmem>>, vector<1x1x128xf32>
    %74 = vector.shape_cast %73 : vector<1x1x128xf32> to vector<1x128xf32>
    %75 = arith.truncf %74 : vector<1x128xf32> to vector<1x128xbf16>
    %c10 = arith.constant 10 : index
    %c0_67 = arith.constant 0 : index
    %c0_68 = arith.constant 0 : index
    %76 = vector.load %arg6[%c10, %c0_67, %c0_68] : memref<25x128x128xbf16, #tpu.memory_space<vmem>>, vector<1x128x128xbf16>
    %77 = vector.shape_cast %76 : vector<1x128x128xbf16> to vector<128x128xbf16>
    %cst_69 = arith.constant dense<0.000000e+00> : vector<1x128xf32>
    %78 = tpu.matmul %75, %77, %cst_69 {dimension_numbers = #tpu.dot_dimension_numbers<[1], [0], [0], [1], [0, 0, 1, 1], [], []>} : vector<1x128xbf16>, vector<128x128xbf16>, vector<1x128xf32> -> vector<1x128xf32>
    %79 = arith.addf %72, %78 : vector<1x128xf32>
    %c2_70 = arith.constant 2 : index
    %c1_71 = arith.constant 1 : index
    %c0_72 = arith.constant 0 : index
    %80 = vector.load %arg14[%c2_70, %c1_71, %c0_72] : memref<5x5x128xf32, #tpu.memory_space<vmem>>, vector<1x1x128xf32>
    %81 = vector.shape_cast %80 : vector<1x1x128xf32> to vector<1x128xf32>
    %82 = arith.truncf %81 : vector<1x128xf32> to vector<1x128xbf16>
    %c11 = arith.constant 11 : index
    %c0_73 = arith.constant 0 : index
    %c0_74 = arith.constant 0 : index
    %83 = vector.load %arg6[%c11, %c0_73, %c0_74] : memref<25x128x128xbf16, #tpu.memory_space<vmem>>, vector<1x128x128xbf16>
    %84 = vector.shape_cast %83 : vector<1x128x128xbf16> to vector<128x128xbf16>
    %cst_75 = arith.constant dense<0.000000e+00> : vector<1x128xf32>
    %85 = tpu.matmul %82, %84, %cst_75 {dimension_numbers = #tpu.dot_dimension_numbers<[1], [0], [0], [1], [0, 0, 1, 1], [], []>} : vector<1x128xbf16>, vector<128x128xbf16>, vector<1x128xf32> -> vector<1x128xf32>
    %86 = arith.addf %79, %85 : vector<1x128xf32>
    %c2_76 = arith.constant 2 : index
    %c2_77 = arith.constant 2 : index
    %c0_78 = arith.constant 0 : index
    %87 = vector.load %arg14[%c2_76, %c2_77, %c0_78] : memref<5x5x128xf32, #tpu.memory_space<vmem>>, vector<1x1x128xf32>
    %88 = vector.shape_cast %87 : vector<1x1x128xf32> to vector<1x128xf32>
    %89 = arith.truncf %88 : vector<1x128xf32> to vector<1x128xbf16>
    %c12 = arith.constant 12 : index
    %c0_79 = arith.constant 0 : index
    %c0_80 = arith.constant 0 : index
    %90 = vector.load %arg6[%c12, %c0_79, %c0_80] : memref<25x128x128xbf16, #tpu.memory_space<vmem>>, vector<1x128x128xbf16>
    %91 = vector.shape_cast %90 : vector<1x128x128xbf16> to vector<128x128xbf16>
    %cst_81 = arith.constant dense<0.000000e+00> : vector<1x128xf32>
    %92 = tpu.matmul %89, %91, %cst_81 {dimension_numbers = #tpu.dot_dimension_numbers<[1], [0], [0], [1], [0, 0, 1, 1], [], []>} : vector<1x128xbf16>, vector<128x128xbf16>, vector<1x128xf32> -> vector<1x128xf32>
    %93 = arith.addf %86, %92 : vector<1x128xf32>
    %c2_82 = arith.constant 2 : index
    %c3_83 = arith.constant 3 : index
    %c0_84 = arith.constant 0 : index
    %94 = vector.load %arg14[%c2_82, %c3_83, %c0_84] : memref<5x5x128xf32, #tpu.memory_space<vmem>>, vector<1x1x128xf32>
    %95 = vector.shape_cast %94 : vector<1x1x128xf32> to vector<1x128xf32>
    %96 = arith.truncf %95 : vector<1x128xf32> to vector<1x128xbf16>
    %c13 = arith.constant 13 : index
    %c0_85 = arith.constant 0 : index
    %c0_86 = arith.constant 0 : index
    %97 = vector.load %arg6[%c13, %c0_85, %c0_86] : memref<25x128x128xbf16, #tpu.memory_space<vmem>>, vector<1x128x128xbf16>
    %98 = vector.shape_cast %97 : vector<1x128x128xbf16> to vector<128x128xbf16>
    %cst_87 = arith.constant dense<0.000000e+00> : vector<1x128xf32>
    %99 = tpu.matmul %96, %98, %cst_87 {dimension_numbers = #tpu.dot_dimension_numbers<[1], [0], [0], [1], [0, 0, 1, 1], [], []>} : vector<1x128xbf16>, vector<128x128xbf16>, vector<1x128xf32> -> vector<1x128xf32>
    %100 = arith.addf %93, %99 : vector<1x128xf32>
    %c2_88 = arith.constant 2 : index
    %c4_89 = arith.constant 4 : index
    %c0_90 = arith.constant 0 : index
    %101 = vector.load %arg14[%c2_88, %c4_89, %c0_90] : memref<5x5x128xf32, #tpu.memory_space<vmem>>, vector<1x1x128xf32>
    %102 = vector.shape_cast %101 : vector<1x1x128xf32> to vector<1x128xf32>
    %103 = arith.truncf %102 : vector<1x128xf32> to vector<1x128xbf16>
    %c14 = arith.constant 14 : index
    %c0_91 = arith.constant 0 : index
    %c0_92 = arith.constant 0 : index
    %104 = vector.load %arg6[%c14, %c0_91, %c0_92] : memref<25x128x128xbf16, #tpu.memory_space<vmem>>, vector<1x128x128xbf16>
    %105 = vector.shape_cast %104 : vector<1x128x128xbf16> to vector<128x128xbf16>
    %cst_93 = arith.constant dense<0.000000e+00> : vector<1x128xf32>
    %106 = tpu.matmul %103, %105, %cst_93 {dimension_numbers = #tpu.dot_dimension_numbers<[1], [0], [0], [1], [0, 0, 1, 1], [], []>} : vector<1x128xbf16>, vector<128x128xbf16>, vector<1x128xf32> -> vector<1x128xf32>
    %107 = arith.addf %100, %106 : vector<1x128xf32>
    %c3_94 = arith.constant 3 : index
    %c0_95 = arith.constant 0 : index
    %c0_96 = arith.constant 0 : index
    %108 = vector.load %arg14[%c3_94, %c0_95, %c0_96] : memref<5x5x128xf32, #tpu.memory_space<vmem>>, vector<1x1x128xf32>
    %109 = vector.shape_cast %108 : vector<1x1x128xf32> to vector<1x128xf32>
    %110 = arith.truncf %109 : vector<1x128xf32> to vector<1x128xbf16>
    %c15 = arith.constant 15 : index
    %c0_97 = arith.constant 0 : index
    %c0_98 = arith.constant 0 : index
    %111 = vector.load %arg6[%c15, %c0_97, %c0_98] : memref<25x128x128xbf16, #tpu.memory_space<vmem>>, vector<1x128x128xbf16>
    %112 = vector.shape_cast %111 : vector<1x128x128xbf16> to vector<128x128xbf16>
    %cst_99 = arith.constant dense<0.000000e+00> : vector<1x128xf32>
    %113 = tpu.matmul %110, %112, %cst_99 {dimension_numbers = #tpu.dot_dimension_numbers<[1], [0], [0], [1], [0, 0, 1, 1], [], []>} : vector<1x128xbf16>, vector<128x128xbf16>, vector<1x128xf32> -> vector<1x128xf32>
    %114 = arith.addf %107, %113 : vector<1x128xf32>
    %c3_100 = arith.constant 3 : index
    %c1_101 = arith.constant 1 : index
    %c0_102 = arith.constant 0 : index
    %115 = vector.load %arg14[%c3_100, %c1_101, %c0_102] : memref<5x5x128xf32, #tpu.memory_space<vmem>>, vector<1x1x128xf32>
    %116 = vector.shape_cast %115 : vector<1x1x128xf32> to vector<1x128xf32>
    %117 = arith.truncf %116 : vector<1x128xf32> to vector<1x128xbf16>
    %c16 = arith.constant 16 : index
    %c0_103 = arith.constant 0 : index
    %c0_104 = arith.constant 0 : index
    %118 = vector.load %arg6[%c16, %c0_103, %c0_104] : memref<25x128x128xbf16, #tpu.memory_space<vmem>>, vector<1x128x128xbf16>
    %119 = vector.shape_cast %118 : vector<1x128x128xbf16> to vector<128x128xbf16>
    %cst_105 = arith.constant dense<0.000000e+00> : vector<1x128xf32>
    %120 = tpu.matmul %117, %119, %cst_105 {dimension_numbers = #tpu.dot_dimension_numbers<[1], [0], [0], [1], [0, 0, 1, 1], [], []>} : vector<1x128xbf16>, vector<128x128xbf16>, vector<1x128xf32> -> vector<1x128xf32>
    %121 = arith.addf %114, %120 : vector<1x128xf32>
    %c3_106 = arith.constant 3 : index
    %c2_107 = arith.constant 2 : index
    %c0_108 = arith.constant 0 : index
    %122 = vector.load %arg14[%c3_106, %c2_107, %c0_108] : memref<5x5x128xf32, #tpu.memory_space<vmem>>, vector<1x1x128xf32>
    %123 = vector.shape_cast %122 : vector<1x1x128xf32> to vector<1x128xf32>
    %124 = arith.truncf %123 : vector<1x128xf32> to vector<1x128xbf16>
    %c17 = arith.constant 17 : index
    %c0_109 = arith.constant 0 : index
    %c0_110 = arith.constant 0 : index
    %125 = vector.load %arg6[%c17, %c0_109, %c0_110] : memref<25x128x128xbf16, #tpu.memory_space<vmem>>, vector<1x128x128xbf16>
    %126 = vector.shape_cast %125 : vector<1x128x128xbf16> to vector<128x128xbf16>
    %cst_111 = arith.constant dense<0.000000e+00> : vector<1x128xf32>
    %127 = tpu.matmul %124, %126, %cst_111 {dimension_numbers = #tpu.dot_dimension_numbers<[1], [0], [0], [1], [0, 0, 1, 1], [], []>} : vector<1x128xbf16>, vector<128x128xbf16>, vector<1x128xf32> -> vector<1x128xf32>
    %128 = arith.addf %121, %127 : vector<1x128xf32>
    %c3_112 = arith.constant 3 : index
    %c3_113 = arith.constant 3 : index
    %c0_114 = arith.constant 0 : index
    %129 = vector.load %arg14[%c3_112, %c3_113, %c0_114] : memref<5x5x128xf32, #tpu.memory_space<vmem>>, vector<1x1x128xf32>
    %130 = vector.shape_cast %129 : vector<1x1x128xf32> to vector<1x128xf32>
    %131 = arith.truncf %130 : vector<1x128xf32> to vector<1x128xbf16>
    %c18 = arith.constant 18 : index
    %c0_115 = arith.constant 0 : index
    %c0_116 = arith.constant 0 : index
    %132 = vector.load %arg6[%c18, %c0_115, %c0_116] : memref<25x128x128xbf16, #tpu.memory_space<vmem>>, vector<1x128x128xbf16>
    %133 = vector.shape_cast %132 : vector<1x128x128xbf16> to vector<128x128xbf16>
    %cst_117 = arith.constant dense<0.000000e+00> : vector<1x128xf32>
    %134 = tpu.matmul %131, %133, %cst_117 {dimension_numbers = #tpu.dot_dimension_numbers<[1], [0], [0], [1], [0, 0, 1, 1], [], []>} : vector<1x128xbf16>, vector<128x128xbf16>, vector<1x128xf32> -> vector<1x128xf32>
    %135 = arith.addf %128, %134 : vector<1x128xf32>
    %c3_118 = arith.constant 3 : index
    %c4_119 = arith.constant 4 : index
    %c0_120 = arith.constant 0 : index
    %136 = vector.load %arg14[%c3_118, %c4_119, %c0_120] : memref<5x5x128xf32, #tpu.memory_space<vmem>>, vector<1x1x128xf32>
    %137 = vector.shape_cast %136 : vector<1x1x128xf32> to vector<1x128xf32>
    %138 = arith.truncf %137 : vector<1x128xf32> to vector<1x128xbf16>
    %c19 = arith.constant 19 : index
    %c0_121 = arith.constant 0 : index
    %c0_122 = arith.constant 0 : index
    %139 = vector.load %arg6[%c19, %c0_121, %c0_122] : memref<25x128x128xbf16, #tpu.memory_space<vmem>>, vector<1x128x128xbf16>
    %140 = vector.shape_cast %139 : vector<1x128x128xbf16> to vector<128x128xbf16>
    %cst_123 = arith.constant dense<0.000000e+00> : vector<1x128xf32>
    %141 = tpu.matmul %138, %140, %cst_123 {dimension_numbers = #tpu.dot_dimension_numbers<[1], [0], [0], [1], [0, 0, 1, 1], [], []>} : vector<1x128xbf16>, vector<128x128xbf16>, vector<1x128xf32> -> vector<1x128xf32>
    %142 = arith.addf %135, %141 : vector<1x128xf32>
    %c4_124 = arith.constant 4 : index
    %c0_125 = arith.constant 0 : index
    %c0_126 = arith.constant 0 : index
    %143 = vector.load %arg14[%c4_124, %c0_125, %c0_126] : memref<5x5x128xf32, #tpu.memory_space<vmem>>, vector<1x1x128xf32>
    %144 = vector.shape_cast %143 : vector<1x1x128xf32> to vector<1x128xf32>
    %145 = arith.truncf %144 : vector<1x128xf32> to vector<1x128xbf16>
    %c20 = arith.constant 20 : index
    %c0_127 = arith.constant 0 : index
    %c0_128 = arith.constant 0 : index
    %146 = vector.load %arg6[%c20, %c0_127, %c0_128] : memref<25x128x128xbf16, #tpu.memory_space<vmem>>, vector<1x128x128xbf16>
    %147 = vector.shape_cast %146 : vector<1x128x128xbf16> to vector<128x128xbf16>
    %cst_129 = arith.constant dense<0.000000e+00> : vector<1x128xf32>
    %148 = tpu.matmul %145, %147, %cst_129 {dimension_numbers = #tpu.dot_dimension_numbers<[1], [0], [0], [1], [0, 0, 1, 1], [], []>} : vector<1x128xbf16>, vector<128x128xbf16>, vector<1x128xf32> -> vector<1x128xf32>
    %149 = arith.addf %142, %148 : vector<1x128xf32>
    %c4_130 = arith.constant 4 : index
    %c1_131 = arith.constant 1 : index
    %c0_132 = arith.constant 0 : index
    %150 = vector.load %arg14[%c4_130, %c1_131, %c0_132] : memref<5x5x128xf32, #tpu.memory_space<vmem>>, vector<1x1x128xf32>
    %151 = vector.shape_cast %150 : vector<1x1x128xf32> to vector<1x128xf32>
    %152 = arith.truncf %151 : vector<1x128xf32> to vector<1x128xbf16>
    %c21 = arith.constant 21 : index
    %c0_133 = arith.constant 0 : index
    %c0_134 = arith.constant 0 : index
    %153 = vector.load %arg6[%c21, %c0_133, %c0_134] : memref<25x128x128xbf16, #tpu.memory_space<vmem>>, vector<1x128x128xbf16>
    %154 = vector.shape_cast %153 : vector<1x128x128xbf16> to vector<128x128xbf16>
    %cst_135 = arith.constant dense<0.000000e+00> : vector<1x128xf32>
    %155 = tpu.matmul %152, %154, %cst_135 {dimension_numbers = #tpu.dot_dimension_numbers<[1], [0], [0], [1], [0, 0, 1, 1], [], []>} : vector<1x128xbf16>, vector<128x128xbf16>, vector<1x128xf32> -> vector<1x128xf32>
    %156 = arith.addf %149, %155 : vector<1x128xf32>
    %c4_136 = arith.constant 4 : index
    %c2_137 = arith.constant 2 : index
    %c0_138 = arith.constant 0 : index
    %157 = vector.load %arg14[%c4_136, %c2_137, %c0_138] : memref<5x5x128xf32, #tpu.memory_space<vmem>>, vector<1x1x128xf32>
    %158 = vector.shape_cast %157 : vector<1x1x128xf32> to vector<1x128xf32>
    %159 = arith.truncf %158 : vector<1x128xf32> to vector<1x128xbf16>
    %c22 = arith.constant 22 : index
    %c0_139 = arith.constant 0 : index
    %c0_140 = arith.constant 0 : index
    %160 = vector.load %arg6[%c22, %c0_139, %c0_140] : memref<25x128x128xbf16, #tpu.memory_space<vmem>>, vector<1x128x128xbf16>
    %161 = vector.shape_cast %160 : vector<1x128x128xbf16> to vector<128x128xbf16>
    %cst_141 = arith.constant dense<0.000000e+00> : vector<1x128xf32>
    %162 = tpu.matmul %159, %161, %cst_141 {dimension_numbers = #tpu.dot_dimension_numbers<[1], [0], [0], [1], [0, 0, 1, 1], [], []>} : vector<1x128xbf16>, vector<128x128xbf16>, vector<1x128xf32> -> vector<1x128xf32>
    %163 = arith.addf %156, %162 : vector<1x128xf32>
    %c4_142 = arith.constant 4 : index
    %c3_143 = arith.constant 3 : index
    %c0_144 = arith.constant 0 : index
    %164 = vector.load %arg14[%c4_142, %c3_143, %c0_144] : memref<5x5x128xf32, #tpu.memory_space<vmem>>, vector<1x1x128xf32>
    %165 = vector.shape_cast %164 : vector<1x1x128xf32> to vector<1x128xf32>
    %166 = arith.truncf %165 : vector<1x128xf32> to vector<1x128xbf16>
    %c23 = arith.constant 23 : index
    %c0_145 = arith.constant 0 : index
    %c0_146 = arith.constant 0 : index
    %167 = vector.load %arg6[%c23, %c0_145, %c0_146] : memref<25x128x128xbf16, #tpu.memory_space<vmem>>, vector<1x128x128xbf16>
    %168 = vector.shape_cast %167 : vector<1x128x128xbf16> to vector<128x128xbf16>
    %cst_147 = arith.constant dense<0.000000e+00> : vector<1x128xf32>
    %169 = tpu.matmul %166, %168, %cst_147 {dimension_numbers = #tpu.dot_dimension_numbers<[1], [0], [0], [1], [0, 0, 1, 1], [], []>} : vector<1x128xbf16>, vector<128x128xbf16>, vector<1x128xf32> -> vector<1x128xf32>
    %170 = arith.addf %163, %169 : vector<1x128xf32>
    %c4_148 = arith.constant 4 : index
    %c4_149 = arith.constant 4 : index
    %c0_150 = arith.constant 0 : index
    %171 = vector.load %arg14[%c4_148, %c4_149, %c0_150] : memref<5x5x128xf32, #tpu.memory_space<vmem>>, vector<1x1x128xf32>
    %172 = vector.shape_cast %171 : vector<1x1x128xf32> to vector<1x128xf32>
    %173 = arith.truncf %172 : vector<1x128xf32> to vector<1x128xbf16>
    %c24 = arith.constant 24 : index
    %c0_151 = arith.constant 0 : index
    %c0_152 = arith.constant 0 : index
    %174 = vector.load %arg6[%c24, %c0_151, %c0_152] : memref<25x128x128xbf16, #tpu.memory_space<vmem>>, vector<1x128x128xbf16>
    %175 = vector.shape_cast %174 : vector<1x128x128xbf16> to vector<128x128xbf16>
    %cst_153 = arith.constant dense<0.000000e+00> : vector<1x128xf32>
    %176 = tpu.matmul %173, %175, %cst_153 {dimension_numbers = #tpu.dot_dimension_numbers<[1], [0], [0], [1], [0, 0, 1, 1], [], []>} : vector<1x128xbf16>, vector<128x128xbf16>, vector<1x128xf32> -> vector<1x128xf32>
    %177 = arith.addf %170, %176 : vector<1x128xf32>
    %c0_154 = arith.constant 0 : index
    %c0_155 = arith.constant 0 : index
    %178 = vector.load %arg7[%c0_154, %c0_155] : memref<1x128xf32, #tpu.memory_space<vmem>>, vector<1x128xf32>
    %179 = arith.addf %177, %178 : vector<1x128xf32>
    %cst_156 = arith.constant 0.000000e+00 : f32
    %180 = vector.broadcast %cst_156 : f32 to vector<1x128xf32>
    %181 = arith.maximumf %179, %180 : vector<1x128xf32>
    %182 = arith.truncf %181 : vector<1x128xf32> to vector<1x128xbf16>
    %c0_157 = arith.constant 0 : index
    %c0_158 = arith.constant 0 : index
    %183 = vector.load %arg8[%c0_157, %c0_158] : memref<128x128xbf16, #tpu.memory_space<vmem>>, vector<128x128xbf16>
    %cst_159 = arith.constant dense<0.000000e+00> : vector<1x128xf32>
    %184 = tpu.matmul %182, %183, %cst_159 {dimension_numbers = #tpu.dot_dimension_numbers<[1], [0], [0], [1], [0, 0, 1, 1], [], []>} : vector<1x128xbf16>, vector<128x128xbf16>, vector<1x128xf32> -> vector<1x128xf32>
    %c0_160 = arith.constant 0 : index
    %c0_161 = arith.constant 0 : index
    %185 = vector.load %arg9[%c0_160, %c0_161] : memref<1x128xf32, #tpu.memory_space<vmem>>, vector<1x128xf32>
    %186 = arith.addf %184, %185 : vector<1x128xf32>
    %cst_162 = arith.constant 0.000000e+00 : f32
    %187 = vector.broadcast %cst_162 : f32 to vector<1x128xf32>
    %188 = arith.maximumf %186, %187 : vector<1x128xf32>
    %189 = arith.truncf %188 : vector<1x128xf32> to vector<1x128xbf16>
    %c0_163 = arith.constant 0 : index
    %c0_164 = arith.constant 0 : index
    %190 = vector.load %arg10[%c0_163, %c0_164] : memref<128x128xbf16, #tpu.memory_space<vmem>>, vector<128x128xbf16>
    %cst_165 = arith.constant dense<0.000000e+00> : vector<1x128xf32>
    %191 = tpu.matmul %189, %190, %cst_165 {dimension_numbers = #tpu.dot_dimension_numbers<[1], [0], [0], [1], [0, 0, 1, 1], [], []>} : vector<1x128xbf16>, vector<128x128xbf16>, vector<1x128xf32> -> vector<1x128xf32>
    %c0_166 = arith.constant 0 : index
    %c0_167 = arith.constant 0 : index
    %192 = vector.load %arg11[%c0_166, %c0_167] : memref<1x128xf32, #tpu.memory_space<vmem>>, vector<1x128xf32>
    %193 = arith.addf %191, %192 : vector<1x128xf32>
    %c0_168 = arith.constant 0 : index
    %c0_169 = arith.constant 0 : index
    %c0_170 = arith.constant 0 : index
    %194 = vector.load %arg12[%c0_168, %c0_169, %c0_170] : memref<1x1x128xf32, #tpu.memory_space<vmem>>, vector<1x1x128xf32>
    %195 = vector.shape_cast %194 : vector<1x1x128xf32> to vector<1x128xf32>
    %196 = vector.shape_cast %193 : vector<1x128xf32> to vector<1x1x128xf32>
    tpu.vector_store %arg12[%c0_168, %c0_169, %c0_170], %196 {strides = array<i32>} : memref<1x1x128xf32, #tpu.memory_space<vmem>>, vector<1x1x128xf32>,
    return
  }
  func.func @transform_0(%arg0: i32) -> (i32, i32, i32, i32) {
    %c0_i32 = arith.constant 0 : i32
    %c0_i32_0 = arith.constant 0 : i32
    %c0_i32_1 = arith.constant 0 : i32
    %c0_i32_2 = arith.constant 0 : i32
    return %arg0, %c0_i32, %c0_i32_0, %c0_i32_1 : i32, i32, i32, i32
  }
  func.func @transform_1(%arg0: i32) -> (i32, i32, i32) {
    %c0_i32 = arith.constant 0 : i32
    %c0_i32_0 = arith.constant 0 : i32
    %c0_i32_1 = arith.constant 0 : i32
    %c0_i32_2 = arith.constant 0 : i32
    return %c0_i32, %c0_i32_0, %c0_i32_1 : i32, i32, i32
  }
  func.func @transform_2(%arg0: i32) -> (i32, i32) {
    %c0_i32 = arith.constant 0 : i32
    %c0_i32_0 = arith.constant 0 : i32
    %c0_i32_1 = arith.constant 0 : i32
    return %c0_i32, %c0_i32_0 : i32, i32
  }
  func.func @transform_3(%arg0: i32) -> (i32, i32, i32) {
    %c0_i32 = arith.constant 0 : i32
    %c0_i32_0 = arith.constant 0 : i32
    %c0_i32_1 = arith.constant 0 : i32
    %c0_i32_2 = arith.constant 0 : i32
    return %c0_i32, %c0_i32_0, %c0_i32_1 : i32, i32, i32
  }
  func.func @transform_4(%arg0: i32) -> (i32, i32) {
    %c0_i32 = arith.constant 0 : i32
    %c0_i32_0 = arith.constant 0 : i32
    %c0_i32_1 = arith.constant 0 : i32
    return %c0_i32, %c0_i32_0 : i32, i32
  }
  func.func @transform_5(%arg0: i32) -> (i32, i32, i32) {
    %c0_i32 = arith.constant 0 : i32
    %c0_i32_0 = arith.constant 0 : i32
    %c0_i32_1 = arith.constant 0 : i32
    %c0_i32_2 = arith.constant 0 : i32
    return %c0_i32, %c0_i32_0, %c0_i32_1 : i32, i32, i32
  }
  func.func @transform_6(%arg0: i32) -> (i32, i32) {
    %c0_i32 = arith.constant 0 : i32
    %c0_i32_0 = arith.constant 0 : i32
    %c0_i32_1 = arith.constant 0 : i32
    return %c0_i32, %c0_i32_0 : i32, i32
  }
  func.func @transform_7(%arg0: i32) -> (i32, i32) {
    %c0_i32 = arith.constant 0 : i32
    %c0_i32_0 = arith.constant 0 : i32
    %c0_i32_1 = arith.constant 0 : i32
    return %c0_i32, %c0_i32_0 : i32, i32
  }
  func.func @transform_8(%arg0: i32) -> (i32, i32) {
    %c0_i32 = arith.constant 0 : i32
    %c0_i32_0 = arith.constant 0 : i32
    %c0_i32_1 = arith.constant 0 : i32
    return %c0_i32, %c0_i32_0 : i32, i32
  }
  func.func @transform_9(%arg0: i32) -> (i32, i32) {
    %c0_i32 = arith.constant 0 : i32
    %c0_i32_0 = arith.constant 0 : i32
    %c0_i32_1 = arith.constant 0 : i32
    return %c0_i32, %c0_i32_0 : i32, i32
  }
  func.func @transform_10(%arg0: i32) -> (i32, i32) {
    %c0_i32 = arith.constant 0 : i32
    %c0_i32_0 = arith.constant 0 : i32
    %c0_i32_1 = arith.constant 0 : i32
    return %c0_i32, %c0_i32_0 : i32, i32
  }
  func.func @transform_11(%arg0: i32) -> (i32, i32, i32) {
    %c0_i32 = arith.constant 0 : i32
    %c0_i32_0 = arith.constant 0 : i32
    %c0_i32_1 = arith.constant 0 : i32
    return %arg0, %c0_i32, %c0_i32_0 : i32, i32, i32
  }
}

</mosaic_0001>

<llo_original>
// kernel: convnet_forward.1
$region0: #{convnet_forward.1}
  #allocation0 [shape = 'u32[]', space=smem, size = 0x4, offset = 0x4, fixed_abs, tag = 'smem constant byte address 0x4 - core index']
  #allocation1 [shape = 'u32[144,128]{1,0:T(1,128)}', space=vmem, size = 0x12000, scoped, tag = 'internal scratch']
  #allocation2 [shape = 'f32[14,14,128]{2,1,0:T(8,128)}', space=vmem, size = 0x1c000, scoped, tag = 'scratch operand']
  #allocation3 [shape = 'f32[5,5,128]{2,1,0:T(8,128)}', space=vmem, size = 0x5000, scoped, tag = 'scratch operand']
  #allocation4 [shape = 'f32[28,128]{1,0:T(8,128)}', space=vmem, size = 0x4000, scoped, tag = 'scratch operand']
  %s0 = inlined_call_operand.vmem [shape: bf16[2,32,28,15], index: 0, kind: input, shape index: {}]
  %s1 = inlined_call_operand.vmem [shape: bf16[5,15,128], index: 1, kind: input, shape index: {}]
  %s2 = inlined_call_operand.vmem [shape: f32[1,128], index: 2, kind: input, shape index: {}]
  %s3 = inlined_call_operand.vmem [shape: bf16[25,128,128], index: 3, kind: input, shape index: {}]
  %s4 = inlined_call_operand.vmem [shape: f32[1,128], index: 4, kind: input, shape index: {}]
  %s5 = inlined_call_operand.hbm [shape: bf16[25,128,128], index: 5, kind: input, shape index: {}]
  %s6 = inlined_call_operand.vmem [shape: f32[1,128], index: 6, kind: input, shape index: {}]
  %s7 = inlined_call_operand.vmem [shape: bf16[128,128], index: 7, kind: input, shape index: {}]
  %s8 = inlined_call_operand.vmem [shape: f32[1,128], index: 8, kind: input, shape index: {}]
  %s9 = inlined_call_operand.vmem [shape: bf16[128,128], index: 9, kind: input, shape index: {}]
  %s10 = inlined_call_operand.vmem [shape: f32[1,128], index: 10, kind: input, shape index: {}]
  %s11 = inlined_call_operand.hbm [shape: f32[2,1,128], index: 11, kind: output, shape index: {}]
  %s12 = sld [smem:[#allocation0]]
  $region95: #{convnet_forward.1} parent=0
    _
  %s14 = ssub.s32 1, %s12
  %s15 = scalar_select 0, %s14, %s12
  $region1: #{convnet_forward.1} parent=0
    #allocation5 [shape = 'u8[819200]{0}', space=vmem, size = 0xc8000, scoped, tag = 'input window, operand 5, single buffered']
    #allocation6 [shape = 's32[2]{0}', space=sflag, size = 0x8, scoped, tag = 'scoped memory for convnet_forward.1']
    #allocation7 [shape = 's32[2]{0}', space=sflag, size = 0x8, scoped, tag = 'scoped memory for convnet_forward.1']
    #allocation8 [shape = 'u8[1024]{0}', space=vmem, size = 0x400, scoped, tag = 'output window, operand 0']
    %16 = vsyncpa [#allocation6], 0
    %17 = vsyncpa [#allocation7], 0
    %s18 = scalar_lea.sflag [#allocation7], 1
    %19 = vsyncpa %s18, 0
    loop: start=0, step=1, limit=4
    $region2: #{convnet_forward.1} parent=1 // loop_pre_header
      _
    $region3: #{convnet_forward.1} parent=1 // loop_header
      %s21 = sphi 0, %s25
      %p22 = scmp.ge.s32.totalorder %s21, 4
      %s31 = sphi 0, %s33
      %s34 = sphi 0, %s31
      %s35 = sphi 0, %s34
      %s51 = sphi 0, %s35
      %s55 = sphi 0, %s55
      %s57 = sphi 0, %s55
      %s58 = sphi 0, %s57
      %s72 = sphi 0, %s58
      %s76 = sphi 0, %s76
      %s78 = sphi 0, %s76
      %s79 = sphi 0, %s78
      %s93 = sphi 0, %s79
      %s97 = sphi 0, %s97
      %s99 = sphi 0, %s97
      %s100 = sphi 0, %s99
      %s114 = sphi 0, %s100
      %s118 = sphi 0, %s118
      %s120 = sphi 0, %s118
      %s121 = sphi 0, %s120
      %s135 = sphi 0, %s121
      %s139 = sphi 0, %s139
      %s141 = sphi 0, %s139
      %s142 = sphi 0, %s141
      %s156 = sphi 0, %s142
      %s160 = sphi 0, %s160
      %s162 = sphi 0, %s160
      %s163 = sphi 0, %s162
      %s177 = sphi 0, %s163
      %s181 = sphi 0, %s181
      %s183 = sphi 0, %s181
      %s184 = sphi 0, %s183
      %s198 = sphi 0, %s184
      %s202 = sphi 0, %s202
      %s204 = sphi 0, %s202
      %s205 = sphi 0, %s204
      %s219 = sphi 0, %s205
      %s223 = sphi 0, %s223
      %s225 = sphi 0, %s223
      %s226 = sphi 0, %s225
      %s240 = sphi 0, %s226
      %s244 = sphi 0, %s244
      %s246 = sphi 0, %s244
      %s247 = sphi 0, %s246
      %s261 = sphi 0, %s247
      %s267 = sphi 0, %s269
      %s270 = sphi 0, %s267
      %s271 = sphi 0, %s270
      %s287 = sphi 0, %s271
    $region4: #{convnet_forward.1} parent=1 // loop_header_branch
      %24 = sbr.rel (%p22) target = $region8
    $region5: #{convnet_forward.1} parent=1 // loop_body
      %s26 = ssub.s32 %s21, 1
      %s27 = ssub.s32 %s21, 2
      %s28 = sadd.s32 %s21, 1
      %s29 = ssub.s32 %s21, %s28
      %p30 = scmp.eq.s32.totalorder %s29, 0
      %s32 = sadd.s32 %s31, 1
      %s33 = scalar_select %p30, %s31, %s32
      %p36 = pneg %p30
      %p37 = scmp.eq.s32.totalorder %s21, 1
      %p38 = por %p36, %p37
      %p39 = scmp.ne.s32.totalorder %s31, %s34
      %p40 = scmp.eq.s32.totalorder %s21, 0
      %p41 = por %p39, %p40
      %p42 = scmp.ne.s32.totalorder %s31, %s34
      %p43 = scmp.eq.s32.totalorder %s26, 1
      %p44 = por %p42, %p43
      %p45 = scmp.ne.s32.totalorder %s34, %s35
      %p46 = scmp.eq.s32.totalorder %s26, 0
      %p47 = por %p45, %p46
      %p48 = scmp.ne.s32.totalorder %s34, %s35
      %p49 = scmp.eq.s32.totalorder %s27, 1
      %p50 = por %p48, %p49
      %p52 = scmp.ne.s32.totalorder %s35, %s51
      %p53 = scmp.eq.s32.totalorder %s27, 0
      %p54 = por %p52, %p53
      %s56 = sadd.s32 %s55, 1
      %p59 = scmp.eq.s32.totalorder %s21, 1
      %p60 = scmp.ne.s32.totalorder %s55, %s57
      %p61 = scmp.eq.s32.totalorder %s21, 0
      %p62 = por %p60, %p61
      %p63 = scmp.ne.s32.totalorder %s55, %s57
      %p64 = scmp.eq.s32.totalorder %s26, 1
      %p65 = por %p63, %p64
      %p66 = scmp.ne.s32.totalorder %s57, %s58
      %p67 = scmp.eq.s32.totalorder %s26, 0
      %p68 = por %p66, %p67
      %p69 = scmp.ne.s32.totalorder %s57, %s58
      %p70 = scmp.eq.s32.totalorder %s27, 1
      %p71 = por %p69, %p70
      %p73 = scmp.ne.s32.totalorder %s58, %s72
      %p74 = scmp.eq.s32.totalorder %s27, 0
      %p75 = por %p73, %p74
      %s77 = sadd.s32 %s76, 1
      %p80 = scmp.eq.s32.totalorder %s21, 1
      %p81 = scmp.ne.s32.totalorder %s76, %s78
      %p82 = scmp.eq.s32.totalorder %s21, 0
      %p83 = por %p81, %p82
      %p84 = scmp.ne.s32.totalorder %s76, %s78
      %p85 = scmp.eq.s32.totalorder %s26, 1
      %p86 = por %p84, %p85
      %p87 = scmp.ne.s32.totalorder %s78, %s79
      %p88 = scmp.eq.s32.totalorder %s26, 0
      %p89 = por %p87, %p88
      %p90 = scmp.ne.s32.totalorder %s78, %s79
      %p91 = scmp.eq.s32.totalorder %s27, 1
      %p92 = por %p90, %p91
      %p94 = scmp.ne.s32.totalorder %s79, %s93
      %p95 = scmp.eq.s32.totalorder %s27, 0
      %p96 = por %p94, %p95
      %s98 = sadd.s32 %s97, 1
      %p101 = scmp.eq.s32.totalorder %s21, 1
      %p102 = scmp.ne.s32.totalorder %s97, %s99
      %p103 = scmp.eq.s32.totalorder %s21, 0
      %p104 = por %p102, %p103
      %p105 = scmp.ne.s32.totalorder %s97, %s99
      %p106 = scmp.eq.s32.totalorder %s26, 1
      %p107 = por %p105, %p106
      %p108 = scmp.ne.s32.totalorder %s99, %s100
      %p109 = scmp.eq.s32.totalorder %s26, 0
      %p110 = por %p108, %p109
      %p111 = scmp.ne.s32.totalorder %s99, %s100
      %p112 = scmp.eq.s32.totalorder %s27, 1
      %p113 = por %p111, %p112
      %p115 = scmp.ne.s32.totalorder %s100, %s114
      %p116 = scmp.eq.s32.totalorder %s27, 0
      %p117 = por %p115, %p116
      %s119 = sadd.s32 %s118, 1
      %p122 = scmp.eq.s32.totalorder %s21, 1
      %p123 = scmp.ne.s32.totalorder %s118, %s120
      %p124 = scmp.eq.s32.totalorder %s21, 0
      %p125 = por %p123, %p124
      %p126 = scmp.ne.s32.totalorder %s118, %s120
      %p127 = scmp.eq.s32.totalorder %s26, 1
      %p128 = por %p126, %p127
      %p129 = scmp.ne.s32.totalorder %s120, %s121
      %p130 = scmp.eq.s32.totalorder %s26, 0
      %p131 = por %p129, %p130
      %p132 = scmp.ne.s32.totalorder %s120, %s121
      %p133 = scmp.eq.s32.totalorder %s27, 1
      %p134 = por %p132, %p133
      %p136 = scmp.ne.s32.totalorder %s121, %s135
      %p137 = scmp.eq.s32.totalorder %s27, 0
      %p138 = por %p136, %p137
      %s140 = sadd.s32 %s139, 1
      %p143 = scmp.eq.s32.totalorder %s21, 1
      %p144 = scmp.ne.s32.totalorder %s139, %s141
      %p145 = scmp.eq.s32.totalorder %s21, 0
      %p146 = por %p144, %p145
      %p147 = scmp.ne.s32.totalorder %s139, %s141
      %p148 = scmp.eq.s32.totalorder %s26, 1
      %p149 = por %p147, %p148
      %p150 = scmp.ne.s32.totalorder %s141, %s142
      %p151 = scmp.eq.s32.totalorder %s26, 0
      %p152 = por %p150, %p151
      %p153 = scmp.ne.s32.totalorder %s141, %s142
      %p154 = scmp.eq.s32.totalorder %s27, 1
      %p155 = por %p153, %p154
      %p157 = scmp.ne.s32.totalorder %s142, %s156
      %p158 = scmp.eq.s32.totalorder %s27, 0
      %p159 = por %p157, %p158
      %s161 = sadd.s32 %s160, 1
      %p164 = scmp.eq.s32.totalorder %s21, 1
      %p165 = scmp.ne.s32.totalorder %s160, %s162
      %p166 = scmp.eq.s32.totalorder %s21, 0
      %p167 = por %p165, %p166
      %p168 = scmp.ne.s32.totalorder %s160, %s162
      %p169 = scmp.eq.s32.totalorder %s26, 1
      %p170 = por %p168, %p169
      %p171 = scmp.ne.s32.totalorder %s162, %s163
      %p172 = scmp.eq.s32.totalorder %s26, 0
      %p173 = por %p171, %p172
      %p174 = scmp.ne.s32.totalorder %s162, %s163
      %p175 = scmp.eq.s32.totalorder %s27, 1
      %p176 = por %p174, %p175
      %p178 = scmp.ne.s32.totalorder %s163, %s177
      %p179 = scmp.eq.s32.totalorder %s27, 0
      %p180 = por %p178, %p179
      %s182 = sadd.s32 %s181, 1
      %p185 = scmp.eq.s32.totalorder %s21, 1
      %p186 = scmp.ne.s32.totalorder %s181, %s183
      %p187 = scmp.eq.s32.totalorder %s21, 0
      %p188 = por %p186, %p187
      %p189 = scmp.ne.s32.totalorder %s181, %s183
      %p190 = scmp.eq.s32.totalorder %s26, 1
      %p191 = por %p189, %p190
      %p192 = scmp.ne.s32.totalorder %s183, %s184
      %p193 = scmp.eq.s32.totalorder %s26, 0
      %p194 = por %p192, %p193
      %p195 = scmp.ne.s32.totalorder %s183, %s184
      %p196 = scmp.eq.s32.totalorder %s27, 1
      %p197 = por %p195, %p196
      %p199 = scmp.ne.s32.totalorder %s184, %s198
      %p200 = scmp.eq.s32.totalorder %s27, 0
      %p201 = por %p199, %p200
      %s203 = sadd.s32 %s202, 1
      %p206 = scmp.eq.s32.totalorder %s21, 1
      %p207 = scmp.ne.s32.totalorder %s202, %s204
      %p208 = scmp.eq.s32.totalorder %s21, 0
      %p209 = por %p207, %p208
      %p210 = scmp.ne.s32.totalorder %s202, %s204
      %p211 = scmp.eq.s32.totalorder %s26, 1
      %p212 = por %p210, %p211
      %p213 = scmp.ne.s32.totalorder %s204, %s205
      %p214 = scmp.eq.s32.totalorder %s26, 0
      %p215 = por %p213, %p214
      %p216 = scmp.ne.s32.totalorder %s204, %s205
      %p217 = scmp.eq.s32.totalorder %s27, 1
      %p218 = por %p216, %p217
      %p220 = scmp.ne.s32.totalorder %s205, %s219
      %p221 = scmp.eq.s32.totalorder %s27, 0
      %p222 = por %p220, %p221
      %s224 = sadd.s32 %s223, 1
      %p227 = scmp.eq.s32.totalorder %s21, 1
      %p228 = scmp.ne.s32.totalorder %s223, %s225
      %p229 = scmp.eq.s32.totalorder %s21, 0
      %p230 = por %p228, %p229
      %p231 = scmp.ne.s32.totalorder %s223, %s225
      %p232 = scmp.eq.s32.totalorder %s26, 1
      %p233 = por %p231, %p232
      %p234 = scmp.ne.s32.totalorder %s225, %s226
      %p235 = scmp.eq.s32.totalorder %s26, 0
      %p236 = por %p234, %p235
      %p237 = scmp.ne.s32.totalorder %s225, %s226
      %p238 = scmp.eq.s32.totalorder %s27, 1
      %p239 = por %p237, %p238
      %p241 = scmp.ne.s32.totalorder %s226, %s240
      %p242 = scmp.eq.s32.totalorder %s27, 0
      %p243 = por %p241, %p242
      %s245 = sadd.s32 %s244, 1
      %p248 = scmp.eq.s32.totalorder %s21, 1
      %p249 = scmp.ne.s32.totalorder %s244, %s246
      %p250 = scmp.eq.s32.totalorder %s21, 0
      %p251 = por %p249, %p250
      %p252 = scmp.ne.s32.totalorder %s244, %s246
      %p253 = scmp.eq.s32.totalorder %s26, 1
      %p254 = por %p252, %p253
      %p255 = scmp.ne.s32.totalorder %s246, %s247
      %p256 = scmp.eq.s32.totalorder %s26, 0
      %p257 = por %p255, %p256
      %p258 = scmp.ne.s32.totalorder %s246, %s247
      %p259 = scmp.eq.s32.totalorder %s27, 1
      %p260 = por %p258, %p259
      %p262 = scmp.ne.s32.totalorder %s247, %s261
      %p263 = scmp.eq.s32.totalorder %s27, 0
      %p264 = por %p262, %p263
      %s265 = ssub.s32 %s21, %s28
      %p266 = scmp.eq.s32.totalorder %s265, 0
      %s268 = sadd.s32 %s267, 1
      %s269 = scalar_select %p266, %s267, %s268
      %p272 = pneg %p266
      %p273 = scmp.eq.s32.totalorder %s21, 1
      %p274 = por %p272, %p273
      %p275 = scmp.ne.s32.totalorder %s267, %s270
      %p276 = scmp.eq.s32.totalorder %s21, 0
      %p277 = por %p275, %p276
      %p278 = scmp.ne.s32.totalorder %s267, %s270
      %p279 = scmp.eq.s32.totalorder %s26, 1
      %p280 = por %p278, %p279
      %p281 = scmp.ne.s32.totalorder %s270, %s271
      %p282 = scmp.eq.s32.totalorder %s26, 0
      %p283 = por %p281, %p282
      %p284 = scmp.ne.s32.totalorder %s270, %s271
      %p285 = scmp.eq.s32.totalorder %s27, 1
      %p286 = por %p284, %p285
      %p288 = scmp.ne.s32.totalorder %s271, %s287
      %p289 = scmp.eq.s32.totalorder %s27, 0
      %p290 = por %p288, %p289
      %p291 = scmp.le.s32.totalorder 1, %s21
      %p292 = scmp.lt.s32.totalorder %s21, 3
      %p293 = pnand %p291, %p292
      %p294 = pneg %p293
      // Predicated region
      $region9: #{convnet_forward.1} parent=5 // pred_check
        _
      $region10: #{convnet_forward.1} parent=5 // pred_check_branch
        %296 = sbr.rel (%p293) target = $region12
      $region11: #{convnet_forward.1} parent=5 // pred_region
        %s297 = ssub.s32 %s21, 1
        // Predicated region
        $region13: #{convnet_forward.1} parent=11 // pred_check
          %p298 = pneg %p68
        $region14: #{convnet_forward.1} parent=11 // pred_check_branch
          %300 = sbr.rel (%p298) target = $region16
        $region15: #{convnet_forward.1} parent=11 // pred_region
          _
        $region16: #{convnet_forward.1} parent=11 // pred_fallthru
          _
        // Predicated region
        $region17: #{convnet_forward.1} parent=11 // pred_check
          %p301 = pneg %p89
        $region18: #{convnet_forward.1} parent=11 // pred_check_branch
          %303 = sbr.rel (%p301) target = $region20
        $region19: #{convnet_forward.1} parent=11 // pred_region
          _
        $region20: #{convnet_forward.1} parent=11 // pred_fallthru
          _
        // Predicated region
        $region21: #{convnet_forward.1} parent=11 // pred_check
          %p304 = pneg %p110
        $region22: #{convnet_forward.1} parent=11 // pred_check_branch
          %306 = sbr.rel (%p304) target = $region24
        $region23: #{convnet_forward.1} parent=11 // pred_region
          _
        $region24: #{convnet_forward.1} parent=11 // pred_fallthru
          _
        // Predicated region
        $region25: #{convnet_forward.1} parent=11 // pred_check
          %p307 = pneg %p131
        $region26: #{convnet_forward.1} parent=11 // pred_check_branch
          %309 = sbr.rel (%p307) target = $region28
        $region27: #{convnet_forward.1} parent=11 // pred_region
          _
        $region28: #{convnet_forward.1} parent=11 // pred_fallthru
          _
        // Predicated region
        $region29: #{convnet_forward.1} parent=11 // pred_check
          %p310 = pneg %p152
        $region30: #{convnet_forward.1} parent=11 // pred_check_branch
          %312 = sbr.rel (%p310) target = $region32
        $region31: #{convnet_forward.1} parent=11 // pred_region
          %s314 = ssub.s32 25600, 25600
          %315 = vsyncadd [#allocation6], %s314
          %s316 = sshll.u32 [#allocation5], 4
          %s317 = int_to_ptr.vmem [resolvable:$true] %s316
          %322 = dma.hbm_to_vmem [thread:$0]  %s5, 25600, %s317, [#allocation6], 64, 64, 4
        $region32: #{convnet_forward.1} parent=11 // pred_fallthru
          _
        // Predicated region
        $region33: #{convnet_forward.1} parent=11 // pred_check
          %p323 = pneg %p173
        $region34: #{convnet_forward.1} parent=11 // pred_check_branch
          %325 = sbr.rel (%p323) target = $region36
        $region35: #{convnet_forward.1} parent=11 // pred_region
          _
        $region36: #{convnet_forward.1} parent=11 // pred_fallthru
          _
        // Predicated region
        $region37: #{convnet_forward.1} parent=11 // pred_check
          %p326 = pneg %p194
        $region38: #{convnet_forward.1} parent=11 // pred_check_branch
          %328 = sbr.rel (%p326) target = $region40
        $region39: #{convnet_forward.1} parent=11 // pred_region
          _
        $region40: #{convnet_forward.1} parent=11 // pred_fallthru
          _
        // Predicated region
        $region41: #{convnet_forward.1} parent=11 // pred_check
          %p329 = pneg %p215
        $region42: #{convnet_forward.1} parent=11 // pred_check_branch
          %331 = sbr.rel (%p329) target = $region44
        $region43: #{convnet_forward.1} parent=11 // pred_region
          _
        $region44: #{convnet_forward.1} parent=11 // pred_fallthru
          _
        // Predicated region
        $region45: #{convnet_forward.1} parent=11 // pred_check
          %p332 = pneg %p236
        $region46: #{convnet_forward.1} parent=11 // pred_check_branch
          %334 = sbr.rel (%p332) target = $region48
        $region47: #{convnet_forward.1} parent=11 // pred_region
          _
        $region48: #{convnet_forward.1} parent=11 // pred_fallthru
          _
        // Predicated region
        $region49: #{convnet_forward.1} parent=11 // pred_check
          %p335 = pneg %p257
        $region50: #{convnet_forward.1} parent=11 // pred_check_branch
          %337 = sbr.rel (%p335) target = $region52
        $region51: #{convnet_forward.1} parent=11 // pred_region
          _
        $region52: #{convnet_forward.1} parent=11 // pred_fallthru
          _
      $region12: #{convnet_forward.1} parent=5 // pred_fallthru
        _
      %p338 = scmp.lt.s32.totalorder %s21, 2
      // Predicated region
      $region53: #{convnet_forward.1} parent=5 // pred_check
        %p339 = pneg %p338
      $region54: #{convnet_forward.1} parent=5 // pred_check_branch
        %341 = sbr.rel (%p339) target = $region56
      $region55: #{convnet_forward.1} parent=5 // pred_region
        // Predicated region
        $region57: #{convnet_forward.1} parent=55 // pred_check
          %p342 = pneg %p41
        $region58: #{convnet_forward.1} parent=55 // pred_check_branch
          %344 = sbr.rel (%p342) target = $region60
        $region59: #{convnet_forward.1} parent=55 // pred_region
          %p345 = scmp.lt.s32.totalorder %s21, 1
          %s346 = scalar_select %p345, %s21, 1
          %s347 = smul.addr %s346, 128
          %s348 = smul.addr %s347, 4
          %s349 = scalar_lea.vmem %s0, %s348
        $region60: #{convnet_forward.1} parent=55 // pred_fallthru
          _
      $region56: #{convnet_forward.1} parent=5 // pred_fallthru
        _
      %p350 = scmp.le.s32.totalorder 1, %s21
      %p351 = scmp.lt.s32.totalorder %s21, 3
      %p352 = pnand %p350, %p351
      %p353 = pneg %p352
      // Predicated region
      $region61: #{convnet_forward.1} parent=5 // pred_check
        _
      $region62: #{convnet_forward.1} parent=5 // pred_check_branch
        %355 = sbr.rel (%p352) target = $region64
      $region63: #{convnet_forward.1} parent=5 // pred_region
        %s356 = ssub.s32 %s21, 1
        // Predicated region
        $region65: #{convnet_forward.1} parent=63 // pred_check
          %p357 = pneg %p152
        $region66: #{convnet_forward.1} parent=63 // pred_check_branch
          %359 = sbr.rel (%p357) target = $region68
        $region67: #{convnet_forward.1} parent=63 // pred_region
          %360 = dma.done [#allocation6], 25600
        $region68: #{convnet_forward.1} parent=63 // pred_fallthru
          _
        %p361 = scmp.lt.s32.totalorder %s26, 1
        %s362 = scalar_select %p361, %s26, 1
        %s363 = smul.addr %s362, 128
        %s364 = smul.addr %s363, 4
        %s365 = scalar_lea.vmem %s0, %s364
        %p366 = pneg %p47
        %p367 = pneg %p44
        %p368 = pneg %p68
        %p369 = pneg %p65
        %p370 = pneg %p89
        %p371 = pneg %p86
        %p372 = pneg %p110
        %p373 = pneg %p107
        %p374 = pneg %p131
        %p375 = pneg %p128
        %p376 = pneg %p152
        %p377 = pneg %p149
        %p378 = pneg %p173
        %p379 = pneg %p170
        %p380 = pneg %p194
        %p381 = pneg %p191
        %p382 = pneg %p215
        %p383 = pneg %p212
        %p384 = pneg %p236
        %p385 = pneg %p233
        %p386 = pneg %p257
        %p387 = pneg %p254
        %p388 = pneg %p283
        %p389 = pneg %p280
        %s390 = sand.u32 %s270, 1
        %s391 = scalar_lea.sflag [#allocation7], %s390
        %s392 = sand.u32 %s270, 1
        %s393 = scalar_lea.vmem [#allocation8], %s392
        %p394 = scmp.lt.s32.totalorder %s26, 1
        %s395 = scalar_select %p394, %s26, 1
        %s396 = smul.addr %s395, 128
        %s397 = smul.addr %s396, 4
        %s398 = scalar_lea.vmem %s0, %s397
        loop: start=0, step=1, limit=14
        $region69: #{convnet_forward.1} parent=63 // loop_pre_header
          _
        $region70: #{convnet_forward.1} parent=63 // loop_header
          %s401 = sphi 0, %s405
          %p402 = scmp.ge.s32.totalorder %s401, 14
        $region71: #{convnet_forward.1} parent=63 // loop_header_branch
          %404 = sbr.rel (%p402) target = $region75
        $region72: #{convnet_forward.1} parent=63 // loop_body
          %s406 = smul.u32 %s401, 2
          %s407 = smul.u32 %s406, 4
          %s408 = smul.addr %s407, 4
          %s409 = scalar_lea.vmem %s398, %s408
          %v410 = vld [vmem:[%s409] sm:$0xf]
          %v411 = vld [vmem:[%s409 + $0x4] sm:$0xf]
          %v412 = vld [vmem:[%s409 + $0x8] sm:$0xf]
          %v413 = vld [vmem:[%s409 + $0xc] sm:$0x3]
          %v414 = vld [vmem:[%s1] sm:$0xf]
          %v415 = vld [vmem:[%s1 + $0x4] sm:$0xf]
          %s416 = sadd.s32 %s406, 1
          %s417 = smul.u32 %s416, 4
          %s418 = smul.addr %s417, 4
          %s419 = scalar_lea.vmem %s398, %s418
          %v420 = vld [vmem:[%s419] sm:$0xf]
          %v421 = vld [vmem:[%s419 + $0x4] sm:$0xf]
          %v422 = vld [vmem:[%s419 + $0x8] sm:$0xf]
          %v423 = vld [vmem:[%s419 + $0xc] sm:$0x3]
          %s424 = scalar_lea.vmem %s1, 8
          %v425 = vld [vmem:[%s424] sm:$0xf]
          %v426 = vld [vmem:[%s424 + $0x4] sm:$0xf]
          %v431 = vunpack.c.l.b16 %v420
          %v432 = vunpack.c.l.b16 %v421
          %v433 = vunpack.c.l.b16 %v422
          %v434 = vunpack.c.l.b16 %v423
          %v435 = vpack.c.b16 %v432, %v431
          %v436 = vpack.c.b16 %v434, %v433
          %v439 = vunpack.c.l.b16 %v425
          %v440 = vunpack.c.l.b16 %v426
          %v441 = vpack.c.b16 %v440, %v439
          %vm442 = vcmask 121856
          %v444 = vsel %vm442, %v435, 0
          %v447 = vsel %vm442, %v436, 0
          %vm449 = vcmask 1046528
          %vm450 = vcmask 1047552
          %v451 = vsel %vm449, 4294967295, 65535
          %v452 = vsel %vm450, %v451, 0
          %v454 = vand.u32 %v441, %v452
          %456 = vmatprep.subr.bf16.mxu0 0
          %457 = vmatpush1.bf16.msra.mxu0 %v454
          %458 = vmatprep.subr.bf16.mxu0 0
          %459 = vmatpush1.bf16.msra.mxu0 0
          %460 = vmatprep.subr.bf16.mxu0 0
          %461 = vmatpush1.bf16.msra.mxu0 0
          %462 = vmatprep.subr.bf16.mxu0 0
          %463 = vmatpush1.bf16.msra.mxu0 0
          %464 = vmatprep.subr.bf16.mxu0 0
          %465 = vmatpush1.bf16.msra.mxu0 0
          %466 = vmatprep.subr.bf16.mxu0 0
          %467 = vmatpush1.bf16.msra.mxu0 0
          %468 = vmatprep.subr.bf16.mxu0 0
          %469 = vmatpush1.bf16.msra.mxu0 0
          %470 = vmatprep.subr.bf16.mxu0 0
          %471 = vmatpush1.bf16.msra.mxu0 0
          %472 = vmatprep.subr.bf16.mxu0 0
          %473 = vmatpush1.bf16.msra.mxu0 0
          %474 = vmatprep.subr.bf16.mxu0 0
          %475 = vmatpush1.bf16.msra.mxu0 0
          %476 = vmatprep.subr.bf16.mxu0 0
          %477 = vmatpush1.bf16.msra.mxu0 0
          %478 = vmatprep.subr.bf16.mxu0 0
          %479 = vmatpush1.bf16.msra.mxu0 0
          %480 = vmatprep.subr.bf16.mxu0 0
          %481 = vmatpush1.bf16.msra.mxu0 0
          %482 = vmatprep.subr.bf16.mxu0 0
          %483 = vmatpush1.bf16.msra.mxu0 0
          %484 = vmatprep.subr.bf16.mxu0 0
          %485 = vmatpush1.bf16.msra.mxu0 0
          %486 = vmatprep.subr.bf16.mxu0 0
          %487 = vmatpush1.bf16.msra.mxu0 0
          %488 = vmatprep.mubr.bf16.mxu0 0
          %489 = vmatmul.mubr.bf16.gmra.mrb[0].mxu0 %v444
          %v490 = vpop.f32.mrb[0].mxu0
          %v491 = vadd.f32 0.0, %v490
          %v492 = vpop.f32.mrb[0].mxu0
          %v493 = vpop.f32.mrb[0].mxu0
          %v494 = vadd.f32 0.0, %v493
          %v495 = vpop.f32.mrb[0].mxu0
          %496 = vmatprep.mubr.bf16.mxu0 0
          %497 = vmatmul.mubr.bf16.gmra.mrb[0].mxu0 %v447
          %v498 = vpop.f32.mrb[0].mxu0
          %v499 = vadd.f32 0.0, %v498
          %v500 = vpop.f32.mrb[0].mxu0
          %v501 = vpop.f32.mrb[0].mxu0
          %v502 = vadd.f32 0.0, %v501
          %v503 = vpop.f32.mrb[0].mxu0
          %504 = vdwg.mxu0
          %v509 = vunpack.c.l.b16 %v410
          %v510 = vunpack.c.l.b16 %v411
          %v511 = vunpack.c.l.b16 %v412
          %v512 = vunpack.c.l.b16 %v413
          %v513 = vpack.c.b16 %v510, %v509
          %v514 = vpack.c.b16 %v512, %v511
          %v517 = vunpack.c.l.b16 %v414
          %v518 = vunpack.c.l.b16 %v415
          %v519 = vpack.c.b16 %v518, %v517
          %v521 = vsel %vm442, %v513, 0
          %v524 = vsel %vm442, %v514, 0
          %v527 = vand.u32 %v519, %v452
          %529 = vmatprep.subr.bf16.mxu0 0
          %530 = vmatpush1.bf16.msra.mxu0 %v527
          %531 = vmatprep.subr.bf16.mxu0 0
          %532 = vmatpush1.bf16.msra.mxu0 0
          %533 = vmatprep.subr.bf16.mxu0 0
          %534 = vmatpush1.bf16.msra.mxu0 0
          %535 = vmatprep.subr.bf16.mxu0 0
          %536 = vmatpush1.bf16.msra.mxu0 0
          %537 = vmatprep.subr.bf16.mxu0 0
          %538 = vmatpush1.bf16.msra.mxu0 0
          %539 = vmatprep.subr.bf16.mxu0 0
          %540 = vmatpush1.bf16.msra.mxu0 0
          %541 = vmatprep.subr.bf16.mxu0 0
          %542 = vmatpush1.bf16.msra.mxu0 0
          %543 = vmatprep.subr.bf16.mxu0 0
          %544 = vmatpush1.bf16.msra.mxu0 0
          %545 = vmatprep.subr.bf16.mxu0 0
          %546 = vmatpush1.bf16.msra.mxu0 0
          %547 = vmatprep.subr.bf16.mxu0 0
          %548 = vmatpush1.bf16.msra.mxu0 0
          %549 = vmatprep.subr.bf16.mxu0 0
          %550 = vmatpush1.bf16.msra.mxu0 0
          %551 = vmatprep.subr.bf16.mxu0 0
          %552 = vmatpush1.bf16.msra.mxu0 0
          %553 = vmatprep.subr.bf16.mxu0 0
          %554 = vmatpush1.bf16.msra.mxu0 0
          %555 = vmatprep.subr.bf16.mxu0 0
          %556 = vmatpush1.bf16.msra.mxu0 0
          %557 = vmatprep.subr.bf16.mxu0 0
          %558 = vmatpush1.bf16.msra.mxu0 0
          %559 = vmatprep.subr.bf16.mxu0 0
          %560 = vmatpush1.bf16.msra.mxu0 0
          %561 = vmatprep.mubr.bf16.mxu0 0
          %562 = vmatmul.mubr.bf16.gmra.mrb[0].mxu0 %v521
          %v563 = vpop.f32.mrb[0].mxu0
          %v564 = vadd.f32 %v491, %v563
          %v565 = vpop.f32.mrb[0].mxu0
          %v566 = vpop.f32.mrb[0].mxu0
          %v567 = vadd.f32 %v494, %v566
          %v568 = vpop.f32.mrb[0].mxu0
          %569 = vmatprep.mubr.bf16.mxu0 0
          %570 = vmatmul.mubr.bf16.gmra.mrb[0].mxu0 %v524
          %v571 = vpop.f32.mrb[0].mxu0
          %v572 = vadd.f32 %v499, %v571
          %v573 = vpop.f32.mrb[0].mxu0
          %v574 = vpop.f32.mrb[0].mxu0
          %v575 = vadd.f32 %v502, %v574
          %v576 = vpop.f32.mrb[0].mxu0
          %577 = vdwg.mxu0
          %s578 = sadd.s32 %s406, 2
          %s579 = smul.u32 %s578, 4
          %s580 = smul.addr %s579, 4
          %s581 = scalar_lea.vmem %s398, %s580
          %v582 = vld [vmem:[%s581] sm:$0xf]
          %v583 = vld [vmem:[%s581 + $0x4] sm:$0xf]
          %v584 = vld [vmem:[%s581 + $0x8] sm:$0xf]
          %v585 = vld [vmem:[%s581 + $0xc] sm:$0x3]
          %s586 = scalar_lea.vmem %s1, 16
          %v587 = vld [vmem:[%s586] sm:$0xf]
          %v588 = vld [vmem:[%s586 + $0x4] sm:$0xf]
          %v593 = vunpack.c.l.b16 %v582
          %v594 = vunpack.c.l.b16 %v583
          %v595 = vunpack.c.l.b16 %v584
          %v596 = vunpack.c.l.b16 %v585
          %v597 = vpack.c.b16 %v594, %v593
          %v598 = vpack.c.b16 %v596, %v595
          %v601 = vunpack.c.l.b16 %v587
          %v602 = vunpack.c.l.b16 %v588
          %v603 = vpack.c.b16 %v602, %v601
          %v605 = vsel %vm442, %v597, 0
          %v608 = vsel %vm442, %v598, 0
          %v611 = vand.u32 %v603, %v452
          %613 = vmatprep.subr.bf16.mxu0 0
          %614 = vmatpush1.bf16.msra.mxu0 %v611
          %615 = vmatprep.subr.bf16.mxu0 0
          %616 = vmatpush1.bf16.msra.mxu0 0
          %617 = vmatprep.subr.bf16.mxu0 0
          %618 = vmatpush1.bf16.msra.mxu0 0
          %619 = vmatprep.subr.bf16.mxu0 0
          %620 = vmatpush1.bf16.msra.mxu0 0
          %621 = vmatprep.subr.bf16.mxu0 0
          %622 = vmatpush1.bf16.msra.mxu0 0
          %623 = vmatprep.subr.bf16.mxu0 0
          %624 = vmatpush1.bf16.msra.mxu0 0
          %625 = vmatprep.subr.bf16.mxu0 0
          %626 = vmatpush1.bf16.msra.mxu0 0
          %627 = vmatprep.subr.bf16.mxu0 0
          %628 = vmatpush1.bf16.msra.mxu0 0
          %629 = vmatprep.subr.bf16.mxu0 0
          %630 = vmatpush1.bf16.msra.mxu0 0
          %631 = vmatprep.subr.bf16.mxu0 0
          %632 = vmatpush1.bf16.msra.mxu0 0
          %633 = vmatprep.subr.bf16.mxu0 0
          %634 = vmatpush1.bf16.msra.mxu0 0
          %635 = vmatprep.subr.bf16.mxu0 0
          %636 = vmatpush1.bf16.msra.mxu0 0
          %637 = vmatprep.subr.bf16.mxu0 0
          %638 = vmatpush1.bf16.msra.mxu0 0
          %639 = vmatprep.subr.bf16.mxu0 0
          %640 = vmatpush1.bf16.msra.mxu0 0
          %641 = vmatprep.subr.bf16.mxu0 0
          %642 = vmatpush1.bf16.msra.mxu0 0
          %643 = vmatprep.subr.bf16.mxu0 0
          %644 = vmatpush1.bf16.msra.mxu0 0
          %645 = vmatprep.mubr.bf16.mxu0 0
          %646 = vmatmul.mubr.bf16.gmra.mrb[0].mxu0 %v605
          %v647 = vpop.f32.mrb[0].mxu0
          %v648 = vadd.f32 0.0, %v647
          %v649 = vpop.f32.mrb[0].mxu0
          %v650 = vpop.f32.mrb[0].mxu0
          %v651 = vadd.f32 0.0, %v650
          %v652 = vpop.f32.mrb[0].mxu0
          %653 = vmatprep.mubr.bf16.mxu0 0
          %654 = vmatmul.mubr.bf16.gmra.mrb[0].mxu0 %v608
          %v655 = vpop.f32.mrb[0].mxu0
          %v656 = vadd.f32 0.0, %v655
          %v657 = vpop.f32.mrb[0].mxu0
          %v658 = vpop.f32.mrb[0].mxu0
          %v659 = vadd.f32 0.0, %v658
          %v660 = vpop.f32.mrb[0].mxu0
          %661 = vdwg.mxu0
          %v662 = vadd.f32 %v564, %v648
          %v663 = vadd.f32 %v567, %v651
          %v664 = vadd.f32 %v572, %v656
          %v665 = vadd.f32 %v575, %v659
          %s666 = sadd.s32 %s406, 3
          %s667 = smul.u32 %s666, 4
          %s668 = smul.addr %s667, 4
          %s669 = scalar_lea.vmem %s398, %s668
          %v670 = vld [vmem:[%s669] sm:$0xf]
          %v671 = vld [vmem:[%s669 + $0x4] sm:$0xf]
          %v672 = vld [vmem:[%s669 + $0x8] sm:$0xf]
          %v673 = vld [vmem:[%s669 + $0xc] sm:$0x3]
          %s674 = scalar_lea.vmem %s1, 24
          %v675 = vld [vmem:[%s674] sm:$0xf]
          %v676 = vld [vmem:[%s674 + $0x4] sm:$0xf]
          %v681 = vunpack.c.l.b16 %v670
          %v682 = vunpack.c.l.b16 %v671
          %v683 = vunpack.c.l.b16 %v672
          %v684 = vunpack.c.l.b16 %v673
          %v685 = vpack.c.b16 %v682, %v681
          %v686 = vpack.c.b16 %v684, %v683
          %v689 = vunpack.c.l.b16 %v675
          %v690 = vunpack.c.l.b16 %v676
          %v691 = vpack.c.b16 %v690, %v689
          %v693 = vsel %vm442, %v685, 0
          %v696 = vsel %vm442, %v686, 0
          %v699 = vand.u32 %v691, %v452
          %701 = vmatprep.subr.bf16.mxu0 0
          %702 = vmatpush1.bf16.msra.mxu0 %v699
          %703 = vmatprep.subr.bf16.mxu0 0
          %704 = vmatpush1.bf16.msra.mxu0 0
          %705 = vmatprep.subr.bf16.mxu0 0
          %706 = vmatpush1.bf16.msra.mxu0 0
          %707 = vmatprep.subr.bf16.mxu0 0
          %708 = vmatpush1.bf16.msra.mxu0 0
          %709 = vmatprep.subr.bf16.mxu0 0
          %710 = vmatpush1.bf16.msra.mxu0 0
          %711 = vmatprep.subr.bf16.mxu0 0
          %712 = vmatpush1.bf16.msra.mxu0 0
          %713 = vmatprep.subr.bf16.mxu0 0
          %714 = vmatpush1.bf16.msra.mxu0 0
          %715 = vmatprep.subr.bf16.mxu0 0
          %716 = vmatpush1.bf16.msra.mxu0 0
          %717 = vmatprep.subr.bf16.mxu0 0
          %718 = vmatpush1.bf16.msra.mxu0 0
          %719 = vmatprep.subr.bf16.mxu0 0
          %720 = vmatpush1.bf16.msra.mxu0 0
          %721 = vmatprep.subr.bf16.mxu0 0
          %722 = vmatpush1.bf16.msra.mxu0 0
          %723 = vmatprep.subr.bf16.mxu0 0
          %724 = vmatpush1.bf16.msra.mxu0 0
          %725 = vmatprep.subr.bf16.mxu0 0
          %726 = vmatpush1.bf16.msra.mxu0 0
          %727 = vmatprep.subr.bf16.mxu0 0
          %728 = vmatpush1.bf16.msra.mxu0 0
          %729 = vmatprep.subr.bf16.mxu0 0
          %730 = vmatpush1.bf16.msra.mxu0 0
          %731 = vmatprep.subr.bf16.mxu0 0
          %732 = vmatpush1.bf16.msra.mxu0 0
          %733 = vmatprep.mubr.bf16.mxu0 0
          %734 = vmatmul.mubr.bf16.gmra.mrb[0].mxu0 %v693
          %v735 = vpop.f32.mrb[0].mxu0
          %v736 = vadd.f32 0.0, %v735
          %v737 = vpop.f32.mrb[0].mxu0
          %v738 = vpop.f32.mrb[0].mxu0
          %v739 = vadd.f32 0.0, %v738
          %v740 = vpop.f32.mrb[0].mxu0
          %741 = vmatprep.mubr.bf16.mxu0 0
          %742 = vmatmul.mubr.bf16.gmra.mrb[0].mxu0 %v696
          %v743 = vpop.f32.mrb[0].mxu0
          %v744 = vadd.f32 0.0, %v743
          %v745 = vpop.f32.mrb[0].mxu0
          %v746 = vpop.f32.mrb[0].mxu0
          %v747 = vadd.f32 0.0, %v746
          %v748 = vpop.f32.mrb[0].mxu0
          %749 = vdwg.mxu0
          %v750 = vadd.f32 %v662, %v736
          %v751 = vadd.f32 %v663, %v739
          %v752 = vadd.f32 %v664, %v744
          %v753 = vadd.f32 %v665, %v747
          %s754 = sadd.s32 %s406, 4
          %s755 = smul.u32 %s754, 4
          %s756 = smul.addr %s755, 4
          %s757 = scalar_lea.vmem %s398, %s756
          %v758 = vld [vmem:[%s757] sm:$0xf]
          %v759 = vld [vmem:[%s757 + $0x4] sm:$0xf]
          %v760 = vld [vmem:[%s757 + $0x8] sm:$0xf]
          %v761 = vld [vmem:[%s757 + $0xc] sm:$0x3]
          %s762 = scalar_lea.vmem %s1, 32
          %v763 = vld [vmem:[%s762] sm:$0xf]
          %v764 = vld [vmem:[%s762 + $0x4] sm:$0xf]
          %v769 = vunpack.c.l.b16 %v758
          %v770 = vunpack.c.l.b16 %v759
          %v771 = vunpack.c.l.b16 %v760
          %v772 = vunpack.c.l.b16 %v761
          %v773 = vpack.c.b16 %v770, %v769
          %v774 = vpack.c.b16 %v772, %v771
          %v777 = vunpack.c.l.b16 %v763
          %v778 = vunpack.c.l.b16 %v764
          %v779 = vpack.c.b16 %v778, %v777
          %v781 = vsel %vm442, %v773, 0
          %v784 = vsel %vm442, %v774, 0
          %v787 = vand.u32 %v779, %v452
          %789 = vmatprep.subr.bf16.mxu0 0
          %790 = vmatpush1.bf16.msra.mxu0 %v787
          %791 = vmatprep.subr.bf16.mxu0 0
          %792 = vmatpush1.bf16.msra.mxu0 0
          %793 = vmatprep.subr.bf16.mxu0 0
          %794 = vmatpush1.bf16.msra.mxu0 0
          %795 = vmatprep.subr.bf16.mxu0 0
          %796 = vmatpush1.bf16.msra.mxu0 0
          %797 = vmatprep.subr.bf16.mxu0 0
          %798 = vmatpush1.bf16.msra.mxu0 0
          %799 = vmatprep.subr.bf16.mxu0 0
          %800 = vmatpush1.bf16.msra.mxu0 0
          %801 = vmatprep.subr.bf16.mxu0 0
          %802 = vmatpush1.bf16.msra.mxu0 0
          %803 = vmatprep.subr.bf16.mxu0 0
          %804 = vmatpush1.bf16.msra.mxu0 0
          %805 = vmatprep.subr.bf16.mxu0 0
          %806 = vmatpush1.bf16.msra.mxu0 0
          %807 = vmatprep.subr.bf16.mxu0 0
          %808 = vmatpush1.bf16.msra.mxu0 0
          %809 = vmatprep.subr.bf16.mxu0 0
          %810 = vmatpush1.bf16.msra.mxu0 0
          %811 = vmatprep.subr.bf16.mxu0 0
          %812 = vmatpush1.bf16.msra.mxu0 0
          %813 = vmatprep.subr.bf16.mxu0 0
          %814 = vmatpush1.bf16.msra.mxu0 0
          %815 = vmatprep.subr.bf16.mxu0 0
          %816 = vmatpush1.bf16.msra.mxu0 0
          %817 = vmatprep.subr.bf16.mxu0 0
          %818 = vmatpush1.bf16.msra.mxu0 0
          %819 = vmatprep.subr.bf16.mxu0 0
          %820 = vmatpush1.bf16.msra.mxu0 0
          %821 = vmatprep.mubr.bf16.mxu0 0
          %822 = vmatmul.mubr.bf16.gmra.mrb[0].mxu0 %v781
          %v823 = vpop.f32.mrb[0].mxu0
          %v824 = vadd.f32 0.0, %v823
          %v825 = vpop.f32.mrb[0].mxu0
          %v826 = vpop.f32.mrb[0].mxu0
          %v827 = vadd.f32 0.0, %v826
          %v828 = vpop.f32.mrb[0].mxu0
          %829 = vmatprep.mubr.bf16.mxu0 0
          %830 = vmatmul.mubr.bf16.gmra.mrb[0].mxu0 %v784
          %v831 = vpop.f32.mrb[0].mxu0
          %v832 = vadd.f32 0.0, %v831
          %v833 = vpop.f32.mrb[0].mxu0
          %v834 = vpop.f32.mrb[0].mxu0
          %v835 = vadd.f32 0.0, %v834
          %v836 = vpop.f32.mrb[0].mxu0
          %837 = vdwg.mxu0
          %v838 = vadd.f32 %v750, %v824
          %v839 = vadd.f32 %v751, %v827
          %v840 = vadd.f32 %v752, %v832
          %v841 = vadd.f32 %v753, %v835
          %842 = vmatprep.subr.bf16.mxu0 0
          %843 = vmatpush1.bf16.msra.mxu0 %v454
          %844 = vmatprep.subr.bf16.mxu0 0
          %845 = vmatpush1.bf16.msra.mxu0 0
          %846 = vmatprep.subr.bf16.mxu0 0
          %847 = vmatpush1.bf16.msra.mxu0 0
          %848 = vmatprep.subr.bf16.mxu0 0
          %849 = vmatpush1.bf16.msra.mxu0 0
          %850 = vmatprep.subr.bf16.mxu0 0
          %851 = vmatpush1.bf16.msra.mxu0 0
          %852 = vmatprep.subr.bf16.mxu0 0
          %853 = vmatpush1.bf16.msra.mxu0 0
          %854 = vmatprep.subr.bf16.mxu0 0
          %855 = vmatpush1.bf16.msra.mxu0 0
          %856 = vmatprep.subr.bf16.mxu0 0
          %857 = vmatpush1.bf16.msra.mxu0 0
          %858 = vmatprep.subr.bf16.mxu0 0
          %859 = vmatpush1.bf16.msra.mxu0 0
          %860 = vmatprep.subr.bf16.mxu0 0
          %861 = vmatpush1.bf16.msra.mxu0 0
          %862 = vmatprep.subr.bf16.mxu0 0
          %863 = vmatpush1.bf16.msra.mxu0 0
          %864 = vmatprep.subr.bf16.mxu0 0
          %865 = vmatpush1.bf16.msra.mxu0 0
          %866 = vmatprep.subr.bf16.mxu0 0
          %867 = vmatpush1.bf16.msra.mxu0 0
          %868 = vmatprep.subr.bf16.mxu0 0
          %869 = vmatpush1.bf16.msra.mxu0 0
          %870 = vmatprep.subr.bf16.mxu0 0
          %871 = vmatpush1.bf16.msra.mxu0 0
          %872 = vmatprep.subr.bf16.mxu0 0
          %873 = vmatpush1.bf16.msra.mxu0 0
          %874 = vmatprep.mubr.bf16.mxu0 0
          %875 = vmatmul.mubr.bf16.gmra.mrb[0].mxu0 %v605
          %v876 = vpop.f32.mrb[0].mxu0
          %v877 = vadd.f32 0.0, %v876
          %v878 = vpop.f32.mrb[0].mxu0
          %v879 = vpop.f32.mrb[0].mxu0
          %v880 = vadd.f32 0.0, %v879
          %v881 = vpop.f32.mrb[0].mxu0
          %882 = vmatprep.mubr.bf16.mxu0 0
          %883 = vmatmul.mubr.bf16.gmra.mrb[0].mxu0 %v608
          %v884 = vpop.f32.mrb[0].mxu0
          %v885 = vadd.f32 0.0, %v884
          %v886 = vpop.f32.mrb[0].mxu0
          %v887 = vpop.f32.mrb[0].mxu0
          %v888 = vadd.f32 0.0, %v887
          %v889 = vpop.f32.mrb[0].mxu0
          %890 = vdwg.mxu0
          %891 = vmatprep.subr.bf16.mxu0 0
          %892 = vmatpush1.bf16.msra.mxu0 %v527
          %893 = vmatprep.subr.bf16.mxu0 0
          %894 = vmatpush1.bf16.msra.mxu0 0
          %895 = vmatprep.subr.bf16.mxu0 0
          %896 = vmatpush1.bf16.msra.mxu0 0
          %897 = vmatprep.subr.bf16.mxu0 0
          %898 = vmatpush1.bf16.msra.mxu0 0
          %899 = vmatprep.subr.bf16.mxu0 0
          %900 = vmatpush1.bf16.msra.mxu0 0
          %901 = vmatprep.subr.bf16.mxu0 0
          %902 = vmatpush1.bf16.msra.mxu0 0
          %903 = vmatprep.subr.bf16.mxu0 0
          %904 = vmatpush1.bf16.msra.mxu0 0
          %905 = vmatprep.subr.bf16.mxu0 0
          %906 = vmatpush1.bf16.msra.mxu0 0
          %907 = vmatprep.subr.bf16.mxu0 0
          %908 = vmatpush1.bf16.msra.mxu0 0
          %909 = vmatprep.subr.bf16.mxu0 0
          %910 = vmatpush1.bf16.msra.mxu0 0
          %911 = vmatprep.subr.bf16.mxu0 0
          %912 = vmatpush1.bf16.msra.mxu0 0
          %913 = vmatprep.subr.bf16.mxu0 0
          %914 = vmatpush1.bf16.msra.mxu0 0
          %915 = vmatprep.subr.bf16.mxu0 0
          %916 = vmatpush1.bf16.msra.mxu0 0
          %917 = vmatprep.subr.bf16.mxu0 0
          %918 = vmatpush1.bf16.msra.mxu0 0
          %919 = vmatprep.subr.bf16.mxu0 0
          %920 = vmatpush1.bf16.msra.mxu0 0
          %921 = vmatprep.subr.bf16.mxu0 0
          %922 = vmatpush1.bf16.msra.mxu0 0
          %923 = vmatprep.mubr.bf16.mxu0 0
          %924 = vmatmul.mubr.bf16.gmra.mrb[0].mxu0 %v444
          %v925 = vpop.f32.mrb[0].mxu0
          %v926 = vadd.f32 %v877, %v925
          %v927 = vpop.f32.mrb[0].mxu0
          %v928 = vpop.f32.mrb[0].mxu0
          %v929 = vadd.f32 %v880, %v928
          %v930 = vpop.f32.mrb[0].mxu0
          %931 = vmatprep.mubr.bf16.mxu0 0
          %932 = vmatmul.mubr.bf16.gmra.mrb[0].mxu0 %v447
          %v933 = vpop.f32.mrb[0].mxu0
          %v934 = vadd.f32 %v885, %v933
          %v935 = vpop.f32.mrb[0].mxu0
          %v936 = vpop.f32.mrb[0].mxu0
          %v937 = vadd.f32 %v888, %v936
          %v938 = vpop.f32.mrb[0].mxu0
          %939 = vdwg.mxu0
          %940 = vmatprep.subr.bf16.mxu0 0
          %941 = vmatpush1.bf16.msra.mxu0 %v611
          %942 = vmatprep.subr.bf16.mxu0 0
          %943 = vmatpush1.bf16.msra.mxu0 0
          %944 = vmatprep.subr.bf16.mxu0 0
          %945 = vmatpush1.bf16.msra.mxu0 0
          %946 = vmatprep.subr.bf16.mxu0 0
          %947 = vmatpush1.bf16.msra.mxu0 0
          %948 = vmatprep.subr.bf16.mxu0 0
          %949 = vmatpush1.bf16.msra.mxu0 0
          %950 = vmatprep.subr.bf16.mxu0 0
          %951 = vmatpush1.bf16.msra.mxu0 0
          %952 = vmatprep.subr.bf16.mxu0 0
          %953 = vmatpush1.bf16.msra.mxu0 0
          %954 = vmatprep.subr.bf16.mxu0 0
          %955 = vmatpush1.bf16.msra.mxu0 0
          %956 = vmatprep.subr.bf16.mxu0 0
          %957 = vmatpush1.bf16.msra.mxu0 0
          %958 = vmatprep.subr.bf16.mxu0 0
          %959 = vmatpush1.bf16.msra.mxu0 0
          %960 = vmatprep.subr.bf16.mxu0 0
          %961 = vmatpush1.bf16.msra.mxu0 0
          %962 = vmatprep.subr.bf16.mxu0 0
          %963 = vmatpush1.bf16.msra.mxu0 0
          %964 = vmatprep.subr.bf16.mxu0 0
          %965 = vmatpush1.bf16.msra.mxu0 0
          %966 = vmatprep.subr.bf16.mxu0 0
          %967 = vmatpush1.bf16.msra.mxu0 0
          %968 = vmatprep.subr.bf16.mxu0 0
          %969 = vmatpush1.bf16.msra.mxu0 0
          %970 = vmatprep.subr.bf16.mxu0 0
          %971 = vmatpush1.bf16.msra.mxu0 0
          %972 = vmatprep.mubr.bf16.mxu0 0
          %973 = vmatmul.mubr.bf16.gmra.mrb[0].mxu0 %v693
          %v974 = vpop.f32.mrb[0].mxu0
          %v975 = vadd.f32 0.0, %v974
          %v976 = vpop.f32.mrb[0].mxu0
          %v977 = vpop.f32.mrb[0].mxu0
          %v978 = vadd.f32 0.0, %v977
          %v979 = vpop.f32.mrb[0].mxu0
          %980 = vmatprep.mubr.bf16.mxu0 0
          %981 = vmatmul.mubr.bf16.gmra.mrb[0].mxu0 %v696
          %v982 = vpop.f32.mrb[0].mxu0
          %v983 = vadd.f32 0.0, %v982
          %v984 = vpop.f32.mrb[0].mxu0
          %v985 = vpop.f32.mrb[0].mxu0
          %v986 = vadd.f32 0.0, %v985
          %v987 = vpop.f32.mrb[0].mxu0
          %988 = vdwg.mxu0
          %v989 = vadd.f32 %v926, %v975
          %v990 = vadd.f32 %v929, %v978
          %v991 = vadd.f32 %v934, %v983
          %v992 = vadd.f32 %v937, %v986
          %993 = vmatprep.subr.bf16.mxu0 0
          %994 = vmatpush1.bf16.msra.mxu0 %v699
          %995 = vmatprep.subr.bf16.mxu0 0
          %996 = vmatpush1.bf16.msra.mxu0 0
          %997 = vmatprep.subr.bf16.mxu0 0
          %998 = vmatpush1.bf16.msra.mxu0 0
          %999 = vmatprep.subr.bf16.mxu0 0
          %1000 = vmatpush1.bf16.msra.mxu0 0
          %1001 = vmatprep.subr.bf16.mxu0 0
          %1002 = vmatpush1.bf16.msra.mxu0 0
          %1003 = vmatprep.subr.bf16.mxu0 0
          %1004 = vmatpush1.bf16.msra.mxu0 0
          %1005 = vmatprep.subr.bf16.mxu0 0
          %1006 = vmatpush1.bf16.msra.mxu0 0
          %1007 = vmatprep.subr.bf16.mxu0 0
          %1008 = vmatpush1.bf16.msra.mxu0 0
          %1009 = vmatprep.subr.bf16.mxu0 0
          %1010 = vmatpush1.bf16.msra.mxu0 0
          %1011 = vmatprep.subr.bf16.mxu0 0
          %1012 = vmatpush1.bf16.msra.mxu0 0
          %1013 = vmatprep.subr.bf16.mxu0 0
          %1014 = vmatpush1.bf16.msra.mxu0 0
          %1015 = vmatprep.subr.bf16.mxu0 0
          %1016 = vmatpush1.bf16.msra.mxu0 0
          %1017 = vmatprep.subr.bf16.mxu0 0
          %1018 = vmatpush1.bf16.msra.mxu0 0
          %1019 = vmatprep.subr.bf16.mxu0 0
          %1020 = vmatpush1.bf16.msra.mxu0 0
          %1021 = vmatprep.subr.bf16.mxu0 0
          %1022 = vmatpush1.bf16.msra.mxu0 0
          %1023 = vmatprep.subr.bf16.mxu0 0
          %1024 = vmatpush1.bf16.msra.mxu0 0
          %1025 = vmatprep.mubr.bf16.mxu0 0
          %1026 = vmatmul.mubr.bf16.gmra.mrb[0].mxu0 %v781
          %v1027 = vpop.f32.mrb[0].mxu0
          %v1028 = vadd.f32 0.0, %v1027
          %v1029 = vpop.f32.mrb[0].mxu0
          %v1030 = vpop.f32.mrb[0].mxu0
          %v1031 = vadd.f32 0.0, %v1030
          %v1032 = vpop.f32.mrb[0].mxu0
          %1033 = vmatprep.mubr.bf16.mxu0 0
          %1034 = vmatmul.mubr.bf16.gmra.mrb[0].mxu0 %v784
          %v1035 = vpop.f32.mrb[0].mxu0
          %v1036 = vadd.f32 0.0, %v1035
          %v1037 = vpop.f32.mrb[0].mxu0
          %v1038 = vpop.f32.mrb[0].mxu0
          %v1039 = vadd.f32 0.0, %v1038
          %v1040 = vpop.f32.mrb[0].mxu0
          %1041 = vdwg.mxu0
          %v1042 = vadd.f32 %v989, %v1028
          %v1043 = vadd.f32 %v990, %v1031
          %v1044 = vadd.f32 %v991, %v1036
          %v1045 = vadd.f32 %v992, %v1039
          %s1046 = sadd.s32 %s406, 5
          %s1047 = smul.u32 %s1046, 4
          %s1048 = smul.addr %s1047, 4
          %s1049 = scalar_lea.vmem %s398, %s1048
          %v1050 = vld [vmem:[%s1049] sm:$0xf]
          %v1051 = vld [vmem:[%s1049 + $0x4] sm:$0xf]
          %v1052 = vld [vmem:[%s1049 + $0x8] sm:$0xf]
          %v1053 = vld [vmem:[%s1049 + $0xc] sm:$0x3]
          %v1058 = vunpack.c.l.b16 %v1050
          %v1059 = vunpack.c.l.b16 %v1051
          %v1060 = vunpack.c.l.b16 %v1052
          %v1061 = vunpack.c.l.b16 %v1053
          %v1062 = vpack.c.b16 %v1059, %v1058
          %v1063 = vpack.c.b16 %v1061, %v1060
          %v1065 = vsel %vm442, %v1062, 0
          %v1068 = vsel %vm442, %v1063, 0
          %1070 = vmatprep.subr.bf16.mxu0 0
          %1071 = vmatpush1.bf16.msra.mxu0 %v787
          %1072 = vmatprep.subr.bf16.mxu0 0
          %1073 = vmatpush1.bf16.msra.mxu0 0
          %1074 = vmatprep.subr.bf16.mxu0 0
          %1075 = vmatpush1.bf16.msra.mxu0 0
          %1076 = vmatprep.subr.bf16.mxu0 0
          %1077 = vmatpush1.bf16.msra.mxu0 0
          %1078 = vmatprep.subr.bf16.mxu0 0
          %1079 = vmatpush1.bf16.msra.mxu0 0
          %1080 = vmatprep.subr.bf16.mxu0 0
          %1081 = vmatpush1.bf16.msra.mxu0 0
          %1082 = vmatprep.subr.bf16.mxu0 0
          %1083 = vmatpush1.bf16.msra.mxu0 0
          %1084 = vmatprep.subr.bf16.mxu0 0
          %1085 = vmatpush1.bf16.msra.mxu0 0
          %1086 = vmatprep.subr.bf16.mxu0 0
          %1087 = vmatpush1.bf16.msra.mxu0 0
          %1088 = vmatprep.subr.bf16.mxu0 0
          %1089 = vmatpush1.bf16.msra.mxu0 0
          %1090 = vmatprep.subr.bf16.mxu0 0
          %1091 = vmatpush1.bf16.msra.mxu0 0
          %1092 = vmatprep.subr.bf16.mxu0 0
          %1093 = vmatpush1.bf16.msra.mxu0 0
          %1094 = vmatprep.subr.bf16.mxu0 0
          %1095 = vmatpush1.bf16.msra.mxu0 0
          %1096 = vmatprep.subr.bf16.mxu0 0
          %1097 = vmatpush1.bf16.msra.mxu0 0
          %1098 = vmatprep.subr.bf16.mxu0 0
          %1099 = vmatpush1.bf16.msra.mxu0 0
          %1100 = vmatprep.subr.bf16.mxu0 0
          %1101 = vmatpush1.bf16.msra.mxu0 0
          %1102 = vmatprep.mubr.bf16.mxu0 0
          %1103 = vmatmul.mubr.bf16.gmra.mrb[0].mxu0 %v1065
          %v1104 = vpop.f32.mrb[0].mxu0
          %v1105 = vadd.f32 0.0, %v1104
          %v1106 = vpop.f32.mrb[0].mxu0
          %v1107 = vpop.f32.mrb[0].mxu0
          %v1108 = vadd.f32 0.0, %v1107
          %v1109 = vpop.f32.mrb[0].mxu0
          %1110 = vmatprep.mubr.bf16.mxu0 0
          %1111 = vmatmul.mubr.bf16.gmra.mrb[0].mxu0 %v1068
          %v1112 = vpop.f32.mrb[0].mxu0
          %v1113 = vadd.f32 0.0, %v1112
          %v1114 = vpop.f32.mrb[0].mxu0
          %v1115 = vpop.f32.mrb[0].mxu0
          %v1116 = vadd.f32 0.0, %v1115
          %v1117 = vpop.f32.mrb[0].mxu0
          %1118 = vdwg.mxu0
          %v1119 = vadd.f32 %v1042, %v1105
          %v1120 = vadd.f32 %v1043, %v1108
          %v1121 = vadd.f32 %v1044, %v1113
          %v1122 = vadd.f32 %v1045, %v1116
          %v1123 = vmax.f32 %v838, %v1119
          %v1124 = vmax.f32 %v839, %v1120
          %v1125 = vmax.f32 %v840, %v1121
          %v1126 = vmax.f32 %v841, %v1122
          %1127 = vst [vmem:[#allocation4] sm:$0xff] %v1123
          %1128 = vst [vmem:[#allocation4 + $0x8] sm:$0xff] %v1124
          %1129 = vst [vmem:[#allocation4 + $0x10] sm:$0xff] %v1125
          %1130 = vst [vmem:[#allocation4 + $0x18] sm:$0xf] %v1126
          %v1131 = vld [vmem:[#allocation4] ss:$2 sm:$0xff]
          %s1132 = scalar_lea.vmem [#allocation4], 16
          %v1133 = vld [vmem:[%s1132] ss:$2 sm:$0x3f]
          %s1134 = scalar_lea.vmem [#allocation4], 1
          %v1135 = vld [vmem:[%s1134] ss:$2 sm:$0xff]
          %s1136 = scalar_lea.vmem [#allocation4], 17
          %v1137 = vld [vmem:[%s1136] ss:$2 sm:$0x3f]
          %v1138 = vmax.f32 %v1131, %v1135
          %v1139 = vmax.f32 %v1133, %v1137
          %v1140 = vld [vmem:[%s2] sm:$0x1]
          %v1142 = vlaneseq
          %v1143 = vshrl.u32 %v1142, 7
          %v1144 = vsub.s32 0, %v1143
          %v1145 = vrot.slane %v1140, %v1144
          %v1147 = vadd.f32 %v1138, %v1145
          %v1148 = vadd.f32 %v1139, %v1145
          %v1149 = vmax.f32 %v1147, 0.0
          %v1150 = vmax.f32 %v1148, 0.0
          %s1151 = smul.u32 %s401, 16
          %s1152 = scalar_lea.vmem [#allocation2], %s1151
          %1153 = vst [vmem:[%s1152] sm:$0xff] %v1149
          %1154 = vst [vmem:[%s1152 + $0x8] sm:$0x3f] %v1150
        $region73: #{convnet_forward.1} parent=63 // loop_footer
          %s405 = sadd.s32 1, %s401
        $region74: #{convnet_forward.1} parent=63 // loop_footer_branch
          %400 = sbr.rel target = $region70
        $region75: #{convnet_forward.1} parent=63 // loop_exit
          _
        loop: start=0, step=1, limit=5
        $region76: #{convnet_forward.1} parent=63 // loop_pre_header
          _
        $region77: #{convnet_forward.1} parent=63 // loop_header
          %s1156 = sphi 0, %s1160
          %p1157 = scmp.ge.s32.totalorder %s1156, 5
        $region78: #{convnet_forward.1} parent=63 // loop_header_branch
          %1159 = sbr.rel (%p1157) target = $region82
        $region79: #{convnet_forward.1} parent=63 // loop_body
          %s1161 = smul.u32 %s1156, 2
          %s1162 = smul.u32 %s1161, 16
          %s1163 = scalar_lea.vmem [#allocation2], %s1162
          %v1164 = vld [vmem:[%s1163] sm:$0xff]
          %v1165 = vld [vmem:[%s1163 + $0x8] sm:$0x3]
          %v1166 = vpack.c.bf16 %v1165, %v1164
          %v1167 = vld [vmem:[%s3] sm:$0xf]
          %v1168 = vld [vmem:[%s3 + $0x4] sm:$0xf]
          %v1169 = vld [vmem:[%s3 + $0x8] sm:$0xf]
          %v1170 = vld [vmem:[%s3 + $0xc] sm:$0xf]
          %v1171 = vld [vmem:[%s3 + $0x10] sm:$0xf]
          %v1172 = vld [vmem:[%s3 + $0x14] sm:$0xf]
          %v1173 = vld [vmem:[%s3 + $0x18] sm:$0xf]
          %v1174 = vld [vmem:[%s3 + $0x1c] sm:$0xf]
          %v1175 = vld [vmem:[%s3 + $0x20] sm:$0xf]
          %v1176 = vld [vmem:[%s3 + $0x24] sm:$0xf]
          %v1177 = vld [vmem:[%s3 + $0x28] sm:$0xf]
          %v1178 = vld [vmem:[%s3 + $0x2c] sm:$0xf]
          %v1179 = vld [vmem:[%s3 + $0x30] sm:$0xf]
          %v1180 = vld [vmem:[%s3 + $0x34] sm:$0xf]
          %v1181 = vld [vmem:[%s3 + $0x38] sm:$0xf]
          %v1182 = vld [vmem:[%s3 + $0x3c] sm:$0xf]
          %v1183 = vld [vmem:[%s1163 + $0x1] sm:$0xff]
          %v1184 = vld [vmem:[%s1163 + $0x9] sm:$0x3]
          %v1185 = vpack.c.bf16 %v1184, %v1183
          %s1186 = scalar_lea.vmem %s3, 64
          %v1187 = vld [vmem:[%s1186] sm:$0xf]
          %v1188 = vld [vmem:[%s1186 + $0x4] sm:$0xf]
          %v1189 = vld [vmem:[%s1186 + $0x8] sm:$0xf]
          %v1190 = vld [vmem:[%s1186 + $0xc] sm:$0xf]
          %v1191 = vld [vmem:[%s1186 + $0x10] sm:$0xf]
          %v1192 = vld [vmem:[%s1186 + $0x14] sm:$0xf]
          %v1193 = vld [vmem:[%s1186 + $0x18] sm:$0xf]
          %v1194 = vld [vmem:[%s1186 + $0x1c] sm:$0xf]
          %v1195 = vld [vmem:[%s1186 + $0x20] sm:$0xf]
          %v1196 = vld [vmem:[%s1186 + $0x24] sm:$0xf]
          %v1197 = vld [vmem:[%s1186 + $0x28] sm:$0xf]
          %v1198 = vld [vmem:[%s1186 + $0x2c] sm:$0xf]
          %v1199 = vld [vmem:[%s1186 + $0x30] sm:$0xf]
          %v1200 = vld [vmem:[%s1186 + $0x34] sm:$0xf]
          %v1201 = vld [vmem:[%s1186 + $0x38] sm:$0xf]
          %v1202 = vld [vmem:[%s1186 + $0x3c] sm:$0xf]
          %v1219 = vunpack.c.l.b16 %v1187
          %v1220 = vunpack.c.l.b16 %v1188
          %v1221 = vunpack.c.l.b16 %v1189
          %v1222 = vunpack.c.l.b16 %v1190
          %v1223 = vunpack.c.l.b16 %v1191
          %v1224 = vunpack.c.l.b16 %v1192
          %v1225 = vunpack.c.l.b16 %v1193
          %v1226 = vunpack.c.l.b16 %v1194
          %v1227 = vunpack.c.l.b16 %v1195
          %v1228 = vunpack.c.l.b16 %v1196
          %v1229 = vunpack.c.l.b16 %v1197
          %v1230 = vunpack.c.l.b16 %v1198
          %v1231 = vunpack.c.l.b16 %v1199
          %v1232 = vunpack.c.l.b16 %v1200
          %v1233 = vunpack.c.l.b16 %v1201
          %v1234 = vunpack.c.l.b16 %v1202
          %v1235 = vpack.c.b16 %v1220, %v1219
          %v1236 = vpack.c.b16 %v1222, %v1221
          %v1237 = vpack.c.b16 %v1224, %v1223
          %v1238 = vpack.c.b16 %v1226, %v1225
          %v1239 = vpack.c.b16 %v1228, %v1227
          %v1240 = vpack.c.b16 %v1230, %v1229
          %v1241 = vpack.c.b16 %v1232, %v1231
          %v1242 = vpack.c.b16 %v1234, %v1233
          %1251 = vmatprep.subr.bf16.mxu0 0
          %1252 = vmatpush1.bf16.msra.mxu0 %v1235
          %1253 = vmatprep.subr.bf16.mxu0 0
          %1254 = vmatpush1.bf16.msra.mxu0 %v1236
          %1255 = vmatprep.subr.bf16.mxu0 0
          %1256 = vmatpush1.bf16.msra.mxu0 %v1237
          %1257 = vmatprep.subr.bf16.mxu0 0
          %1258 = vmatpush1.bf16.msra.mxu0 %v1238
          %1259 = vmatprep.subr.bf16.mxu0 0
          %1260 = vmatpush1.bf16.msra.mxu0 %v1239
          %1261 = vmatprep.subr.bf16.mxu0 0
          %1262 = vmatpush1.bf16.msra.mxu0 %v1240
          %1263 = vmatprep.subr.bf16.mxu0 0
          %1264 = vmatpush1.bf16.msra.mxu0 %v1241
          %1265 = vmatprep.subr.bf16.mxu0 0
          %1266 = vmatpush1.bf16.msra.mxu0 %v1242
          %1267 = vmatprep.subr.bf16.mxu0 0
          %1268 = vmatpush1.bf16.msra.mxu0 0
          %1269 = vmatprep.subr.bf16.mxu0 0
          %1270 = vmatpush1.bf16.msra.mxu0 0
          %1271 = vmatprep.subr.bf16.mxu0 0
          %1272 = vmatpush1.bf16.msra.mxu0 0
          %1273 = vmatprep.subr.bf16.mxu0 0
          %1274 = vmatpush1.bf16.msra.mxu0 0
          %1275 = vmatprep.subr.bf16.mxu0 0
          %1276 = vmatpush1.bf16.msra.mxu0 0
          %1277 = vmatprep.subr.bf16.mxu0 0
          %1278 = vmatpush1.bf16.msra.mxu0 0
          %1279 = vmatprep.subr.bf16.mxu0 0
          %1280 = vmatpush1.bf16.msra.mxu0 0
          %1281 = vmatprep.subr.bf16.mxu0 0
          %1282 = vmatpush1.bf16.msra.mxu0 0
          %1283 = vmatprep.mubr.bf16.mxu0 0
          %1284 = vmatmul.mubr.bf16.gmra.mrb[0].mxu0 %v1185
          %v1285 = vpop.f32.mrb[0].mxu0
          %v1286 = vadd.f32 0.0, %v1285
          %v1287 = vpop.f32.mrb[0].mxu0
          %v1288 = vpop.f32.mrb[0].mxu0
          %v1289 = vadd.f32 0.0, %v1288
          %v1290 = vpop.f32.mrb[0].mxu0
          %1291 = vdwg.mxu0
          %v1308 = vunpack.c.l.b16 %v1167
          %v1309 = vunpack.c.l.b16 %v1168
          %v1310 = vunpack.c.l.b16 %v1169
          %v1311 = vunpack.c.l.b16 %v1170
          %v1312 = vunpack.c.l.b16 %v1171
          %v1313 = vunpack.c.l.b16 %v1172
          %v1314 = vunpack.c.l.b16 %v1173
          %v1315 = vunpack.c.l.b16 %v1174
          %v1316 = vunpack.c.l.b16 %v1175
          %v1317 = vunpack.c.l.b16 %v1176
          %v1318 = vunpack.c.l.b16 %v1177
          %v1319 = vunpack.c.l.b16 %v1178
          %v1320 = vunpack.c.l.b16 %v1179
          %v1321 = vunpack.c.l.b16 %v1180
          %v1322 = vunpack.c.l.b16 %v1181
          %v1323 = vunpack.c.l.b16 %v1182
          %v1324 = vpack.c.b16 %v1309, %v1308
          %v1325 = vpack.c.b16 %v1311, %v1310
          %v1326 = vpack.c.b16 %v1313, %v1312
          %v1327 = vpack.c.b16 %v1315, %v1314
          %v1328 = vpack.c.b16 %v1317, %v1316
          %v1329 = vpack.c.b16 %v1319, %v1318
          %v1330 = vpack.c.b16 %v1321, %v1320
          %v1331 = vpack.c.b16 %v1323, %v1322
          %1340 = vmatprep.subr.bf16.mxu0 0
          %1341 = vmatpush1.bf16.msra.mxu0 %v1324
          %1342 = vmatprep.subr.bf16.mxu0 0
          %1343 = vmatpush1.bf16.msra.mxu0 %v1325
          %1344 = vmatprep.subr.bf16.mxu0 0
          %1345 = vmatpush1.bf16.msra.mxu0 %v1326
          %1346 = vmatprep.subr.bf16.mxu0 0
          %1347 = vmatpush1.bf16.msra.mxu0 %v1327
          %1348 = vmatprep.subr.bf16.mxu0 0
          %1349 = vmatpush1.bf16.msra.mxu0 %v1328
          %1350 = vmatprep.subr.bf16.mxu0 0
          %1351 = vmatpush1.bf16.msra.mxu0 %v1329
          %1352 = vmatprep.subr.bf16.mxu0 0
          %1353 = vmatpush1.bf16.msra.mxu0 %v1330
          %1354 = vmatprep.subr.bf16.mxu0 0
          %1355 = vmatpush1.bf16.msra.mxu0 %v1331
          %1356 = vmatprep.subr.bf16.mxu0 0
          %1357 = vmatpush1.bf16.msra.mxu0 0
          %1358 = vmatprep.subr.bf16.mxu0 0
          %1359 = vmatpush1.bf16.msra.mxu0 0
          %1360 = vmatprep.subr.bf16.mxu0 0
          %1361 = vmatpush1.bf16.msra.mxu0 0
          %1362 = vmatprep.subr.bf16.mxu0 0
          %1363 = vmatpush1.bf16.msra.mxu0 0
          %1364 = vmatprep.subr.bf16.mxu0 0
          %1365 = vmatpush1.bf16.msra.mxu0 0
          %1366 = vmatprep.subr.bf16.mxu0 0
          %1367 = vmatpush1.bf16.msra.mxu0 0
          %1368 = vmatprep.subr.bf16.mxu0 0
          %1369 = vmatpush1.bf16.msra.mxu0 0
          %1370 = vmatprep.subr.bf16.mxu0 0
          %1371 = vmatpush1.bf16.msra.mxu0 0
          %1372 = vmatprep.mubr.bf16.mxu0 0
          %1373 = vmatmul.mubr.bf16.gmra.mrb[0].mxu0 %v1166
          %v1374 = vpop.f32.mrb[0].mxu0
          %v1375 = vadd.f32 %v1286, %v1374
          %v1376 = vpop.f32.mrb[0].mxu0
          %v1377 = vpop.f32.mrb[0].mxu0
          %v1378 = vadd.f32 %v1289, %v1377
          %v1379 = vpop.f32.mrb[0].mxu0
          %1380 = vdwg.mxu0
          %v1381 = vld [vmem:[%s1163 + $0x2] sm:$0xff]
          %v1382 = vld [vmem:[%s1163 + $0xa] sm:$0x3]
          %v1383 = vpack.c.bf16 %v1382, %v1381
          %s1384 = scalar_lea.vmem %s3, 128
          %v1385 = vld [vmem:[%s1384] sm:$0xf]
          %v1386 = vld [vmem:[%s1384 + $0x4] sm:$0xf]
          %v1387 = vld [vmem:[%s1384 + $0x8] sm:$0xf]
          %v1388 = vld [vmem:[%s1384 + $0xc] sm:$0xf]
          %v1389 = vld [vmem:[%s1384 + $0x10] sm:$0xf]
          %v1390 = vld [vmem:[%s1384 + $0x14] sm:$0xf]
          %v1391 = vld [vmem:[%s1384 + $0x18] sm:$0xf]
          %v1392 = vld [vmem:[%s1384 + $0x1c] sm:$0xf]
          %v1393 = vld [vmem:[%s1384 + $0x20] sm:$0xf]
          %v1394 = vld [vmem:[%s1384 + $0x24] sm:$0xf]
          %v1395 = vld [vmem:[%s1384 + $0x28] sm:$0xf]
          %v1396 = vld [vmem:[%s1384 + $0x2c] sm:$0xf]
          %v1397 = vld [vmem:[%s1384 + $0x30] sm:$0xf]
          %v1398 = vld [vmem:[%s1384 + $0x34] sm:$0xf]
          %v1399 = vld [vmem:[%s1384 + $0x38] sm:$0xf]
          %v1400 = vld [vmem:[%s1384 + $0x3c] sm:$0xf]
          %v1417 = vunpack.c.l.b16 %v1385
          %v1418 = vunpack.c.l.b16 %v1386
          %v1419 = vunpack.c.l.b16 %v1387
          %v1420 = vunpack.c.l.b16 %v1388
          %v1421 = vunpack.c.l.b16 %v1389
          %v1422 = vunpack.c.l.b16 %v1390
          %v1423 = vunpack.c.l.b16 %v1391
          %v1424 = vunpack.c.l.b16 %v1392
          %v1425 = vunpack.c.l.b16 %v1393
          %v1426 = vunpack.c.l.b16 %v1394
          %v1427 = vunpack.c.l.b16 %v1395
          %v1428 = vunpack.c.l.b16 %v1396
          %v1429 = vunpack.c.l.b16 %v1397
          %v1430 = vunpack.c.l.b16 %v1398
          %v1431 = vunpack.c.l.b16 %v1399
          %v1432 = vunpack.c.l.b16 %v1400
          %v1433 = vpack.c.b16 %v1418, %v1417
          %v1434 = vpack.c.b16 %v1420, %v1419
          %v1435 = vpack.c.b16 %v1422, %v1421
          %v1436 = vpack.c.b16 %v1424, %v1423
          %v1437 = vpack.c.b16 %v1426, %v1425
          %v1438 = vpack.c.b16 %v1428, %v1427
          %v1439 = vpack.c.b16 %v1430, %v1429
          %v1440 = vpack.c.b16 %v1432, %v1431
          %1449 = vmatprep.subr.bf16.mxu0 0
          %1450 = vmatpush1.bf16.msra.mxu0 %v1433
          %1451 = vmatprep.subr.bf16.mxu0 0
          %1452 = vmatpush1.bf16.msra.mxu0 %v1434
          %1453 = vmatprep.subr.bf16.mxu0 0
          %1454 = vmatpush1.bf16.msra.mxu0 %v1435
          %1455 = vmatprep.subr.bf16.mxu0 0
          %1456 = vmatpush1.bf16.msra.mxu0 %v1436
          %1457 = vmatprep.subr.bf16.mxu0 0
          %1458 = vmatpush1.bf16.msra.mxu0 %v1437
          %1459 = vmatprep.subr.bf16.mxu0 0
          %1460 = vmatpush1.bf16.msra.mxu0 %v1438
          %1461 = vmatprep.subr.bf16.mxu0 0
          %1462 = vmatpush1.bf16.msra.mxu0 %v1439
          %1463 = vmatprep.subr.bf16.mxu0 0
          %1464 = vmatpush1.bf16.msra.mxu0 %v1440
          %1465 = vmatprep.subr.bf16.mxu0 0
          %1466 = vmatpush1.bf16.msra.mxu0 0
          %1467 = vmatprep.subr.bf16.mxu0 0
          %1468 = vmatpush1.bf16.msra.mxu0 0
          %1469 = vmatprep.subr.bf16.mxu0 0
          %1470 = vmatpush1.bf16.msra.mxu0 0
          %1471 = vmatprep.subr.bf16.mxu0 0
          %1472 = vmatpush1.bf16.msra.mxu0 0
          %1473 = vmatprep.subr.bf16.mxu0 0
          %1474 = vmatpush1.bf16.msra.mxu0 0
          %1475 = vmatprep.subr.bf16.mxu0 0
          %1476 = vmatpush1.bf16.msra.mxu0 0
          %1477 = vmatprep.subr.bf16.mxu0 0
          %1478 = vmatpush1.bf16.msra.mxu0 0
          %1479 = vmatprep.subr.bf16.mxu0 0
          %1480 = vmatpush1.bf16.msra.mxu0 0
          %1481 = vmatprep.mubr.bf16.mxu0 0
          %1482 = vmatmul.mubr.bf16.gmra.mrb[0].mxu0 %v1383
          %v1483 = vpop.f32.mrb[0].mxu0
          %v1484 = vadd.f32 0.0, %v1483
          %v1485 = vpop.f32.mrb[0].mxu0
          %v1486 = vpop.f32.mrb[0].mxu0
          %v1487 = vadd.f32 0.0, %v1486
          %v1488 = vpop.f32.mrb[0].mxu0
          %1489 = vdwg.mxu0
          %v1490 = vadd.f32 %v1375, %v1484
          %v1491 = vadd.f32 %v1378, %v1487
          %v1492 = vld [vmem:[%s1163 + $0x3] sm:$0xff]
          %v1493 = vld [vmem:[%s1163 + $0xb] sm:$0x3]
          %v1494 = vpack.c.bf16 %v1493, %v1492
          %s1495 = scalar_lea.vmem %s3, 192
          %v1496 = vld [vmem:[%s1495] sm:$0xf]
          %v1497 = vld [vmem:[%s1495 + $0x4] sm:$0xf]
          %v1498 = vld [vmem:[%s1495 + $0x8] sm:$0xf]
          %v1499 = vld [vmem:[%s1495 + $0xc] sm:$0xf]
          %v1500 = vld [vmem:[%s1495 + $0x10] sm:$0xf]
          %v1501 = vld [vmem:[%s1495 + $0x14] sm:$0xf]
          %v1502 = vld [vmem:[%s1495 + $0x18] sm:$0xf]
          %v1503 = vld [vmem:[%s1495 + $0x1c] sm:$0xf]
          %v1504 = vld [vmem:[%s1495 + $0x20] sm:$0xf]
          %v1505 = vld [vmem:[%s1495 + $0x24] sm:$0xf]
          %v1506 = vld [vmem:[%s1495 + $0x28] sm:$0xf]
          %v1507 = vld [vmem:[%s1495 + $0x2c] sm:$0xf]
          %v1508 = vld [vmem:[%s1495 + $0x30] sm:$0xf]
          %v1509 = vld [vmem:[%s1495 + $0x34] sm:$0xf]
          %v1510 = vld [vmem:[%s1495 + $0x38] sm:$0xf]
          %v1511 = vld [vmem:[%s1495 + $0x3c] sm:$0xf]
          %v1528 = vunpack.c.l.b16 %v1496
          %v1529 = vunpack.c.l.b16 %v1497
          %v1530 = vunpack.c.l.b16 %v1498
          %v1531 = vunpack.c.l.b16 %v1499
          %v1532 = vunpack.c.l.b16 %v1500
          %v1533 = vunpack.c.l.b16 %v1501
          %v1534 = vunpack.c.l.b16 %v1502
          %v1535 = vunpack.c.l.b16 %v1503
          %v1536 = vunpack.c.l.b16 %v1504
          %v1537 = vunpack.c.l.b16 %v1505
          %v1538 = vunpack.c.l.b16 %v1506
          %v1539 = vunpack.c.l.b16 %v1507
          %v1540 = vunpack.c.l.b16 %v1508
          %v1541 = vunpack.c.l.b16 %v1509
          %v1542 = vunpack.c.l.b16 %v1510
          %v1543 = vunpack.c.l.b16 %v1511
          %v1544 = vpack.c.b16 %v1529, %v1528
          %v1545 = vpack.c.b16 %v1531, %v1530
          %v1546 = vpack.c.b16 %v1533, %v1532
          %v1547 = vpack.c.b16 %v1535, %v1534
          %v1548 = vpack.c.b16 %v1537, %v1536
          %v1549 = vpack.c.b16 %v1539, %v1538
          %v1550 = vpack.c.b16 %v1541, %v1540
          %v1551 = vpack.c.b16 %v1543, %v1542
          %1560 = vmatprep.subr.bf16.mxu0 0
          %1561 = vmatpush1.bf16.msra.mxu0 %v1544
          %1562 = vmatprep.subr.bf16.mxu0 0
          %1563 = vmatpush1.bf16.msra.mxu0 %v1545
          %1564 = vmatprep.subr.bf16.mxu0 0
          %1565 = vmatpush1.bf16.msra.mxu0 %v1546
          %1566 = vmatprep.subr.bf16.mxu0 0
          %1567 = vmatpush1.bf16.msra.mxu0 %v1547
          %1568 = vmatprep.subr.bf16.mxu0 0
          %1569 = vmatpush1.bf16.msra.mxu0 %v1548
          %1570 = vmatprep.subr.bf16.mxu0 0
          %1571 = vmatpush1.bf16.msra.mxu0 %v1549
          %1572 = vmatprep.subr.bf16.mxu0 0
          %1573 = vmatpush1.bf16.msra.mxu0 %v1550
          %1574 = vmatprep.subr.bf16.mxu0 0
          %1575 = vmatpush1.bf16.msra.mxu0 %v1551
          %1576 = vmatprep.subr.bf16.mxu0 0
          %1577 = vmatpush1.bf16.msra.mxu0 0
          %1578 = vmatprep.subr.bf16.mxu0 0
          %1579 = vmatpush1.bf16.msra.mxu0 0
          %1580 = vmatprep.subr.bf16.mxu0 0
          %1581 = vmatpush1.bf16.msra.mxu0 0
          %1582 = vmatprep.subr.bf16.mxu0 0
          %1583 = vmatpush1.bf16.msra.mxu0 0
          %1584 = vmatprep.subr.bf16.mxu0 0
          %1585 = vmatpush1.bf16.msra.mxu0 0
          %1586 = vmatprep.subr.bf16.mxu0 0
          %1587 = vmatpush1.bf16.msra.mxu0 0
          %1588 = vmatprep.subr.bf16.mxu0 0
          %1589 = vmatpush1.bf16.msra.mxu0 0
          %1590 = vmatprep.subr.bf16.mxu0 0
          %1591 = vmatpush1.bf16.msra.mxu0 0
          %1592 = vmatprep.mubr.bf16.mxu0 0
          %1593 = vmatmul.mubr.bf16.gmra.mrb[0].mxu0 %v1494
          %v1594 = vpop.f32.mrb[0].mxu0
          %v1595 = vadd.f32 0.0, %v1594
          %v1596 = vpop.f32.mrb[0].mxu0
          %v1597 = vpop.f32.mrb[0].mxu0
          %v1598 = vadd.f32 0.0, %v1597
          %v1599 = vpop.f32.mrb[0].mxu0
          %1600 = vdwg.mxu0
          %v1601 = vadd.f32 %v1490, %v1595
          %v1602 = vadd.f32 %v1491, %v1598
          %v1603 = vld [vmem:[%s1163 + $0x4] sm:$0xff]
          %v1604 = vld [vmem:[%s1163 + $0xc] sm:$0x3]
          %v1605 = vpack.c.bf16 %v1604, %v1603
          %s1606 = scalar_lea.vmem %s3, 256
          %v1607 = vld [vmem:[%s1606] sm:$0xf]
          %v1608 = vld [vmem:[%s1606 + $0x4] sm:$0xf]
          %v1609 = vld [vmem:[%s1606 + $0x8] sm:$0xf]
          %v1610 = vld [vmem:[%s1606 + $0xc] sm:$0xf]
          %v1611 = vld [vmem:[%s1606 + $0x10] sm:$0xf]
          %v1612 = vld [vmem:[%s1606 + $0x14] sm:$0xf]
          %v1613 = vld [vmem:[%s1606 + $0x18] sm:$0xf]
          %v1614 = vld [vmem:[%s1606 + $0x1c] sm:$0xf]
          %v1615 = vld [vmem:[%s1606 + $0x20] sm:$0xf]
          %v1616 = vld [vmem:[%s1606 + $0x24] sm:$0xf]
          %v1617 = vld [vmem:[%s1606 + $0x28] sm:$0xf]
          %v1618 = vld [vmem:[%s1606 + $0x2c] sm:$0xf]
          %v1619 = vld [vmem:[%s1606 + $0x30] sm:$0xf]
          %v1620 = vld [vmem:[%s1606 + $0x34] sm:$0xf]
          %v1621 = vld [vmem:[%s1606 + $0x38] sm:$0xf]
          %v1622 = vld [vmem:[%s1606 + $0x3c] sm:$0xf]
          %v1639 = vunpack.c.l.b16 %v1607
          %v1640 = vunpack.c.l.b16 %v1608
          %v1641 = vunpack.c.l.b16 %v1609
          %v1642 = vunpack.c.l.b16 %v1610
          %v1643 = vunpack.c.l.b16 %v1611
          %v1644 = vunpack.c.l.b16 %v1612
          %v1645 = vunpack.c.l.b16 %v1613
          %v1646 = vunpack.c.l.b16 %v1614
          %v1647 = vunpack.c.l.b16 %v1615
          %v1648 = vunpack.c.l.b16 %v1616
          %v1649 = vunpack.c.l.b16 %v1617
          %v1650 = vunpack.c.l.b16 %v1618
          %v1651 = vunpack.c.l.b16 %v1619
          %v1652 = vunpack.c.l.b16 %v1620
          %v1653 = vunpack.c.l.b16 %v1621
          %v1654 = vunpack.c.l.b16 %v1622
          %v1655 = vpack.c.b16 %v1640, %v1639
          %v1656 = vpack.c.b16 %v1642, %v1641
          %v1657 = vpack.c.b16 %v1644, %v1643
          %v1658 = vpack.c.b16 %v1646, %v1645
          %v1659 = vpack.c.b16 %v1648, %v1647
          %v1660 = vpack.c.b16 %v1650, %v1649
          %v1661 = vpack.c.b16 %v1652, %v1651
          %v1662 = vpack.c.b16 %v1654, %v1653
          %1671 = vmatprep.subr.bf16.mxu0 0
          %1672 = vmatpush1.bf16.msra.mxu0 %v1655
          %1673 = vmatprep.subr.bf16.mxu0 0
          %1674 = vmatpush1.bf16.msra.mxu0 %v1656
          %1675 = vmatprep.subr.bf16.mxu0 0
          %1676 = vmatpush1.bf16.msra.mxu0 %v1657
          %1677 = vmatprep.subr.bf16.mxu0 0
          %1678 = vmatpush1.bf16.msra.mxu0 %v1658
          %1679 = vmatprep.subr.bf16.mxu0 0
          %1680 = vmatpush1.bf16.msra.mxu0 %v1659
          %1681 = vmatprep.subr.bf16.mxu0 0
          %1682 = vmatpush1.bf16.msra.mxu0 %v1660
          %1683 = vmatprep.subr.bf16.mxu0 0
          %1684 = vmatpush1.bf16.msra.mxu0 %v1661
          %1685 = vmatprep.subr.bf16.mxu0 0
          %1686 = vmatpush1.bf16.msra.mxu0 %v1662
          %1687 = vmatprep.subr.bf16.mxu0 0
          %1688 = vmatpush1.bf16.msra.mxu0 0
          %1689 = vmatprep.subr.bf16.mxu0 0
          %1690 = vmatpush1.bf16.msra.mxu0 0
          %1691 = vmatprep.subr.bf16.mxu0 0
          %1692 = vmatpush1.bf16.msra.mxu0 0
          %1693 = vmatprep.subr.bf16.mxu0 0
          %1694 = vmatpush1.bf16.msra.mxu0 0
          %1695 = vmatprep.subr.bf16.mxu0 0
          %1696 = vmatpush1.bf16.msra.mxu0 0
          %1697 = vmatprep.subr.bf16.mxu0 0
          %1698 = vmatpush1.bf16.msra.mxu0 0
          %1699 = vmatprep.subr.bf16.mxu0 0
          %1700 = vmatpush1.bf16.msra.mxu0 0
          %1701 = vmatprep.subr.bf16.mxu0 0
          %1702 = vmatpush1.bf16.msra.mxu0 0
          %1703 = vmatprep.mubr.bf16.mxu0 0
          %1704 = vmatmul.mubr.bf16.gmra.mrb[0].mxu0 %v1605
          %v1705 = vpop.f32.mrb[0].mxu0
          %v1706 = vadd.f32 0.0, %v1705
          %v1707 = vpop.f32.mrb[0].mxu0
          %v1708 = vpop.f32.mrb[0].mxu0
          %v1709 = vadd.f32 0.0, %v1708
          %v1710 = vpop.f32.mrb[0].mxu0
          %1711 = vdwg.mxu0
          %v1712 = vadd.f32 %v1601, %v1706
          %v1713 = vadd.f32 %v1602, %v1709
          %s1714 = sadd.s32 %s1161, 1
          %s1715 = smul.u32 %s1714, 16
          %s1716 = scalar_lea.vmem [#allocation2], %s1715
          %v1717 = vld [vmem:[%s1716] sm:$0xff]
          %v1718 = vld [vmem:[%s1716 + $0x8] sm:$0x3]
          %v1719 = vpack.c.bf16 %v1718, %v1717
          %s1720 = scalar_lea.vmem %s3, 320
          %v1721 = vld [vmem:[%s1720] sm:$0xf]
          %v1722 = vld [vmem:[%s1720 + $0x4] sm:$0xf]
          %v1723 = vld [vmem:[%s1720 + $0x8] sm:$0xf]
          %v1724 = vld [vmem:[%s1720 + $0xc] sm:$0xf]
          %v1725 = vld [vmem:[%s1720 + $0x10] sm:$0xf]
          %v1726 = vld [vmem:[%s1720 + $0x14] sm:$0xf]
          %v1727 = vld [vmem:[%s1720 + $0x18] sm:$0xf]
          %v1728 = vld [vmem:[%s1720 + $0x1c] sm:$0xf]
          %v1729 = vld [vmem:[%s1720 + $0x20] sm:$0xf]
          %v1730 = vld [vmem:[%s1720 + $0x24] sm:$0xf]
          %v1731 = vld [vmem:[%s1720 + $0x28] sm:$0xf]
          %v1732 = vld [vmem:[%s1720 + $0x2c] sm:$0xf]
          %v1733 = vld [vmem:[%s1720 + $0x30] sm:$0xf]
          %v1734 = vld [vmem:[%s1720 + $0x34] sm:$0xf]
          %v1735 = vld [vmem:[%s1720 + $0x38] sm:$0xf]
          %v1736 = vld [vmem:[%s1720 + $0x3c] sm:$0xf]
          %v1753 = vunpack.c.l.b16 %v1721
          %v1754 = vunpack.c.l.b16 %v1722
          %v1755 = vunpack.c.l.b16 %v1723
          %v1756 = vunpack.c.l.b16 %v1724
          %v1757 = vunpack.c.l.b16 %v1725
          %v1758 = vunpack.c.l.b16 %v1726
          %v1759 = vunpack.c.l.b16 %v1727
          %v1760 = vunpack.c.l.b16 %v1728
          %v1761 = vunpack.c.l.b16 %v1729
          %v1762 = vunpack.c.l.b16 %v1730
          %v1763 = vunpack.c.l.b16 %v1731
          %v1764 = vunpack.c.l.b16 %v1732
          %v1765 = vunpack.c.l.b16 %v1733
          %v1766 = vunpack.c.l.b16 %v1734
          %v1767 = vunpack.c.l.b16 %v1735
          %v1768 = vunpack.c.l.b16 %v1736
          %v1769 = vpack.c.b16 %v1754, %v1753
          %v1770 = vpack.c.b16 %v1756, %v1755
          %v1771 = vpack.c.b16 %v1758, %v1757
          %v1772 = vpack.c.b16 %v1760, %v1759
          %v1773 = vpack.c.b16 %v1762, %v1761
          %v1774 = vpack.c.b16 %v1764, %v1763
          %v1775 = vpack.c.b16 %v1766, %v1765
          %v1776 = vpack.c.b16 %v1768, %v1767
          %1785 = vmatprep.subr.bf16.mxu0 0
          %1786 = vmatpush1.bf16.msra.mxu0 %v1769
          %1787 = vmatprep.subr.bf16.mxu0 0
          %1788 = vmatpush1.bf16.msra.mxu0 %v1770
          %1789 = vmatprep.subr.bf16.mxu0 0
          %1790 = vmatpush1.bf16.msra.mxu0 %v1771
          %1791 = vmatprep.subr.bf16.mxu0 0
          %1792 = vmatpush1.bf16.msra.mxu0 %v1772
          %1793 = vmatprep.subr.bf16.mxu0 0
          %1794 = vmatpush1.bf16.msra.mxu0 %v1773
          %1795 = vmatprep.subr.bf16.mxu0 0
          %1796 = vmatpush1.bf16.msra.mxu0 %v1774
          %1797 = vmatprep.subr.bf16.mxu0 0
          %1798 = vmatpush1.bf16.msra.mxu0 %v1775
          %1799 = vmatprep.subr.bf16.mxu0 0
          %1800 = vmatpush1.bf16.msra.mxu0 %v1776
          %1801 = vmatprep.subr.bf16.mxu0 0
          %1802 = vmatpush1.bf16.msra.mxu0 0
          %1803 = vmatprep.subr.bf16.mxu0 0
          %1804 = vmatpush1.bf16.msra.mxu0 0
          %1805 = vmatprep.subr.bf16.mxu0 0
          %1806 = vmatpush1.bf16.msra.mxu0 0
          %1807 = vmatprep.subr.bf16.mxu0 0
          %1808 = vmatpush1.bf16.msra.mxu0 0
          %1809 = vmatprep.subr.bf16.mxu0 0
          %1810 = vmatpush1.bf16.msra.mxu0 0
          %1811 = vmatprep.subr.bf16.mxu0 0
          %1812 = vmatpush1.bf16.msra.mxu0 0
          %1813 = vmatprep.subr.bf16.mxu0 0
          %1814 = vmatpush1.bf16.msra.mxu0 0
          %1815 = vmatprep.subr.bf16.mxu0 0
          %1816 = vmatpush1.bf16.msra.mxu0 0
          %1817 = vmatprep.mubr.bf16.mxu0 0
          %1818 = vmatmul.mubr.bf16.gmra.mrb[0].mxu0 %v1719
          %v1819 = vpop.f32.mrb[0].mxu0
          %v1820 = vadd.f32 0.0, %v1819
          %v1821 = vpop.f32.mrb[0].mxu0
          %v1822 = vpop.f32.mrb[0].mxu0
          %v1823 = vadd.f32 0.0, %v1822
          %v1824 = vpop.f32.mrb[0].mxu0
          %1825 = vdwg.mxu0
          %v1826 = vadd.f32 %v1712, %v1820
          %v1827 = vadd.f32 %v1713, %v1823
          %v1828 = vld [vmem:[%s1716 + $0x1] sm:$0xff]
          %v1829 = vld [vmem:[%s1716 + $0x9] sm:$0x3]
          %v1830 = vpack.c.bf16 %v1829, %v1828
          %s1831 = scalar_lea.vmem %s3, 384
          %v1832 = vld [vmem:[%s1831] sm:$0xf]
          %v1833 = vld [vmem:[%s1831 + $0x4] sm:$0xf]
          %v1834 = vld [vmem:[%s1831 + $0x8] sm:$0xf]
          %v1835 = vld [vmem:[%s1831 + $0xc] sm:$0xf]
          %v1836 = vld [vmem:[%s1831 + $0x10] sm:$0xf]
          %v1837 = vld [vmem:[%s1831 + $0x14] sm:$0xf]
          %v1838 = vld [vmem:[%s1831 + $0x18] sm:$0xf]
          %v1839 = vld [vmem:[%s1831 + $0x1c] sm:$0xf]
          %v1840 = vld [vmem:[%s1831 + $0x20] sm:$0xf]
          %v1841 = vld [vmem:[%s1831 + $0x24] sm:$0xf]
          %v1842 = vld [vmem:[%s1831 + $0x28] sm:$0xf]
          %v1843 = vld [vmem:[%s1831 + $0x2c] sm:$0xf]
          %v1844 = vld [vmem:[%s1831 + $0x30] sm:$0xf]
          %v1845 = vld [vmem:[%s1831 + $0x34] sm:$0xf]
          %v1846 = vld [vmem:[%s1831 + $0x38] sm:$0xf]
          %v1847 = vld [vmem:[%s1831 + $0x3c] sm:$0xf]
          %v1864 = vunpack.c.l.b16 %v1832
          %v1865 = vunpack.c.l.b16 %v1833
          %v1866 = vunpack.c.l.b16 %v1834
          %v1867 = vunpack.c.l.b16 %v1835
          %v1868 = vunpack.c.l.b16 %v1836
          %v1869 = vunpack.c.l.b16 %v1837
          %v1870 = vunpack.c.l.b16 %v1838
          %v1871 = vunpack.c.l.b16 %v1839
          %v1872 = vunpack.c.l.b16 %v1840
          %v1873 = vunpack.c.l.b16 %v1841
          %v1874 = vunpack.c.l.b16 %v1842
          %v1875 = vunpack.c.l.b16 %v1843
          %v1876 = vunpack.c.l.b16 %v1844
          %v1877 = vunpack.c.l.b16 %v1845
          %v1878 = vunpack.c.l.b16 %v1846
          %v1879 = vunpack.c.l.b16 %v1847
          %v1880 = vpack.c.b16 %v1865, %v1864
          %v1881 = vpack.c.b16 %v1867, %v1866
          %v1882 = vpack.c.b16 %v1869, %v1868
          %v1883 = vpack.c.b16 %v1871, %v1870
          %v1884 = vpack.c.b16 %v1873, %v1872
          %v1885 = vpack.c.b16 %v1875, %v1874
          %v1886 = vpack.c.b16 %v1877, %v1876
          %v1887 = vpack.c.b16 %v1879, %v1878
          %1896 = vmatprep.subr.bf16.mxu0 0
          %1897 = vmatpush1.bf16.msra.mxu0 %v1880
          %1898 = vmatprep.subr.bf16.mxu0 0
          %1899 = vmatpush1.bf16.msra.mxu0 %v1881
          %1900 = vmatprep.subr.bf16.mxu0 0
          %1901 = vmatpush1.bf16.msra.mxu0 %v1882
          %1902 = vmatprep.subr.bf16.mxu0 0
          %1903 = vmatpush1.bf16.msra.mxu0 %v1883
          %1904 = vmatprep.subr.bf16.mxu0 0
          %1905 = vmatpush1.bf16.msra.mxu0 %v1884
          %1906 = vmatprep.subr.bf16.mxu0 0
          %1907 = vmatpush1.bf16.msra.mxu0 %v1885
          %1908 = vmatprep.subr.bf16.mxu0 0
          %1909 = vmatpush1.bf16.msra.mxu0 %v1886
          %1910 = vmatprep.subr.bf16.mxu0 0
          %1911 = vmatpush1.bf16.msra.mxu0 %v1887
          %1912 = vmatprep.subr.bf16.mxu0 0
          %1913 = vmatpush1.bf16.msra.mxu0 0
          %1914 = vmatprep.subr.bf16.mxu0 0
          %1915 = vmatpush1.bf16.msra.mxu0 0
          %1916 = vmatprep.subr.bf16.mxu0 0
          %1917 = vmatpush1.bf16.msra.mxu0 0
          %1918 = vmatprep.subr.bf16.mxu0 0
          %1919 = vmatpush1.bf16.msra.mxu0 0
          %1920 = vmatprep.subr.bf16.mxu0 0
          %1921 = vmatpush1.bf16.msra.mxu0 0
          %1922 = vmatprep.subr.bf16.mxu0 0
          %1923 = vmatpush1.bf16.msra.mxu0 0
          %1924 = vmatprep.subr.bf16.mxu0 0
          %1925 = vmatpush1.bf16.msra.mxu0 0
          %1926 = vmatprep.subr.bf16.mxu0 0
          %1927 = vmatpush1.bf16.msra.mxu0 0
          %1928 = vmatprep.mubr.bf16.mxu0 0
          %1929 = vmatmul.mubr.bf16.gmra.mrb[0].mxu0 %v1830
          %v1930 = vpop.f32.mrb[0].mxu0
          %v1931 = vadd.f32 0.0, %v1930
          %v1932 = vpop.f32.mrb[0].mxu0
          %v1933 = vpop.f32.mrb[0].mxu0
          %v1934 = vadd.f32 0.0, %v1933
          %v1935 = vpop.f32.mrb[0].mxu0
          %1936 = vdwg.mxu0
          %v1937 = vadd.f32 %v1826, %v1931
          %v1938 = vadd.f32 %v1827, %v1934
          %v1939 = vld [vmem:[%s1716 + $0x2] sm:$0xff]
          %v1940 = vld [vmem:[%s1716 + $0xa] sm:$0x3]
          %v1941 = vpack.c.bf16 %v1940, %v1939
          %s1942 = scalar_lea.vmem %s3, 448
          %v1943 = vld [vmem:[%s1942] sm:$0xf]
          %v1944 = vld [vmem:[%s1942 + $0x4] sm:$0xf]
          %v1945 = vld [vmem:[%s1942 + $0x8] sm:$0xf]
          %v1946 = vld [vmem:[%s1942 + $0xc] sm:$0xf]
          %v1947 = vld [vmem:[%s1942 + $0x10] sm:$0xf]
          %v1948 = vld [vmem:[%s1942 + $0x14] sm:$0xf]
          %v1949 = vld [vmem:[%s1942 + $0x18] sm:$0xf]
          %v1950 = vld [vmem:[%s1942 + $0x1c] sm:$0xf]
          %v1951 = vld [vmem:[%s1942 + $0x20] sm:$0xf]
          %v1952 = vld [vmem:[%s1942 + $0x24] sm:$0xf]
          %v1953 = vld [vmem:[%s1942 + $0x28] sm:$0xf]
          %v1954 = vld [vmem:[%s1942 + $0x2c] sm:$0xf]
          %v1955 = vld [vmem:[%s1942 + $0x30] sm:$0xf]
          %v1956 = vld [vmem:[%s1942 + $0x34] sm:$0xf]
          %v1957 = vld [vmem:[%s1942 + $0x38] sm:$0xf]
          %v1958 = vld [vmem:[%s1942 + $0x3c] sm:$0xf]
          %v1975 = vunpack.c.l.b16 %v1943
          %v1976 = vunpack.c.l.b16 %v1944
          %v1977 = vunpack.c.l.b16 %v1945
          %v1978 = vunpack.c.l.b16 %v1946
          %v1979 = vunpack.c.l.b16 %v1947
          %v1980 = vunpack.c.l.b16 %v1948
          %v1981 = vunpack.c.l.b16 %v1949
          %v1982 = vunpack.c.l.b16 %v1950
          %v1983 = vunpack.c.l.b16 %v1951
          %v1984 = vunpack.c.l.b16 %v1952
          %v1985 = vunpack.c.l.b16 %v1953
          %v1986 = vunpack.c.l.b16 %v1954
          %v1987 = vunpack.c.l.b16 %v1955
          %v1988 = vunpack.c.l.b16 %v1956
          %v1989 = vunpack.c.l.b16 %v1957
          %v1990 = vunpack.c.l.b16 %v1958
          %v1991 = vpack.c.b16 %v1976, %v1975
          %v1992 = vpack.c.b16 %v1978, %v1977
          %v1993 = vpack.c.b16 %v1980, %v1979
          %v1994 = vpack.c.b16 %v1982, %v1981
          %v1995 = vpack.c.b16 %v1984, %v1983
          %v1996 = vpack.c.b16 %v1986, %v1985
          %v1997 = vpack.c.b16 %v1988, %v1987
          %v1998 = vpack.c.b16 %v1990, %v1989
          %2007 = vmatprep.subr.bf16.mxu0 0
          %2008 = vmatpush1.bf16.msra.mxu0 %v1991
          %2009 = vmatprep.subr.bf16.mxu0 0
          %2010 = vmatpush1.bf16.msra.mxu0 %v1992
          %2011 = vmatprep.subr.bf16.mxu0 0
          %2012 = vmatpush1.bf16.msra.mxu0 %v1993
          %2013 = vmatprep.subr.bf16.mxu0 0
          %2014 = vmatpush1.bf16.msra.mxu0 %v1994
          %2015 = vmatprep.subr.bf16.mxu0 0
          %2016 = vmatpush1.bf16.msra.mxu0 %v1995
          %2017 = vmatprep.subr.bf16.mxu0 0
          %2018 = vmatpush1.bf16.msra.mxu0 %v1996
          %2019 = vmatprep.subr.bf16.mxu0 0
          %2020 = vmatpush1.bf16.msra.mxu0 %v1997
          %2021 = vmatprep.subr.bf16.mxu0 0
          %2022 = vmatpush1.bf16.msra.mxu0 %v1998
          %2023 = vmatprep.subr.bf16.mxu0 0
          %2024 = vmatpush1.bf16.msra.mxu0 0
          %2025 = vmatprep.subr.bf16.mxu0 0
          %2026 = vmatpush1.bf16.msra.mxu0 0
          %2027 = vmatprep.subr.bf16.mxu0 0
          %2028 = vmatpush1.bf16.msra.mxu0 0
          %2029 = vmatprep.subr.bf16.mxu0 0
          %2030 = vmatpush1.bf16.msra.mxu0 0
          %2031 = vmatprep.subr.bf16.mxu0 0
          %2032 = vmatpush1.bf16.msra.mxu0 0
          %2033 = vmatprep.subr.bf16.mxu0 0
          %2034 = vmatpush1.bf16.msra.mxu0 0
          %2035 = vmatprep.subr.bf16.mxu0 0
          %2036 = vmatpush1.bf16.msra.mxu0 0
          %2037 = vmatprep.subr.bf16.mxu0 0
          %2038 = vmatpush1.bf16.msra.mxu0 0
          %2039 = vmatprep.mubr.bf16.mxu0 0
          %2040 = vmatmul.mubr.bf16.gmra.mrb[0].mxu0 %v1941
          %v2041 = vpop.f32.mrb[0].mxu0
          %v2042 = vadd.f32 0.0, %v2041
          %v2043 = vpop.f32.mrb[0].mxu0
          %v2044 = vpop.f32.mrb[0].mxu0
          %v2045 = vadd.f32 0.0, %v2044
          %v2046 = vpop.f32.mrb[0].mxu0
          %2047 = vdwg.mxu0
          %v2048 = vadd.f32 %v1937, %v2042
          %v2049 = vadd.f32 %v1938, %v2045
          %v2050 = vld [vmem:[%s1716 + $0x3] sm:$0xff]
          %v2051 = vld [vmem:[%s1716 + $0xb] sm:$0x3]
          %v2052 = vpack.c.bf16 %v2051, %v2050
          %s2053 = scalar_lea.vmem %s3, 512
          %v2054 = vld [vmem:[%s2053] sm:$0xf]
          %v2055 = vld [vmem:[%s2053 + $0x4] sm:$0xf]
          %v2056 = vld [vmem:[%s2053 + $0x8] sm:$0xf]
          %v2057 = vld [vmem:[%s2053 + $0xc] sm:$0xf]
          %v2058 = vld [vmem:[%s2053 + $0x10] sm:$0xf]
          %v2059 = vld [vmem:[%s2053 + $0x14] sm:$0xf]
          %v2060 = vld [vmem:[%s2053 + $0x18] sm:$0xf]
          %v2061 = vld [vmem:[%s2053 + $0x1c] sm:$0xf]
          %v2062 = vld [vmem:[%s2053 + $0x20] sm:$0xf]
          %v2063 = vld [vmem:[%s2053 + $0x24] sm:$0xf]
          %v2064 = vld [vmem:[%s2053 + $0x28] sm:$0xf]
          %v2065 = vld [vmem:[%s2053 + $0x2c] sm:$0xf]
          %v2066 = vld [vmem:[%s2053 + $0x30] sm:$0xf]
          %v2067 = vld [vmem:[%s2053 + $0x34] sm:$0xf]
          %v2068 = vld [vmem:[%s2053 + $0x38] sm:$0xf]
          %v2069 = vld [vmem:[%s2053 + $0x3c] sm:$0xf]
          %v2086 = vunpack.c.l.b16 %v2054
          %v2087 = vunpack.c.l.b16 %v2055
          %v2088 = vunpack.c.l.b16 %v2056
          %v2089 = vunpack.c.l.b16 %v2057
          %v2090 = vunpack.c.l.b16 %v2058
          %v2091 = vunpack.c.l.b16 %v2059
          %v2092 = vunpack.c.l.b16 %v2060
          %v2093 = vunpack.c.l.b16 %v2061
          %v2094 = vunpack.c.l.b16 %v2062
          %v2095 = vunpack.c.l.b16 %v2063
          %v2096 = vunpack.c.l.b16 %v2064
          %v2097 = vunpack.c.l.b16 %v2065
          %v2098 = vunpack.c.l.b16 %v2066
          %v2099 = vunpack.c.l.b16 %v2067
          %v2100 = vunpack.c.l.b16 %v2068
          %v2101 = vunpack.c.l.b16 %v2069
          %v2102 = vpack.c.b16 %v2087, %v2086
          %v2103 = vpack.c.b16 %v2089, %v2088
          %v2104 = vpack.c.b16 %v2091, %v2090
          %v2105 = vpack.c.b16 %v2093, %v2092
          %v2106 = vpack.c.b16 %v2095, %v2094
          %v2107 = vpack.c.b16 %v2097, %v2096
          %v2108 = vpack.c.b16 %v2099, %v2098
          %v2109 = vpack.c.b16 %v2101, %v2100
          %2118 = vmatprep.subr.bf16.mxu0 0
          %2119 = vmatpush1.bf16.msra.mxu0 %v2102
          %2120 = vmatprep.subr.bf16.mxu0 0
          %2121 = vmatpush1.bf16.msra.mxu0 %v2103
          %2122 = vmatprep.subr.bf16.mxu0 0
          %2123 = vmatpush1.bf16.msra.mxu0 %v2104
          %2124 = vmatprep.subr.bf16.mxu0 0
          %2125 = vmatpush1.bf16.msra.mxu0 %v2105
          %2126 = vmatprep.subr.bf16.mxu0 0
          %2127 = vmatpush1.bf16.msra.mxu0 %v2106
          %2128 = vmatprep.subr.bf16.mxu0 0
          %2129 = vmatpush1.bf16.msra.mxu0 %v2107
          %2130 = vmatprep.subr.bf16.mxu0 0
          %2131 = vmatpush1.bf16.msra.mxu0 %v2108
          %2132 = vmatprep.subr.bf16.mxu0 0
          %2133 = vmatpush1.bf16.msra.mxu0 %v2109
          %2134 = vmatprep.subr.bf16.mxu0 0
          %2135 = vmatpush1.bf16.msra.mxu0 0
          %2136 = vmatprep.subr.bf16.mxu0 0
          %2137 = vmatpush1.bf16.msra.mxu0 0
          %2138 = vmatprep.subr.bf16.mxu0 0
          %2139 = vmatpush1.bf16.msra.mxu0 0
          %2140 = vmatprep.subr.bf16.mxu0 0
          %2141 = vmatpush1.bf16.msra.mxu0 0
          %2142 = vmatprep.subr.bf16.mxu0 0
          %2143 = vmatpush1.bf16.msra.mxu0 0
          %2144 = vmatprep.subr.bf16.mxu0 0
          %2145 = vmatpush1.bf16.msra.mxu0 0
          %2146 = vmatprep.subr.bf16.mxu0 0
          %2147 = vmatpush1.bf16.msra.mxu0 0
          %2148 = vmatprep.subr.bf16.mxu0 0
          %2149 = vmatpush1.bf16.msra.mxu0 0
          %2150 = vmatprep.mubr.bf16.mxu0 0
          %2151 = vmatmul.mubr.bf16.gmra.mrb[0].mxu0 %v2052
          %v2152 = vpop.f32.mrb[0].mxu0
          %v2153 = vadd.f32 0.0, %v2152
          %v2154 = vpop.f32.mrb[0].mxu0
          %v2155 = vpop.f32.mrb[0].mxu0
          %v2156 = vadd.f32 0.0, %v2155
          %v2157 = vpop.f32.mrb[0].mxu0
          %2158 = vdwg.mxu0
          %v2159 = vadd.f32 %v2048, %v2153
          %v2160 = vadd.f32 %v2049, %v2156
          %v2161 = vld [vmem:[%s1716 + $0x4] sm:$0xff]
          %v2162 = vld [vmem:[%s1716 + $0xc] sm:$0x3]
          %v2163 = vpack.c.bf16 %v2162, %v2161
          %s2164 = scalar_lea.vmem %s3, 576
          %v2165 = vld [vmem:[%s2164] sm:$0xf]
          %v2166 = vld [vmem:[%s2164 + $0x4] sm:$0xf]
          %v2167 = vld [vmem:[%s2164 + $0x8] sm:$0xf]
          %v2168 = vld [vmem:[%s2164 + $0xc] sm:$0xf]
          %v2169 = vld [vmem:[%s2164 + $0x10] sm:$0xf]
          %v2170 = vld [vmem:[%s2164 + $0x14] sm:$0xf]
          %v2171 = vld [vmem:[%s2164 + $0x18] sm:$0xf]
          %v2172 = vld [vmem:[%s2164 + $0x1c] sm:$0xf]
          %v2173 = vld [vmem:[%s2164 + $0x20] sm:$0xf]
          %v2174 = vld [vmem:[%s2164 + $0x24] sm:$0xf]
          %v2175 = vld [vmem:[%s2164 + $0x28] sm:$0xf]
          %v2176 = vld [vmem:[%s2164 + $0x2c] sm:$0xf]
          %v2177 = vld [vmem:[%s2164 + $0x30] sm:$0xf]
          %v2178 = vld [vmem:[%s2164 + $0x34] sm:$0xf]
          %v2179 = vld [vmem:[%s2164 + $0x38] sm:$0xf]
          %v2180 = vld [vmem:[%s2164 + $0x3c] sm:$0xf]
          %v2197 = vunpack.c.l.b16 %v2165
          %v2198 = vunpack.c.l.b16 %v2166
          %v2199 = vunpack.c.l.b16 %v2167
          %v2200 = vunpack.c.l.b16 %v2168
          %v2201 = vunpack.c.l.b16 %v2169
          %v2202 = vunpack.c.l.b16 %v2170
          %v2203 = vunpack.c.l.b16 %v2171
          %v2204 = vunpack.c.l.b16 %v2172
          %v2205 = vunpack.c.l.b16 %v2173
          %v2206 = vunpack.c.l.b16 %v2174
          %v2207 = vunpack.c.l.b16 %v2175
          %v2208 = vunpack.c.l.b16 %v2176
          %v2209 = vunpack.c.l.b16 %v2177
          %v2210 = vunpack.c.l.b16 %v2178
          %v2211 = vunpack.c.l.b16 %v2179
          %v2212 = vunpack.c.l.b16 %v2180
          %v2213 = vpack.c.b16 %v2198, %v2197
          %v2214 = vpack.c.b16 %v2200, %v2199
          %v2215 = vpack.c.b16 %v2202, %v2201
          %v2216 = vpack.c.b16 %v2204, %v2203
          %v2217 = vpack.c.b16 %v2206, %v2205
          %v2218 = vpack.c.b16 %v2208, %v2207
          %v2219 = vpack.c.b16 %v2210, %v2209
          %v2220 = vpack.c.b16 %v2212, %v2211
          %2229 = vmatprep.subr.bf16.mxu0 0
          %2230 = vmatpush1.bf16.msra.mxu0 %v2213
          %2231 = vmatprep.subr.bf16.mxu0 0
          %2232 = vmatpush1.bf16.msra.mxu0 %v2214
          %2233 = vmatprep.subr.bf16.mxu0 0
          %2234 = vmatpush1.bf16.msra.mxu0 %v2215
          %2235 = vmatprep.subr.bf16.mxu0 0
          %2236 = vmatpush1.bf16.msra.mxu0 %v2216
          %2237 = vmatprep.subr.bf16.mxu0 0
          %2238 = vmatpush1.bf16.msra.mxu0 %v2217
          %2239 = vmatprep.subr.bf16.mxu0 0
          %2240 = vmatpush1.bf16.msra.mxu0 %v2218
          %2241 = vmatprep.subr.bf16.mxu0 0
          %2242 = vmatpush1.bf16.msra.mxu0 %v2219
          %2243 = vmatprep.subr.bf16.mxu0 0
          %2244 = vmatpush1.bf16.msra.mxu0 %v2220
          %2245 = vmatprep.subr.bf16.mxu0 0
          %2246 = vmatpush1.bf16.msra.mxu0 0
          %2247 = vmatprep.subr.bf16.mxu0 0
          %2248 = vmatpush1.bf16.msra.mxu0 0
          %2249 = vmatprep.subr.bf16.mxu0 0
          %2250 = vmatpush1.bf16.msra.mxu0 0
          %2251 = vmatprep.subr.bf16.mxu0 0
          %2252 = vmatpush1.bf16.msra.mxu0 0
          %2253 = vmatprep.subr.bf16.mxu0 0
          %2254 = vmatpush1.bf16.msra.mxu0 0
          %2255 = vmatprep.subr.bf16.mxu0 0
          %2256 = vmatpush1.bf16.msra.mxu0 0
          %2257 = vmatprep.subr.bf16.mxu0 0
          %2258 = vmatpush1.bf16.msra.mxu0 0
          %2259 = vmatprep.subr.bf16.mxu0 0
          %2260 = vmatpush1.bf16.msra.mxu0 0
          %2261 = vmatprep.mubr.bf16.mxu0 0
          %2262 = vmatmul.mubr.bf16.gmra.mrb[0].mxu0 %v2163
          %v2263 = vpop.f32.mrb[0].mxu0
          %v2264 = vadd.f32 0.0, %v2263
          %v2265 = vpop.f32.mrb[0].mxu0
          %v2266 = vpop.f32.mrb[0].mxu0
          %v2267 = vadd.f32 0.0, %v2266
          %v2268 = vpop.f32.mrb[0].mxu0
          %2269 = vdwg.mxu0
          %v2270 = vadd.f32 %v2159, %v2264
          %v2271 = vadd.f32 %v2160, %v2267
          %s2272 = sadd.s32 %s1161, 2
          %s2273 = smul.u32 %s2272, 16
          %s2274 = scalar_lea.vmem [#allocation2], %s2273
          %v2275 = vld [vmem:[%s2274] sm:$0xff]
          %v2276 = vld [vmem:[%s2274 + $0x8] sm:$0x3]
          %v2277 = vpack.c.bf16 %v2276, %v2275
          %s2278 = scalar_lea.vmem %s3, 640
          %v2279 = vld [vmem:[%s2278] sm:$0xf]
          %v2280 = vld [vmem:[%s2278 + $0x4] sm:$0xf]
          %v2281 = vld [vmem:[%s2278 + $0x8] sm:$0xf]
          %v2282 = vld [vmem:[%s2278 + $0xc] sm:$0xf]
          %v2283 = vld [vmem:[%s2278 + $0x10] sm:$0xf]
          %v2284 = vld [vmem:[%s2278 + $0x14] sm:$0xf]
          %v2285 = vld [vmem:[%s2278 + $0x18] sm:$0xf]
          %v2286 = vld [vmem:[%s2278 + $0x1c] sm:$0xf]
          %v2287 = vld [vmem:[%s2278 + $0x20] sm:$0xf]
          %v2288 = vld [vmem:[%s2278 + $0x24] sm:$0xf]
          %v2289 = vld [vmem:[%s2278 + $0x28] sm:$0xf]
          %v2290 = vld [vmem:[%s2278 + $0x2c] sm:$0xf]
          %v2291 = vld [vmem:[%s2278 + $0x30] sm:$0xf]
          %v2292 = vld [vmem:[%s2278 + $0x34] sm:$0xf]
          %v2293 = vld [vmem:[%s2278 + $0x38] sm:$0xf]
          %v2294 = vld [vmem:[%s2278 + $0x3c] sm:$0xf]
          %v2311 = vunpack.c.l.b16 %v2279
          %v2312 = vunpack.c.l.b16 %v2280
          %v2313 = vunpack.c.l.b16 %v2281
          %v2314 = vunpack.c.l.b16 %v2282
          %v2315 = vunpack.c.l.b16 %v2283
          %v2316 = vunpack.c.l.b16 %v2284
          %v2317 = vunpack.c.l.b16 %v2285
          %v2318 = vunpack.c.l.b16 %v2286
          %v2319 = vunpack.c.l.b16 %v2287
          %v2320 = vunpack.c.l.b16 %v2288
          %v2321 = vunpack.c.l.b16 %v2289
          %v2322 = vunpack.c.l.b16 %v2290
          %v2323 = vunpack.c.l.b16 %v2291
          %v2324 = vunpack.c.l.b16 %v2292
          %v2325 = vunpack.c.l.b16 %v2293
          %v2326 = vunpack.c.l.b16 %v2294
          %v2327 = vpack.c.b16 %v2312, %v2311
          %v2328 = vpack.c.b16 %v2314, %v2313
          %v2329 = vpack.c.b16 %v2316, %v2315
          %v2330 = vpack.c.b16 %v2318, %v2317
          %v2331 = vpack.c.b16 %v2320, %v2319
          %v2332 = vpack.c.b16 %v2322, %v2321
          %v2333 = vpack.c.b16 %v2324, %v2323
          %v2334 = vpack.c.b16 %v2326, %v2325
          %2343 = vmatprep.subr.bf16.mxu0 0
          %2344 = vmatpush1.bf16.msra.mxu0 %v2327
          %2345 = vmatprep.subr.bf16.mxu0 0
          %2346 = vmatpush1.bf16.msra.mxu0 %v2328
          %2347 = vmatprep.subr.bf16.mxu0 0
          %2348 = vmatpush1.bf16.msra.mxu0 %v2329
          %2349 = vmatprep.subr.bf16.mxu0 0
          %2350 = vmatpush1.bf16.msra.mxu0 %v2330
          %2351 = vmatprep.subr.bf16.mxu0 0
          %2352 = vmatpush1.bf16.msra.mxu0 %v2331
          %2353 = vmatprep.subr.bf16.mxu0 0
          %2354 = vmatpush1.bf16.msra.mxu0 %v2332
          %2355 = vmatprep.subr.bf16.mxu0 0
          %2356 = vmatpush1.bf16.msra.mxu0 %v2333
          %2357 = vmatprep.subr.bf16.mxu0 0
          %2358 = vmatpush1.bf16.msra.mxu0 %v2334
          %2359 = vmatprep.subr.bf16.mxu0 0
          %2360 = vmatpush1.bf16.msra.mxu0 0
          %2361 = vmatprep.subr.bf16.mxu0 0
          %2362 = vmatpush1.bf16.msra.mxu0 0
          %2363 = vmatprep.subr.bf16.mxu0 0
          %2364 = vmatpush1.bf16.msra.mxu0 0
          %2365 = vmatprep.subr.bf16.mxu0 0
          %2366 = vmatpush1.bf16.msra.mxu0 0
          %2367 = vmatprep.subr.bf16.mxu0 0
          %2368 = vmatpush1.bf16.msra.mxu0 0
          %2369 = vmatprep.subr.bf16.mxu0 0
          %2370 = vmatpush1.bf16.msra.mxu0 0
          %2371 = vmatprep.subr.bf16.mxu0 0
          %2372 = vmatpush1.bf16.msra.mxu0 0
          %2373 = vmatprep.subr.bf16.mxu0 0
          %2374 = vmatpush1.bf16.msra.mxu0 0
          %2375 = vmatprep.mubr.bf16.mxu0 0
          %2376 = vmatmul.mubr.bf16.gmra.mrb[0].mxu0 %v2277
          %v2377 = vpop.f32.mrb[0].mxu0
          %v2378 = vadd.f32 0.0, %v2377
          %v2379 = vpop.f32.mrb[0].mxu0
          %v2380 = vpop.f32.mrb[0].mxu0
          %v2381 = vadd.f32 0.0, %v2380
          %v2382 = vpop.f32.mrb[0].mxu0
          %2383 = vdwg.mxu0
          %v2384 = vadd.f32 %v2270, %v2378
          %v2385 = vadd.f32 %v2271, %v2381
          %v2386 = vld [vmem:[%s2274 + $0x1] sm:$0xff]
          %v2387 = vld [vmem:[%s2274 + $0x9] sm:$0x3]
          %v2388 = vpack.c.bf16 %v2387, %v2386
          %s2389 = scalar_lea.vmem %s3, 704
          %v2390 = vld [vmem:[%s2389] sm:$0xf]
          %v2391 = vld [vmem:[%s2389 + $0x4] sm:$0xf]
          %v2392 = vld [vmem:[%s2389 + $0x8] sm:$0xf]
          %v2393 = vld [vmem:[%s2389 + $0xc] sm:$0xf]
          %v2394 = vld [vmem:[%s2389 + $0x10] sm:$0xf]
          %v2395 = vld [vmem:[%s2389 + $0x14] sm:$0xf]
          %v2396 = vld [vmem:[%s2389 + $0x18] sm:$0xf]
          %v2397 = vld [vmem:[%s2389 + $0x1c] sm:$0xf]
          %v2398 = vld [vmem:[%s2389 + $0x20] sm:$0xf]
          %v2399 = vld [vmem:[%s2389 + $0x24] sm:$0xf]
          %v2400 = vld [vmem:[%s2389 + $0x28] sm:$0xf]
          %v2401 = vld [vmem:[%s2389 + $0x2c] sm:$0xf]
          %v2402 = vld [vmem:[%s2389 + $0x30] sm:$0xf]
          %v2403 = vld [vmem:[%s2389 + $0x34] sm:$0xf]
          %v2404 = vld [vmem:[%s2389 + $0x38] sm:$0xf]
          %v2405 = vld [vmem:[%s2389 + $0x3c] sm:$0xf]
          %v2422 = vunpack.c.l.b16 %v2390
          %v2423 = vunpack.c.l.b16 %v2391
          %v2424 = vunpack.c.l.b16 %v2392
          %v2425 = vunpack.c.l.b16 %v2393
          %v2426 = vunpack.c.l.b16 %v2394
          %v2427 = vunpack.c.l.b16 %v2395
          %v2428 = vunpack.c.l.b16 %v2396
          %v2429 = vunpack.c.l.b16 %v2397
          %v2430 = vunpack.c.l.b16 %v2398
          %v2431 = vunpack.c.l.b16 %v2399
          %v2432 = vunpack.c.l.b16 %v2400
          %v2433 = vunpack.c.l.b16 %v2401
          %v2434 = vunpack.c.l.b16 %v2402
          %v2435 = vunpack.c.l.b16 %v2403
          %v2436 = vunpack.c.l.b16 %v2404
          %v2437 = vunpack.c.l.b16 %v2405
          %v2438 = vpack.c.b16 %v2423, %v2422
          %v2439 = vpack.c.b16 %v2425, %v2424
          %v2440 = vpack.c.b16 %v2427, %v2426
          %v2441 = vpack.c.b16 %v2429, %v2428
          %v2442 = vpack.c.b16 %v2431, %v2430
          %v2443 = vpack.c.b16 %v2433, %v2432
          %v2444 = vpack.c.b16 %v2435, %v2434
          %v2445 = vpack.c.b16 %v2437, %v2436
          %2454 = vmatprep.subr.bf16.mxu0 0
          %2455 = vmatpush1.bf16.msra.mxu0 %v2438
          %2456 = vmatprep.subr.bf16.mxu0 0
          %2457 = vmatpush1.bf16.msra.mxu0 %v2439
          %2458 = vmatprep.subr.bf16.mxu0 0
          %2459 = vmatpush1.bf16.msra.mxu0 %v2440
          %2460 = vmatprep.subr.bf16.mxu0 0
          %2461 = vmatpush1.bf16.msra.mxu0 %v2441
          %2462 = vmatprep.subr.bf16.mxu0 0
          %2463 = vmatpush1.bf16.msra.mxu0 %v2442
          %2464 = vmatprep.subr.bf16.mxu0 0
          %2465 = vmatpush1.bf16.msra.mxu0 %v2443
          %2466 = vmatprep.subr.bf16.mxu0 0
          %2467 = vmatpush1.bf16.msra.mxu0 %v2444
          %2468 = vmatprep.subr.bf16.mxu0 0
          %2469 = vmatpush1.bf16.msra.mxu0 %v2445
          %2470 = vmatprep.subr.bf16.mxu0 0
          %2471 = vmatpush1.bf16.msra.mxu0 0
          %2472 = vmatprep.subr.bf16.mxu0 0
          %2473 = vmatpush1.bf16.msra.mxu0 0
          %2474 = vmatprep.subr.bf16.mxu0 0
          %2475 = vmatpush1.bf16.msra.mxu0 0
          %2476 = vmatprep.subr.bf16.mxu0 0
          %2477 = vmatpush1.bf16.msra.mxu0 0
          %2478 = vmatprep.subr.bf16.mxu0 0
          %2479 = vmatpush1.bf16.msra.mxu0 0
          %2480 = vmatprep.subr.bf16.mxu0 0
          %2481 = vmatpush1.bf16.msra.mxu0 0
          %2482 = vmatprep.subr.bf16.mxu0 0
          %2483 = vmatpush1.bf16.msra.mxu0 0
          %2484 = vmatprep.subr.bf16.mxu0 0
          %2485 = vmatpush1.bf16.msra.mxu0 0
          %2486 = vmatprep.mubr.bf16.mxu0 0
          %2487 = vmatmul.mubr.bf16.gmra.mrb[0].mxu0 %v2388
          %v2488 = vpop.f32.mrb[0].mxu0
          %v2489 = vadd.f32 0.0, %v2488
          %v2490 = vpop.f32.mrb[0].mxu0
          %v2491 = vpop.f32.mrb[0].mxu0
          %v2492 = vadd.f32 0.0, %v2491
          %v2493 = vpop.f32.mrb[0].mxu0
          %2494 = vdwg.mxu0
          %v2495 = vadd.f32 %v2384, %v2489
          %v2496 = vadd.f32 %v2385, %v2492
          %v2497 = vld [vmem:[%s2274 + $0x2] sm:$0xff]
          %v2498 = vld [vmem:[%s2274 + $0xa] sm:$0x3]
          %v2499 = vpack.c.bf16 %v2498, %v2497
          %s2500 = scalar_lea.vmem %s3, 768
          %v2501 = vld [vmem:[%s2500] sm:$0xf]
          %v2502 = vld [vmem:[%s2500 + $0x4] sm:$0xf]
          %v2503 = vld [vmem:[%s2500 + $0x8] sm:$0xf]
          %v2504 = vld [vmem:[%s2500 + $0xc] sm:$0xf]
          %v2505 = vld [vmem:[%s2500 + $0x10] sm:$0xf]
          %v2506 = vld [vmem:[%s2500 + $0x14] sm:$0xf]
          %v2507 = vld [vmem:[%s2500 + $0x18] sm:$0xf]
          %v2508 = vld [vmem:[%s2500 + $0x1c] sm:$0xf]
          %v2509 = vld [vmem:[%s2500 + $0x20] sm:$0xf]
          %v2510 = vld [vmem:[%s2500 + $0x24] sm:$0xf]
          %v2511 = vld [vmem:[%s2500 + $0x28] sm:$0xf]
          %v2512 = vld [vmem:[%s2500 + $0x2c] sm:$0xf]
          %v2513 = vld [vmem:[%s2500 + $0x30] sm:$0xf]
          %v2514 = vld [vmem:[%s2500 + $0x34] sm:$0xf]
          %v2515 = vld [vmem:[%s2500 + $0x38] sm:$0xf]
          %v2516 = vld [vmem:[%s2500 + $0x3c] sm:$0xf]
          %v2533 = vunpack.c.l.b16 %v2501
          %v2534 = vunpack.c.l.b16 %v2502
          %v2535 = vunpack.c.l.b16 %v2503
          %v2536 = vunpack.c.l.b16 %v2504
          %v2537 = vunpack.c.l.b16 %v2505
          %v2538 = vunpack.c.l.b16 %v2506
          %v2539 = vunpack.c.l.b16 %v2507
          %v2540 = vunpack.c.l.b16 %v2508
          %v2541 = vunpack.c.l.b16 %v2509
          %v2542 = vunpack.c.l.b16 %v2510
          %v2543 = vunpack.c.l.b16 %v2511
          %v2544 = vunpack.c.l.b16 %v2512
          %v2545 = vunpack.c.l.b16 %v2513
          %v2546 = vunpack.c.l.b16 %v2514
          %v2547 = vunpack.c.l.b16 %v2515
          %v2548 = vunpack.c.l.b16 %v2516
          %v2549 = vpack.c.b16 %v2534, %v2533
          %v2550 = vpack.c.b16 %v2536, %v2535
          %v2551 = vpack.c.b16 %v2538, %v2537
          %v2552 = vpack.c.b16 %v2540, %v2539
          %v2553 = vpack.c.b16 %v2542, %v2541
          %v2554 = vpack.c.b16 %v2544, %v2543
          %v2555 = vpack.c.b16 %v2546, %v2545
          %v2556 = vpack.c.b16 %v2548, %v2547
          %2565 = vmatprep.subr.bf16.mxu0 0
          %2566 = vmatpush1.bf16.msra.mxu0 %v2549
          %2567 = vmatprep.subr.bf16.mxu0 0
          %2568 = vmatpush1.bf16.msra.mxu0 %v2550
          %2569 = vmatprep.subr.bf16.mxu0 0
          %2570 = vmatpush1.bf16.msra.mxu0 %v2551
          %2571 = vmatprep.subr.bf16.mxu0 0
          %2572 = vmatpush1.bf16.msra.mxu0 %v2552
          %2573 = vmatprep.subr.bf16.mxu0 0
          %2574 = vmatpush1.bf16.msra.mxu0 %v2553
          %2575 = vmatprep.subr.bf16.mxu0 0
          %2576 = vmatpush1.bf16.msra.mxu0 %v2554
          %2577 = vmatprep.subr.bf16.mxu0 0
          %2578 = vmatpush1.bf16.msra.mxu0 %v2555
          %2579 = vmatprep.subr.bf16.mxu0 0
          %2580 = vmatpush1.bf16.msra.mxu0 %v2556
          %2581 = vmatprep.subr.bf16.mxu0 0
          %2582 = vmatpush1.bf16.msra.mxu0 0
          %2583 = vmatprep.subr.bf16.mxu0 0
          %2584 = vmatpush1.bf16.msra.mxu0 0
          %2585 = vmatprep.subr.bf16.mxu0 0
          %2586 = vmatpush1.bf16.msra.mxu0 0
          %2587 = vmatprep.subr.bf16.mxu0 0
          %2588 = vmatpush1.bf16.msra.mxu0 0
          %2589 = vmatprep.subr.bf16.mxu0 0
          %2590 = vmatpush1.bf16.msra.mxu0 0
          %2591 = vmatprep.subr.bf16.mxu0 0
          %2592 = vmatpush1.bf16.msra.mxu0 0
          %2593 = vmatprep.subr.bf16.mxu0 0
          %2594 = vmatpush1.bf16.msra.mxu0 0
          %2595 = vmatprep.subr.bf16.mxu0 0
          %2596 = vmatpush1.bf16.msra.mxu0 0
          %2597 = vmatprep.mubr.bf16.mxu0 0
          %2598 = vmatmul.mubr.bf16.gmra.mrb[0].mxu0 %v2499
          %v2599 = vpop.f32.mrb[0].mxu0
          %v2600 = vadd.f32 0.0, %v2599
          %v2601 = vpop.f32.mrb[0].mxu0
          %v2602 = vpop.f32.mrb[0].mxu0
          %v2603 = vadd.f32 0.0, %v2602
          %v2604 = vpop.f32.mrb[0].mxu0
          %2605 = vdwg.mxu0
          %v2606 = vadd.f32 %v2495, %v2600
          %v2607 = vadd.f32 %v2496, %v2603
          %v2608 = vld [vmem:[%s2274 + $0x3] sm:$0xff]
          %v2609 = vld [vmem:[%s2274 + $0xb] sm:$0x3]
          %v2610 = vpack.c.bf16 %v2609, %v2608
          %s2611 = scalar_lea.vmem %s3, 832
          %v2612 = vld [vmem:[%s2611] sm:$0xf]
          %v2613 = vld [vmem:[%s2611 + $0x4] sm:$0xf]
          %v2614 = vld [vmem:[%s2611 + $0x8] sm:$0xf]
          %v2615 = vld [vmem:[%s2611 + $0xc] sm:$0xf]
          %v2616 = vld [vmem:[%s2611 + $0x10] sm:$0xf]
          %v2617 = vld [vmem:[%s2611 + $0x14] sm:$0xf]
          %v2618 = vld [vmem:[%s2611 + $0x18] sm:$0xf]
          %v2619 = vld [vmem:[%s2611 + $0x1c] sm:$0xf]
          %v2620 = vld [vmem:[%s2611 + $0x20] sm:$0xf]
          %v2621 = vld [vmem:[%s2611 + $0x24] sm:$0xf]
          %v2622 = vld [vmem:[%s2611 + $0x28] sm:$0xf]
          %v2623 = vld [vmem:[%s2611 + $0x2c] sm:$0xf]
          %v2624 = vld [vmem:[%s2611 + $0x30] sm:$0xf]
          %v2625 = vld [vmem:[%s2611 + $0x34] sm:$0xf]
          %v2626 = vld [vmem:[%s2611 + $0x38] sm:$0xf]
          %v2627 = vld [vmem:[%s2611 + $0x3c] sm:$0xf]
          %v2644 = vunpack.c.l.b16 %v2612
          %v2645 = vunpack.c.l.b16 %v2613
          %v2646 = vunpack.c.l.b16 %v2614
          %v2647 = vunpack.c.l.b16 %v2615
          %v2648 = vunpack.c.l.b16 %v2616
          %v2649 = vunpack.c.l.b16 %v2617
          %v2650 = vunpack.c.l.b16 %v2618
          %v2651 = vunpack.c.l.b16 %v2619
          %v2652 = vunpack.c.l.b16 %v2620
          %v2653 = vunpack.c.l.b16 %v2621
          %v2654 = vunpack.c.l.b16 %v2622
          %v2655 = vunpack.c.l.b16 %v2623
          %v2656 = vunpack.c.l.b16 %v2624
          %v2657 = vunpack.c.l.b16 %v2625
          %v2658 = vunpack.c.l.b16 %v2626
          %v2659 = vunpack.c.l.b16 %v2627
          %v2660 = vpack.c.b16 %v2645, %v2644
          %v2661 = vpack.c.b16 %v2647, %v2646
          %v2662 = vpack.c.b16 %v2649, %v2648
          %v2663 = vpack.c.b16 %v2651, %v2650
          %v2664 = vpack.c.b16 %v2653, %v2652
          %v2665 = vpack.c.b16 %v2655, %v2654
          %v2666 = vpack.c.b16 %v2657, %v2656
          %v2667 = vpack.c.b16 %v2659, %v2658
          %2676 = vmatprep.subr.bf16.mxu0 0
          %2677 = vmatpush1.bf16.msra.mxu0 %v2660
          %2678 = vmatprep.subr.bf16.mxu0 0
          %2679 = vmatpush1.bf16.msra.mxu0 %v2661
          %2680 = vmatprep.subr.bf16.mxu0 0
          %2681 = vmatpush1.bf16.msra.mxu0 %v2662
          %2682 = vmatprep.subr.bf16.mxu0 0
          %2683 = vmatpush1.bf16.msra.mxu0 %v2663
          %2684 = vmatprep.subr.bf16.mxu0 0
          %2685 = vmatpush1.bf16.msra.mxu0 %v2664
          %2686 = vmatprep.subr.bf16.mxu0 0
          %2687 = vmatpush1.bf16.msra.mxu0 %v2665
          %2688 = vmatprep.subr.bf16.mxu0 0
          %2689 = vmatpush1.bf16.msra.mxu0 %v2666
          %2690 = vmatprep.subr.bf16.mxu0 0
          %2691 = vmatpush1.bf16.msra.mxu0 %v2667
          %2692 = vmatprep.subr.bf16.mxu0 0
          %2693 = vmatpush1.bf16.msra.mxu0 0
          %2694 = vmatprep.subr.bf16.mxu0 0
          %2695 = vmatpush1.bf16.msra.mxu0 0
          %2696 = vmatprep.subr.bf16.mxu0 0
          %2697 = vmatpush1.bf16.msra.mxu0 0
          %2698 = vmatprep.subr.bf16.mxu0 0
          %2699 = vmatpush1.bf16.msra.mxu0 0
          %2700 = vmatprep.subr.bf16.mxu0 0
          %2701 = vmatpush1.bf16.msra.mxu0 0
          %2702 = vmatprep.subr.bf16.mxu0 0
          %2703 = vmatpush1.bf16.msra.mxu0 0
          %2704 = vmatprep.subr.bf16.mxu0 0
          %2705 = vmatpush1.bf16.msra.mxu0 0
          %2706 = vmatprep.subr.bf16.mxu0 0
          %2707 = vmatpush1.bf16.msra.mxu0 0
          %2708 = vmatprep.mubr.bf16.mxu0 0
          %2709 = vmatmul.mubr.bf16.gmra.mrb[0].mxu0 %v2610
          %v2710 = vpop.f32.mrb[0].mxu0
          %v2711 = vadd.f32 0.0, %v2710
          %v2712 = vpop.f32.mrb[0].mxu0
          %v2713 = vpop.f32.mrb[0].mxu0
          %v2714 = vadd.f32 0.0, %v2713
          %v2715 = vpop.f32.mrb[0].mxu0
          %2716 = vdwg.mxu0
          %v2717 = vadd.f32 %v2606, %v2711
          %v2718 = vadd.f32 %v2607, %v2714
          %v2719 = vld [vmem:[%s2274 + $0x4] sm:$0xff]
          %v2720 = vld [vmem:[%s2274 + $0xc] sm:$0x3]
          %v2721 = vpack.c.bf16 %v2720, %v2719
          %s2722 = scalar_lea.vmem %s3, 896
          %v2723 = vld [vmem:[%s2722] sm:$0xf]
          %v2724 = vld [vmem:[%s2722 + $0x4] sm:$0xf]
          %v2725 = vld [vmem:[%s2722 + $0x8] sm:$0xf]
          %v2726 = vld [vmem:[%s2722 + $0xc] sm:$0xf]
          %v2727 = vld [vmem:[%s2722 + $0x10] sm:$0xf]
          %v2728 = vld [vmem:[%s2722 + $0x14] sm:$0xf]
          %v2729 = vld [vmem:[%s2722 + $0x18] sm:$0xf]
          %v2730 = vld [vmem:[%s2722 + $0x1c] sm:$0xf]
          %v2731 = vld [vmem:[%s2722 + $0x20] sm:$0xf]
          %v2732 = vld [vmem:[%s2722 + $0x24] sm:$0xf]
          %v2733 = vld [vmem:[%s2722 + $0x28] sm:$0xf]
          %v2734 = vld [vmem:[%s2722 + $0x2c] sm:$0xf]
          %v2735 = vld [vmem:[%s2722 + $0x30] sm:$0xf]
          %v2736 = vld [vmem:[%s2722 + $0x34] sm:$0xf]
          %v2737 = vld [vmem:[%s2722 + $0x38] sm:$0xf]
          %v2738 = vld [vmem:[%s2722 + $0x3c] sm:$0xf]
          %v2755 = vunpack.c.l.b16 %v2723
          %v2756 = vunpack.c.l.b16 %v2724
          %v2757 = vunpack.c.l.b16 %v2725
          %v2758 = vunpack.c.l.b16 %v2726
          %v2759 = vunpack.c.l.b16 %v2727
          %v2760 = vunpack.c.l.b16 %v2728
          %v2761 = vunpack.c.l.b16 %v2729
          %v2762 = vunpack.c.l.b16 %v2730
          %v2763 = vunpack.c.l.b16 %v2731
          %v2764 = vunpack.c.l.b16 %v2732
          %v2765 = vunpack.c.l.b16 %v2733
          %v2766 = vunpack.c.l.b16 %v2734
          %v2767 = vunpack.c.l.b16 %v2735
          %v2768 = vunpack.c.l.b16 %v2736
          %v2769 = vunpack.c.l.b16 %v2737
          %v2770 = vunpack.c.l.b16 %v2738
          %v2771 = vpack.c.b16 %v2756, %v2755
          %v2772 = vpack.c.b16 %v2758, %v2757
          %v2773 = vpack.c.b16 %v2760, %v2759
          %v2774 = vpack.c.b16 %v2762, %v2761
          %v2775 = vpack.c.b16 %v2764, %v2763
          %v2776 = vpack.c.b16 %v2766, %v2765
          %v2777 = vpack.c.b16 %v2768, %v2767
          %v2778 = vpack.c.b16 %v2770, %v2769
          %2787 = vmatprep.subr.bf16.mxu0 0
          %2788 = vmatpush1.bf16.msra.mxu0 %v2771
          %2789 = vmatprep.subr.bf16.mxu0 0
          %2790 = vmatpush1.bf16.msra.mxu0 %v2772
          %2791 = vmatprep.subr.bf16.mxu0 0
          %2792 = vmatpush1.bf16.msra.mxu0 %v2773
          %2793 = vmatprep.subr.bf16.mxu0 0
          %2794 = vmatpush1.bf16.msra.mxu0 %v2774
          %2795 = vmatprep.subr.bf16.mxu0 0
          %2796 = vmatpush1.bf16.msra.mxu0 %v2775
          %2797 = vmatprep.subr.bf16.mxu0 0
          %2798 = vmatpush1.bf16.msra.mxu0 %v2776
          %2799 = vmatprep.subr.bf16.mxu0 0
          %2800 = vmatpush1.bf16.msra.mxu0 %v2777
          %2801 = vmatprep.subr.bf16.mxu0 0
          %2802 = vmatpush1.bf16.msra.mxu0 %v2778
          %2803 = vmatprep.subr.bf16.mxu0 0
          %2804 = vmatpush1.bf16.msra.mxu0 0
          %2805 = vmatprep.subr.bf16.mxu0 0
          %2806 = vmatpush1.bf16.msra.mxu0 0
          %2807 = vmatprep.subr.bf16.mxu0 0
          %2808 = vmatpush1.bf16.msra.mxu0 0
          %2809 = vmatprep.subr.bf16.mxu0 0
          %2810 = vmatpush1.bf16.msra.mxu0 0
          %2811 = vmatprep.subr.bf16.mxu0 0
          %2812 = vmatpush1.bf16.msra.mxu0 0
          %2813 = vmatprep.subr.bf16.mxu0 0
          %2814 = vmatpush1.bf16.msra.mxu0 0
          %2815 = vmatprep.subr.bf16.mxu0 0
          %2816 = vmatpush1.bf16.msra.mxu0 0
          %2817 = vmatprep.subr.bf16.mxu0 0
          %2818 = vmatpush1.bf16.msra.mxu0 0
          %2819 = vmatprep.mubr.bf16.mxu0 0
          %2820 = vmatmul.mubr.bf16.gmra.mrb[0].mxu0 %v2721
          %v2821 = vpop.f32.mrb[0].mxu0
          %v2822 = vadd.f32 0.0, %v2821
          %v2823 = vpop.f32.mrb[0].mxu0
          %v2824 = vpop.f32.mrb[0].mxu0
          %v2825 = vadd.f32 0.0, %v2824
          %v2826 = vpop.f32.mrb[0].mxu0
          %2827 = vdwg.mxu0
          %v2828 = vadd.f32 %v2717, %v2822
          %v2829 = vadd.f32 %v2718, %v2825
          %s2830 = sadd.s32 %s1161, 3
          %s2831 = smul.u32 %s2830, 16
          %s2832 = scalar_lea.vmem [#allocation2], %s2831
          %v2833 = vld [vmem:[%s2832] sm:$0xff]
          %v2834 = vld [vmem:[%s2832 + $0x8] sm:$0x3]
          %v2835 = vpack.c.bf16 %v2834, %v2833
          %s2836 = scalar_lea.vmem %s3, 960
          %v2837 = vld [vmem:[%s2836] sm:$0xf]
          %v2838 = vld [vmem:[%s2836 + $0x4] sm:$0xf]
          %v2839 = vld [vmem:[%s2836 + $0x8] sm:$0xf]
          %v2840 = vld [vmem:[%s2836 + $0xc] sm:$0xf]
          %v2841 = vld [vmem:[%s2836 + $0x10] sm:$0xf]
          %v2842 = vld [vmem:[%s2836 + $0x14] sm:$0xf]
          %v2843 = vld [vmem:[%s2836 + $0x18] sm:$0xf]
          %v2844 = vld [vmem:[%s2836 + $0x1c] sm:$0xf]
          %v2845 = vld [vmem:[%s2836 + $0x20] sm:$0xf]
          %v2846 = vld [vmem:[%s2836 + $0x24] sm:$0xf]
          %v2847 = vld [vmem:[%s2836 + $0x28] sm:$0xf]
          %v2848 = vld [vmem:[%s2836 + $0x2c] sm:$0xf]
          %v2849 = vld [vmem:[%s2836 + $0x30] sm:$0xf]
          %v2850 = vld [vmem:[%s2836 + $0x34] sm:$0xf]
          %v2851 = vld [vmem:[%s2836 + $0x38] sm:$0xf]
          %v2852 = vld [vmem:[%s2836 + $0x3c] sm:$0xf]
          %v2869 = vunpack.c.l.b16 %v2837
          %v2870 = vunpack.c.l.b16 %v2838
          %v2871 = vunpack.c.l.b16 %v2839
          %v2872 = vunpack.c.l.b16 %v2840
          %v2873 = vunpack.c.l.b16 %v2841
          %v2874 = vunpack.c.l.b16 %v2842
          %v2875 = vunpack.c.l.b16 %v2843
          %v2876 = vunpack.c.l.b16 %v2844
          %v2877 = vunpack.c.l.b16 %v2845
          %v2878 = vunpack.c.l.b16 %v2846
          %v2879 = vunpack.c.l.b16 %v2847
          %v2880 = vunpack.c.l.b16 %v2848
          %v2881 = vunpack.c.l.b16 %v2849
          %v2882 = vunpack.c.l.b16 %v2850
          %v2883 = vunpack.c.l.b16 %v2851
          %v2884 = vunpack.c.l.b16 %v2852
          %v2885 = vpack.c.b16 %v2870, %v2869
          %v2886 = vpack.c.b16 %v2872, %v2871
          %v2887 = vpack.c.b16 %v2874, %v2873
          %v2888 = vpack.c.b16 %v2876, %v2875
          %v2889 = vpack.c.b16 %v2878, %v2877
          %v2890 = vpack.c.b16 %v2880, %v2879
          %v2891 = vpack.c.b16 %v2882, %v2881
          %v2892 = vpack.c.b16 %v2884, %v2883
          %2901 = vmatprep.subr.bf16.mxu0 0
          %2902 = vmatpush1.bf16.msra.mxu0 %v2885
          %2903 = vmatprep.subr.bf16.mxu0 0
          %2904 = vmatpush1.bf16.msra.mxu0 %v2886
          %2905 = vmatprep.subr.bf16.mxu0 0
          %2906 = vmatpush1.bf16.msra.mxu0 %v2887
          %2907 = vmatprep.subr.bf16.mxu0 0
          %2908 = vmatpush1.bf16.msra.mxu0 %v2888
          %2909 = vmatprep.subr.bf16.mxu0 0
          %2910 = vmatpush1.bf16.msra.mxu0 %v2889
          %2911 = vmatprep.subr.bf16.mxu0 0
          %2912 = vmatpush1.bf16.msra.mxu0 %v2890
          %2913 = vmatprep.subr.bf16.mxu0 0
          %2914 = vmatpush1.bf16.msra.mxu0 %v2891
          %2915 = vmatprep.subr.bf16.mxu0 0
          %2916 = vmatpush1.bf16.msra.mxu0 %v2892
          %2917 = vmatprep.subr.bf16.mxu0 0
          %2918 = vmatpush1.bf16.msra.mxu0 0
          %2919 = vmatprep.subr.bf16.mxu0 0
          %2920 = vmatpush1.bf16.msra.mxu0 0
          %2921 = vmatprep.subr.bf16.mxu0 0
          %2922 = vmatpush1.bf16.msra.mxu0 0
          %2923 = vmatprep.subr.bf16.mxu0 0
          %2924 = vmatpush1.bf16.msra.mxu0 0
          %2925 = vmatprep.subr.bf16.mxu0 0
          %2926 = vmatpush1.bf16.msra.mxu0 0
          %2927 = vmatprep.subr.bf16.mxu0 0
          %2928 = vmatpush1.bf16.msra.mxu0 0
          %2929 = vmatprep.subr.bf16.mxu0 0
          %2930 = vmatpush1.bf16.msra.mxu0 0
          %2931 = vmatprep.subr.bf16.mxu0 0
          %2932 = vmatpush1.bf16.msra.mxu0 0
          %2933 = vmatprep.mubr.bf16.mxu0 0
          %2934 = vmatmul.mubr.bf16.gmra.mrb[0].mxu0 %v2835
          %v2935 = vpop.f32.mrb[0].mxu0
          %v2936 = vadd.f32 0.0, %v2935
          %v2937 = vpop.f32.mrb[0].mxu0
          %v2938 = vpop.f32.mrb[0].mxu0
          %v2939 = vadd.f32 0.0, %v2938
          %v2940 = vpop.f32.mrb[0].mxu0
          %2941 = vdwg.mxu0
          %v2942 = vadd.f32 %v2828, %v2936
          %v2943 = vadd.f32 %v2829, %v2939
          %v2944 = vld [vmem:[%s2832 + $0x1] sm:$0xff]
          %v2945 = vld [vmem:[%s2832 + $0x9] sm:$0x3]
          %v2946 = vpack.c.bf16 %v2945, %v2944
          %s2947 = scalar_lea.vmem %s3, 1024
          %v2948 = vld [vmem:[%s2947] sm:$0xf]
          %v2949 = vld [vmem:[%s2947 + $0x4] sm:$0xf]
          %v2950 = vld [vmem:[%s2947 + $0x8] sm:$0xf]
          %v2951 = vld [vmem:[%s2947 + $0xc] sm:$0xf]
          %v2952 = vld [vmem:[%s2947 + $0x10] sm:$0xf]
          %v2953 = vld [vmem:[%s2947 + $0x14] sm:$0xf]
          %v2954 = vld [vmem:[%s2947 + $0x18] sm:$0xf]
          %v2955 = vld [vmem:[%s2947 + $0x1c] sm:$0xf]
          %v2956 = vld [vmem:[%s2947 + $0x20] sm:$0xf]
          %v2957 = vld [vmem:[%s2947 + $0x24] sm:$0xf]
          %v2958 = vld [vmem:[%s2947 + $0x28] sm:$0xf]
          %v2959 = vld [vmem:[%s2947 + $0x2c] sm:$0xf]
          %v2960 = vld [vmem:[%s2947 + $0x30] sm:$0xf]
          %v2961 = vld [vmem:[%s2947 + $0x34] sm:$0xf]
          %v2962 = vld [vmem:[%s2947 + $0x38] sm:$0xf]
          %v2963 = vld [vmem:[%s2947 + $0x3c] sm:$0xf]
          %v2980 = vunpack.c.l.b16 %v2948
          %v2981 = vunpack.c.l.b16 %v2949
          %v2982 = vunpack.c.l.b16 %v2950
          %v2983 = vunpack.c.l.b16 %v2951
          %v2984 = vunpack.c.l.b16 %v2952
          %v2985 = vunpack.c.l.b16 %v2953
          %v2986 = vunpack.c.l.b16 %v2954
          %v2987 = vunpack.c.l.b16 %v2955
          %v2988 = vunpack.c.l.b16 %v2956
          %v2989 = vunpack.c.l.b16 %v2957
          %v2990 = vunpack.c.l.b16 %v2958
          %v2991 = vunpack.c.l.b16 %v2959
          %v2992 = vunpack.c.l.b16 %v2960
          %v2993 = vunpack.c.l.b16 %v2961
          %v2994 = vunpack.c.l.b16 %v2962
          %v2995 = vunpack.c.l.b16 %v2963
          %v2996 = vpack.c.b16 %v2981, %v2980
          %v2997 = vpack.c.b16 %v2983, %v2982
          %v2998 = vpack.c.b16 %v2985, %v2984
          %v2999 = vpack.c.b16 %v2987, %v2986
          %v3000 = vpack.c.b16 %v2989, %v2988
          %v3001 = vpack.c.b16 %v2991, %v2990
          %v3002 = vpack.c.b16 %v2993, %v2992
          %v3003 = vpack.c.b16 %v2995, %v2994
          %3012 = vmatprep.subr.bf16.mxu0 0
          %3013 = vmatpush1.bf16.msra.mxu0 %v2996
          %3014 = vmatprep.subr.bf16.mxu0 0
          %3015 = vmatpush1.bf16.msra.mxu0 %v2997
          %3016 = vmatprep.subr.bf16.mxu0 0
          %3017 = vmatpush1.bf16.msra.mxu0 %v2998
          %3018 = vmatprep.subr.bf16.mxu0 0
          %3019 = vmatpush1.bf16.msra.mxu0 %v2999
          %3020 = vmatprep.subr.bf16.mxu0 0
          %3021 = vmatpush1.bf16.msra.mxu0 %v3000
          %3022 = vmatprep.subr.bf16.mxu0 0
          %3023 = vmatpush1.bf16.msra.mxu0 %v3001
          %3024 = vmatprep.subr.bf16.mxu0 0
          %3025 = vmatpush1.bf16.msra.mxu0 %v3002
          %3026 = vmatprep.subr.bf16.mxu0 0
          %3027 = vmatpush1.bf16.msra.mxu0 %v3003
          %3028 = vmatprep.subr.bf16.mxu0 0
          %3029 = vmatpush1.bf16.msra.mxu0 0
          %3030 = vmatprep.subr.bf16.mxu0 0
          %3031 = vmatpush1.bf16.msra.mxu0 0
          %3032 = vmatprep.subr.bf16.mxu0 0
          %3033 = vmatpush1.bf16.msra.mxu0 0
          %3034 = vmatprep.subr.bf16.mxu0 0
          %3035 = vmatpush1.bf16.msra.mxu0 0
          %3036 = vmatprep.subr.bf16.mxu0 0
          %3037 = vmatpush1.bf16.msra.mxu0 0
          %3038 = vmatprep.subr.bf16.mxu0 0
          %3039 = vmatpush1.bf16.msra.mxu0 0
          %3040 = vmatprep.subr.bf16.mxu0 0
          %3041 = vmatpush1.bf16.msra.mxu0 0
          %3042 = vmatprep.subr.bf16.mxu0 0
          %3043 = vmatpush1.bf16.msra.mxu0 0
          %3044 = vmatprep.mubr.bf16.mxu0 0
          %3045 = vmatmul.mubr.bf16.gmra.mrb[0].mxu0 %v2946
          %v3046 = vpop.f32.mrb[0].mxu0
          %v3047 = vadd.f32 0.0, %v3046
          %v3048 = vpop.f32.mrb[0].mxu0
          %v3049 = vpop.f32.mrb[0].mxu0
          %v3050 = vadd.f32 0.0, %v3049
          %v3051 = vpop.f32.mrb[0].mxu0
          %3052 = vdwg.mxu0
          %v3053 = vadd.f32 %v2942, %v3047
          %v3054 = vadd.f32 %v2943, %v3050
          %v3055 = vld [vmem:[%s2832 + $0x2] sm:$0xff]
          %v3056 = vld [vmem:[%s2832 + $0xa] sm:$0x3]
          %v3057 = vpack.c.bf16 %v3056, %v3055
          %s3058 = scalar_lea.vmem %s3, 1088
          %v3059 = vld [vmem:[%s3058] sm:$0xf]
          %v3060 = vld [vmem:[%s3058 + $0x4] sm:$0xf]
          %v3061 = vld [vmem:[%s3058 + $0x8] sm:$0xf]
          %v3062 = vld [vmem:[%s3058 + $0xc] sm:$0xf]
          %v3063 = vld [vmem:[%s3058 + $0x10] sm:$0xf]
          %v3064 = vld [vmem:[%s3058 + $0x14] sm:$0xf]
          %v3065 = vld [vmem:[%s3058 + $0x18] sm:$0xf]
          %v3066 = vld [vmem:[%s3058 + $0x1c] sm:$0xf]
          %v3067 = vld [vmem:[%s3058 + $0x20] sm:$0xf]
          %v3068 = vld [vmem:[%s3058 + $0x24] sm:$0xf]
          %v3069 = vld [vmem:[%s3058 + $0x28] sm:$0xf]
          %v3070 = vld [vmem:[%s3058 + $0x2c] sm:$0xf]
          %v3071 = vld [vmem:[%s3058 + $0x30] sm:$0xf]
          %v3072 = vld [vmem:[%s3058 + $0x34] sm:$0xf]
          %v3073 = vld [vmem:[%s3058 + $0x38] sm:$0xf]
          %v3074 = vld [vmem:[%s3058 + $0x3c] sm:$0xf]
          %v3091 = vunpack.c.l.b16 %v3059
          %v3092 = vunpack.c.l.b16 %v3060
          %v3093 = vunpack.c.l.b16 %v3061
          %v3094 = vunpack.c.l.b16 %v3062
          %v3095 = vunpack.c.l.b16 %v3063
          %v3096 = vunpack.c.l.b16 %v3064
          %v3097 = vunpack.c.l.b16 %v3065
          %v3098 = vunpack.c.l.b16 %v3066
          %v3099 = vunpack.c.l.b16 %v3067
          %v3100 = vunpack.c.l.b16 %v3068
          %v3101 = vunpack.c.l.b16 %v3069
          %v3102 = vunpack.c.l.b16 %v3070
          %v3103 = vunpack.c.l.b16 %v3071
          %v3104 = vunpack.c.l.b16 %v3072
          %v3105 = vunpack.c.l.b16 %v3073
          %v3106 = vunpack.c.l.b16 %v3074
          %v3107 = vpack.c.b16 %v3092, %v3091
          %v3108 = vpack.c.b16 %v3094, %v3093
          %v3109 = vpack.c.b16 %v3096, %v3095
          %v3110 = vpack.c.b16 %v3098, %v3097
          %v3111 = vpack.c.b16 %v3100, %v3099
          %v3112 = vpack.c.b16 %v3102, %v3101
          %v3113 = vpack.c.b16 %v3104, %v3103
          %v3114 = vpack.c.b16 %v3106, %v3105
          %3123 = vmatprep.subr.bf16.mxu0 0
          %3124 = vmatpush1.bf16.msra.mxu0 %v3107
          %3125 = vmatprep.subr.bf16.mxu0 0
          %3126 = vmatpush1.bf16.msra.mxu0 %v3108
          %3127 = vmatprep.subr.bf16.mxu0 0
          %3128 = vmatpush1.bf16.msra.mxu0 %v3109
          %3129 = vmatprep.subr.bf16.mxu0 0
          %3130 = vmatpush1.bf16.msra.mxu0 %v3110
          %3131 = vmatprep.subr.bf16.mxu0 0
          %3132 = vmatpush1.bf16.msra.mxu0 %v3111
          %3133 = vmatprep.subr.bf16.mxu0 0
          %3134 = vmatpush1.bf16.msra.mxu0 %v3112
          %3135 = vmatprep.subr.bf16.mxu0 0
          %3136 = vmatpush1.bf16.msra.mxu0 %v3113
          %3137 = vmatprep.subr.bf16.mxu0 0
          %3138 = vmatpush1.bf16.msra.mxu0 %v3114
          %3139 = vmatprep.subr.bf16.mxu0 0
          %3140 = vmatpush1.bf16.msra.mxu0 0
          %3141 = vmatprep.subr.bf16.mxu0 0
          %3142 = vmatpush1.bf16.msra.mxu0 0
          %3143 = vmatprep.subr.bf16.mxu0 0
          %3144 = vmatpush1.bf16.msra.mxu0 0
          %3145 = vmatprep.subr.bf16.mxu0 0
          %3146 = vmatpush1.bf16.msra.mxu0 0
          %3147 = vmatprep.subr.bf16.mxu0 0
          %3148 = vmatpush1.bf16.msra.mxu0 0
          %3149 = vmatprep.subr.bf16.mxu0 0
          %3150 = vmatpush1.bf16.msra.mxu0 0
          %3151 = vmatprep.subr.bf16.mxu0 0
          %3152 = vmatpush1.bf16.msra.mxu0 0
          %3153 = vmatprep.subr.bf16.mxu0 0
          %3154 = vmatpush1.bf16.msra.mxu0 0
          %3155 = vmatprep.mubr.bf16.mxu0 0
          %3156 = vmatmul.mubr.bf16.gmra.mrb[0].mxu0 %v3057
          %v3157 = vpop.f32.mrb[0].mxu0
          %v3158 = vadd.f32 0.0, %v3157
          %v3159 = vpop.f32.mrb[0].mxu0
          %v3160 = vpop.f32.mrb[0].mxu0
          %v3161 = vadd.f32 0.0, %v3160
          %v3162 = vpop.f32.mrb[0].mxu0
          %3163 = vdwg.mxu0
          %v3164 = vadd.f32 %v3053, %v3158
          %v3165 = vadd.f32 %v3054, %v3161
          %v3166 = vld [vmem:[%s2832 + $0x3] sm:$0xff]
          %v3167 = vld [vmem:[%s2832 + $0xb] sm:$0x3]
          %v3168 = vpack.c.bf16 %v3167, %v3166
          %s3169 = scalar_lea.vmem %s3, 1152
          %v3170 = vld [vmem:[%s3169] sm:$0xf]
          %v3171 = vld [vmem:[%s3169 + $0x4] sm:$0xf]
          %v3172 = vld [vmem:[%s3169 + $0x8] sm:$0xf]
          %v3173 = vld [vmem:[%s3169 + $0xc] sm:$0xf]
          %v3174 = vld [vmem:[%s3169 + $0x10] sm:$0xf]
          %v3175 = vld [vmem:[%s3169 + $0x14] sm:$0xf]
          %v3176 = vld [vmem:[%s3169 + $0x18] sm:$0xf]
          %v3177 = vld [vmem:[%s3169 + $0x1c] sm:$0xf]
          %v3178 = vld [vmem:[%s3169 + $0x20] sm:$0xf]
          %v3179 = vld [vmem:[%s3169 + $0x24] sm:$0xf]
          %v3180 = vld [vmem:[%s3169 + $0x28] sm:$0xf]
          %v3181 = vld [vmem:[%s3169 + $0x2c] sm:$0xf]
          %v3182 = vld [vmem:[%s3169 + $0x30] sm:$0xf]
          %v3183 = vld [vmem:[%s3169 + $0x34] sm:$0xf]
          %v3184 = vld [vmem:[%s3169 + $0x38] sm:$0xf]
          %v3185 = vld [vmem:[%s3169 + $0x3c] sm:$0xf]
          %v3202 = vunpack.c.l.b16 %v3170
          %v3203 = vunpack.c.l.b16 %v3171
          %v3204 = vunpack.c.l.b16 %v3172
          %v3205 = vunpack.c.l.b16 %v3173
          %v3206 = vunpack.c.l.b16 %v3174
          %v3207 = vunpack.c.l.b16 %v3175
          %v3208 = vunpack.c.l.b16 %v3176
          %v3209 = vunpack.c.l.b16 %v3177
          %v3210 = vunpack.c.l.b16 %v3178
          %v3211 = vunpack.c.l.b16 %v3179
          %v3212 = vunpack.c.l.b16 %v3180
          %v3213 = vunpack.c.l.b16 %v3181
          %v3214 = vunpack.c.l.b16 %v3182
          %v3215 = vunpack.c.l.b16 %v3183
          %v3216 = vunpack.c.l.b16 %v3184
          %v3217 = vunpack.c.l.b16 %v3185
          %v3218 = vpack.c.b16 %v3203, %v3202
          %v3219 = vpack.c.b16 %v3205, %v3204
          %v3220 = vpack.c.b16 %v3207, %v3206
          %v3221 = vpack.c.b16 %v3209, %v3208
          %v3222 = vpack.c.b16 %v3211, %v3210
          %v3223 = vpack.c.b16 %v3213, %v3212
          %v3224 = vpack.c.b16 %v3215, %v3214
          %v3225 = vpack.c.b16 %v3217, %v3216
          %3234 = vmatprep.subr.bf16.mxu0 0
          %3235 = vmatpush1.bf16.msra.mxu0 %v3218
          %3236 = vmatprep.subr.bf16.mxu0 0
          %3237 = vmatpush1.bf16.msra.mxu0 %v3219
          %3238 = vmatprep.subr.bf16.mxu0 0
          %3239 = vmatpush1.bf16.msra.mxu0 %v3220
          %3240 = vmatprep.subr.bf16.mxu0 0
          %3241 = vmatpush1.bf16.msra.mxu0 %v3221
          %3242 = vmatprep.subr.bf16.mxu0 0
          %3243 = vmatpush1.bf16.msra.mxu0 %v3222
          %3244 = vmatprep.subr.bf16.mxu0 0
          %3245 = vmatpush1.bf16.msra.mxu0 %v3223
          %3246 = vmatprep.subr.bf16.mxu0 0
          %3247 = vmatpush1.bf16.msra.mxu0 %v3224
          %3248 = vmatprep.subr.bf16.mxu0 0
          %3249 = vmatpush1.bf16.msra.mxu0 %v3225
          %3250 = vmatprep.subr.bf16.mxu0 0
          %3251 = vmatpush1.bf16.msra.mxu0 0
          %3252 = vmatprep.subr.bf16.mxu0 0
          %3253 = vmatpush1.bf16.msra.mxu0 0
          %3254 = vmatprep.subr.bf16.mxu0 0
          %3255 = vmatpush1.bf16.msra.mxu0 0
          %3256 = vmatprep.subr.bf16.mxu0 0
          %3257 = vmatpush1.bf16.msra.mxu0 0
          %3258 = vmatprep.subr.bf16.mxu0 0
          %3259 = vmatpush1.bf16.msra.mxu0 0
          %3260 = vmatprep.subr.bf16.mxu0 0
          %3261 = vmatpush1.bf16.msra.mxu0 0
          %3262 = vmatprep.subr.bf16.mxu0 0
          %3263 = vmatpush1.bf16.msra.mxu0 0
          %3264 = vmatprep.subr.bf16.mxu0 0
          %3265 = vmatpush1.bf16.msra.mxu0 0
          %3266 = vmatprep.mubr.bf16.mxu0 0
          %3267 = vmatmul.mubr.bf16.gmra.mrb[0].mxu0 %v3168
          %v3268 = vpop.f32.mrb[0].mxu0
          %v3269 = vadd.f32 0.0, %v3268
          %v3270 = vpop.f32.mrb[0].mxu0
          %v3271 = vpop.f32.mrb[0].mxu0
          %v3272 = vadd.f32 0.0, %v3271
          %v3273 = vpop.f32.mrb[0].mxu0
          %3274 = vdwg.mxu0
          %v3275 = vadd.f32 %v3164, %v3269
          %v3276 = vadd.f32 %v3165, %v3272
          %v3277 = vld [vmem:[%s2832 + $0x4] sm:$0xff]
          %v3278 = vld [vmem:[%s2832 + $0xc] sm:$0x3]
          %v3279 = vpack.c.bf16 %v3278, %v3277
          %s3280 = scalar_lea.vmem %s3, 1216
          %v3281 = vld [vmem:[%s3280] sm:$0xf]
          %v3282 = vld [vmem:[%s3280 + $0x4] sm:$0xf]
          %v3283 = vld [vmem:[%s3280 + $0x8] sm:$0xf]
          %v3284 = vld [vmem:[%s3280 + $0xc] sm:$0xf]
          %v3285 = vld [vmem:[%s3280 + $0x10] sm:$0xf]
          %v3286 = vld [vmem:[%s3280 + $0x14] sm:$0xf]
          %v3287 = vld [vmem:[%s3280 + $0x18] sm:$0xf]
          %v3288 = vld [vmem:[%s3280 + $0x1c] sm:$0xf]
          %v3289 = vld [vmem:[%s3280 + $0x20] sm:$0xf]
          %v3290 = vld [vmem:[%s3280 + $0x24] sm:$0xf]
          %v3291 = vld [vmem:[%s3280 + $0x28] sm:$0xf]
          %v3292 = vld [vmem:[%s3280 + $0x2c] sm:$0xf]
          %v3293 = vld [vmem:[%s3280 + $0x30] sm:$0xf]
          %v3294 = vld [vmem:[%s3280 + $0x34] sm:$0xf]
          %v3295 = vld [vmem:[%s3280 + $0x38] sm:$0xf]
          %v3296 = vld [vmem:[%s3280 + $0x3c] sm:$0xf]
          %v3313 = vunpack.c.l.b16 %v3281
          %v3314 = vunpack.c.l.b16 %v3282
          %v3315 = vunpack.c.l.b16 %v3283
          %v3316 = vunpack.c.l.b16 %v3284
          %v3317 = vunpack.c.l.b16 %v3285
          %v3318 = vunpack.c.l.b16 %v3286
          %v3319 = vunpack.c.l.b16 %v3287
          %v3320 = vunpack.c.l.b16 %v3288
          %v3321 = vunpack.c.l.b16 %v3289
          %v3322 = vunpack.c.l.b16 %v3290
          %v3323 = vunpack.c.l.b16 %v3291
          %v3324 = vunpack.c.l.b16 %v3292
          %v3325 = vunpack.c.l.b16 %v3293
          %v3326 = vunpack.c.l.b16 %v3294
          %v3327 = vunpack.c.l.b16 %v3295
          %v3328 = vunpack.c.l.b16 %v3296
          %v3329 = vpack.c.b16 %v3314, %v3313
          %v3330 = vpack.c.b16 %v3316, %v3315
          %v3331 = vpack.c.b16 %v3318, %v3317
          %v3332 = vpack.c.b16 %v3320, %v3319
          %v3333 = vpack.c.b16 %v3322, %v3321
          %v3334 = vpack.c.b16 %v3324, %v3323
          %v3335 = vpack.c.b16 %v3326, %v3325
          %v3336 = vpack.c.b16 %v3328, %v3327
          %3345 = vmatprep.subr.bf16.mxu0 0
          %3346 = vmatpush1.bf16.msra.mxu0 %v3329
          %3347 = vmatprep.subr.bf16.mxu0 0
          %3348 = vmatpush1.bf16.msra.mxu0 %v3330
          %3349 = vmatprep.subr.bf16.mxu0 0
          %3350 = vmatpush1.bf16.msra.mxu0 %v3331
          %3351 = vmatprep.subr.bf16.mxu0 0
          %3352 = vmatpush1.bf16.msra.mxu0 %v3332
          %3353 = vmatprep.subr.bf16.mxu0 0
          %3354 = vmatpush1.bf16.msra.mxu0 %v3333
          %3355 = vmatprep.subr.bf16.mxu0 0
          %3356 = vmatpush1.bf16.msra.mxu0 %v3334
          %3357 = vmatprep.subr.bf16.mxu0 0
          %3358 = vmatpush1.bf16.msra.mxu0 %v3335
          %3359 = vmatprep.subr.bf16.mxu0 0
          %3360 = vmatpush1.bf16.msra.mxu0 %v3336
          %3361 = vmatprep.subr.bf16.mxu0 0
          %3362 = vmatpush1.bf16.msra.mxu0 0
          %3363 = vmatprep.subr.bf16.mxu0 0
          %3364 = vmatpush1.bf16.msra.mxu0 0
          %3365 = vmatprep.subr.bf16.mxu0 0
          %3366 = vmatpush1.bf16.msra.mxu0 0
          %3367 = vmatprep.subr.bf16.mxu0 0
          %3368 = vmatpush1.bf16.msra.mxu0 0
          %3369 = vmatprep.subr.bf16.mxu0 0
          %3370 = vmatpush1.bf16.msra.mxu0 0
          %3371 = vmatprep.subr.bf16.mxu0 0
          %3372 = vmatpush1.bf16.msra.mxu0 0
          %3373 = vmatprep.subr.bf16.mxu0 0
          %3374 = vmatpush1.bf16.msra.mxu0 0
          %3375 = vmatprep.subr.bf16.mxu0 0
          %3376 = vmatpush1.bf16.msra.mxu0 0
          %3377 = vmatprep.mubr.bf16.mxu0 0
          %3378 = vmatmul.mubr.bf16.gmra.mrb[0].mxu0 %v3279
          %v3379 = vpop.f32.mrb[0].mxu0
          %v3380 = vadd.f32 0.0, %v3379
          %v3381 = vpop.f32.mrb[0].mxu0
          %v3382 = vpop.f32.mrb[0].mxu0
          %v3383 = vadd.f32 0.0, %v3382
          %v3384 = vpop.f32.mrb[0].mxu0
          %3385 = vdwg.mxu0
          %v3386 = vadd.f32 %v3275, %v3380
          %v3387 = vadd.f32 %v3276, %v3383
          %s3388 = sadd.s32 %s1161, 4
          %s3389 = smul.u32 %s3388, 16
          %s3390 = scalar_lea.vmem [#allocation2], %s3389
          %v3391 = vld [vmem:[%s3390] sm:$0xff]
          %v3392 = vld [vmem:[%s3390 + $0x8] sm:$0x3]
          %v3393 = vpack.c.bf16 %v3392, %v3391
          %s3394 = scalar_lea.vmem %s3, 1280
          %v3395 = vld [vmem:[%s3394] sm:$0xf]
          %v3396 = vld [vmem:[%s3394 + $0x4] sm:$0xf]
          %v3397 = vld [vmem:[%s3394 + $0x8] sm:$0xf]
          %v3398 = vld [vmem:[%s3394 + $0xc] sm:$0xf]
          %v3399 = vld [vmem:[%s3394 + $0x10] sm:$0xf]
          %v3400 = vld [vmem:[%s3394 + $0x14] sm:$0xf]
          %v3401 = vld [vmem:[%s3394 + $0x18] sm:$0xf]
          %v3402 = vld [vmem:[%s3394 + $0x1c] sm:$0xf]
          %v3403 = vld [vmem:[%s3394 + $0x20] sm:$0xf]
          %v3404 = vld [vmem:[%s3394 + $0x24] sm:$0xf]
          %v3405 = vld [vmem:[%s3394 + $0x28] sm:$0xf]
          %v3406 = vld [vmem:[%s3394 + $0x2c] sm:$0xf]
          %v3407 = vld [vmem:[%s3394 + $0x30] sm:$0xf]
          %v3408 = vld [vmem:[%s3394 + $0x34] sm:$0xf]
          %v3409 = vld [vmem:[%s3394 + $0x38] sm:$0xf]
          %v3410 = vld [vmem:[%s3394 + $0x3c] sm:$0xf]
          %v3427 = vunpack.c.l.b16 %v3395
          %v3428 = vunpack.c.l.b16 %v3396
          %v3429 = vunpack.c.l.b16 %v3397
          %v3430 = vunpack.c.l.b16 %v3398
          %v3431 = vunpack.c.l.b16 %v3399
          %v3432 = vunpack.c.l.b16 %v3400
          %v3433 = vunpack.c.l.b16 %v3401
          %v3434 = vunpack.c.l.b16 %v3402
          %v3435 = vunpack.c.l.b16 %v3403
          %v3436 = vunpack.c.l.b16 %v3404
          %v3437 = vunpack.c.l.b16 %v3405
          %v3438 = vunpack.c.l.b16 %v3406
          %v3439 = vunpack.c.l.b16 %v3407
          %v3440 = vunpack.c.l.b16 %v3408
          %v3441 = vunpack.c.l.b16 %v3409
          %v3442 = vunpack.c.l.b16 %v3410
          %v3443 = vpack.c.b16 %v3428, %v3427
          %v3444 = vpack.c.b16 %v3430, %v3429
          %v3445 = vpack.c.b16 %v3432, %v3431
          %v3446 = vpack.c.b16 %v3434, %v3433
          %v3447 = vpack.c.b16 %v3436, %v3435
          %v3448 = vpack.c.b16 %v3438, %v3437
          %v3449 = vpack.c.b16 %v3440, %v3439
          %v3450 = vpack.c.b16 %v3442, %v3441
          %3459 = vmatprep.subr.bf16.mxu0 0
          %3460 = vmatpush1.bf16.msra.mxu0 %v3443
          %3461 = vmatprep.subr.bf16.mxu0 0
          %3462 = vmatpush1.bf16.msra.mxu0 %v3444
          %3463 = vmatprep.subr.bf16.mxu0 0
          %3464 = vmatpush1.bf16.msra.mxu0 %v3445
          %3465 = vmatprep.subr.bf16.mxu0 0
          %3466 = vmatpush1.bf16.msra.mxu0 %v3446
          %3467 = vmatprep.subr.bf16.mxu0 0
          %3468 = vmatpush1.bf16.msra.mxu0 %v3447
          %3469 = vmatprep.subr.bf16.mxu0 0
          %3470 = vmatpush1.bf16.msra.mxu0 %v3448
          %3471 = vmatprep.subr.bf16.mxu0 0
          %3472 = vmatpush1.bf16.msra.mxu0 %v3449
          %3473 = vmatprep.subr.bf16.mxu0 0
          %3474 = vmatpush1.bf16.msra.mxu0 %v3450
          %3475 = vmatprep.subr.bf16.mxu0 0
          %3476 = vmatpush1.bf16.msra.mxu0 0
          %3477 = vmatprep.subr.bf16.mxu0 0
          %3478 = vmatpush1.bf16.msra.mxu0 0
          %3479 = vmatprep.subr.bf16.mxu0 0
          %3480 = vmatpush1.bf16.msra.mxu0 0
          %3481 = vmatprep.subr.bf16.mxu0 0
          %3482 = vmatpush1.bf16.msra.mxu0 0
          %3483 = vmatprep.subr.bf16.mxu0 0
          %3484 = vmatpush1.bf16.msra.mxu0 0
          %3485 = vmatprep.subr.bf16.mxu0 0
          %3486 = vmatpush1.bf16.msra.mxu0 0
          %3487 = vmatprep.subr.bf16.mxu0 0
          %3488 = vmatpush1.bf16.msra.mxu0 0
          %3489 = vmatprep.subr.bf16.mxu0 0
          %3490 = vmatpush1.bf16.msra.mxu0 0
          %3491 = vmatprep.mubr.bf16.mxu0 0
          %3492 = vmatmul.mubr.bf16.gmra.mrb[0].mxu0 %v3393
          %v3493 = vpop.f32.mrb[0].mxu0
          %v3494 = vadd.f32 0.0, %v3493
          %v3495 = vpop.f32.mrb[0].mxu0
          %v3496 = vpop.f32.mrb[0].mxu0
          %v3497 = vadd.f32 0.0, %v3496
          %v3498 = vpop.f32.mrb[0].mxu0
          %3499 = vdwg.mxu0
          %v3500 = vadd.f32 %v3386, %v3494
          %v3501 = vadd.f32 %v3387, %v3497
          %v3502 = vld [vmem:[%s3390 + $0x1] sm:$0xff]
          %v3503 = vld [vmem:[%s3390 + $0x9] sm:$0x3]
          %v3504 = vpack.c.bf16 %v3503, %v3502
          %s3505 = scalar_lea.vmem %s3, 1344
          %v3506 = vld [vmem:[%s3505] sm:$0xf]
          %v3507 = vld [vmem:[%s3505 + $0x4] sm:$0xf]
          %v3508 = vld [vmem:[%s3505 + $0x8] sm:$0xf]
          %v3509 = vld [vmem:[%s3505 + $0xc] sm:$0xf]
          %v3510 = vld [vmem:[%s3505 + $0x10] sm:$0xf]
          %v3511 = vld [vmem:[%s3505 + $0x14] sm:$0xf]
          %v3512 = vld [vmem:[%s3505 + $0x18] sm:$0xf]
          %v3513 = vld [vmem:[%s3505 + $0x1c] sm:$0xf]
          %v3514 = vld [vmem:[%s3505 + $0x20] sm:$0xf]
          %v3515 = vld [vmem:[%s3505 + $0x24] sm:$0xf]
          %v3516 = vld [vmem:[%s3505 + $0x28] sm:$0xf]
          %v3517 = vld [vmem:[%s3505 + $0x2c] sm:$0xf]
          %v3518 = vld [vmem:[%s3505 + $0x30] sm:$0xf]
          %v3519 = vld [vmem:[%s3505 + $0x34] sm:$0xf]
          %v3520 = vld [vmem:[%s3505 + $0x38] sm:$0xf]
          %v3521 = vld [vmem:[%s3505 + $0x3c] sm:$0xf]
          %v3538 = vunpack.c.l.b16 %v3506
          %v3539 = vunpack.c.l.b16 %v3507
          %v3540 = vunpack.c.l.b16 %v3508
          %v3541 = vunpack.c.l.b16 %v3509
          %v3542 = vunpack.c.l.b16 %v3510
          %v3543 = vunpack.c.l.b16 %v3511
          %v3544 = vunpack.c.l.b16 %v3512
          %v3545 = vunpack.c.l.b16 %v3513
          %v3546 = vunpack.c.l.b16 %v3514
          %v3547 = vunpack.c.l.b16 %v3515
          %v3548 = vunpack.c.l.b16 %v3516
          %v3549 = vunpack.c.l.b16 %v3517
          %v3550 = vunpack.c.l.b16 %v3518
          %v3551 = vunpack.c.l.b16 %v3519
          %v3552 = vunpack.c.l.b16 %v3520
          %v3553 = vunpack.c.l.b16 %v3521
          %v3554 = vpack.c.b16 %v3539, %v3538
          %v3555 = vpack.c.b16 %v3541, %v3540
          %v3556 = vpack.c.b16 %v3543, %v3542
          %v3557 = vpack.c.b16 %v3545, %v3544
          %v3558 = vpack.c.b16 %v3547, %v3546
          %v3559 = vpack.c.b16 %v3549, %v3548
          %v3560 = vpack.c.b16 %v3551, %v3550
          %v3561 = vpack.c.b16 %v3553, %v3552
          %3570 = vmatprep.subr.bf16.mxu0 0
          %3571 = vmatpush1.bf16.msra.mxu0 %v3554
          %3572 = vmatprep.subr.bf16.mxu0 0
          %3573 = vmatpush1.bf16.msra.mxu0 %v3555
          %3574 = vmatprep.subr.bf16.mxu0 0
          %3575 = vmatpush1.bf16.msra.mxu0 %v3556
          %3576 = vmatprep.subr.bf16.mxu0 0
          %3577 = vmatpush1.bf16.msra.mxu0 %v3557
          %3578 = vmatprep.subr.bf16.mxu0 0
          %3579 = vmatpush1.bf16.msra.mxu0 %v3558
          %3580 = vmatprep.subr.bf16.mxu0 0
          %3581 = vmatpush1.bf16.msra.mxu0 %v3559
          %3582 = vmatprep.subr.bf16.mxu0 0
          %3583 = vmatpush1.bf16.msra.mxu0 %v3560
          %3584 = vmatprep.subr.bf16.mxu0 0
          %3585 = vmatpush1.bf16.msra.mxu0 %v3561
          %3586 = vmatprep.subr.bf16.mxu0 0
          %3587 = vmatpush1.bf16.msra.mxu0 0
          %3588 = vmatprep.subr.bf16.mxu0 0
          %3589 = vmatpush1.bf16.msra.mxu0 0
          %3590 = vmatprep.subr.bf16.mxu0 0
          %3591 = vmatpush1.bf16.msra.mxu0 0
          %3592 = vmatprep.subr.bf16.mxu0 0
          %3593 = vmatpush1.bf16.msra.mxu0 0
          %3594 = vmatprep.subr.bf16.mxu0 0
          %3595 = vmatpush1.bf16.msra.mxu0 0
          %3596 = vmatprep.subr.bf16.mxu0 0
          %3597 = vmatpush1.bf16.msra.mxu0 0
          %3598 = vmatprep.subr.bf16.mxu0 0
          %3599 = vmatpush1.bf16.msra.mxu0 0
          %3600 = vmatprep.subr.bf16.mxu0 0
          %3601 = vmatpush1.bf16.msra.mxu0 0
          %3602 = vmatprep.mubr.bf16.mxu0 0
          %3603 = vmatmul.mubr.bf16.gmra.mrb[0].mxu0 %v3504
          %v3604 = vpop.f32.mrb[0].mxu0
          %v3605 = vadd.f32 0.0, %v3604
          %v3606 = vpop.f32.mrb[0].mxu0
          %v3607 = vpop.f32.mrb[0].mxu0
          %v3608 = vadd.f32 0.0, %v3607
          %v3609 = vpop.f32.mrb[0].mxu0
          %3610 = vdwg.mxu0
          %v3611 = vadd.f32 %v3500, %v3605
          %v3612 = vadd.f32 %v3501, %v3608
          %v3613 = vld [vmem:[%s3390 + $0x2] sm:$0xff]
          %v3614 = vld [vmem:[%s3390 + $0xa] sm:$0x3]
          %v3615 = vpack.c.bf16 %v3614, %v3613
          %s3616 = scalar_lea.vmem %s3, 1408
          %v3617 = vld [vmem:[%s3616] sm:$0xf]
          %v3618 = vld [vmem:[%s3616 + $0x4] sm:$0xf]
          %v3619 = vld [vmem:[%s3616 + $0x8] sm:$0xf]
          %v3620 = vld [vmem:[%s3616 + $0xc] sm:$0xf]
          %v3621 = vld [vmem:[%s3616 + $0x10] sm:$0xf]
          %v3622 = vld [vmem:[%s3616 + $0x14] sm:$0xf]
          %v3623 = vld [vmem:[%s3616 + $0x18] sm:$0xf]
          %v3624 = vld [vmem:[%s3616 + $0x1c] sm:$0xf]
          %v3625 = vld [vmem:[%s3616 + $0x20] sm:$0xf]
          %v3626 = vld [vmem:[%s3616 + $0x24] sm:$0xf]
          %v3627 = vld [vmem:[%s3616 + $0x28] sm:$0xf]
          %v3628 = vld [vmem:[%s3616 + $0x2c] sm:$0xf]
          %v3629 = vld [vmem:[%s3616 + $0x30] sm:$0xf]
          %v3630 = vld [vmem:[%s3616 + $0x34] sm:$0xf]
          %v3631 = vld [vmem:[%s3616 + $0x38] sm:$0xf]
          %v3632 = vld [vmem:[%s3616 + $0x3c] sm:$0xf]
          %v3649 = vunpack.c.l.b16 %v3617
          %v3650 = vunpack.c.l.b16 %v3618
          %v3651 = vunpack.c.l.b16 %v3619
          %v3652 = vunpack.c.l.b16 %v3620
          %v3653 = vunpack.c.l.b16 %v3621
          %v3654 = vunpack.c.l.b16 %v3622
          %v3655 = vunpack.c.l.b16 %v3623
          %v3656 = vunpack.c.l.b16 %v3624
          %v3657 = vunpack.c.l.b16 %v3625
          %v3658 = vunpack.c.l.b16 %v3626
          %v3659 = vunpack.c.l.b16 %v3627
          %v3660 = vunpack.c.l.b16 %v3628
          %v3661 = vunpack.c.l.b16 %v3629
          %v3662 = vunpack.c.l.b16 %v3630
          %v3663 = vunpack.c.l.b16 %v3631
          %v3664 = vunpack.c.l.b16 %v3632
          %v3665 = vpack.c.b16 %v3650, %v3649
          %v3666 = vpack.c.b16 %v3652, %v3651
          %v3667 = vpack.c.b16 %v3654, %v3653
          %v3668 = vpack.c.b16 %v3656, %v3655
          %v3669 = vpack.c.b16 %v3658, %v3657
          %v3670 = vpack.c.b16 %v3660, %v3659
          %v3671 = vpack.c.b16 %v3662, %v3661
          %v3672 = vpack.c.b16 %v3664, %v3663
          %3681 = vmatprep.subr.bf16.mxu0 0
          %3682 = vmatpush1.bf16.msra.mxu0 %v3665
          %3683 = vmatprep.subr.bf16.mxu0 0
          %3684 = vmatpush1.bf16.msra.mxu0 %v3666
          %3685 = vmatprep.subr.bf16.mxu0 0
          %3686 = vmatpush1.bf16.msra.mxu0 %v3667
          %3687 = vmatprep.subr.bf16.mxu0 0
          %3688 = vmatpush1.bf16.msra.mxu0 %v3668
          %3689 = vmatprep.subr.bf16.mxu0 0
          %3690 = vmatpush1.bf16.msra.mxu0 %v3669
          %3691 = vmatprep.subr.bf16.mxu0 0
          %3692 = vmatpush1.bf16.msra.mxu0 %v3670
          %3693 = vmatprep.subr.bf16.mxu0 0
          %3694 = vmatpush1.bf16.msra.mxu0 %v3671
          %3695 = vmatprep.subr.bf16.mxu0 0
          %3696 = vmatpush1.bf16.msra.mxu0 %v3672
          %3697 = vmatprep.subr.bf16.mxu0 0
          %3698 = vmatpush1.bf16.msra.mxu0 0
          %3699 = vmatprep.subr.bf16.mxu0 0
          %3700 = vmatpush1.bf16.msra.mxu0 0
          %3701 = vmatprep.subr.bf16.mxu0 0
          %3702 = vmatpush1.bf16.msra.mxu0 0
          %3703 = vmatprep.subr.bf16.mxu0 0
          %3704 = vmatpush1.bf16.msra.mxu0 0
          %3705 = vmatprep.subr.bf16.mxu0 0
          %3706 = vmatpush1.bf16.msra.mxu0 0
          %3707 = vmatprep.subr.bf16.mxu0 0
          %3708 = vmatpush1.bf16.msra.mxu0 0
          %3709 = vmatprep.subr.bf16.mxu0 0
          %3710 = vmatpush1.bf16.msra.mxu0 0
          %3711 = vmatprep.subr.bf16.mxu0 0
          %3712 = vmatpush1.bf16.msra.mxu0 0
          %3713 = vmatprep.mubr.bf16.mxu0 0
          %3714 = vmatmul.mubr.bf16.gmra.mrb[0].mxu0 %v3615
          %v3715 = vpop.f32.mrb[0].mxu0
          %v3716 = vadd.f32 0.0, %v3715
          %v3717 = vpop.f32.mrb[0].mxu0
          %v3718 = vpop.f32.mrb[0].mxu0
          %v3719 = vadd.f32 0.0, %v3718
          %v3720 = vpop.f32.mrb[0].mxu0
          %3721 = vdwg.mxu0
          %v3722 = vadd.f32 %v3611, %v3716
          %v3723 = vadd.f32 %v3612, %v3719
          %v3724 = vld [vmem:[%s3390 + $0x3] sm:$0xff]
          %v3725 = vld [vmem:[%s3390 + $0xb] sm:$0x3]
          %v3726 = vpack.c.bf16 %v3725, %v3724
          %s3727 = scalar_lea.vmem %s3, 1472
          %v3728 = vld [vmem:[%s3727] sm:$0xf]
          %v3729 = vld [vmem:[%s3727 + $0x4] sm:$0xf]
          %v3730 = vld [vmem:[%s3727 + $0x8] sm:$0xf]
          %v3731 = vld [vmem:[%s3727 + $0xc] sm:$0xf]
          %v3732 = vld [vmem:[%s3727 + $0x10] sm:$0xf]
          %v3733 = vld [vmem:[%s3727 + $0x14] sm:$0xf]
          %v3734 = vld [vmem:[%s3727 + $0x18] sm:$0xf]
          %v3735 = vld [vmem:[%s3727 + $0x1c] sm:$0xf]
          %v3736 = vld [vmem:[%s3727 + $0x20] sm:$0xf]
          %v3737 = vld [vmem:[%s3727 + $0x24] sm:$0xf]
          %v3738 = vld [vmem:[%s3727 + $0x28] sm:$0xf]
          %v3739 = vld [vmem:[%s3727 + $0x2c] sm:$0xf]
          %v3740 = vld [vmem:[%s3727 + $0x30] sm:$0xf]
          %v3741 = vld [vmem:[%s3727 + $0x34] sm:$0xf]
          %v3742 = vld [vmem:[%s3727 + $0x38] sm:$0xf]
          %v3743 = vld [vmem:[%s3727 + $0x3c] sm:$0xf]
          %v3760 = vunpack.c.l.b16 %v3728
          %v3761 = vunpack.c.l.b16 %v3729
          %v3762 = vunpack.c.l.b16 %v3730
          %v3763 = vunpack.c.l.b16 %v3731
          %v3764 = vunpack.c.l.b16 %v3732
          %v3765 = vunpack.c.l.b16 %v3733
          %v3766 = vunpack.c.l.b16 %v3734
          %v3767 = vunpack.c.l.b16 %v3735
          %v3768 = vunpack.c.l.b16 %v3736
          %v3769 = vunpack.c.l.b16 %v3737
          %v3770 = vunpack.c.l.b16 %v3738
          %v3771 = vunpack.c.l.b16 %v3739
          %v3772 = vunpack.c.l.b16 %v3740
          %v3773 = vunpack.c.l.b16 %v3741
          %v3774 = vunpack.c.l.b16 %v3742
          %v3775 = vunpack.c.l.b16 %v3743
          %v3776 = vpack.c.b16 %v3761, %v3760
          %v3777 = vpack.c.b16 %v3763, %v3762
          %v3778 = vpack.c.b16 %v3765, %v3764
          %v3779 = vpack.c.b16 %v3767, %v3766
          %v3780 = vpack.c.b16 %v3769, %v3768
          %v3781 = vpack.c.b16 %v3771, %v3770
          %v3782 = vpack.c.b16 %v3773, %v3772
          %v3783 = vpack.c.b16 %v3775, %v3774
          %3792 = vmatprep.subr.bf16.mxu0 0
          %3793 = vmatpush1.bf16.msra.mxu0 %v3776
          %3794 = vmatprep.subr.bf16.mxu0 0
          %3795 = vmatpush1.bf16.msra.mxu0 %v3777
          %3796 = vmatprep.subr.bf16.mxu0 0
          %3797 = vmatpush1.bf16.msra.mxu0 %v3778
          %3798 = vmatprep.subr.bf16.mxu0 0
          %3799 = vmatpush1.bf16.msra.mxu0 %v3779
          %3800 = vmatprep.subr.bf16.mxu0 0
          %3801 = vmatpush1.bf16.msra.mxu0 %v3780
          %3802 = vmatprep.subr.bf16.mxu0 0
          %3803 = vmatpush1.bf16.msra.mxu0 %v3781
          %3804 = vmatprep.subr.bf16.mxu0 0
          %3805 = vmatpush1.bf16.msra.mxu0 %v3782
          %3806 = vmatprep.subr.bf16.mxu0 0
          %3807 = vmatpush1.bf16.msra.mxu0 %v3783
          %3808 = vmatprep.subr.bf16.mxu0 0
          %3809 = vmatpush1.bf16.msra.mxu0 0
          %3810 = vmatprep.subr.bf16.mxu0 0
          %3811 = vmatpush1.bf16.msra.mxu0 0
          %3812 = vmatprep.subr.bf16.mxu0 0
          %3813 = vmatpush1.bf16.msra.mxu0 0
          %3814 = vmatprep.subr.bf16.mxu0 0
          %3815 = vmatpush1.bf16.msra.mxu0 0
          %3816 = vmatprep.subr.bf16.mxu0 0
          %3817 = vmatpush1.bf16.msra.mxu0 0
          %3818 = vmatprep.subr.bf16.mxu0 0
          %3819 = vmatpush1.bf16.msra.mxu0 0
          %3820 = vmatprep.subr.bf16.mxu0 0
          %3821 = vmatpush1.bf16.msra.mxu0 0
          %3822 = vmatprep.subr.bf16.mxu0 0
          %3823 = vmatpush1.bf16.msra.mxu0 0
          %3824 = vmatprep.mubr.bf16.mxu0 0
          %3825 = vmatmul.mubr.bf16.gmra.mrb[0].mxu0 %v3726
          %v3826 = vpop.f32.mrb[0].mxu0
          %v3827 = vadd.f32 0.0, %v3826
          %v3828 = vpop.f32.mrb[0].mxu0
          %v3829 = vpop.f32.mrb[0].mxu0
          %v3830 = vadd.f32 0.0, %v3829
          %v3831 = vpop.f32.mrb[0].mxu0
          %3832 = vdwg.mxu0
          %v3833 = vadd.f32 %v3722, %v3827
          %v3834 = vadd.f32 %v3723, %v3830
          %v3835 = vld [vmem:[%s3390 + $0x4] sm:$0xff]
          %v3836 = vld [vmem:[%s3390 + $0xc] sm:$0x3]
          %v3837 = vpack.c.bf16 %v3836, %v3835
          %s3838 = scalar_lea.vmem %s3, 1536
          %v3839 = vld [vmem:[%s3838] sm:$0xf]
          %v3840 = vld [vmem:[%s3838 + $0x4] sm:$0xf]
          %v3841 = vld [vmem:[%s3838 + $0x8] sm:$0xf]
          %v3842 = vld [vmem:[%s3838 + $0xc] sm:$0xf]
          %v3843 = vld [vmem:[%s3838 + $0x10] sm:$0xf]
          %v3844 = vld [vmem:[%s3838 + $0x14] sm:$0xf]
          %v3845 = vld [vmem:[%s3838 + $0x18] sm:$0xf]
          %v3846 = vld [vmem:[%s3838 + $0x1c] sm:$0xf]
          %v3847 = vld [vmem:[%s3838 + $0x20] sm:$0xf]
          %v3848 = vld [vmem:[%s3838 + $0x24] sm:$0xf]
          %v3849 = vld [vmem:[%s3838 + $0x28] sm:$0xf]
          %v3850 = vld [vmem:[%s3838 + $0x2c] sm:$0xf]
          %v3851 = vld [vmem:[%s3838 + $0x30] sm:$0xf]
          %v3852 = vld [vmem:[%s3838 + $0x34] sm:$0xf]
          %v3853 = vld [vmem:[%s3838 + $0x38] sm:$0xf]
          %v3854 = vld [vmem:[%s3838 + $0x3c] sm:$0xf]
          %v3871 = vunpack.c.l.b16 %v3839
          %v3872 = vunpack.c.l.b16 %v3840
          %v3873 = vunpack.c.l.b16 %v3841
          %v3874 = vunpack.c.l.b16 %v3842
          %v3875 = vunpack.c.l.b16 %v3843
          %v3876 = vunpack.c.l.b16 %v3844
          %v3877 = vunpack.c.l.b16 %v3845
          %v3878 = vunpack.c.l.b16 %v3846
          %v3879 = vunpack.c.l.b16 %v3847
          %v3880 = vunpack.c.l.b16 %v3848
          %v3881 = vunpack.c.l.b16 %v3849
          %v3882 = vunpack.c.l.b16 %v3850
          %v3883 = vunpack.c.l.b16 %v3851
          %v3884 = vunpack.c.l.b16 %v3852
          %v3885 = vunpack.c.l.b16 %v3853
          %v3886 = vunpack.c.l.b16 %v3854
          %v3887 = vpack.c.b16 %v3872, %v3871
          %v3888 = vpack.c.b16 %v3874, %v3873
          %v3889 = vpack.c.b16 %v3876, %v3875
          %v3890 = vpack.c.b16 %v3878, %v3877
          %v3891 = vpack.c.b16 %v3880, %v3879
          %v3892 = vpack.c.b16 %v3882, %v3881
          %v3893 = vpack.c.b16 %v3884, %v3883
          %v3894 = vpack.c.b16 %v3886, %v3885
          %3903 = vmatprep.subr.bf16.mxu0 0
          %3904 = vmatpush1.bf16.msra.mxu0 %v3887
          %3905 = vmatprep.subr.bf16.mxu0 0
          %3906 = vmatpush1.bf16.msra.mxu0 %v3888
          %3907 = vmatprep.subr.bf16.mxu0 0
          %3908 = vmatpush1.bf16.msra.mxu0 %v3889
          %3909 = vmatprep.subr.bf16.mxu0 0
          %3910 = vmatpush1.bf16.msra.mxu0 %v3890
          %3911 = vmatprep.subr.bf16.mxu0 0
          %3912 = vmatpush1.bf16.msra.mxu0 %v3891
          %3913 = vmatprep.subr.bf16.mxu0 0
          %3914 = vmatpush1.bf16.msra.mxu0 %v3892
          %3915 = vmatprep.subr.bf16.mxu0 0
          %3916 = vmatpush1.bf16.msra.mxu0 %v3893
          %3917 = vmatprep.subr.bf16.mxu0 0
          %3918 = vmatpush1.bf16.msra.mxu0 %v3894
          %3919 = vmatprep.subr.bf16.mxu0 0
          %3920 = vmatpush1.bf16.msra.mxu0 0
          %3921 = vmatprep.subr.bf16.mxu0 0
          %3922 = vmatpush1.bf16.msra.mxu0 0
          %3923 = vmatprep.subr.bf16.mxu0 0
          %3924 = vmatpush1.bf16.msra.mxu0 0
          %3925 = vmatprep.subr.bf16.mxu0 0
          %3926 = vmatpush1.bf16.msra.mxu0 0
          %3927 = vmatprep.subr.bf16.mxu0 0
          %3928 = vmatpush1.bf16.msra.mxu0 0
          %3929 = vmatprep.subr.bf16.mxu0 0
          %3930 = vmatpush1.bf16.msra.mxu0 0
          %3931 = vmatprep.subr.bf16.mxu0 0
          %3932 = vmatpush1.bf16.msra.mxu0 0
          %3933 = vmatprep.subr.bf16.mxu0 0
          %3934 = vmatpush1.bf16.msra.mxu0 0
          %3935 = vmatprep.mubr.bf16.mxu0 0
          %3936 = vmatmul.mubr.bf16.gmra.mrb[0].mxu0 %v3837
          %v3937 = vpop.f32.mrb[0].mxu0
          %v3938 = vadd.f32 0.0, %v3937
          %v3939 = vpop.f32.mrb[0].mxu0
          %v3940 = vpop.f32.mrb[0].mxu0
          %v3941 = vadd.f32 0.0, %v3940
          %v3942 = vpop.f32.mrb[0].mxu0
          %3943 = vdwg.mxu0
          %v3944 = vadd.f32 %v3833, %v3938
          %v3945 = vadd.f32 %v3834, %v3941
          %3946 = vmatprep.subr.bf16.mxu0 0
          %3947 = vmatpush1.bf16.msra.mxu0 %v1235
          %3948 = vmatprep.subr.bf16.mxu0 0
          %3949 = vmatpush1.bf16.msra.mxu0 %v1236
          %3950 = vmatprep.subr.bf16.mxu0 0
          %3951 = vmatpush1.bf16.msra.mxu0 %v1237
          %3952 = vmatprep.subr.bf16.mxu0 0
          %3953 = vmatpush1.bf16.msra.mxu0 %v1238
          %3954 = vmatprep.subr.bf16.mxu0 0
          %3955 = vmatpush1.bf16.msra.mxu0 %v1239
          %3956 = vmatprep.subr.bf16.mxu0 0
          %3957 = vmatpush1.bf16.msra.mxu0 %v1240
          %3958 = vmatprep.subr.bf16.mxu0 0
          %3959 = vmatpush1.bf16.msra.mxu0 %v1241
          %3960 = vmatprep.subr.bf16.mxu0 0
          %3961 = vmatpush1.bf16.msra.mxu0 %v1242
          %3962 = vmatprep.subr.bf16.mxu0 0
          %3963 = vmatpush1.bf16.msra.mxu0 0
          %3964 = vmatprep.subr.bf16.mxu0 0
          %3965 = vmatpush1.bf16.msra.mxu0 0
          %3966 = vmatprep.subr.bf16.mxu0 0
          %3967 = vmatpush1.bf16.msra.mxu0 0
          %3968 = vmatprep.subr.bf16.mxu0 0
          %3969 = vmatpush1.bf16.msra.mxu0 0
          %3970 = vmatprep.subr.bf16.mxu0 0
          %3971 = vmatpush1.bf16.msra.mxu0 0
          %3972 = vmatprep.subr.bf16.mxu0 0
          %3973 = vmatpush1.bf16.msra.mxu0 0
          %3974 = vmatprep.subr.bf16.mxu0 0
          %3975 = vmatpush1.bf16.msra.mxu0 0
          %3976 = vmatprep.subr.bf16.mxu0 0
          %3977 = vmatpush1.bf16.msra.mxu0 0
          %3978 = vmatprep.mubr.bf16.mxu0 0
          %3979 = vmatmul.mubr.bf16.gmra.mrb[0].mxu0 %v1830
          %v3980 = vpop.f32.mrb[0].mxu0
          %v3981 = vadd.f32 0.0, %v3980
          %v3982 = vpop.f32.mrb[0].mxu0
          %v3983 = vpop.f32.mrb[0].mxu0
          %v3984 = vadd.f32 0.0, %v3983
          %v3985 = vpop.f32.mrb[0].mxu0
          %3986 = vdwg.mxu0
          %3987 = vmatprep.subr.bf16.mxu0 0
          %3988 = vmatpush1.bf16.msra.mxu0 %v1324
          %3989 = vmatprep.subr.bf16.mxu0 0
          %3990 = vmatpush1.bf16.msra.mxu0 %v1325
          %3991 = vmatprep.subr.bf16.mxu0 0
          %3992 = vmatpush1.bf16.msra.mxu0 %v1326
          %3993 = vmatprep.subr.bf16.mxu0 0
          %3994 = vmatpush1.bf16.msra.mxu0 %v1327
          %3995 = vmatprep.subr.bf16.mxu0 0
          %3996 = vmatpush1.bf16.msra.mxu0 %v1328
          %3997 = vmatprep.subr.bf16.mxu0 0
          %3998 = vmatpush1.bf16.msra.mxu0 %v1329
          %3999 = vmatprep.subr.bf16.mxu0 0
          %4000 = vmatpush1.bf16.msra.mxu0 %v1330
          %4001 = vmatprep.subr.bf16.mxu0 0
          %4002 = vmatpush1.bf16.msra.mxu0 %v1331
          %4003 = vmatprep.subr.bf16.mxu0 0
          %4004 = vmatpush1.bf16.msra.mxu0 0
          %4005 = vmatprep.subr.bf16.mxu0 0
          %4006 = vmatpush1.bf16.msra.mxu0 0
          %4007 = vmatprep.subr.bf16.mxu0 0
          %4008 = vmatpush1.bf16.msra.mxu0 0
          %4009 = vmatprep.subr.bf16.mxu0 0
          %4010 = vmatpush1.bf16.msra.mxu0 0
          %4011 = vmatprep.subr.bf16.mxu0 0
          %4012 = vmatpush1.bf16.msra.mxu0 0
          %4013 = vmatprep.subr.bf16.mxu0 0
          %4014 = vmatpush1.bf16.msra.mxu0 0
          %4015 = vmatprep.subr.bf16.mxu0 0
          %4016 = vmatpush1.bf16.msra.mxu0 0
          %4017 = vmatprep.subr.bf16.mxu0 0
          %4018 = vmatpush1.bf16.msra.mxu0 0
          %4019 = vmatprep.mubr.bf16.mxu0 0
          %4020 = vmatmul.mubr.bf16.gmra.mrb[0].mxu0 %v1719
          %v4021 = vpop.f32.mrb[0].mxu0
          %v4022 = vadd.f32 %v3981, %v4021
          %v4023 = vpop.f32.mrb[0].mxu0
          %v4024 = vpop.f32.mrb[0].mxu0
          %v4025 = vadd.f32 %v3984, %v4024
          %v4026 = vpop.f32.mrb[0].mxu0
          %4027 = vdwg.mxu0
          %4028 = vmatprep.subr.bf16.mxu0 0
          %4029 = vmatpush1.bf16.msra.mxu0 %v1433
          %4030 = vmatprep.subr.bf16.mxu0 0
          %4031 = vmatpush1.bf16.msra.mxu0 %v1434
          %4032 = vmatprep.subr.bf16.mxu0 0
          %4033 = vmatpush1.bf16.msra.mxu0 %v1435
          %4034 = vmatprep.subr.bf16.mxu0 0
          %4035 = vmatpush1.bf16.msra.mxu0 %v1436
          %4036 = vmatprep.subr.bf16.mxu0 0
          %4037 = vmatpush1.bf16.msra.mxu0 %v1437
          %4038 = vmatprep.subr.bf16.mxu0 0
          %4039 = vmatpush1.bf16.msra.mxu0 %v1438
          %4040 = vmatprep.subr.bf16.mxu0 0
          %4041 = vmatpush1.bf16.msra.mxu0 %v1439
          %4042 = vmatprep.subr.bf16.mxu0 0
          %4043 = vmatpush1.bf16.msra.mxu0 %v1440
          %4044 = vmatprep.subr.bf16.mxu0 0
          %4045 = vmatpush1.bf16.msra.mxu0 0
          %4046 = vmatprep.subr.bf16.mxu0 0
          %4047 = vmatpush1.bf16.msra.mxu0 0
          %4048 = vmatprep.subr.bf16.mxu0 0
          %4049 = vmatpush1.bf16.msra.mxu0 0
          %4050 = vmatprep.subr.bf16.mxu0 0
          %4051 = vmatpush1.bf16.msra.mxu0 0
          %4052 = vmatprep.subr.bf16.mxu0 0
          %4053 = vmatpush1.bf16.msra.mxu0 0
          %4054 = vmatprep.subr.bf16.mxu0 0
          %4055 = vmatpush1.bf16.msra.mxu0 0
          %4056 = vmatprep.subr.bf16.mxu0 0
          %4057 = vmatpush1.bf16.msra.mxu0 0
          %4058 = vmatprep.subr.bf16.mxu0 0
          %4059 = vmatpush1.bf16.msra.mxu0 0
          %4060 = vmatprep.mubr.bf16.mxu0 0
          %4061 = vmatmul.mubr.bf16.gmra.mrb[0].mxu0 %v1941
          %v4062 = vpop.f32.mrb[0].mxu0
          %v4063 = vadd.f32 0.0, %v4062
          %v4064 = vpop.f32.mrb[0].mxu0
          %v4065 = vpop.f32.mrb[0].mxu0
          %v4066 = vadd.f32 0.0, %v4065
          %v4067 = vpop.f32.mrb[0].mxu0
          %4068 = vdwg.mxu0
          %v4069 = vadd.f32 %v4022, %v4063
          %v4070 = vadd.f32 %v4025, %v4066
          %4071 = vmatprep.subr.bf16.mxu0 0
          %4072 = vmatpush1.bf16.msra.mxu0 %v1544
          %4073 = vmatprep.subr.bf16.mxu0 0
          %4074 = vmatpush1.bf16.msra.mxu0 %v1545
          %4075 = vmatprep.subr.bf16.mxu0 0
          %4076 = vmatpush1.bf16.msra.mxu0 %v1546
          %4077 = vmatprep.subr.bf16.mxu0 0
          %4078 = vmatpush1.bf16.msra.mxu0 %v1547
          %4079 = vmatprep.subr.bf16.mxu0 0
          %4080 = vmatpush1.bf16.msra.mxu0 %v1548
          %4081 = vmatprep.subr.bf16.mxu0 0
          %4082 = vmatpush1.bf16.msra.mxu0 %v1549
          %4083 = vmatprep.subr.bf16.mxu0 0
          %4084 = vmatpush1.bf16.msra.mxu0 %v1550
          %4085 = vmatprep.subr.bf16.mxu0 0
          %4086 = vmatpush1.bf16.msra.mxu0 %v1551
          %4087 = vmatprep.subr.bf16.mxu0 0
          %4088 = vmatpush1.bf16.msra.mxu0 0
          %4089 = vmatprep.subr.bf16.mxu0 0
          %4090 = vmatpush1.bf16.msra.mxu0 0
          %4091 = vmatprep.subr.bf16.mxu0 0
          %4092 = vmatpush1.bf16.msra.mxu0 0
          %4093 = vmatprep.subr.bf16.mxu0 0
          %4094 = vmatpush1.bf16.msra.mxu0 0
          %4095 = vmatprep.subr.bf16.mxu0 0
          %4096 = vmatpush1.bf16.msra.mxu0 0
          %4097 = vmatprep.subr.bf16.mxu0 0
          %4098 = vmatpush1.bf16.msra.mxu0 0
          %4099 = vmatprep.subr.bf16.mxu0 0
          %4100 = vmatpush1.bf16.msra.mxu0 0
          %4101 = vmatprep.subr.bf16.mxu0 0
          %4102 = vmatpush1.bf16.msra.mxu0 0
          %4103 = vmatprep.mubr.bf16.mxu0 0
          %4104 = vmatmul.mubr.bf16.gmra.mrb[0].mxu0 %v2052
          %v4105 = vpop.f32.mrb[0].mxu0
          %v4106 = vadd.f32 0.0, %v4105
          %v4107 = vpop.f32.mrb[0].mxu0
          %v4108 = vpop.f32.mrb[0].mxu0
          %v4109 = vadd.f32 0.0, %v4108
          %v4110 = vpop.f32.mrb[0].mxu0
          %4111 = vdwg.mxu0
          %v4112 = vadd.f32 %v4069, %v4106
          %v4113 = vadd.f32 %v4070, %v4109
          %4114 = vmatprep.subr.bf16.mxu0 0
          %4115 = vmatpush1.bf16.msra.mxu0 %v1655
          %4116 = vmatprep.subr.bf16.mxu0 0
          %4117 = vmatpush1.bf16.msra.mxu0 %v1656
          %4118 = vmatprep.subr.bf16.mxu0 0
          %4119 = vmatpush1.bf16.msra.mxu0 %v1657
          %4120 = vmatprep.subr.bf16.mxu0 0
          %4121 = vmatpush1.bf16.msra.mxu0 %v1658
          %4122 = vmatprep.subr.bf16.mxu0 0
          %4123 = vmatpush1.bf16.msra.mxu0 %v1659
          %4124 = vmatprep.subr.bf16.mxu0 0
          %4125 = vmatpush1.bf16.msra.mxu0 %v1660
          %4126 = vmatprep.subr.bf16.mxu0 0
          %4127 = vmatpush1.bf16.msra.mxu0 %v1661
          %4128 = vmatprep.subr.bf16.mxu0 0
          %4129 = vmatpush1.bf16.msra.mxu0 %v1662
          %4130 = vmatprep.subr.bf16.mxu0 0
          %4131 = vmatpush1.bf16.msra.mxu0 0
          %4132 = vmatprep.subr.bf16.mxu0 0
          %4133 = vmatpush1.bf16.msra.mxu0 0
          %4134 = vmatprep.subr.bf16.mxu0 0
          %4135 = vmatpush1.bf16.msra.mxu0 0
          %4136 = vmatprep.subr.bf16.mxu0 0
          %4137 = vmatpush1.bf16.msra.mxu0 0
          %4138 = vmatprep.subr.bf16.mxu0 0
          %4139 = vmatpush1.bf16.msra.mxu0 0
          %4140 = vmatprep.subr.bf16.mxu0 0
          %4141 = vmatpush1.bf16.msra.mxu0 0
          %4142 = vmatprep.subr.bf16.mxu0 0
          %4143 = vmatpush1.bf16.msra.mxu0 0
          %4144 = vmatprep.subr.bf16.mxu0 0
          %4145 = vmatpush1.bf16.msra.mxu0 0
          %4146 = vmatprep.mubr.bf16.mxu0 0
          %4147 = vmatmul.mubr.bf16.gmra.mrb[0].mxu0 %v2163
          %v4148 = vpop.f32.mrb[0].mxu0
          %v4149 = vadd.f32 0.0, %v4148
          %v4150 = vpop.f32.mrb[0].mxu0
          %v4151 = vpop.f32.mrb[0].mxu0
          %v4152 = vadd.f32 0.0, %v4151
          %v4153 = vpop.f32.mrb[0].mxu0
          %4154 = vdwg.mxu0
          %v4155 = vadd.f32 %v4112, %v4149
          %v4156 = vadd.f32 %v4113, %v4152
          %4157 = vmatprep.subr.bf16.mxu0 0
          %4158 = vmatpush1.bf16.msra.mxu0 %v1769
          %4159 = vmatprep.subr.bf16.mxu0 0
          %4160 = vmatpush1.bf16.msra.mxu0 %v1770
          %4161 = vmatprep.subr.bf16.mxu0 0
          %4162 = vmatpush1.bf16.msra.mxu0 %v1771
          %4163 = vmatprep.subr.bf16.mxu0 0
          %4164 = vmatpush1.bf16.msra.mxu0 %v1772
          %4165 = vmatprep.subr.bf16.mxu0 0
          %4166 = vmatpush1.bf16.msra.mxu0 %v1773
          %4167 = vmatprep.subr.bf16.mxu0 0
          %4168 = vmatpush1.bf16.msra.mxu0 %v1774
          %4169 = vmatprep.subr.bf16.mxu0 0
          %4170 = vmatpush1.bf16.msra.mxu0 %v1775
          %4171 = vmatprep.subr.bf16.mxu0 0
          %4172 = vmatpush1.bf16.msra.mxu0 %v1776
          %4173 = vmatprep.subr.bf16.mxu0 0
          %4174 = vmatpush1.bf16.msra.mxu0 0
          %4175 = vmatprep.subr.bf16.mxu0 0
          %4176 = vmatpush1.bf16.msra.mxu0 0
          %4177 = vmatprep.subr.bf16.mxu0 0
          %4178 = vmatpush1.bf16.msra.mxu0 0
          %4179 = vmatprep.subr.bf16.mxu0 0
          %4180 = vmatpush1.bf16.msra.mxu0 0
          %4181 = vmatprep.subr.bf16.mxu0 0
          %4182 = vmatpush1.bf16.msra.mxu0 0
          %4183 = vmatprep.subr.bf16.mxu0 0
          %4184 = vmatpush1.bf16.msra.mxu0 0
          %4185 = vmatprep.subr.bf16.mxu0 0
          %4186 = vmatpush1.bf16.msra.mxu0 0
          %4187 = vmatprep.subr.bf16.mxu0 0
          %4188 = vmatpush1.bf16.msra.mxu0 0
          %4189 = vmatprep.mubr.bf16.mxu0 0
          %4190 = vmatmul.mubr.bf16.gmra.mrb[0].mxu0 %v2277
          %v4191 = vpop.f32.mrb[0].mxu0
          %v4192 = vadd.f32 0.0, %v4191
          %v4193 = vpop.f32.mrb[0].mxu0
          %v4194 = vpop.f32.mrb[0].mxu0
          %v4195 = vadd.f32 0.0, %v4194
          %v4196 = vpop.f32.mrb[0].mxu0
          %4197 = vdwg.mxu0
          %v4198 = vadd.f32 %v4155, %v4192
          %v4199 = vadd.f32 %v4156, %v4195
          %4200 = vmatprep.subr.bf16.mxu0 0
          %4201 = vmatpush1.bf16.msra.mxu0 %v1880
          %4202 = vmatprep.subr.bf16.mxu0 0
          %4203 = vmatpush1.bf16.msra.mxu0 %v1881
          %4204 = vmatprep.subr.bf16.mxu0 0
          %4205 = vmatpush1.bf16.msra.mxu0 %v1882
          %4206 = vmatprep.subr.bf16.mxu0 0
          %4207 = vmatpush1.bf16.msra.mxu0 %v1883
          %4208 = vmatprep.subr.bf16.mxu0 0
          %4209 = vmatpush1.bf16.msra.mxu0 %v1884
          %4210 = vmatprep.subr.bf16.mxu0 0
          %4211 = vmatpush1.bf16.msra.mxu0 %v1885
          %4212 = vmatprep.subr.bf16.mxu0 0
          %4213 = vmatpush1.bf16.msra.mxu0 %v1886
          %4214 = vmatprep.subr.bf16.mxu0 0
          %4215 = vmatpush1.bf16.msra.mxu0 %v1887
          %4216 = vmatprep.subr.bf16.mxu0 0
          %4217 = vmatpush1.bf16.msra.mxu0 0
          %4218 = vmatprep.subr.bf16.mxu0 0
          %4219 = vmatpush1.bf16.msra.mxu0 0
          %4220 = vmatprep.subr.bf16.mxu0 0
          %4221 = vmatpush1.bf16.msra.mxu0 0
          %4222 = vmatprep.subr.bf16.mxu0 0
          %4223 = vmatpush1.bf16.msra.mxu0 0
          %4224 = vmatprep.subr.bf16.mxu0 0
          %4225 = vmatpush1.bf16.msra.mxu0 0
          %4226 = vmatprep.subr.bf16.mxu0 0
          %4227 = vmatpush1.bf16.msra.mxu0 0
          %4228 = vmatprep.subr.bf16.mxu0 0
          %4229 = vmatpush1.bf16.msra.mxu0 0
          %4230 = vmatprep.subr.bf16.mxu0 0
          %4231 = vmatpush1.bf16.msra.mxu0 0
          %4232 = vmatprep.mubr.bf16.mxu0 0
          %4233 = vmatmul.mubr.bf16.gmra.mrb[0].mxu0 %v2388
          %v4234 = vpop.f32.mrb[0].mxu0
          %v4235 = vadd.f32 0.0, %v4234
          %v4236 = vpop.f32.mrb[0].mxu0
          %v4237 = vpop.f32.mrb[0].mxu0
          %v4238 = vadd.f32 0.0, %v4237
          %v4239 = vpop.f32.mrb[0].mxu0
          %4240 = vdwg.mxu0
          %v4241 = vadd.f32 %v4198, %v4235
          %v4242 = vadd.f32 %v4199, %v4238
          %4243 = vmatprep.subr.bf16.mxu0 0
          %4244 = vmatpush1.bf16.msra.mxu0 %v1991
          %4245 = vmatprep.subr.bf16.mxu0 0
          %4246 = vmatpush1.bf16.msra.mxu0 %v1992
          %4247 = vmatprep.subr.bf16.mxu0 0
          %4248 = vmatpush1.bf16.msra.mxu0 %v1993
          %4249 = vmatprep.subr.bf16.mxu0 0
          %4250 = vmatpush1.bf16.msra.mxu0 %v1994
          %4251 = vmatprep.subr.bf16.mxu0 0
          %4252 = vmatpush1.bf16.msra.mxu0 %v1995
          %4253 = vmatprep.subr.bf16.mxu0 0
          %4254 = vmatpush1.bf16.msra.mxu0 %v1996
          %4255 = vmatprep.subr.bf16.mxu0 0
          %4256 = vmatpush1.bf16.msra.mxu0 %v1997
          %4257 = vmatprep.subr.bf16.mxu0 0
          %4258 = vmatpush1.bf16.msra.mxu0 %v1998
          %4259 = vmatprep.subr.bf16.mxu0 0
          %4260 = vmatpush1.bf16.msra.mxu0 0
          %4261 = vmatprep.subr.bf16.mxu0 0
          %4262 = vmatpush1.bf16.msra.mxu0 0
          %4263 = vmatprep.subr.bf16.mxu0 0
          %4264 = vmatpush1.bf16.msra.mxu0 0
          %4265 = vmatprep.subr.bf16.mxu0 0
          %4266 = vmatpush1.bf16.msra.mxu0 0
          %4267 = vmatprep.subr.bf16.mxu0 0
          %4268 = vmatpush1.bf16.msra.mxu0 0
          %4269 = vmatprep.subr.bf16.mxu0 0
          %4270 = vmatpush1.bf16.msra.mxu0 0
          %4271 = vmatprep.subr.bf16.mxu0 0
          %4272 = vmatpush1.bf16.msra.mxu0 0
          %4273 = vmatprep.subr.bf16.mxu0 0
          %4274 = vmatpush1.bf16.msra.mxu0 0
          %4275 = vmatprep.mubr.bf16.mxu0 0
          %4276 = vmatmul.mubr.bf16.gmra.mrb[0].mxu0 %v2499
          %v4277 = vpop.f32.mrb[0].mxu0
          %v4278 = vadd.f32 0.0, %v4277
          %v4279 = vpop.f32.mrb[0].mxu0
          %v4280 = vpop.f32.mrb[0].mxu0
          %v4281 = vadd.f32 0.0, %v4280
          %v4282 = vpop.f32.mrb[0].mxu0
          %4283 = vdwg.mxu0
          %v4284 = vadd.f32 %v4241, %v4278
          %v4285 = vadd.f32 %v4242, %v4281
          %4286 = vmatprep.subr.bf16.mxu0 0
          %4287 = vmatpush1.bf16.msra.mxu0 %v2102
          %4288 = vmatprep.subr.bf16.mxu0 0
          %4289 = vmatpush1.bf16.msra.mxu0 %v2103
          %4290 = vmatprep.subr.bf16.mxu0 0
          %4291 = vmatpush1.bf16.msra.mxu0 %v2104
          %4292 = vmatprep.subr.bf16.mxu0 0
          %4293 = vmatpush1.bf16.msra.mxu0 %v2105
          %4294 = vmatprep.subr.bf16.mxu0 0
          %4295 = vmatpush1.bf16.msra.mxu0 %v2106
          %4296 = vmatprep.subr.bf16.mxu0 0
          %4297 = vmatpush1.bf16.msra.mxu0 %v2107
          %4298 = vmatprep.subr.bf16.mxu0 0
          %4299 = vmatpush1.bf16.msra.mxu0 %v2108
          %4300 = vmatprep.subr.bf16.mxu0 0
          %4301 = vmatpush1.bf16.msra.mxu0 %v2109
          %4302 = vmatprep.subr.bf16.mxu0 0
          %4303 = vmatpush1.bf16.msra.mxu0 0
          %4304 = vmatprep.subr.bf16.mxu0 0
          %4305 = vmatpush1.bf16.msra.mxu0 0
          %4306 = vmatprep.subr.bf16.mxu0 0
          %4307 = vmatpush1.bf16.msra.mxu0 0
          %4308 = vmatprep.subr.bf16.mxu0 0
          %4309 = vmatpush1.bf16.msra.mxu0 0
          %4310 = vmatprep.subr.bf16.mxu0 0
          %4311 = vmatpush1.bf16.msra.mxu0 0
          %4312 = vmatprep.subr.bf16.mxu0 0
          %4313 = vmatpush1.bf16.msra.mxu0 0
          %4314 = vmatprep.subr.bf16.mxu0 0
          %4315 = vmatpush1.bf16.msra.mxu0 0
          %4316 = vmatprep.subr.bf16.mxu0 0
          %4317 = vmatpush1.bf16.msra.mxu0 0
          %4318 = vmatprep.mubr.bf16.mxu0 0
          %4319 = vmatmul.mubr.bf16.gmra.mrb[0].mxu0 %v2610
          %v4320 = vpop.f32.mrb[0].mxu0
          %v4321 = vadd.f32 0.0, %v4320
          %v4322 = vpop.f32.mrb[0].mxu0
          %v4323 = vpop.f32.mrb[0].mxu0
          %v4324 = vadd.f32 0.0, %v4323
          %v4325 = vpop.f32.mrb[0].mxu0
          %4326 = vdwg.mxu0
          %v4327 = vadd.f32 %v4284, %v4321
          %v4328 = vadd.f32 %v4285, %v4324
          %4329 = vmatprep.subr.bf16.mxu0 0
          %4330 = vmatpush1.bf16.msra.mxu0 %v2213
          %4331 = vmatprep.subr.bf16.mxu0 0
          %4332 = vmatpush1.bf16.msra.mxu0 %v2214
          %4333 = vmatprep.subr.bf16.mxu0 0
          %4334 = vmatpush1.bf16.msra.mxu0 %v2215
          %4335 = vmatprep.subr.bf16.mxu0 0
          %4336 = vmatpush1.bf16.msra.mxu0 %v2216
          %4337 = vmatprep.subr.bf16.mxu0 0
          %4338 = vmatpush1.bf16.msra.mxu0 %v2217
          %4339 = vmatprep.subr.bf16.mxu0 0
          %4340 = vmatpush1.bf16.msra.mxu0 %v2218
          %4341 = vmatprep.subr.bf16.mxu0 0
          %4342 = vmatpush1.bf16.msra.mxu0 %v2219
          %4343 = vmatprep.subr.bf16.mxu0 0
          %4344 = vmatpush1.bf16.msra.mxu0 %v2220
          %4345 = vmatprep.subr.bf16.mxu0 0
          %4346 = vmatpush1.bf16.msra.mxu0 0
          %4347 = vmatprep.subr.bf16.mxu0 0
          %4348 = vmatpush1.bf16.msra.mxu0 0
          %4349 = vmatprep.subr.bf16.mxu0 0
          %4350 = vmatpush1.bf16.msra.mxu0 0
          %4351 = vmatprep.subr.bf16.mxu0 0
          %4352 = vmatpush1.bf16.msra.mxu0 0
          %4353 = vmatprep.subr.bf16.mxu0 0
          %4354 = vmatpush1.bf16.msra.mxu0 0
          %4355 = vmatprep.subr.bf16.mxu0 0
          %4356 = vmatpush1.bf16.msra.mxu0 0
          %4357 = vmatprep.subr.bf16.mxu0 0
          %4358 = vmatpush1.bf16.msra.mxu0 0
          %4359 = vmatprep.subr.bf16.mxu0 0
          %4360 = vmatpush1.bf16.msra.mxu0 0
          %4361 = vmatprep.mubr.bf16.mxu0 0
          %4362 = vmatmul.mubr.bf16.gmra.mrb[0].mxu0 %v2721
          %v4363 = vpop.f32.mrb[0].mxu0
          %v4364 = vadd.f32 0.0, %v4363
          %v4365 = vpop.f32.mrb[0].mxu0
          %v4366 = vpop.f32.mrb[0].mxu0
          %v4367 = vadd.f32 0.0, %v4366
          %v4368 = vpop.f32.mrb[0].mxu0
          %4369 = vdwg.mxu0
          %v4370 = vadd.f32 %v4327, %v4364
          %v4371 = vadd.f32 %v4328, %v4367
          %4372 = vmatprep.subr.bf16.mxu0 0
          %4373 = vmatpush1.bf16.msra.mxu0 %v2327
          %4374 = vmatprep.subr.bf16.mxu0 0
          %4375 = vmatpush1.bf16.msra.mxu0 %v2328
          %4376 = vmatprep.subr.bf16.mxu0 0
          %4377 = vmatpush1.bf16.msra.mxu0 %v2329
          %4378 = vmatprep.subr.bf16.mxu0 0
          %4379 = vmatpush1.bf16.msra.mxu0 %v2330
          %4380 = vmatprep.subr.bf16.mxu0 0
          %4381 = vmatpush1.bf16.msra.mxu0 %v2331
          %4382 = vmatprep.subr.bf16.mxu0 0
          %4383 = vmatpush1.bf16.msra.mxu0 %v2332
          %4384 = vmatprep.subr.bf16.mxu0 0
          %4385 = vmatpush1.bf16.msra.mxu0 %v2333
          %4386 = vmatprep.subr.bf16.mxu0 0
          %4387 = vmatpush1.bf16.msra.mxu0 %v2334
          %4388 = vmatprep.subr.bf16.mxu0 0
          %4389 = vmatpush1.bf16.msra.mxu0 0
          %4390 = vmatprep.subr.bf16.mxu0 0
          %4391 = vmatpush1.bf16.msra.mxu0 0
          %4392 = vmatprep.subr.bf16.mxu0 0
          %4393 = vmatpush1.bf16.msra.mxu0 0
          %4394 = vmatprep.subr.bf16.mxu0 0
          %4395 = vmatpush1.bf16.msra.mxu0 0
          %4396 = vmatprep.subr.bf16.mxu0 0
          %4397 = vmatpush1.bf16.msra.mxu0 0
          %4398 = vmatprep.subr.bf16.mxu0 0
          %4399 = vmatpush1.bf16.msra.mxu0 0
          %4400 = vmatprep.subr.bf16.mxu0 0
          %4401 = vmatpush1.bf16.msra.mxu0 0
          %4402 = vmatprep.subr.bf16.mxu0 0
          %4403 = vmatpush1.bf16.msra.mxu0 0
          %4404 = vmatprep.mubr.bf16.mxu0 0
          %4405 = vmatmul.mubr.bf16.gmra.mrb[0].mxu0 %v2835
          %v4406 = vpop.f32.mrb[0].mxu0
          %v4407 = vadd.f32 0.0, %v4406
          %v4408 = vpop.f32.mrb[0].mxu0
          %v4409 = vpop.f32.mrb[0].mxu0
          %v4410 = vadd.f32 0.0, %v4409
          %v4411 = vpop.f32.mrb[0].mxu0
          %4412 = vdwg.mxu0
          %v4413 = vadd.f32 %v4370, %v4407
          %v4414 = vadd.f32 %v4371, %v4410
          %4415 = vmatprep.subr.bf16.mxu0 0
          %4416 = vmatpush1.bf16.msra.mxu0 %v2438
          %4417 = vmatprep.subr.bf16.mxu0 0
          %4418 = vmatpush1.bf16.msra.mxu0 %v2439
          %4419 = vmatprep.subr.bf16.mxu0 0
          %4420 = vmatpush1.bf16.msra.mxu0 %v2440
          %4421 = vmatprep.subr.bf16.mxu0 0
          %4422 = vmatpush1.bf16.msra.mxu0 %v2441
          %4423 = vmatprep.subr.bf16.mxu0 0
          %4424 = vmatpush1.bf16.msra.mxu0 %v2442
          %4425 = vmatprep.subr.bf16.mxu0 0
          %4426 = vmatpush1.bf16.msra.mxu0 %v2443
          %4427 = vmatprep.subr.bf16.mxu0 0
          %4428 = vmatpush1.bf16.msra.mxu0 %v2444
          %4429 = vmatprep.subr.bf16.mxu0 0
          %4430 = vmatpush1.bf16.msra.mxu0 %v2445
          %4431 = vmatprep.subr.bf16.mxu0 0
          %4432 = vmatpush1.bf16.msra.mxu0 0
          %4433 = vmatprep.subr.bf16.mxu0 0
          %4434 = vmatpush1.bf16.msra.mxu0 0
          %4435 = vmatprep.subr.bf16.mxu0 0
          %4436 = vmatpush1.bf16.msra.mxu0 0
          %4437 = vmatprep.subr.bf16.mxu0 0
          %4438 = vmatpush1.bf16.msra.mxu0 0
          %4439 = vmatprep.subr.bf16.mxu0 0
          %4440 = vmatpush1.bf16.msra.mxu0 0
          %4441 = vmatprep.subr.bf16.mxu0 0
          %4442 = vmatpush1.bf16.msra.mxu0 0
          %4443 = vmatprep.subr.bf16.mxu0 0
          %4444 = vmatpush1.bf16.msra.mxu0 0
          %4445 = vmatprep.subr.bf16.mxu0 0
          %4446 = vmatpush1.bf16.msra.mxu0 0
          %4447 = vmatprep.mubr.bf16.mxu0 0
          %4448 = vmatmul.mubr.bf16.gmra.mrb[0].mxu0 %v2946
          %v4449 = vpop.f32.mrb[0].mxu0
          %v4450 = vadd.f32 0.0, %v4449
          %v4451 = vpop.f32.mrb[0].mxu0
          %v4452 = vpop.f32.mrb[0].mxu0
          %v4453 = vadd.f32 0.0, %v4452
          %v4454 = vpop.f32.mrb[0].mxu0
          %4455 = vdwg.mxu0
          %v4456 = vadd.f32 %v4413, %v4450
          %v4457 = vadd.f32 %v4414, %v4453
          %4458 = vmatprep.subr.bf16.mxu0 0
          %4459 = vmatpush1.bf16.msra.mxu0 %v2549
          %4460 = vmatprep.subr.bf16.mxu0 0
          %4461 = vmatpush1.bf16.msra.mxu0 %v2550
          %4462 = vmatprep.subr.bf16.mxu0 0
          %4463 = vmatpush1.bf16.msra.mxu0 %v2551
          %4464 = vmatprep.subr.bf16.mxu0 0
          %4465 = vmatpush1.bf16.msra.mxu0 %v2552
          %4466 = vmatprep.subr.bf16.mxu0 0
          %4467 = vmatpush1.bf16.msra.mxu0 %v2553
          %4468 = vmatprep.subr.bf16.mxu0 0
          %4469 = vmatpush1.bf16.msra.mxu0 %v2554
          %4470 = vmatprep.subr.bf16.mxu0 0
          %4471 = vmatpush1.bf16.msra.mxu0 %v2555
          %4472 = vmatprep.subr.bf16.mxu0 0
          %4473 = vmatpush1.bf16.msra.mxu0 %v2556
          %4474 = vmatprep.subr.bf16.mxu0 0
          %4475 = vmatpush1.bf16.msra.mxu0 0
          %4476 = vmatprep.subr.bf16.mxu0 0
          %4477 = vmatpush1.bf16.msra.mxu0 0
          %4478 = vmatprep.subr.bf16.mxu0 0
          %4479 = vmatpush1.bf16.msra.mxu0 0
          %4480 = vmatprep.subr.bf16.mxu0 0
          %4481 = vmatpush1.bf16.msra.mxu0 0
          %4482 = vmatprep.subr.bf16.mxu0 0
          %4483 = vmatpush1.bf16.msra.mxu0 0
          %4484 = vmatprep.subr.bf16.mxu0 0
          %4485 = vmatpush1.bf16.msra.mxu0 0
          %4486 = vmatprep.subr.bf16.mxu0 0
          %4487 = vmatpush1.bf16.msra.mxu0 0
          %4488 = vmatprep.subr.bf16.mxu0 0
          %4489 = vmatpush1.bf16.msra.mxu0 0
          %4490 = vmatprep.mubr.bf16.mxu0 0
          %4491 = vmatmul.mubr.bf16.gmra.mrb[0].mxu0 %v3057
          %v4492 = vpop.f32.mrb[0].mxu0
          %v4493 = vadd.f32 0.0, %v4492
          %v4494 = vpop.f32.mrb[0].mxu0
          %v4495 = vpop.f32.mrb[0].mxu0
          %v4496 = vadd.f32 0.0, %v4495
          %v4497 = vpop.f32.mrb[0].mxu0
          %4498 = vdwg.mxu0
          %v4499 = vadd.f32 %v4456, %v4493
          %v4500 = vadd.f32 %v4457, %v4496
          %4501 = vmatprep.subr.bf16.mxu0 0
          %4502 = vmatpush1.bf16.msra.mxu0 %v2660
          %4503 = vmatprep.subr.bf16.mxu0 0
          %4504 = vmatpush1.bf16.msra.mxu0 %v2661
          %4505 = vmatprep.subr.bf16.mxu0 0
          %4506 = vmatpush1.bf16.msra.mxu0 %v2662
          %4507 = vmatprep.subr.bf16.mxu0 0
          %4508 = vmatpush1.bf16.msra.mxu0 %v2663
          %4509 = vmatprep.subr.bf16.mxu0 0
          %4510 = vmatpush1.bf16.msra.mxu0 %v2664
          %4511 = vmatprep.subr.bf16.mxu0 0
          %4512 = vmatpush1.bf16.msra.mxu0 %v2665
          %4513 = vmatprep.subr.bf16.mxu0 0
          %4514 = vmatpush1.bf16.msra.mxu0 %v2666
          %4515 = vmatprep.subr.bf16.mxu0 0
          %4516 = vmatpush1.bf16.msra.mxu0 %v2667
          %4517 = vmatprep.subr.bf16.mxu0 0
          %4518 = vmatpush1.bf16.msra.mxu0 0
          %4519 = vmatprep.subr.bf16.mxu0 0
          %4520 = vmatpush1.bf16.msra.mxu0 0
          %4521 = vmatprep.subr.bf16.mxu0 0
          %4522 = vmatpush1.bf16.msra.mxu0 0
          %4523 = vmatprep.subr.bf16.mxu0 0
          %4524 = vmatpush1.bf16.msra.mxu0 0
          %4525 = vmatprep.subr.bf16.mxu0 0
          %4526 = vmatpush1.bf16.msra.mxu0 0
          %4527 = vmatprep.subr.bf16.mxu0 0
          %4528 = vmatpush1.bf16.msra.mxu0 0
          %4529 = vmatprep.subr.bf16.mxu0 0
          %4530 = vmatpush1.bf16.msra.mxu0 0
          %4531 = vmatprep.subr.bf16.mxu0 0
          %4532 = vmatpush1.bf16.msra.mxu0 0
          %4533 = vmatprep.mubr.bf16.mxu0 0
          %4534 = vmatmul.mubr.bf16.gmra.mrb[0].mxu0 %v3168
          %v4535 = vpop.f32.mrb[0].mxu0
          %v4536 = vadd.f32 0.0, %v4535
          %v4537 = vpop.f32.mrb[0].mxu0
          %v4538 = vpop.f32.mrb[0].mxu0
          %v4539 = vadd.f32 0.0, %v4538
          %v4540 = vpop.f32.mrb[0].mxu0
          %4541 = vdwg.mxu0
          %v4542 = vadd.f32 %v4499, %v4536
          %v4543 = vadd.f32 %v4500, %v4539
          %4544 = vmatprep.subr.bf16.mxu0 0
          %4545 = vmatpush1.bf16.msra.mxu0 %v2771
          %4546 = vmatprep.subr.bf16.mxu0 0
          %4547 = vmatpush1.bf16.msra.mxu0 %v2772
          %4548 = vmatprep.subr.bf16.mxu0 0
          %4549 = vmatpush1.bf16.msra.mxu0 %v2773
          %4550 = vmatprep.subr.bf16.mxu0 0
          %4551 = vmatpush1.bf16.msra.mxu0 %v2774
          %4552 = vmatprep.subr.bf16.mxu0 0
          %4553 = vmatpush1.bf16.msra.mxu0 %v2775
          %4554 = vmatprep.subr.bf16.mxu0 0
          %4555 = vmatpush1.bf16.msra.mxu0 %v2776
          %4556 = vmatprep.subr.bf16.mxu0 0
          %4557 = vmatpush1.bf16.msra.mxu0 %v2777
          %4558 = vmatprep.subr.bf16.mxu0 0
          %4559 = vmatpush1.bf16.msra.mxu0 %v2778
          %4560 = vmatprep.subr.bf16.mxu0 0
          %4561 = vmatpush1.bf16.msra.mxu0 0
          %4562 = vmatprep.subr.bf16.mxu0 0
          %4563 = vmatpush1.bf16.msra.mxu0 0
          %4564 = vmatprep.subr.bf16.mxu0 0
          %4565 = vmatpush1.bf16.msra.mxu0 0
          %4566 = vmatprep.subr.bf16.mxu0 0
          %4567 = vmatpush1.bf16.msra.mxu0 0
          %4568 = vmatprep.subr.bf16.mxu0 0
          %4569 = vmatpush1.bf16.msra.mxu0 0
          %4570 = vmatprep.subr.bf16.mxu0 0
          %4571 = vmatpush1.bf16.msra.mxu0 0
          %4572 = vmatprep.subr.bf16.mxu0 0
          %4573 = vmatpush1.bf16.msra.mxu0 0
          %4574 = vmatprep.subr.bf16.mxu0 0
          %4575 = vmatpush1.bf16.msra.mxu0 0
          %4576 = vmatprep.mubr.bf16.mxu0 0
          %4577 = vmatmul.mubr.bf16.gmra.mrb[0].mxu0 %v3279
          %v4578 = vpop.f32.mrb[0].mxu0
          %v4579 = vadd.f32 0.0, %v4578
          %v4580 = vpop.f32.mrb[0].mxu0
          %v4581 = vpop.f32.mrb[0].mxu0
          %v4582 = vadd.f32 0.0, %v4581
          %v4583 = vpop.f32.mrb[0].mxu0
          %4584 = vdwg.mxu0
          %v4585 = vadd.f32 %v4542, %v4579
          %v4586 = vadd.f32 %v4543, %v4582
          %4587 = vmatprep.subr.bf16.mxu0 0
          %4588 = vmatpush1.bf16.msra.mxu0 %v2885
          %4589 = vmatprep.subr.bf16.mxu0 0
          %4590 = vmatpush1.bf16.msra.mxu0 %v2886
          %4591 = vmatprep.subr.bf16.mxu0 0
          %4592 = vmatpush1.bf16.msra.mxu0 %v2887
          %4593 = vmatprep.subr.bf16.mxu0 0
          %4594 = vmatpush1.bf16.msra.mxu0 %v2888
          %4595 = vmatprep.subr.bf16.mxu0 0
          %4596 = vmatpush1.bf16.msra.mxu0 %v2889
          %4597 = vmatprep.subr.bf16.mxu0 0
          %4598 = vmatpush1.bf16.msra.mxu0 %v2890
          %4599 = vmatprep.subr.bf16.mxu0 0
          %4600 = vmatpush1.bf16.msra.mxu0 %v2891
          %4601 = vmatprep.subr.bf16.mxu0 0
          %4602 = vmatpush1.bf16.msra.mxu0 %v2892
          %4603 = vmatprep.subr.bf16.mxu0 0
          %4604 = vmatpush1.bf16.msra.mxu0 0
          %4605 = vmatprep.subr.bf16.mxu0 0
          %4606 = vmatpush1.bf16.msra.mxu0 0
          %4607 = vmatprep.subr.bf16.mxu0 0
          %4608 = vmatpush1.bf16.msra.mxu0 0
          %4609 = vmatprep.subr.bf16.mxu0 0
          %4610 = vmatpush1.bf16.msra.mxu0 0
          %4611 = vmatprep.subr.bf16.mxu0 0
          %4612 = vmatpush1.bf16.msra.mxu0 0
          %4613 = vmatprep.subr.bf16.mxu0 0
          %4614 = vmatpush1.bf16.msra.mxu0 0
          %4615 = vmatprep.subr.bf16.mxu0 0
          %4616 = vmatpush1.bf16.msra.mxu0 0
          %4617 = vmatprep.subr.bf16.mxu0 0
          %4618 = vmatpush1.bf16.msra.mxu0 0
          %4619 = vmatprep.mubr.bf16.mxu0 0
          %4620 = vmatmul.mubr.bf16.gmra.mrb[0].mxu0 %v3393
          %v4621 = vpop.f32.mrb[0].mxu0
          %v4622 = vadd.f32 0.0, %v4621
          %v4623 = vpop.f32.mrb[0].mxu0
          %v4624 = vpop.f32.mrb[0].mxu0
          %v4625 = vadd.f32 0.0, %v4624
          %v4626 = vpop.f32.mrb[0].mxu0
          %4627 = vdwg.mxu0
          %v4628 = vadd.f32 %v4585, %v4622
          %v4629 = vadd.f32 %v4586, %v4625
          %4630 = vmatprep.subr.bf16.mxu0 0
          %4631 = vmatpush1.bf16.msra.mxu0 %v2996
          %4632 = vmatprep.subr.bf16.mxu0 0
          %4633 = vmatpush1.bf16.msra.mxu0 %v2997
          %4634 = vmatprep.subr.bf16.mxu0 0
          %4635 = vmatpush1.bf16.msra.mxu0 %v2998
          %4636 = vmatprep.subr.bf16.mxu0 0
          %4637 = vmatpush1.bf16.msra.mxu0 %v2999
          %4638 = vmatprep.subr.bf16.mxu0 0
          %4639 = vmatpush1.bf16.msra.mxu0 %v3000
          %4640 = vmatprep.subr.bf16.mxu0 0
          %4641 = vmatpush1.bf16.msra.mxu0 %v3001
          %4642 = vmatprep.subr.bf16.mxu0 0
          %4643 = vmatpush1.bf16.msra.mxu0 %v3002
          %4644 = vmatprep.subr.bf16.mxu0 0
          %4645 = vmatpush1.bf16.msra.mxu0 %v3003
          %4646 = vmatprep.subr.bf16.mxu0 0
          %4647 = vmatpush1.bf16.msra.mxu0 0
          %4648 = vmatprep.subr.bf16.mxu0 0
          %4649 = vmatpush1.bf16.msra.mxu0 0
          %4650 = vmatprep.subr.bf16.mxu0 0
          %4651 = vmatpush1.bf16.msra.mxu0 0
          %4652 = vmatprep.subr.bf16.mxu0 0
          %4653 = vmatpush1.bf16.msra.mxu0 0
          %4654 = vmatprep.subr.bf16.mxu0 0
          %4655 = vmatpush1.bf16.msra.mxu0 0
          %4656 = vmatprep.subr.bf16.mxu0 0
          %4657 = vmatpush1.bf16.msra.mxu0 0
          %4658 = vmatprep.subr.bf16.mxu0 0
          %4659 = vmatpush1.bf16.msra.mxu0 0
          %4660 = vmatprep.subr.bf16.mxu0 0
          %4661 = vmatpush1.bf16.msra.mxu0 0
          %4662 = vmatprep.mubr.bf16.mxu0 0
          %4663 = vmatmul.mubr.bf16.gmra.mrb[0].mxu0 %v3504
          %v4664 = vpop.f32.mrb[0].mxu0
          %v4665 = vadd.f32 0.0, %v4664
          %v4666 = vpop.f32.mrb[0].mxu0
          %v4667 = vpop.f32.mrb[0].mxu0
          %v4668 = vadd.f32 0.0, %v4667
          %v4669 = vpop.f32.mrb[0].mxu0
          %4670 = vdwg.mxu0
          %v4671 = vadd.f32 %v4628, %v4665
          %v4672 = vadd.f32 %v4629, %v4668
          %4673 = vmatprep.subr.bf16.mxu0 0
          %4674 = vmatpush1.bf16.msra.mxu0 %v3107
          %4675 = vmatprep.subr.bf16.mxu0 0
          %4676 = vmatpush1.bf16.msra.mxu0 %v3108
          %4677 = vmatprep.subr.bf16.mxu0 0
          %4678 = vmatpush1.bf16.msra.mxu0 %v3109
          %4679 = vmatprep.subr.bf16.mxu0 0
          %4680 = vmatpush1.bf16.msra.mxu0 %v3110
          %4681 = vmatprep.subr.bf16.mxu0 0
          %4682 = vmatpush1.bf16.msra.mxu0 %v3111
          %4683 = vmatprep.subr.bf16.mxu0 0
          %4684 = vmatpush1.bf16.msra.mxu0 %v3112
          %4685 = vmatprep.subr.bf16.mxu0 0
          %4686 = vmatpush1.bf16.msra.mxu0 %v3113
          %4687 = vmatprep.subr.bf16.mxu0 0
          %4688 = vmatpush1.bf16.msra.mxu0 %v3114
          %4689 = vmatprep.subr.bf16.mxu0 0
          %4690 = vmatpush1.bf16.msra.mxu0 0
          %4691 = vmatprep.subr.bf16.mxu0 0
          %4692 = vmatpush1.bf16.msra.mxu0 0
          %4693 = vmatprep.subr.bf16.mxu0 0
          %4694 = vmatpush1.bf16.msra.mxu0 0
          %4695 = vmatprep.subr.bf16.mxu0 0
          %4696 = vmatpush1.bf16.msra.mxu0 0
          %4697 = vmatprep.subr.bf16.mxu0 0
          %4698 = vmatpush1.bf16.msra.mxu0 0
          %4699 = vmatprep.subr.bf16.mxu0 0
          %4700 = vmatpush1.bf16.msra.mxu0 0
          %4701 = vmatprep.subr.bf16.mxu0 0
          %4702 = vmatpush1.bf16.msra.mxu0 0
          %4703 = vmatprep.subr.bf16.mxu0 0
          %4704 = vmatpush1.bf16.msra.mxu0 0
          %4705 = vmatprep.mubr.bf16.mxu0 0
          %4706 = vmatmul.mubr.bf16.gmra.mrb[0].mxu0 %v3615
          %v4707 = vpop.f32.mrb[0].mxu0
          %v4708 = vadd.f32 0.0, %v4707
          %v4709 = vpop.f32.mrb[0].mxu0
          %v4710 = vpop.f32.mrb[0].mxu0
          %v4711 = vadd.f32 0.0, %v4710
          %v4712 = vpop.f32.mrb[0].mxu0
          %4713 = vdwg.mxu0
          %v4714 = vadd.f32 %v4671, %v4708
          %v4715 = vadd.f32 %v4672, %v4711
          %4716 = vmatprep.subr.bf16.mxu0 0
          %4717 = vmatpush1.bf16.msra.mxu0 %v3218
          %4718 = vmatprep.subr.bf16.mxu0 0
          %4719 = vmatpush1.bf16.msra.mxu0 %v3219
          %4720 = vmatprep.subr.bf16.mxu0 0
          %4721 = vmatpush1.bf16.msra.mxu0 %v3220
          %4722 = vmatprep.subr.bf16.mxu0 0
          %4723 = vmatpush1.bf16.msra.mxu0 %v3221
          %4724 = vmatprep.subr.bf16.mxu0 0
          %4725 = vmatpush1.bf16.msra.mxu0 %v3222
          %4726 = vmatprep.subr.bf16.mxu0 0
          %4727 = vmatpush1.bf16.msra.mxu0 %v3223
          %4728 = vmatprep.subr.bf16.mxu0 0
          %4729 = vmatpush1.bf16.msra.mxu0 %v3224
          %4730 = vmatprep.subr.bf16.mxu0 0
          %4731 = vmatpush1.bf16.msra.mxu0 %v3225
          %4732 = vmatprep.subr.bf16.mxu0 0
          %4733 = vmatpush1.bf16.msra.mxu0 0
          %4734 = vmatprep.subr.bf16.mxu0 0
          %4735 = vmatpush1.bf16.msra.mxu0 0
          %4736 = vmatprep.subr.bf16.mxu0 0
          %4737 = vmatpush1.bf16.msra.mxu0 0
          %4738 = vmatprep.subr.bf16.mxu0 0
          %4739 = vmatpush1.bf16.msra.mxu0 0
          %4740 = vmatprep.subr.bf16.mxu0 0
          %4741 = vmatpush1.bf16.msra.mxu0 0
          %4742 = vmatprep.subr.bf16.mxu0 0
          %4743 = vmatpush1.bf16.msra.mxu0 0
          %4744 = vmatprep.subr.bf16.mxu0 0
          %4745 = vmatpush1.bf16.msra.mxu0 0
          %4746 = vmatprep.subr.bf16.mxu0 0
          %4747 = vmatpush1.bf16.msra.mxu0 0
          %4748 = vmatprep.mubr.bf16.mxu0 0
          %4749 = vmatmul.mubr.bf16.gmra.mrb[0].mxu0 %v3726
          %v4750 = vpop.f32.mrb[0].mxu0
          %v4751 = vadd.f32 0.0, %v4750
          %v4752 = vpop.f32.mrb[0].mxu0
          %v4753 = vpop.f32.mrb[0].mxu0
          %v4754 = vadd.f32 0.0, %v4753
          %v4755 = vpop.f32.mrb[0].mxu0
          %4756 = vdwg.mxu0
          %v4757 = vadd.f32 %v4714, %v4751
          %v4758 = vadd.f32 %v4715, %v4754
          %4759 = vmatprep.subr.bf16.mxu0 0
          %4760 = vmatpush1.bf16.msra.mxu0 %v3329
          %4761 = vmatprep.subr.bf16.mxu0 0
          %4762 = vmatpush1.bf16.msra.mxu0 %v3330
          %4763 = vmatprep.subr.bf16.mxu0 0
          %4764 = vmatpush1.bf16.msra.mxu0 %v3331
          %4765 = vmatprep.subr.bf16.mxu0 0
          %4766 = vmatpush1.bf16.msra.mxu0 %v3332
          %4767 = vmatprep.subr.bf16.mxu0 0
          %4768 = vmatpush1.bf16.msra.mxu0 %v3333
          %4769 = vmatprep.subr.bf16.mxu0 0
          %4770 = vmatpush1.bf16.msra.mxu0 %v3334
          %4771 = vmatprep.subr.bf16.mxu0 0
          %4772 = vmatpush1.bf16.msra.mxu0 %v3335
          %4773 = vmatprep.subr.bf16.mxu0 0
          %4774 = vmatpush1.bf16.msra.mxu0 %v3336
          %4775 = vmatprep.subr.bf16.mxu0 0
          %4776 = vmatpush1.bf16.msra.mxu0 0
          %4777 = vmatprep.subr.bf16.mxu0 0
          %4778 = vmatpush1.bf16.msra.mxu0 0
          %4779 = vmatprep.subr.bf16.mxu0 0
          %4780 = vmatpush1.bf16.msra.mxu0 0
          %4781 = vmatprep.subr.bf16.mxu0 0
          %4782 = vmatpush1.bf16.msra.mxu0 0
          %4783 = vmatprep.subr.bf16.mxu0 0
          %4784 = vmatpush1.bf16.msra.mxu0 0
          %4785 = vmatprep.subr.bf16.mxu0 0
          %4786 = vmatpush1.bf16.msra.mxu0 0
          %4787 = vmatprep.subr.bf16.mxu0 0
          %4788 = vmatpush1.bf16.msra.mxu0 0
          %4789 = vmatprep.subr.bf16.mxu0 0
          %4790 = vmatpush1.bf16.msra.mxu0 0
          %4791 = vmatprep.mubr.bf16.mxu0 0
          %4792 = vmatmul.mubr.bf16.gmra.mrb[0].mxu0 %v3837
          %v4793 = vpop.f32.mrb[0].mxu0
          %v4794 = vadd.f32 0.0, %v4793
          %v4795 = vpop.f32.mrb[0].mxu0
          %v4796 = vpop.f32.mrb[0].mxu0
          %v4797 = vadd.f32 0.0, %v4796
          %v4798 = vpop.f32.mrb[0].mxu0
          %4799 = vdwg.mxu0
          %v4800 = vadd.f32 %v4757, %v4794
          %v4801 = vadd.f32 %v4758, %v4797
          %s4802 = sadd.s32 %s1161, 5
          %s4803 = smul.u32 %s4802, 16
          %s4804 = scalar_lea.vmem [#allocation2], %s4803
          %v4805 = vld [vmem:[%s4804] sm:$0xff]
          %v4806 = vld [vmem:[%s4804 + $0x8] sm:$0x3]
          %v4807 = vpack.c.bf16 %v4806, %v4805
          %4808 = vmatprep.subr.bf16.mxu0 0
          %4809 = vmatpush1.bf16.msra.mxu0 %v3443
          %4810 = vmatprep.subr.bf16.mxu0 0
          %4811 = vmatpush1.bf16.msra.mxu0 %v3444
          %4812 = vmatprep.subr.bf16.mxu0 0
          %4813 = vmatpush1.bf16.msra.mxu0 %v3445
          %4814 = vmatprep.subr.bf16.mxu0 0
          %4815 = vmatpush1.bf16.msra.mxu0 %v3446
          %4816 = vmatprep.subr.bf16.mxu0 0
          %4817 = vmatpush1.bf16.msra.mxu0 %v3447
          %4818 = vmatprep.subr.bf16.mxu0 0
          %4819 = vmatpush1.bf16.msra.mxu0 %v3448
          %4820 = vmatprep.subr.bf16.mxu0 0
          %4821 = vmatpush1.bf16.msra.mxu0 %v3449
          %4822 = vmatprep.subr.bf16.mxu0 0
          %4823 = vmatpush1.bf16.msra.mxu0 %v3450
          %4824 = vmatprep.subr.bf16.mxu0 0
          %4825 = vmatpush1.bf16.msra.mxu0 0
          %4826 = vmatprep.subr.bf16.mxu0 0
          %4827 = vmatpush1.bf16.msra.mxu0 0
          %4828 = vmatprep.subr.bf16.mxu0 0
          %4829 = vmatpush1.bf16.msra.mxu0 0
          %4830 = vmatprep.subr.bf16.mxu0 0
          %4831 = vmatpush1.bf16.msra.mxu0 0
          %4832 = vmatprep.subr.bf16.mxu0 0
          %4833 = vmatpush1.bf16.msra.mxu0 0
          %4834 = vmatprep.subr.bf16.mxu0 0
          %4835 = vmatpush1.bf16.msra.mxu0 0
          %4836 = vmatprep.subr.bf16.mxu0 0
          %4837 = vmatpush1.bf16.msra.mxu0 0
          %4838 = vmatprep.subr.bf16.mxu0 0
          %4839 = vmatpush1.bf16.msra.mxu0 0
          %4840 = vmatprep.mubr.bf16.mxu0 0
          %4841 = vmatmul.mubr.bf16.gmra.mrb[0].mxu0 %v4807
          %v4842 = vpop.f32.mrb[0].mxu0
          %v4843 = vadd.f32 0.0, %v4842
          %v4844 = vpop.f32.mrb[0].mxu0
          %v4845 = vpop.f32.mrb[0].mxu0
          %v4846 = vadd.f32 0.0, %v4845
          %v4847 = vpop.f32.mrb[0].mxu0
          %4848 = vdwg.mxu0
          %v4849 = vadd.f32 %v4800, %v4843
          %v4850 = vadd.f32 %v4801, %v4846
          %v4851 = vld [vmem:[%s4804 + $0x1] sm:$0xff]
          %v4852 = vld [vmem:[%s4804 + $0x9] sm:$0x3]
          %v4853 = vpack.c.bf16 %v4852, %v4851
          %4854 = vmatprep.subr.bf16.mxu0 0
          %4855 = vmatpush1.bf16.msra.mxu0 %v3554
          %4856 = vmatprep.subr.bf16.mxu0 0
          %4857 = vmatpush1.bf16.msra.mxu0 %v3555
          %4858 = vmatprep.subr.bf16.mxu0 0
          %4859 = vmatpush1.bf16.msra.mxu0 %v3556
          %4860 = vmatprep.subr.bf16.mxu0 0
          %4861 = vmatpush1.bf16.msra.mxu0 %v3557
          %4862 = vmatprep.subr.bf16.mxu0 0
          %4863 = vmatpush1.bf16.msra.mxu0 %v3558
          %4864 = vmatprep.subr.bf16.mxu0 0
          %4865 = vmatpush1.bf16.msra.mxu0 %v3559
          %4866 = vmatprep.subr.bf16.mxu0 0
          %4867 = vmatpush1.bf16.msra.mxu0 %v3560
          %4868 = vmatprep.subr.bf16.mxu0 0
          %4869 = vmatpush1.bf16.msra.mxu0 %v3561
          %4870 = vmatprep.subr.bf16.mxu0 0
          %4871 = vmatpush1.bf16.msra.mxu0 0
          %4872 = vmatprep.subr.bf16.mxu0 0
          %4873 = vmatpush1.bf16.msra.mxu0 0
          %4874 = vmatprep.subr.bf16.mxu0 0
          %4875 = vmatpush1.bf16.msra.mxu0 0
          %4876 = vmatprep.subr.bf16.mxu0 0
          %4877 = vmatpush1.bf16.msra.mxu0 0
          %4878 = vmatprep.subr.bf16.mxu0 0
          %4879 = vmatpush1.bf16.msra.mxu0 0
          %4880 = vmatprep.subr.bf16.mxu0 0
          %4881 = vmatpush1.bf16.msra.mxu0 0
          %4882 = vmatprep.subr.bf16.mxu0 0
          %4883 = vmatpush1.bf16.msra.mxu0 0
          %4884 = vmatprep.subr.bf16.mxu0 0
          %4885 = vmatpush1.bf16.msra.mxu0 0
          %4886 = vmatprep.mubr.bf16.mxu0 0
          %4887 = vmatmul.mubr.bf16.gmra.mrb[0].mxu0 %v4853
          %v4888 = vpop.f32.mrb[0].mxu0
          %v4889 = vadd.f32 0.0, %v4888
          %v4890 = vpop.f32.mrb[0].mxu0
          %v4891 = vpop.f32.mrb[0].mxu0
          %v4892 = vadd.f32 0.0, %v4891
          %v4893 = vpop.f32.mrb[0].mxu0
          %4894 = vdwg.mxu0
          %v4895 = vadd.f32 %v4849, %v4889
          %v4896 = vadd.f32 %v4850, %v4892
          %v4897 = vld [vmem:[%s4804 + $0x2] sm:$0xff]
          %v4898 = vld [vmem:[%s4804 + $0xa] sm:$0x3]
          %v4899 = vpack.c.bf16 %v4898, %v4897
          %4900 = vmatprep.subr.bf16.mxu0 0
          %4901 = vmatpush1.bf16.msra.mxu0 %v3665
          %4902 = vmatprep.subr.bf16.mxu0 0
          %4903 = vmatpush1.bf16.msra.mxu0 %v3666
          %4904 = vmatprep.subr.bf16.mxu0 0
          %4905 = vmatpush1.bf16.msra.mxu0 %v3667
          %4906 = vmatprep.subr.bf16.mxu0 0
          %4907 = vmatpush1.bf16.msra.mxu0 %v3668
          %4908 = vmatprep.subr.bf16.mxu0 0
          %4909 = vmatpush1.bf16.msra.mxu0 %v3669
          %4910 = vmatprep.subr.bf16.mxu0 0
          %4911 = vmatpush1.bf16.msra.mxu0 %v3670
          %4912 = vmatprep.subr.bf16.mxu0 0
          %4913 = vmatpush1.bf16.msra.mxu0 %v3671
          %4914 = vmatprep.subr.bf16.mxu0 0
          %4915 = vmatpush1.bf16.msra.mxu0 %v3672
          %4916 = vmatprep.subr.bf16.mxu0 0
          %4917 = vmatpush1.bf16.msra.mxu0 0
          %4918 = vmatprep.subr.bf16.mxu0 0
          %4919 = vmatpush1.bf16.msra.mxu0 0
          %4920 = vmatprep.subr.bf16.mxu0 0
          %4921 = vmatpush1.bf16.msra.mxu0 0
          %4922 = vmatprep.subr.bf16.mxu0 0
          %4923 = vmatpush1.bf16.msra.mxu0 0
          %4924 = vmatprep.subr.bf16.mxu0 0
          %4925 = vmatpush1.bf16.msra.mxu0 0
          %4926 = vmatprep.subr.bf16.mxu0 0
          %4927 = vmatpush1.bf16.msra.mxu0 0
          %4928 = vmatprep.subr.bf16.mxu0 0
          %4929 = vmatpush1.bf16.msra.mxu0 0
          %4930 = vmatprep.subr.bf16.mxu0 0
          %4931 = vmatpush1.bf16.msra.mxu0 0
          %4932 = vmatprep.mubr.bf16.mxu0 0
          %4933 = vmatmul.mubr.bf16.gmra.mrb[0].mxu0 %v4899
          %v4934 = vpop.f32.mrb[0].mxu0
          %v4935 = vadd.f32 0.0, %v4934
          %v4936 = vpop.f32.mrb[0].mxu0
          %v4937 = vpop.f32.mrb[0].mxu0
          %v4938 = vadd.f32 0.0, %v4937
          %v4939 = vpop.f32.mrb[0].mxu0
          %4940 = vdwg.mxu0
          %v4941 = vadd.f32 %v4895, %v4935
          %v4942 = vadd.f32 %v4896, %v4938
          %v4943 = vld [vmem:[%s4804 + $0x3] sm:$0xff]
          %v4944 = vld [vmem:[%s4804 + $0xb] sm:$0x3]
          %v4945 = vpack.c.bf16 %v4944, %v4943
          %4946 = vmatprep.subr.bf16.mxu0 0
          %4947 = vmatpush1.bf16.msra.mxu0 %v3776
          %4948 = vmatprep.subr.bf16.mxu0 0
          %4949 = vmatpush1.bf16.msra.mxu0 %v3777
          %4950 = vmatprep.subr.bf16.mxu0 0
          %4951 = vmatpush1.bf16.msra.mxu0 %v3778
          %4952 = vmatprep.subr.bf16.mxu0 0
          %4953 = vmatpush1.bf16.msra.mxu0 %v3779
          %4954 = vmatprep.subr.bf16.mxu0 0
          %4955 = vmatpush1.bf16.msra.mxu0 %v3780
          %4956 = vmatprep.subr.bf16.mxu0 0
          %4957 = vmatpush1.bf16.msra.mxu0 %v3781
          %4958 = vmatprep.subr.bf16.mxu0 0
          %4959 = vmatpush1.bf16.msra.mxu0 %v3782
          %4960 = vmatprep.subr.bf16.mxu0 0
          %4961 = vmatpush1.bf16.msra.mxu0 %v3783
          %4962 = vmatprep.subr.bf16.mxu0 0
          %4963 = vmatpush1.bf16.msra.mxu0 0
          %4964 = vmatprep.subr.bf16.mxu0 0
          %4965 = vmatpush1.bf16.msra.mxu0 0
          %4966 = vmatprep.subr.bf16.mxu0 0
          %4967 = vmatpush1.bf16.msra.mxu0 0
          %4968 = vmatprep.subr.bf16.mxu0 0
          %4969 = vmatpush1.bf16.msra.mxu0 0
          %4970 = vmatprep.subr.bf16.mxu0 0
          %4971 = vmatpush1.bf16.msra.mxu0 0
          %4972 = vmatprep.subr.bf16.mxu0 0
          %4973 = vmatpush1.bf16.msra.mxu0 0
          %4974 = vmatprep.subr.bf16.mxu0 0
          %4975 = vmatpush1.bf16.msra.mxu0 0
          %4976 = vmatprep.subr.bf16.mxu0 0
          %4977 = vmatpush1.bf16.msra.mxu0 0
          %4978 = vmatprep.mubr.bf16.mxu0 0
          %4979 = vmatmul.mubr.bf16.gmra.mrb[0].mxu0 %v4945
          %v4980 = vpop.f32.mrb[0].mxu0
          %v4981 = vadd.f32 0.0, %v4980
          %v4982 = vpop.f32.mrb[0].mxu0
          %v4983 = vpop.f32.mrb[0].mxu0
          %v4984 = vadd.f32 0.0, %v4983
          %v4985 = vpop.f32.mrb[0].mxu0
          %4986 = vdwg.mxu0
          %v4987 = vadd.f32 %v4941, %v4981
          %v4988 = vadd.f32 %v4942, %v4984
          %v4989 = vld [vmem:[%s4804 + $0x4] sm:$0xff]
          %v4990 = vld [vmem:[%s4804 + $0xc] sm:$0x3]
          %v4991 = vpack.c.bf16 %v4990, %v4989
          %4992 = vmatprep.subr.bf16.mxu0 0
          %4993 = vmatpush1.bf16.msra.mxu0 %v3887
          %4994 = vmatprep.subr.bf16.mxu0 0
          %4995 = vmatpush1.bf16.msra.mxu0 %v3888
          %4996 = vmatprep.subr.bf16.mxu0 0
          %4997 = vmatpush1.bf16.msra.mxu0 %v3889
          %4998 = vmatprep.subr.bf16.mxu0 0
          %4999 = vmatpush1.bf16.msra.mxu0 %v3890
          %5000 = vmatprep.subr.bf16.mxu0 0
          %5001 = vmatpush1.bf16.msra.mxu0 %v3891
          %5002 = vmatprep.subr.bf16.mxu0 0
          %5003 = vmatpush1.bf16.msra.mxu0 %v3892
          %5004 = vmatprep.subr.bf16.mxu0 0
          %5005 = vmatpush1.bf16.msra.mxu0 %v3893
          %5006 = vmatprep.subr.bf16.mxu0 0
          %5007 = vmatpush1.bf16.msra.mxu0 %v3894
          %5008 = vmatprep.subr.bf16.mxu0 0
          %5009 = vmatpush1.bf16.msra.mxu0 0
          %5010 = vmatprep.subr.bf16.mxu0 0
          %5011 = vmatpush1.bf16.msra.mxu0 0
          %5012 = vmatprep.subr.bf16.mxu0 0
          %5013 = vmatpush1.bf16.msra.mxu0 0
          %5014 = vmatprep.subr.bf16.mxu0 0
          %5015 = vmatpush1.bf16.msra.mxu0 0
          %5016 = vmatprep.subr.bf16.mxu0 0
          %5017 = vmatpush1.bf16.msra.mxu0 0
          %5018 = vmatprep.subr.bf16.mxu0 0
          %5019 = vmatpush1.bf16.msra.mxu0 0
          %5020 = vmatprep.subr.bf16.mxu0 0
          %5021 = vmatpush1.bf16.msra.mxu0 0
          %5022 = vmatprep.subr.bf16.mxu0 0
          %5023 = vmatpush1.bf16.msra.mxu0 0
          %5024 = vmatprep.mubr.bf16.mxu0 0
          %5025 = vmatmul.mubr.bf16.gmra.mrb[0].mxu0 %v4991
          %v5026 = vpop.f32.mrb[0].mxu0
          %v5027 = vadd.f32 0.0, %v5026
          %v5028 = vpop.f32.mrb[0].mxu0
          %v5029 = vpop.f32.mrb[0].mxu0
          %v5030 = vadd.f32 0.0, %v5029
          %v5031 = vpop.f32.mrb[0].mxu0
          %5032 = vdwg.mxu0
          %v5033 = vadd.f32 %v4987, %v5027
          %v5034 = vadd.f32 %v4988, %v5030
          %v5035 = vmax.f32 %v3944, %v5033
          %v5036 = vmax.f32 %v3945, %v5034
          %5037 = vst [vmem:[#allocation4] sm:$0xff] %v5035
          %5038 = vst [vmem:[#allocation4 + $0x8] sm:$0x3] %v5036
          %v5039 = vld [vmem:[#allocation4] ss:$2 sm:$0x1f]
          %s5040 = scalar_lea.vmem [#allocation4], 1
          %v5041 = vld [vmem:[%s5040] ss:$2 sm:$0x1f]
          %v5042 = vmax.f32 %v5039, %v5041
          %v5043 = vld [vmem:[%s4] sm:$0x1]
          %v5045 = vlaneseq
          %v5046 = vshrl.u32 %v5045, 7
          %v5047 = vsub.s32 0, %v5046
          %v5048 = vrot.slane %v5043, %v5047
          %v5050 = vadd.f32 %v5042, %v5048
          %v5051 = vmax.f32 %v5050, 0.0
          %s5052 = smul.u32 %s1156, 8
          %s5053 = scalar_lea.vmem [#allocation3], %s5052
          %5054 = vst [vmem:[%s5053] sm:$0x1f] %v5051
        $region80: #{convnet_forward.1} parent=63 // loop_footer
          %s1160 = sadd.s32 1, %s1156
        $region81: #{convnet_forward.1} parent=63 // loop_footer_branch
          %1155 = sbr.rel target = $region77
        $region82: #{convnet_forward.1} parent=63 // loop_exit
          _
        %v5055 = vld [vmem:[#allocation3] sm:$0x1]
        %v5056 = vpack.c.bf16 %v5055, %v5055
        %v5057 = vld [vmem:[#allocation5] sm:$0xf]
        %v5058 = vld [vmem:[#allocation5 + $0x4] sm:$0xf]
        %v5059 = vld [vmem:[#allocation5 + $0x8] sm:$0xf]
        %v5060 = vld [vmem:[#allocation5 + $0xc] sm:$0xf]
        %v5061 = vld [vmem:[#allocation5 + $0x10] sm:$0xf]
        %v5062 = vld [vmem:[#allocation5 + $0x14] sm:$0xf]
        %v5063 = vld [vmem:[#allocation5 + $0x18] sm:$0xf]
        %v5064 = vld [vmem:[#allocation5 + $0x1c] sm:$0xf]
        %v5065 = vld [vmem:[#allocation5 + $0x20] sm:$0xf]
        %v5066 = vld [vmem:[#allocation5 + $0x24] sm:$0xf]
        %v5067 = vld [vmem:[#allocation5 + $0x28] sm:$0xf]
        %v5068 = vld [vmem:[#allocation5 + $0x2c] sm:$0xf]
        %v5069 = vld [vmem:[#allocation5 + $0x30] sm:$0xf]
        %v5070 = vld [vmem:[#allocation5 + $0x34] sm:$0xf]
        %v5071 = vld [vmem:[#allocation5 + $0x38] sm:$0xf]
        %v5072 = vld [vmem:[#allocation5 + $0x3c] sm:$0xf]
        %v5073 = vld [vmem:[#allocation3 + $0x1] sm:$0x1]
        %v5074 = vpack.c.bf16 %v5073, %v5073
        %s5075 = scalar_lea.vmem [#allocation5], 64
        %v5076 = vld [vmem:[%s5075] sm:$0xf]
        %v5077 = vld [vmem:[%s5075 + $0x4] sm:$0xf]
        %v5078 = vld [vmem:[%s5075 + $0x8] sm:$0xf]
        %v5079 = vld [vmem:[%s5075 + $0xc] sm:$0xf]
        %v5080 = vld [vmem:[%s5075 + $0x10] sm:$0xf]
        %v5081 = vld [vmem:[%s5075 + $0x14] sm:$0xf]
        %v5082 = vld [vmem:[%s5075 + $0x18] sm:$0xf]
        %v5083 = vld [vmem:[%s5075 + $0x1c] sm:$0xf]
        %v5084 = vld [vmem:[%s5075 + $0x20] sm:$0xf]
        %v5085 = vld [vmem:[%s5075 + $0x24] sm:$0xf]
        %v5086 = vld [vmem:[%s5075 + $0x28] sm:$0xf]
        %v5087 = vld [vmem:[%s5075 + $0x2c] sm:$0xf]
        %v5088 = vld [vmem:[%s5075 + $0x30] sm:$0xf]
        %v5089 = vld [vmem:[%s5075 + $0x34] sm:$0xf]
        %v5090 = vld [vmem:[%s5075 + $0x38] sm:$0xf]
        %v5091 = vld [vmem:[%s5075 + $0x3c] sm:$0xf]
        %v5108 = vunpack.c.l.b16 %v5076
        %v5109 = vunpack.c.l.b16 %v5077
        %v5110 = vunpack.c.l.b16 %v5078
        %v5111 = vunpack.c.l.b16 %v5079
        %v5112 = vunpack.c.l.b16 %v5080
        %v5113 = vunpack.c.l.b16 %v5081
        %v5114 = vunpack.c.l.b16 %v5082
        %v5115 = vunpack.c.l.b16 %v5083
        %v5116 = vunpack.c.l.b16 %v5084
        %v5117 = vunpack.c.l.b16 %v5085
        %v5118 = vunpack.c.l.b16 %v5086
        %v5119 = vunpack.c.l.b16 %v5087
        %v5120 = vunpack.c.l.b16 %v5088
        %v5121 = vunpack.c.l.b16 %v5089
        %v5122 = vunpack.c.l.b16 %v5090
        %v5123 = vunpack.c.l.b16 %v5091
        %v5124 = vpack.c.b16 %v5109, %v5108
        %v5125 = vpack.c.b16 %v5111, %v5110
        %v5126 = vpack.c.b16 %v5113, %v5112
        %v5127 = vpack.c.b16 %v5115, %v5114
        %v5128 = vpack.c.b16 %v5117, %v5116
        %v5129 = vpack.c.b16 %v5119, %v5118
        %v5130 = vpack.c.b16 %v5121, %v5120
        %v5131 = vpack.c.b16 %v5123, %v5122
        %5140 = vmatprep.subr.bf16.mxu0 0
        %5141 = vmatpush1.bf16.msra.mxu0 %v5124
        %5142 = vmatprep.subr.bf16.mxu0 0
        %5143 = vmatpush1.bf16.msra.mxu0 %v5125
        %5144 = vmatprep.subr.bf16.mxu0 0
        %5145 = vmatpush1.bf16.msra.mxu0 %v5126
        %5146 = vmatprep.subr.bf16.mxu0 0
        %5147 = vmatpush1.bf16.msra.mxu0 %v5127
        %5148 = vmatprep.subr.bf16.mxu0 0
        %5149 = vmatpush1.bf16.msra.mxu0 %v5128
        %5150 = vmatprep.subr.bf16.mxu0 0
        %5151 = vmatpush1.bf16.msra.mxu0 %v5129
        %5152 = vmatprep.subr.bf16.mxu0 0
        %5153 = vmatpush1.bf16.msra.mxu0 %v5130
        %5154 = vmatprep.subr.bf16.mxu0 0
        %5155 = vmatpush1.bf16.msra.mxu0 %v5131
        %5156 = vmatprep.subr.bf16.mxu0 0
        %5157 = vmatpush1.bf16.msra.mxu0 0
        %5158 = vmatprep.subr.bf16.mxu0 0
        %5159 = vmatpush1.bf16.msra.mxu0 0
        %5160 = vmatprep.subr.bf16.mxu0 0
        %5161 = vmatpush1.bf16.msra.mxu0 0
        %5162 = vmatprep.subr.bf16.mxu0 0
        %5163 = vmatpush1.bf16.msra.mxu0 0
        %5164 = vmatprep.subr.bf16.mxu0 0
        %5165 = vmatpush1.bf16.msra.mxu0 0
        %5166 = vmatprep.subr.bf16.mxu0 0
        %5167 = vmatpush1.bf16.msra.mxu0 0
        %5168 = vmatprep.subr.bf16.mxu0 0
        %5169 = vmatpush1.bf16.msra.mxu0 0
        %5170 = vmatprep.subr.bf16.mxu0 0
        %5171 = vmatpush1.bf16.msra.mxu0 0
        %5172 = vmatprep.mubr.bf16.mxu0 0
        %5173 = vmatmul.mubr.bf16.gmra.mrb[0].mxu0 %v5074
        %v5174 = vpop.f32.mrb[0].mxu0
        %v5175 = vadd.f32 0.0, %v5174
        %v5176 = vpop.f32.mrb[0].mxu0
        %v5177 = vpop.f32.mrb[0].mxu0
        %v5178 = vpop.f32.mrb[0].mxu0
        %5179 = vdwg.mxu0
        %v5196 = vunpack.c.l.b16 %v5057
        %v5197 = vunpack.c.l.b16 %v5058
        %v5198 = vunpack.c.l.b16 %v5059
        %v5199 = vunpack.c.l.b16 %v5060
        %v5200 = vunpack.c.l.b16 %v5061
        %v5201 = vunpack.c.l.b16 %v5062
        %v5202 = vunpack.c.l.b16 %v5063
        %v5203 = vunpack.c.l.b16 %v5064
        %v5204 = vunpack.c.l.b16 %v5065
        %v5205 = vunpack.c.l.b16 %v5066
        %v5206 = vunpack.c.l.b16 %v5067
        %v5207 = vunpack.c.l.b16 %v5068
        %v5208 = vunpack.c.l.b16 %v5069
        %v5209 = vunpack.c.l.b16 %v5070
        %v5210 = vunpack.c.l.b16 %v5071
        %v5211 = vunpack.c.l.b16 %v5072
        %v5212 = vpack.c.b16 %v5197, %v5196
        %v5213 = vpack.c.b16 %v5199, %v5198
        %v5214 = vpack.c.b16 %v5201, %v5200
        %v5215 = vpack.c.b16 %v5203, %v5202
        %v5216 = vpack.c.b16 %v5205, %v5204
        %v5217 = vpack.c.b16 %v5207, %v5206
        %v5218 = vpack.c.b16 %v5209, %v5208
        %v5219 = vpack.c.b16 %v5211, %v5210
        %5228 = vmatprep.subr.bf16.mxu0 0
        %5229 = vmatpush1.bf16.msra.mxu0 %v5212
        %5230 = vmatprep.subr.bf16.mxu0 0
        %5231 = vmatpush1.bf16.msra.mxu0 %v5213
        %5232 = vmatprep.subr.bf16.mxu0 0
        %5233 = vmatpush1.bf16.msra.mxu0 %v5214
        %5234 = vmatprep.subr.bf16.mxu0 0
        %5235 = vmatpush1.bf16.msra.mxu0 %v5215
        %5236 = vmatprep.subr.bf16.mxu0 0
        %5237 = vmatpush1.bf16.msra.mxu0 %v5216
        %5238 = vmatprep.subr.bf16.mxu0 0
        %5239 = vmatpush1.bf16.msra.mxu0 %v5217
        %5240 = vmatprep.subr.bf16.mxu0 0
        %5241 = vmatpush1.bf16.msra.mxu0 %v5218
        %5242 = vmatprep.subr.bf16.mxu0 0
        %5243 = vmatpush1.bf16.msra.mxu0 %v5219
        %5244 = vmatprep.subr.bf16.mxu0 0
        %5245 = vmatpush1.bf16.msra.mxu0 0
        %5246 = vmatprep.subr.bf16.mxu0 0
        %5247 = vmatpush1.bf16.msra.mxu0 0
        %5248 = vmatprep.subr.bf16.mxu0 0
        %5249 = vmatpush1.bf16.msra.mxu0 0
        %5250 = vmatprep.subr.bf16.mxu0 0
        %5251 = vmatpush1.bf16.msra.mxu0 0
        %5252 = vmatprep.subr.bf16.mxu0 0
        %5253 = vmatpush1.bf16.msra.mxu0 0
        %5254 = vmatprep.subr.bf16.mxu0 0
        %5255 = vmatpush1.bf16.msra.mxu0 0
        %5256 = vmatprep.subr.bf16.mxu0 0
        %5257 = vmatpush1.bf16.msra.mxu0 0
        %5258 = vmatprep.subr.bf16.mxu0 0
        %5259 = vmatpush1.bf16.msra.mxu0 0
        %5260 = vmatprep.mubr.bf16.mxu0 0
        %5261 = vmatmul.mubr.bf16.gmra.mrb[0].mxu0 %v5056
        %v5262 = vpop.f32.mrb[0].mxu0
        %v5263 = vadd.f32 %v5175, %v5262
        %v5264 = vpop.f32.mrb[0].mxu0
        %v5265 = vpop.f32.mrb[0].mxu0
        %v5266 = vpop.f32.mrb[0].mxu0
        %5267 = vdwg.mxu0
        %v5268 = vld [vmem:[#allocation3 + $0x2] sm:$0x1]
        %v5269 = vpack.c.bf16 %v5268, %v5268
        %s5270 = scalar_lea.vmem [#allocation5], 128
        %v5271 = vld [vmem:[%s5270] sm:$0xf]
        %v5272 = vld [vmem:[%s5270 + $0x4] sm:$0xf]
        %v5273 = vld [vmem:[%s5270 + $0x8] sm:$0xf]
        %v5274 = vld [vmem:[%s5270 + $0xc] sm:$0xf]
        %v5275 = vld [vmem:[%s5270 + $0x10] sm:$0xf]
        %v5276 = vld [vmem:[%s5270 + $0x14] sm:$0xf]
        %v5277 = vld [vmem:[%s5270 + $0x18] sm:$0xf]
        %v5278 = vld [vmem:[%s5270 + $0x1c] sm:$0xf]
        %v5279 = vld [vmem:[%s5270 + $0x20] sm:$0xf]
        %v5280 = vld [vmem:[%s5270 + $0x24] sm:$0xf]
        %v5281 = vld [vmem:[%s5270 + $0x28] sm:$0xf]
        %v5282 = vld [vmem:[%s5270 + $0x2c] sm:$0xf]
        %v5283 = vld [vmem:[%s5270 + $0x30] sm:$0xf]
        %v5284 = vld [vmem:[%s5270 + $0x34] sm:$0xf]
        %v5285 = vld [vmem:[%s5270 + $0x38] sm:$0xf]
        %v5286 = vld [vmem:[%s5270 + $0x3c] sm:$0xf]
        %v5303 = vunpack.c.l.b16 %v5271
        %v5304 = vunpack.c.l.b16 %v5272
        %v5305 = vunpack.c.l.b16 %v5273
        %v5306 = vunpack.c.l.b16 %v5274
        %v5307 = vunpack.c.l.b16 %v5275
        %v5308 = vunpack.c.l.b16 %v5276
        %v5309 = vunpack.c.l.b16 %v5277
        %v5310 = vunpack.c.l.b16 %v5278
        %v5311 = vunpack.c.l.b16 %v5279
        %v5312 = vunpack.c.l.b16 %v5280
        %v5313 = vunpack.c.l.b16 %v5281
        %v5314 = vunpack.c.l.b16 %v5282
        %v5315 = vunpack.c.l.b16 %v5283
        %v5316 = vunpack.c.l.b16 %v5284
        %v5317 = vunpack.c.l.b16 %v5285
        %v5318 = vunpack.c.l.b16 %v5286
        %v5319 = vpack.c.b16 %v5304, %v5303
        %v5320 = vpack.c.b16 %v5306, %v5305
        %v5321 = vpack.c.b16 %v5308, %v5307
        %v5322 = vpack.c.b16 %v5310, %v5309
        %v5323 = vpack.c.b16 %v5312, %v5311
        %v5324 = vpack.c.b16 %v5314, %v5313
        %v5325 = vpack.c.b16 %v5316, %v5315
        %v5326 = vpack.c.b16 %v5318, %v5317
        %5335 = vmatprep.subr.bf16.mxu0 0
        %5336 = vmatpush1.bf16.msra.mxu0 %v5319
        %5337 = vmatprep.subr.bf16.mxu0 0
        %5338 = vmatpush1.bf16.msra.mxu0 %v5320
        %5339 = vmatprep.subr.bf16.mxu0 0
        %5340 = vmatpush1.bf16.msra.mxu0 %v5321
        %5341 = vmatprep.subr.bf16.mxu0 0
        %5342 = vmatpush1.bf16.msra.mxu0 %v5322
        %5343 = vmatprep.subr.bf16.mxu0 0
        %5344 = vmatpush1.bf16.msra.mxu0 %v5323
        %5345 = vmatprep.subr.bf16.mxu0 0
        %5346 = vmatpush1.bf16.msra.mxu0 %v5324
        %5347 = vmatprep.subr.bf16.mxu0 0
        %5348 = vmatpush1.bf16.msra.mxu0 %v5325
        %5349 = vmatprep.subr.bf16.mxu0 0
        %5350 = vmatpush1.bf16.msra.mxu0 %v5326
        %5351 = vmatprep.subr.bf16.mxu0 0
        %5352 = vmatpush1.bf16.msra.mxu0 0
        %5353 = vmatprep.subr.bf16.mxu0 0
        %5354 = vmatpush1.bf16.msra.mxu0 0
        %5355 = vmatprep.subr.bf16.mxu0 0
        %5356 = vmatpush1.bf16.msra.mxu0 0
        %5357 = vmatprep.subr.bf16.mxu0 0
        %5358 = vmatpush1.bf16.msra.mxu0 0
        %5359 = vmatprep.subr.bf16.mxu0 0
        %5360 = vmatpush1.bf16.msra.mxu0 0
        %5361 = vmatprep.subr.bf16.mxu0 0
        %5362 = vmatpush1.bf16.msra.mxu0 0
        %5363 = vmatprep.subr.bf16.mxu0 0
        %5364 = vmatpush1.bf16.msra.mxu0 0
        %5365 = vmatprep.subr.bf16.mxu0 0
        %5366 = vmatpush1.bf16.msra.mxu0 0
        %5367 = vmatprep.mubr.bf16.mxu0 0
        %5368 = vmatmul.mubr.bf16.gmra.mrb[0].mxu0 %v5269
        %v5369 = vpop.f32.mrb[0].mxu0
        %v5370 = vadd.f32 0.0, %v5369
        %v5371 = vpop.f32.mrb[0].mxu0
        %v5372 = vpop.f32.mrb[0].mxu0
        %v5373 = vpop.f32.mrb[0].mxu0
        %5374 = vdwg.mxu0
        %v5375 = vadd.f32 %v5263, %v5370
        %v5376 = vld [vmem:[#allocation3 + $0x3] sm:$0x1]
        %v5377 = vpack.c.bf16 %v5376, %v5376
        %s5378 = scalar_lea.vmem [#allocation5], 192
        %v5379 = vld [vmem:[%s5378] sm:$0xf]
        %v5380 = vld [vmem:[%s5378 + $0x4] sm:$0xf]
        %v5381 = vld [vmem:[%s5378 + $0x8] sm:$0xf]
        %v5382 = vld [vmem:[%s5378 + $0xc] sm:$0xf]
        %v5383 = vld [vmem:[%s5378 + $0x10] sm:$0xf]
        %v5384 = vld [vmem:[%s5378 + $0x14] sm:$0xf]
        %v5385 = vld [vmem:[%s5378 + $0x18] sm:$0xf]
        %v5386 = vld [vmem:[%s5378 + $0x1c] sm:$0xf]
        %v5387 = vld [vmem:[%s5378 + $0x20] sm:$0xf]
        %v5388 = vld [vmem:[%s5378 + $0x24] sm:$0xf]
        %v5389 = vld [vmem:[%s5378 + $0x28] sm:$0xf]
        %v5390 = vld [vmem:[%s5378 + $0x2c] sm:$0xf]
        %v5391 = vld [vmem:[%s5378 + $0x30] sm:$0xf]
        %v5392 = vld [vmem:[%s5378 + $0x34] sm:$0xf]
        %v5393 = vld [vmem:[%s5378 + $0x38] sm:$0xf]
        %v5394 = vld [vmem:[%s5378 + $0x3c] sm:$0xf]
        %v5411 = vunpack.c.l.b16 %v5379
        %v5412 = vunpack.c.l.b16 %v5380
        %v5413 = vunpack.c.l.b16 %v5381
        %v5414 = vunpack.c.l.b16 %v5382
        %v5415 = vunpack.c.l.b16 %v5383
        %v5416 = vunpack.c.l.b16 %v5384
        %v5417 = vunpack.c.l.b16 %v5385
        %v5418 = vunpack.c.l.b16 %v5386
        %v5419 = vunpack.c.l.b16 %v5387
        %v5420 = vunpack.c.l.b16 %v5388
        %v5421 = vunpack.c.l.b16 %v5389
        %v5422 = vunpack.c.l.b16 %v5390
        %v5423 = vunpack.c.l.b16 %v5391
        %v5424 = vunpack.c.l.b16 %v5392
        %v5425 = vunpack.c.l.b16 %v5393
        %v5426 = vunpack.c.l.b16 %v5394
        %v5427 = vpack.c.b16 %v5412, %v5411
        %v5428 = vpack.c.b16 %v5414, %v5413
        %v5429 = vpack.c.b16 %v5416, %v5415
        %v5430 = vpack.c.b16 %v5418, %v5417
        %v5431 = vpack.c.b16 %v5420, %v5419
        %v5432 = vpack.c.b16 %v5422, %v5421
        %v5433 = vpack.c.b16 %v5424, %v5423
        %v5434 = vpack.c.b16 %v5426, %v5425
        %5443 = vmatprep.subr.bf16.mxu0 0
        %5444 = vmatpush1.bf16.msra.mxu0 %v5427
        %5445 = vmatprep.subr.bf16.mxu0 0
        %5446 = vmatpush1.bf16.msra.mxu0 %v5428
        %5447 = vmatprep.subr.bf16.mxu0 0
        %5448 = vmatpush1.bf16.msra.mxu0 %v5429
        %5449 = vmatprep.subr.bf16.mxu0 0
        %5450 = vmatpush1.bf16.msra.mxu0 %v5430
        %5451 = vmatprep.subr.bf16.mxu0 0
        %5452 = vmatpush1.bf16.msra.mxu0 %v5431
        %5453 = vmatprep.subr.bf16.mxu0 0
        %5454 = vmatpush1.bf16.msra.mxu0 %v5432
        %5455 = vmatprep.subr.bf16.mxu0 0
        %5456 = vmatpush1.bf16.msra.mxu0 %v5433
        %5457 = vmatprep.subr.bf16.mxu0 0
        %5458 = vmatpush1.bf16.msra.mxu0 %v5434
        %5459 = vmatprep.subr.bf16.mxu0 0
        %5460 = vmatpush1.bf16.msra.mxu0 0
        %5461 = vmatprep.subr.bf16.mxu0 0
        %5462 = vmatpush1.bf16.msra.mxu0 0
        %5463 = vmatprep.subr.bf16.mxu0 0
        %5464 = vmatpush1.bf16.msra.mxu0 0
        %5465 = vmatprep.subr.bf16.mxu0 0
        %5466 = vmatpush1.bf16.msra.mxu0 0
        %5467 = vmatprep.subr.bf16.mxu0 0
        %5468 = vmatpush1.bf16.msra.mxu0 0
        %5469 = vmatprep.subr.bf16.mxu0 0
        %5470 = vmatpush1.bf16.msra.mxu0 0
        %5471 = vmatprep.subr.bf16.mxu0 0
        %5472 = vmatpush1.bf16.msra.mxu0 0
        %5473 = vmatprep.subr.bf16.mxu0 0
        %5474 = vmatpush1.bf16.msra.mxu0 0
        %5475 = vmatprep.mubr.bf16.mxu0 0
        %5476 = vmatmul.mubr.bf16.gmra.mrb[0].mxu0 %v5377
        %v5477 = vpop.f32.mrb[0].mxu0
        %v5478 = vadd.f32 0.0, %v5477
        %v5479 = vpop.f32.mrb[0].mxu0
        %v5480 = vpop.f32.mrb[0].mxu0
        %v5481 = vpop.f32.mrb[0].mxu0
        %5482 = vdwg.mxu0
        %v5483 = vadd.f32 %v5375, %v5478
        %v5484 = vld [vmem:[#allocation3 + $0x4] sm:$0x1]
        %v5485 = vpack.c.bf16 %v5484, %v5484
        %s5486 = scalar_lea.vmem [#allocation5], 256
        %v5487 = vld [vmem:[%s5486] sm:$0xf]
        %v5488 = vld [vmem:[%s5486 + $0x4] sm:$0xf]
        %v5489 = vld [vmem:[%s5486 + $0x8] sm:$0xf]
        %v5490 = vld [vmem:[%s5486 + $0xc] sm:$0xf]
        %v5491 = vld [vmem:[%s5486 + $0x10] sm:$0xf]
        %v5492 = vld [vmem:[%s5486 + $0x14] sm:$0xf]
        %v5493 = vld [vmem:[%s5486 + $0x18] sm:$0xf]
        %v5494 = vld [vmem:[%s5486 + $0x1c] sm:$0xf]
        %v5495 = vld [vmem:[%s5486 + $0x20] sm:$0xf]
        %v5496 = vld [vmem:[%s5486 + $0x24] sm:$0xf]
        %v5497 = vld [vmem:[%s5486 + $0x28] sm:$0xf]
        %v5498 = vld [vmem:[%s5486 + $0x2c] sm:$0xf]
        %v5499 = vld [vmem:[%s5486 + $0x30] sm:$0xf]
        %v5500 = vld [vmem:[%s5486 + $0x34] sm:$0xf]
        %v5501 = vld [vmem:[%s5486 + $0x38] sm:$0xf]
        %v5502 = vld [vmem:[%s5486 + $0x3c] sm:$0xf]
        %v5519 = vunpack.c.l.b16 %v5487
        %v5520 = vunpack.c.l.b16 %v5488
        %v5521 = vunpack.c.l.b16 %v5489
        %v5522 = vunpack.c.l.b16 %v5490
        %v5523 = vunpack.c.l.b16 %v5491
        %v5524 = vunpack.c.l.b16 %v5492
        %v5525 = vunpack.c.l.b16 %v5493
        %v5526 = vunpack.c.l.b16 %v5494
        %v5527 = vunpack.c.l.b16 %v5495
        %v5528 = vunpack.c.l.b16 %v5496
        %v5529 = vunpack.c.l.b16 %v5497
        %v5530 = vunpack.c.l.b16 %v5498
        %v5531 = vunpack.c.l.b16 %v5499
        %v5532 = vunpack.c.l.b16 %v5500
        %v5533 = vunpack.c.l.b16 %v5501
        %v5534 = vunpack.c.l.b16 %v5502
        %v5535 = vpack.c.b16 %v5520, %v5519
        %v5536 = vpack.c.b16 %v5522, %v5521
        %v5537 = vpack.c.b16 %v5524, %v5523
        %v5538 = vpack.c.b16 %v5526, %v5525
        %v5539 = vpack.c.b16 %v5528, %v5527
        %v5540 = vpack.c.b16 %v5530, %v5529
        %v5541 = vpack.c.b16 %v5532, %v5531
        %v5542 = vpack.c.b16 %v5534, %v5533
        %5551 = vmatprep.subr.bf16.mxu0 0
        %5552 = vmatpush1.bf16.msra.mxu0 %v5535
        %5553 = vmatprep.subr.bf16.mxu0 0
        %5554 = vmatpush1.bf16.msra.mxu0 %v5536
        %5555 = vmatprep.subr.bf16.mxu0 0
        %5556 = vmatpush1.bf16.msra.mxu0 %v5537
        %5557 = vmatprep.subr.bf16.mxu0 0
        %5558 = vmatpush1.bf16.msra.mxu0 %v5538
        %5559 = vmatprep.subr.bf16.mxu0 0
        %5560 = vmatpush1.bf16.msra.mxu0 %v5539
        %5561 = vmatprep.subr.bf16.mxu0 0
        %5562 = vmatpush1.bf16.msra.mxu0 %v5540
        %5563 = vmatprep.subr.bf16.mxu0 0
        %5564 = vmatpush1.bf16.msra.mxu0 %v5541
        %5565 = vmatprep.subr.bf16.mxu0 0
        %5566 = vmatpush1.bf16.msra.mxu0 %v5542
        %5567 = vmatprep.subr.bf16.mxu0 0
        %5568 = vmatpush1.bf16.msra.mxu0 0
        %5569 = vmatprep.subr.bf16.mxu0 0
        %5570 = vmatpush1.bf16.msra.mxu0 0
        %5571 = vmatprep.subr.bf16.mxu0 0
        %5572 = vmatpush1.bf16.msra.mxu0 0
        %5573 = vmatprep.subr.bf16.mxu0 0
        %5574 = vmatpush1.bf16.msra.mxu0 0
        %5575 = vmatprep.subr.bf16.mxu0 0
        %5576 = vmatpush1.bf16.msra.mxu0 0
        %5577 = vmatprep.subr.bf16.mxu0 0
        %5578 = vmatpush1.bf16.msra.mxu0 0
        %5579 = vmatprep.subr.bf16.mxu0 0
        %5580 = vmatpush1.bf16.msra.mxu0 0
        %5581 = vmatprep.subr.bf16.mxu0 0
        %5582 = vmatpush1.bf16.msra.mxu0 0
        %5583 = vmatprep.mubr.bf16.mxu0 0
        %5584 = vmatmul.mubr.bf16.gmra.mrb[0].mxu0 %v5485
        %v5585 = vpop.f32.mrb[0].mxu0
        %v5586 = vadd.f32 0.0, %v5585
        %v5587 = vpop.f32.mrb[0].mxu0
        %v5588 = vpop.f32.mrb[0].mxu0
        %v5589 = vpop.f32.mrb[0].mxu0
        %5590 = vdwg.mxu0
        %v5591 = vadd.f32 %v5483, %v5586
        %s5592 = scalar_lea.vmem [#allocation3], 8
        %v5593 = vld [vmem:[%s5592] sm:$0x1]
        %v5594 = vpack.c.bf16 %v5593, %v5593
        %s5595 = scalar_lea.vmem [#allocation5], 320
        %v5596 = vld [vmem:[%s5595] sm:$0xf]
        %v5597 = vld [vmem:[%s5595 + $0x4] sm:$0xf]
        %v5598 = vld [vmem:[%s5595 + $0x8] sm:$0xf]
        %v5599 = vld [vmem:[%s5595 + $0xc] sm:$0xf]
        %v5600 = vld [vmem:[%s5595 + $0x10] sm:$0xf]
        %v5601 = vld [vmem:[%s5595 + $0x14] sm:$0xf]
        %v5602 = vld [vmem:[%s5595 + $0x18] sm:$0xf]
        %v5603 = vld [vmem:[%s5595 + $0x1c] sm:$0xf]
        %v5604 = vld [vmem:[%s5595 + $0x20] sm:$0xf]
        %v5605 = vld [vmem:[%s5595 + $0x24] sm:$0xf]
        %v5606 = vld [vmem:[%s5595 + $0x28] sm:$0xf]
        %v5607 = vld [vmem:[%s5595 + $0x2c] sm:$0xf]
        %v5608 = vld [vmem:[%s5595 + $0x30] sm:$0xf]
        %v5609 = vld [vmem:[%s5595 + $0x34] sm:$0xf]
        %v5610 = vld [vmem:[%s5595 + $0x38] sm:$0xf]
        %v5611 = vld [vmem:[%s5595 + $0x3c] sm:$0xf]
        %v5628 = vunpack.c.l.b16 %v5596
        %v5629 = vunpack.c.l.b16 %v5597
        %v5630 = vunpack.c.l.b16 %v5598
        %v5631 = vunpack.c.l.b16 %v5599
        %v5632 = vunpack.c.l.b16 %v5600
        %v5633 = vunpack.c.l.b16 %v5601
        %v5634 = vunpack.c.l.b16 %v5602
        %v5635 = vunpack.c.l.b16 %v5603
        %v5636 = vunpack.c.l.b16 %v5604
        %v5637 = vunpack.c.l.b16 %v5605
        %v5638 = vunpack.c.l.b16 %v5606
        %v5639 = vunpack.c.l.b16 %v5607
        %v5640 = vunpack.c.l.b16 %v5608
        %v5641 = vunpack.c.l.b16 %v5609
        %v5642 = vunpack.c.l.b16 %v5610
        %v5643 = vunpack.c.l.b16 %v5611
        %v5644 = vpack.c.b16 %v5629, %v5628
        %v5645 = vpack.c.b16 %v5631, %v5630
        %v5646 = vpack.c.b16 %v5633, %v5632
        %v5647 = vpack.c.b16 %v5635, %v5634
        %v5648 = vpack.c.b16 %v5637, %v5636
        %v5649 = vpack.c.b16 %v5639, %v5638
        %v5650 = vpack.c.b16 %v5641, %v5640
        %v5651 = vpack.c.b16 %v5643, %v5642
        %5660 = vmatprep.subr.bf16.mxu0 0
        %5661 = vmatpush1.bf16.msra.mxu0 %v5644
        %5662 = vmatprep.subr.bf16.mxu0 0
        %5663 = vmatpush1.bf16.msra.mxu0 %v5645
        %5664 = vmatprep.subr.bf16.mxu0 0
        %5665 = vmatpush1.bf16.msra.mxu0 %v5646
        %5666 = vmatprep.subr.bf16.mxu0 0
        %5667 = vmatpush1.bf16.msra.mxu0 %v5647
        %5668 = vmatprep.subr.bf16.mxu0 0
        %5669 = vmatpush1.bf16.msra.mxu0 %v5648
        %5670 = vmatprep.subr.bf16.mxu0 0
        %5671 = vmatpush1.bf16.msra.mxu0 %v5649
        %5672 = vmatprep.subr.bf16.mxu0 0
        %5673 = vmatpush1.bf16.msra.mxu0 %v5650
        %5674 = vmatprep.subr.bf16.mxu0 0
        %5675 = vmatpush1.bf16.msra.mxu0 %v5651
        %5676 = vmatprep.subr.bf16.mxu0 0
        %5677 = vmatpush1.bf16.msra.mxu0 0
        %5678 = vmatprep.subr.bf16.mxu0 0
        %5679 = vmatpush1.bf16.msra.mxu0 0
        %5680 = vmatprep.subr.bf16.mxu0 0
        %5681 = vmatpush1.bf16.msra.mxu0 0
        %5682 = vmatprep.subr.bf16.mxu0 0
        %5683 = vmatpush1.bf16.msra.mxu0 0
        %5684 = vmatprep.subr.bf16.mxu0 0
        %5685 = vmatpush1.bf16.msra.mxu0 0
        %5686 = vmatprep.subr.bf16.mxu0 0
        %5687 = vmatpush1.bf16.msra.mxu0 0
        %5688 = vmatprep.subr.bf16.mxu0 0
        %5689 = vmatpush1.bf16.msra.mxu0 0
        %5690 = vmatprep.subr.bf16.mxu0 0
        %5691 = vmatpush1.bf16.msra.mxu0 0
        %5692 = vmatprep.mubr.bf16.mxu0 0
        %5693 = vmatmul.mubr.bf16.gmra.mrb[0].mxu0 %v5594
        %v5694 = vpop.f32.mrb[0].mxu0
        %v5695 = vadd.f32 0.0, %v5694
        %v5696 = vpop.f32.mrb[0].mxu0
        %v5697 = vpop.f32.mrb[0].mxu0
        %v5698 = vpop.f32.mrb[0].mxu0
        %5699 = vdwg.mxu0
        %v5700 = vadd.f32 %v5591, %v5695
        %v5701 = vld [vmem:[%s5592 + $0x1] sm:$0x1]
        %v5702 = vpack.c.bf16 %v5701, %v5701
        %s5703 = scalar_lea.vmem [#allocation5], 384
        %v5704 = vld [vmem:[%s5703] sm:$0xf]
        %v5705 = vld [vmem:[%s5703 + $0x4] sm:$0xf]
        %v5706 = vld [vmem:[%s5703 + $0x8] sm:$0xf]
        %v5707 = vld [vmem:[%s5703 + $0xc] sm:$0xf]
        %v5708 = vld [vmem:[%s5703 + $0x10] sm:$0xf]
        %v5709 = vld [vmem:[%s5703 + $0x14] sm:$0xf]
        %v5710 = vld [vmem:[%s5703 + $0x18] sm:$0xf]
        %v5711 = vld [vmem:[%s5703 + $0x1c] sm:$0xf]
        %v5712 = vld [vmem:[%s5703 + $0x20] sm:$0xf]
        %v5713 = vld [vmem:[%s5703 + $0x24] sm:$0xf]
        %v5714 = vld [vmem:[%s5703 + $0x28] sm:$0xf]
        %v5715 = vld [vmem:[%s5703 + $0x2c] sm:$0xf]
        %v5716 = vld [vmem:[%s5703 + $0x30] sm:$0xf]
        %v5717 = vld [vmem:[%s5703 + $0x34] sm:$0xf]
        %v5718 = vld [vmem:[%s5703 + $0x38] sm:$0xf]
        %v5719 = vld [vmem:[%s5703 + $0x3c] sm:$0xf]
        %v5736 = vunpack.c.l.b16 %v5704
        %v5737 = vunpack.c.l.b16 %v5705
        %v5738 = vunpack.c.l.b16 %v5706
        %v5739 = vunpack.c.l.b16 %v5707
        %v5740 = vunpack.c.l.b16 %v5708
        %v5741 = vunpack.c.l.b16 %v5709
        %v5742 = vunpack.c.l.b16 %v5710
        %v5743 = vunpack.c.l.b16 %v5711
        %v5744 = vunpack.c.l.b16 %v5712
        %v5745 = vunpack.c.l.b16 %v5713
        %v5746 = vunpack.c.l.b16 %v5714
        %v5747 = vunpack.c.l.b16 %v5715
        %v5748 = vunpack.c.l.b16 %v5716
        %v5749 = vunpack.c.l.b16 %v5717
        %v5750 = vunpack.c.l.b16 %v5718
        %v5751 = vunpack.c.l.b16 %v5719
        %v5752 = vpack.c.b16 %v5737, %v5736
        %v5753 = vpack.c.b16 %v5739, %v5738
        %v5754 = vpack.c.b16 %v5741, %v5740
        %v5755 = vpack.c.b16 %v5743, %v5742
        %v5756 = vpack.c.b16 %v5745, %v5744
        %v5757 = vpack.c.b16 %v5747, %v5746
        %v5758 = vpack.c.b16 %v5749, %v5748
        %v5759 = vpack.c.b16 %v5751, %v5750
        %5768 = vmatprep.subr.bf16.mxu0 0
        %5769 = vmatpush1.bf16.msra.mxu0 %v5752
        %5770 = vmatprep.subr.bf16.mxu0 0
        %5771 = vmatpush1.bf16.msra.mxu0 %v5753
        %5772 = vmatprep.subr.bf16.mxu0 0
        %5773 = vmatpush1.bf16.msra.mxu0 %v5754
        %5774 = vmatprep.subr.bf16.mxu0 0
        %5775 = vmatpush1.bf16.msra.mxu0 %v5755
        %5776 = vmatprep.subr.bf16.mxu0 0
        %5777 = vmatpush1.bf16.msra.mxu0 %v5756
        %5778 = vmatprep.subr.bf16.mxu0 0
        %5779 = vmatpush1.bf16.msra.mxu0 %v5757
        %5780 = vmatprep.subr.bf16.mxu0 0
        %5781 = vmatpush1.bf16.msra.mxu0 %v5758
        %5782 = vmatprep.subr.bf16.mxu0 0
        %5783 = vmatpush1.bf16.msra.mxu0 %v5759
        %5784 = vmatprep.subr.bf16.mxu0 0
        %5785 = vmatpush1.bf16.msra.mxu0 0
        %5786 = vmatprep.subr.bf16.mxu0 0
        %5787 = vmatpush1.bf16.msra.mxu0 0
        %5788 = vmatprep.subr.bf16.mxu0 0
        %5789 = vmatpush1.bf16.msra.mxu0 0
        %5790 = vmatprep.subr.bf16.mxu0 0
        %5791 = vmatpush1.bf16.msra.mxu0 0
        %5792 = vmatprep.subr.bf16.mxu0 0
        %5793 = vmatpush1.bf16.msra.mxu0 0
        %5794 = vmatprep.subr.bf16.mxu0 0
        %5795 = vmatpush1.bf16.msra.mxu0 0
        %5796 = vmatprep.subr.bf16.mxu0 0
        %5797 = vmatpush1.bf16.msra.mxu0 0
        %5798 = vmatprep.subr.bf16.mxu0 0
        %5799 = vmatpush1.bf16.msra.mxu0 0
        %5800 = vmatprep.mubr.bf16.mxu0 0
        %5801 = vmatmul.mubr.bf16.gmra.mrb[0].mxu0 %v5702
        %v5802 = vpop.f32.mrb[0].mxu0
        %v5803 = vadd.f32 0.0, %v5802
        %v5804 = vpop.f32.mrb[0].mxu0
        %v5805 = vpop.f32.mrb[0].mxu0
        %v5806 = vpop.f32.mrb[0].mxu0
        %5807 = vdwg.mxu0
        %v5808 = vadd.f32 %v5700, %v5803
        %v5809 = vld [vmem:[%s5592 + $0x2] sm:$0x1]
        %v5810 = vpack.c.bf16 %v5809, %v5809
        %s5811 = scalar_lea.vmem [#allocation5], 448
        %v5812 = vld [vmem:[%s5811] sm:$0xf]
        %v5813 = vld [vmem:[%s5811 + $0x4] sm:$0xf]
        %v5814 = vld [vmem:[%s5811 + $0x8] sm:$0xf]
        %v5815 = vld [vmem:[%s5811 + $0xc] sm:$0xf]
        %v5816 = vld [vmem:[%s5811 + $0x10] sm:$0xf]
        %v5817 = vld [vmem:[%s5811 + $0x14] sm:$0xf]
        %v5818 = vld [vmem:[%s5811 + $0x18] sm:$0xf]
        %v5819 = vld [vmem:[%s5811 + $0x1c] sm:$0xf]
        %v5820 = vld [vmem:[%s5811 + $0x20] sm:$0xf]
        %v5821 = vld [vmem:[%s5811 + $0x24] sm:$0xf]
        %v5822 = vld [vmem:[%s5811 + $0x28] sm:$0xf]
        %v5823 = vld [vmem:[%s5811 + $0x2c] sm:$0xf]
        %v5824 = vld [vmem:[%s5811 + $0x30] sm:$0xf]
        %v5825 = vld [vmem:[%s5811 + $0x34] sm:$0xf]
        %v5826 = vld [vmem:[%s5811 + $0x38] sm:$0xf]
        %v5827 = vld [vmem:[%s5811 + $0x3c] sm:$0xf]
        %v5844 = vunpack.c.l.b16 %v5812
        %v5845 = vunpack.c.l.b16 %v5813
        %v5846 = vunpack.c.l.b16 %v5814
        %v5847 = vunpack.c.l.b16 %v5815
        %v5848 = vunpack.c.l.b16 %v5816
        %v5849 = vunpack.c.l.b16 %v5817
        %v5850 = vunpack.c.l.b16 %v5818
        %v5851 = vunpack.c.l.b16 %v5819
        %v5852 = vunpack.c.l.b16 %v5820
        %v5853 = vunpack.c.l.b16 %v5821
        %v5854 = vunpack.c.l.b16 %v5822
        %v5855 = vunpack.c.l.b16 %v5823
        %v5856 = vunpack.c.l.b16 %v5824
        %v5857 = vunpack.c.l.b16 %v5825
        %v5858 = vunpack.c.l.b16 %v5826
        %v5859 = vunpack.c.l.b16 %v5827
        %v5860 = vpack.c.b16 %v5845, %v5844
        %v5861 = vpack.c.b16 %v5847, %v5846
        %v5862 = vpack.c.b16 %v5849, %v5848
        %v5863 = vpack.c.b16 %v5851, %v5850
        %v5864 = vpack.c.b16 %v5853, %v5852
        %v5865 = vpack.c.b16 %v5855, %v5854
        %v5866 = vpack.c.b16 %v5857, %v5856
        %v5867 = vpack.c.b16 %v5859, %v5858
        %5876 = vmatprep.subr.bf16.mxu0 0
        %5877 = vmatpush1.bf16.msra.mxu0 %v5860
        %5878 = vmatprep.subr.bf16.mxu0 0
        %5879 = vmatpush1.bf16.msra.mxu0 %v5861
        %5880 = vmatprep.subr.bf16.mxu0 0
        %5881 = vmatpush1.bf16.msra.mxu0 %v5862
        %5882 = vmatprep.subr.bf16.mxu0 0
        %5883 = vmatpush1.bf16.msra.mxu0 %v5863
        %5884 = vmatprep.subr.bf16.mxu0 0
        %5885 = vmatpush1.bf16.msra.mxu0 %v5864
        %5886 = vmatprep.subr.bf16.mxu0 0
        %5887 = vmatpush1.bf16.msra.mxu0 %v5865
        %5888 = vmatprep.subr.bf16.mxu0 0
        %5889 = vmatpush1.bf16.msra.mxu0 %v5866
        %5890 = vmatprep.subr.bf16.mxu0 0
        %5891 = vmatpush1.bf16.msra.mxu0 %v5867
        %5892 = vmatprep.subr.bf16.mxu0 0
        %5893 = vmatpush1.bf16.msra.mxu0 0
        %5894 = vmatprep.subr.bf16.mxu0 0
        %5895 = vmatpush1.bf16.msra.mxu0 0
        %5896 = vmatprep.subr.bf16.mxu0 0
        %5897 = vmatpush1.bf16.msra.mxu0 0
        %5898 = vmatprep.subr.bf16.mxu0 0
        %5899 = vmatpush1.bf16.msra.mxu0 0
        %5900 = vmatprep.subr.bf16.mxu0 0
        %5901 = vmatpush1.bf16.msra.mxu0 0
        %5902 = vmatprep.subr.bf16.mxu0 0
        %5903 = vmatpush1.bf16.msra.mxu0 0
        %5904 = vmatprep.subr.bf16.mxu0 0
        %5905 = vmatpush1.bf16.msra.mxu0 0
        %5906 = vmatprep.subr.bf16.mxu0 0
        %5907 = vmatpush1.bf16.msra.mxu0 0
        %5908 = vmatprep.mubr.bf16.mxu0 0
        %5909 = vmatmul.mubr.bf16.gmra.mrb[0].mxu0 %v5810
        %v5910 = vpop.f32.mrb[0].mxu0
        %v5911 = vadd.f32 0.0, %v5910
        %v5912 = vpop.f32.mrb[0].mxu0
        %v5913 = vpop.f32.mrb[0].mxu0
        %v5914 = vpop.f32.mrb[0].mxu0
        %5915 = vdwg.mxu0
        %v5916 = vadd.f32 %v5808, %v5911
        %v5917 = vld [vmem:[%s5592 + $0x3] sm:$0x1]
        %v5918 = vpack.c.bf16 %v5917, %v5917
        %s5919 = scalar_lea.vmem [#allocation5], 512
        %v5920 = vld [vmem:[%s5919] sm:$0xf]
        %v5921 = vld [vmem:[%s5919 + $0x4] sm:$0xf]
        %v5922 = vld [vmem:[%s5919 + $0x8] sm:$0xf]
        %v5923 = vld [vmem:[%s5919 + $0xc] sm:$0xf]
        %v5924 = vld [vmem:[%s5919 + $0x10] sm:$0xf]
        %v5925 = vld [vmem:[%s5919 + $0x14] sm:$0xf]
        %v5926 = vld [vmem:[%s5919 + $0x18] sm:$0xf]
        %v5927 = vld [vmem:[%s5919 + $0x1c] sm:$0xf]
        %v5928 = vld [vmem:[%s5919 + $0x20] sm:$0xf]
        %v5929 = vld [vmem:[%s5919 + $0x24] sm:$0xf]
        %v5930 = vld [vmem:[%s5919 + $0x28] sm:$0xf]
        %v5931 = vld [vmem:[%s5919 + $0x2c] sm:$0xf]
        %v5932 = vld [vmem:[%s5919 + $0x30] sm:$0xf]
        %v5933 = vld [vmem:[%s5919 + $0x34] sm:$0xf]
        %v5934 = vld [vmem:[%s5919 + $0x38] sm:$0xf]
        %v5935 = vld [vmem:[%s5919 + $0x3c] sm:$0xf]
        %v5952 = vunpack.c.l.b16 %v5920
        %v5953 = vunpack.c.l.b16 %v5921
        %v5954 = vunpack.c.l.b16 %v5922
        %v5955 = vunpack.c.l.b16 %v5923
        %v5956 = vunpack.c.l.b16 %v5924
        %v5957 = vunpack.c.l.b16 %v5925
        %v5958 = vunpack.c.l.b16 %v5926
        %v5959 = vunpack.c.l.b16 %v5927
        %v5960 = vunpack.c.l.b16 %v5928
        %v5961 = vunpack.c.l.b16 %v5929
        %v5962 = vunpack.c.l.b16 %v5930
        %v5963 = vunpack.c.l.b16 %v5931
        %v5964 = vunpack.c.l.b16 %v5932
        %v5965 = vunpack.c.l.b16 %v5933
        %v5966 = vunpack.c.l.b16 %v5934
        %v5967 = vunpack.c.l.b16 %v5935
        %v5968 = vpack.c.b16 %v5953, %v5952
        %v5969 = vpack.c.b16 %v5955, %v5954
        %v5970 = vpack.c.b16 %v5957, %v5956
        %v5971 = vpack.c.b16 %v5959, %v5958
        %v5972 = vpack.c.b16 %v5961, %v5960
        %v5973 = vpack.c.b16 %v5963, %v5962
        %v5974 = vpack.c.b16 %v5965, %v5964
        %v5975 = vpack.c.b16 %v5967, %v5966
        %5984 = vmatprep.subr.bf16.mxu0 0
        %5985 = vmatpush1.bf16.msra.mxu0 %v5968
        %5986 = vmatprep.subr.bf16.mxu0 0
        %5987 = vmatpush1.bf16.msra.mxu0 %v5969
        %5988 = vmatprep.subr.bf16.mxu0 0
        %5989 = vmatpush1.bf16.msra.mxu0 %v5970
        %5990 = vmatprep.subr.bf16.mxu0 0
        %5991 = vmatpush1.bf16.msra.mxu0 %v5971
        %5992 = vmatprep.subr.bf16.mxu0 0
        %5993 = vmatpush1.bf16.msra.mxu0 %v5972
        %5994 = vmatprep.subr.bf16.mxu0 0
        %5995 = vmatpush1.bf16.msra.mxu0 %v5973
        %5996 = vmatprep.subr.bf16.mxu0 0
        %5997 = vmatpush1.bf16.msra.mxu0 %v5974
        %5998 = vmatprep.subr.bf16.mxu0 0
        %5999 = vmatpush1.bf16.msra.mxu0 %v5975
        %6000 = vmatprep.subr.bf16.mxu0 0
        %6001 = vmatpush1.bf16.msra.mxu0 0
        %6002 = vmatprep.subr.bf16.mxu0 0
        %6003 = vmatpush1.bf16.msra.mxu0 0
        %6004 = vmatprep.subr.bf16.mxu0 0
        %6005 = vmatpush1.bf16.msra.mxu0 0
        %6006 = vmatprep.subr.bf16.mxu0 0
        %6007 = vmatpush1.bf16.msra.mxu0 0
        %6008 = vmatprep.subr.bf16.mxu0 0
        %6009 = vmatpush1.bf16.msra.mxu0 0
        %6010 = vmatprep.subr.bf16.mxu0 0
        %6011 = vmatpush1.bf16.msra.mxu0 0
        %6012 = vmatprep.subr.bf16.mxu0 0
        %6013 = vmatpush1.bf16.msra.mxu0 0
        %6014 = vmatprep.subr.bf16.mxu0 0
        %6015 = vmatpush1.bf16.msra.mxu0 0
        %6016 = vmatprep.mubr.bf16.mxu0 0
        %6017 = vmatmul.mubr.bf16.gmra.mrb[0].mxu0 %v5918
        %v6018 = vpop.f32.mrb[0].mxu0
        %v6019 = vadd.f32 0.0, %v6018
        %v6020 = vpop.f32.mrb[0].mxu0
        %v6021 = vpop.f32.mrb[0].mxu0
        %v6022 = vpop.f32.mrb[0].mxu0
        %6023 = vdwg.mxu0
        %v6024 = vadd.f32 %v5916, %v6019
        %v6025 = vld [vmem:[%s5592 + $0x4] sm:$0x1]
        %v6026 = vpack.c.bf16 %v6025, %v6025
        %s6027 = scalar_lea.vmem [#allocation5], 576
        %v6028 = vld [vmem:[%s6027] sm:$0xf]
        %v6029 = vld [vmem:[%s6027 + $0x4] sm:$0xf]
        %v6030 = vld [vmem:[%s6027 + $0x8] sm:$0xf]
        %v6031 = vld [vmem:[%s6027 + $0xc] sm:$0xf]
        %v6032 = vld [vmem:[%s6027 + $0x10] sm:$0xf]
        %v6033 = vld [vmem:[%s6027 + $0x14] sm:$0xf]
        %v6034 = vld [vmem:[%s6027 + $0x18] sm:$0xf]
        %v6035 = vld [vmem:[%s6027 + $0x1c] sm:$0xf]
        %v6036 = vld [vmem:[%s6027 + $0x20] sm:$0xf]
        %v6037 = vld [vmem:[%s6027 + $0x24] sm:$0xf]
        %v6038 = vld [vmem:[%s6027 + $0x28] sm:$0xf]
        %v6039 = vld [vmem:[%s6027 + $0x2c] sm:$0xf]
        %v6040 = vld [vmem:[%s6027 + $0x30] sm:$0xf]
        %v6041 = vld [vmem:[%s6027 + $0x34] sm:$0xf]
        %v6042 = vld [vmem:[%s6027 + $0x38] sm:$0xf]
        %v6043 = vld [vmem:[%s6027 + $0x3c] sm:$0xf]
        %v6060 = vunpack.c.l.b16 %v6028
        %v6061 = vunpack.c.l.b16 %v6029
        %v6062 = vunpack.c.l.b16 %v6030
        %v6063 = vunpack.c.l.b16 %v6031
        %v6064 = vunpack.c.l.b16 %v6032
        %v6065 = vunpack.c.l.b16 %v6033
        %v6066 = vunpack.c.l.b16 %v6034
        %v6067 = vunpack.c.l.b16 %v6035
        %v6068 = vunpack.c.l.b16 %v6036
        %v6069 = vunpack.c.l.b16 %v6037
        %v6070 = vunpack.c.l.b16 %v6038
        %v6071 = vunpack.c.l.b16 %v6039
        %v6072 = vunpack.c.l.b16 %v6040
        %v6073 = vunpack.c.l.b16 %v6041
        %v6074 = vunpack.c.l.b16 %v6042
        %v6075 = vunpack.c.l.b16 %v6043
        %v6076 = vpack.c.b16 %v6061, %v6060
        %v6077 = vpack.c.b16 %v6063, %v6062
        %v6078 = vpack.c.b16 %v6065, %v6064
        %v6079 = vpack.c.b16 %v6067, %v6066
        %v6080 = vpack.c.b16 %v6069, %v6068
        %v6081 = vpack.c.b16 %v6071, %v6070
        %v6082 = vpack.c.b16 %v6073, %v6072
        %v6083 = vpack.c.b16 %v6075, %v6074
        %6092 = vmatprep.subr.bf16.mxu0 0
        %6093 = vmatpush1.bf16.msra.mxu0 %v6076
        %6094 = vmatprep.subr.bf16.mxu0 0
        %6095 = vmatpush1.bf16.msra.mxu0 %v6077
        %6096 = vmatprep.subr.bf16.mxu0 0
        %6097 = vmatpush1.bf16.msra.mxu0 %v6078
        %6098 = vmatprep.subr.bf16.mxu0 0
        %6099 = vmatpush1.bf16.msra.mxu0 %v6079
        %6100 = vmatprep.subr.bf16.mxu0 0
        %6101 = vmatpush1.bf16.msra.mxu0 %v6080
        %6102 = vmatprep.subr.bf16.mxu0 0
        %6103 = vmatpush1.bf16.msra.mxu0 %v6081
        %6104 = vmatprep.subr.bf16.mxu0 0
        %6105 = vmatpush1.bf16.msra.mxu0 %v6082
        %6106 = vmatprep.subr.bf16.mxu0 0
        %6107 = vmatpush1.bf16.msra.mxu0 %v6083
        %6108 = vmatprep.subr.bf16.mxu0 0
        %6109 = vmatpush1.bf16.msra.mxu0 0
        %6110 = vmatprep.subr.bf16.mxu0 0
        %6111 = vmatpush1.bf16.msra.mxu0 0
        %6112 = vmatprep.subr.bf16.mxu0 0
        %6113 = vmatpush1.bf16.msra.mxu0 0
        %6114 = vmatprep.subr.bf16.mxu0 0
        %6115 = vmatpush1.bf16.msra.mxu0 0
        %6116 = vmatprep.subr.bf16.mxu0 0
        %6117 = vmatpush1.bf16.msra.mxu0 0
        %6118 = vmatprep.subr.bf16.mxu0 0
        %6119 = vmatpush1.bf16.msra.mxu0 0
        %6120 = vmatprep.subr.bf16.mxu0 0
        %6121 = vmatpush1.bf16.msra.mxu0 0
        %6122 = vmatprep.subr.bf16.mxu0 0
        %6123 = vmatpush1.bf16.msra.mxu0 0
        %6124 = vmatprep.mubr.bf16.mxu0 0
        %6125 = vmatmul.mubr.bf16.gmra.mrb[0].mxu0 %v6026
        %v6126 = vpop.f32.mrb[0].mxu0
        %v6127 = vadd.f32 0.0, %v6126
        %v6128 = vpop.f32.mrb[0].mxu0
        %v6129 = vpop.f32.mrb[0].mxu0
        %v6130 = vpop.f32.mrb[0].mxu0
        %6131 = vdwg.mxu0
        %v6132 = vadd.f32 %v6024, %v6127
        %s6133 = scalar_lea.vmem [#allocation3], 16
        %v6134 = vld [vmem:[%s6133] sm:$0x1]
        %v6135 = vpack.c.bf16 %v6134, %v6134
        %s6136 = scalar_lea.vmem [#allocation5], 640
        %v6137 = vld [vmem:[%s6136] sm:$0xf]
        %v6138 = vld [vmem:[%s6136 + $0x4] sm:$0xf]
        %v6139 = vld [vmem:[%s6136 + $0x8] sm:$0xf]
        %v6140 = vld [vmem:[%s6136 + $0xc] sm:$0xf]
        %v6141 = vld [vmem:[%s6136 + $0x10] sm:$0xf]
        %v6142 = vld [vmem:[%s6136 + $0x14] sm:$0xf]
        %v6143 = vld [vmem:[%s6136 + $0x18] sm:$0xf]
        %v6144 = vld [vmem:[%s6136 + $0x1c] sm:$0xf]
        %v6145 = vld [vmem:[%s6136 + $0x20] sm:$0xf]
        %v6146 = vld [vmem:[%s6136 + $0x24] sm:$0xf]
        %v6147 = vld [vmem:[%s6136 + $0x28] sm:$0xf]
        %v6148 = vld [vmem:[%s6136 + $0x2c] sm:$0xf]
        %v6149 = vld [vmem:[%s6136 + $0x30] sm:$0xf]
        %v6150 = vld [vmem:[%s6136 + $0x34] sm:$0xf]
        %v6151 = vld [vmem:[%s6136 + $0x38] sm:$0xf]
        %v6152 = vld [vmem:[%s6136 + $0x3c] sm:$0xf]
        %v6169 = vunpack.c.l.b16 %v6137
        %v6170 = vunpack.c.l.b16 %v6138
        %v6171 = vunpack.c.l.b16 %v6139
        %v6172 = vunpack.c.l.b16 %v6140
        %v6173 = vunpack.c.l.b16 %v6141
        %v6174 = vunpack.c.l.b16 %v6142
        %v6175 = vunpack.c.l.b16 %v6143
        %v6176 = vunpack.c.l.b16 %v6144
        %v6177 = vunpack.c.l.b16 %v6145
        %v6178 = vunpack.c.l.b16 %v6146
        %v6179 = vunpack.c.l.b16 %v6147
        %v6180 = vunpack.c.l.b16 %v6148
        %v6181 = vunpack.c.l.b16 %v6149
        %v6182 = vunpack.c.l.b16 %v6150
        %v6183 = vunpack.c.l.b16 %v6151
        %v6184 = vunpack.c.l.b16 %v6152
        %v6185 = vpack.c.b16 %v6170, %v6169
        %v6186 = vpack.c.b16 %v6172, %v6171
        %v6187 = vpack.c.b16 %v6174, %v6173
        %v6188 = vpack.c.b16 %v6176, %v6175
        %v6189 = vpack.c.b16 %v6178, %v6177
        %v6190 = vpack.c.b16 %v6180, %v6179
        %v6191 = vpack.c.b16 %v6182, %v6181
        %v6192 = vpack.c.b16 %v6184, %v6183
        %6201 = vmatprep.subr.bf16.mxu0 0
        %6202 = vmatpush1.bf16.msra.mxu0 %v6185
        %6203 = vmatprep.subr.bf16.mxu0 0
        %6204 = vmatpush1.bf16.msra.mxu0 %v6186
        %6205 = vmatprep.subr.bf16.mxu0 0
        %6206 = vmatpush1.bf16.msra.mxu0 %v6187
        %6207 = vmatprep.subr.bf16.mxu0 0
        %6208 = vmatpush1.bf16.msra.mxu0 %v6188
        %6209 = vmatprep.subr.bf16.mxu0 0
        %6210 = vmatpush1.bf16.msra.mxu0 %v6189
        %6211 = vmatprep.subr.bf16.mxu0 0
        %6212 = vmatpush1.bf16.msra.mxu0 %v6190
        %6213 = vmatprep.subr.bf16.mxu0 0
        %6214 = vmatpush1.bf16.msra.mxu0 %v6191
        %6215 = vmatprep.subr.bf16.mxu0 0
        %6216 = vmatpush1.bf16.msra.mxu0 %v6192
        %6217 = vmatprep.subr.bf16.mxu0 0
        %6218 = vmatpush1.bf16.msra.mxu0 0
        %6219 = vmatprep.subr.bf16.mxu0 0
        %6220 = vmatpush1.bf16.msra.mxu0 0
        %6221 = vmatprep.subr.bf16.mxu0 0
        %6222 = vmatpush1.bf16.msra.mxu0 0
        %6223 = vmatprep.subr.bf16.mxu0 0
        %6224 = vmatpush1.bf16.msra.mxu0 0
        %6225 = vmatprep.subr.bf16.mxu0 0
        %6226 = vmatpush1.bf16.msra.mxu0 0
        %6227 = vmatprep.subr.bf16.mxu0 0
        %6228 = vmatpush1.bf16.msra.mxu0 0
        %6229 = vmatprep.subr.bf16.mxu0 0
        %6230 = vmatpush1.bf16.msra.mxu0 0
        %6231 = vmatprep.subr.bf16.mxu0 0
        %6232 = vmatpush1.bf16.msra.mxu0 0
        %6233 = vmatprep.mubr.bf16.mxu0 0
        %6234 = vmatmul.mubr.bf16.gmra.mrb[0].mxu0 %v6135
        %v6235 = vpop.f32.mrb[0].mxu0
        %v6236 = vadd.f32 0.0, %v6235
        %v6237 = vpop.f32.mrb[0].mxu0
        %v6238 = vpop.f32.mrb[0].mxu0
        %v6239 = vpop.f32.mrb[0].mxu0
        %6240 = vdwg.mxu0
        %v6241 = vadd.f32 %v6132, %v6236
        %v6242 = vld [vmem:[%s6133 + $0x1] sm:$0x1]
        %v6243 = vpack.c.bf16 %v6242, %v6242
        %s6244 = scalar_lea.vmem [#allocation5], 704
        %v6245 = vld [vmem:[%s6244] sm:$0xf]
        %v6246 = vld [vmem:[%s6244 + $0x4] sm:$0xf]
        %v6247 = vld [vmem:[%s6244 + $0x8] sm:$0xf]
        %v6248 = vld [vmem:[%s6244 + $0xc] sm:$0xf]
        %v6249 = vld [vmem:[%s6244 + $0x10] sm:$0xf]
        %v6250 = vld [vmem:[%s6244 + $0x14] sm:$0xf]
        %v6251 = vld [vmem:[%s6244 + $0x18] sm:$0xf]
        %v6252 = vld [vmem:[%s6244 + $0x1c] sm:$0xf]
        %v6253 = vld [vmem:[%s6244 + $0x20] sm:$0xf]
        %v6254 = vld [vmem:[%s6244 + $0x24] sm:$0xf]
        %v6255 = vld [vmem:[%s6244 + $0x28] sm:$0xf]
        %v6256 = vld [vmem:[%s6244 + $0x2c] sm:$0xf]
        %v6257 = vld [vmem:[%s6244 + $0x30] sm:$0xf]
        %v6258 = vld [vmem:[%s6244 + $0x34] sm:$0xf]
        %v6259 = vld [vmem:[%s6244 + $0x38] sm:$0xf]
        %v6260 = vld [vmem:[%s6244 + $0x3c] sm:$0xf]
        %v6277 = vunpack.c.l.b16 %v6245
        %v6278 = vunpack.c.l.b16 %v6246
        %v6279 = vunpack.c.l.b16 %v6247
        %v6280 = vunpack.c.l.b16 %v6248
        %v6281 = vunpack.c.l.b16 %v6249
        %v6282 = vunpack.c.l.b16 %v6250
        %v6283 = vunpack.c.l.b16 %v6251
        %v6284 = vunpack.c.l.b16 %v6252
        %v6285 = vunpack.c.l.b16 %v6253
        %v6286 = vunpack.c.l.b16 %v6254
        %v6287 = vunpack.c.l.b16 %v6255
        %v6288 = vunpack.c.l.b16 %v6256
        %v6289 = vunpack.c.l.b16 %v6257
        %v6290 = vunpack.c.l.b16 %v6258
        %v6291 = vunpack.c.l.b16 %v6259
        %v6292 = vunpack.c.l.b16 %v6260
        %v6293 = vpack.c.b16 %v6278, %v6277
        %v6294 = vpack.c.b16 %v6280, %v6279
        %v6295 = vpack.c.b16 %v6282, %v6281
        %v6296 = vpack.c.b16 %v6284, %v6283
        %v6297 = vpack.c.b16 %v6286, %v6285
        %v6298 = vpack.c.b16 %v6288, %v6287
        %v6299 = vpack.c.b16 %v6290, %v6289
        %v6300 = vpack.c.b16 %v6292, %v6291
        %6309 = vmatprep.subr.bf16.mxu0 0
        %6310 = vmatpush1.bf16.msra.mxu0 %v6293
        %6311 = vmatprep.subr.bf16.mxu0 0
        %6312 = vmatpush1.bf16.msra.mxu0 %v6294
        %6313 = vmatprep.subr.bf16.mxu0 0
        %6314 = vmatpush1.bf16.msra.mxu0 %v6295
        %6315 = vmatprep.subr.bf16.mxu0 0
        %6316 = vmatpush1.bf16.msra.mxu0 %v6296
        %6317 = vmatprep.subr.bf16.mxu0 0
        %6318 = vmatpush1.bf16.msra.mxu0 %v6297
        %6319 = vmatprep.subr.bf16.mxu0 0
        %6320 = vmatpush1.bf16.msra.mxu0 %v6298
        %6321 = vmatprep.subr.bf16.mxu0 0
        %6322 = vmatpush1.bf16.msra.mxu0 %v6299
        %6323 = vmatprep.subr.bf16.mxu0 0
        %6324 = vmatpush1.bf16.msra.mxu0 %v6300
        %6325 = vmatprep.subr.bf16.mxu0 0
        %6326 = vmatpush1.bf16.msra.mxu0 0
        %6327 = vmatprep.subr.bf16.mxu0 0
        %6328 = vmatpush1.bf16.msra.mxu0 0
        %6329 = vmatprep.subr.bf16.mxu0 0
        %6330 = vmatpush1.bf16.msra.mxu0 0
        %6331 = vmatprep.subr.bf16.mxu0 0
        %6332 = vmatpush1.bf16.msra.mxu0 0
        %6333 = vmatprep.subr.bf16.mxu0 0
        %6334 = vmatpush1.bf16.msra.mxu0 0
        %6335 = vmatprep.subr.bf16.mxu0 0
        %6336 = vmatpush1.bf16.msra.mxu0 0
        %6337 = vmatprep.subr.bf16.mxu0 0
        %6338 = vmatpush1.bf16.msra.mxu0 0
        %6339 = vmatprep.subr.bf16.mxu0 0
        %6340 = vmatpush1.bf16.msra.mxu0 0
        %6341 = vmatprep.mubr.bf16.mxu0 0
        %6342 = vmatmul.mubr.bf16.gmra.mrb[0].mxu0 %v6243
        %v6343 = vpop.f32.mrb[0].mxu0
        %v6344 = vadd.f32 0.0, %v6343
        %v6345 = vpop.f32.mrb[0].mxu0
        %v6346 = vpop.f32.mrb[0].mxu0
        %v6347 = vpop.f32.mrb[0].mxu0
        %6348 = vdwg.mxu0
        %v6349 = vadd.f32 %v6241, %v6344
        %v6350 = vld [vmem:[%s6133 + $0x2] sm:$0x1]
        %v6351 = vpack.c.bf16 %v6350, %v6350
        %s6352 = scalar_lea.vmem [#allocation5], 768
        %v6353 = vld [vmem:[%s6352] sm:$0xf]
        %v6354 = vld [vmem:[%s6352 + $0x4] sm:$0xf]
        %v6355 = vld [vmem:[%s6352 + $0x8] sm:$0xf]
        %v6356 = vld [vmem:[%s6352 + $0xc] sm:$0xf]
        %v6357 = vld [vmem:[%s6352 + $0x10] sm:$0xf]
        %v6358 = vld [vmem:[%s6352 + $0x14] sm:$0xf]
        %v6359 = vld [vmem:[%s6352 + $0x18] sm:$0xf]
        %v6360 = vld [vmem:[%s6352 + $0x1c] sm:$0xf]
        %v6361 = vld [vmem:[%s6352 + $0x20] sm:$0xf]
        %v6362 = vld [vmem:[%s6352 + $0x24] sm:$0xf]
        %v6363 = vld [vmem:[%s6352 + $0x28] sm:$0xf]
        %v6364 = vld [vmem:[%s6352 + $0x2c] sm:$0xf]
        %v6365 = vld [vmem:[%s6352 + $0x30] sm:$0xf]
        %v6366 = vld [vmem:[%s6352 + $0x34] sm:$0xf]
        %v6367 = vld [vmem:[%s6352 + $0x38] sm:$0xf]
        %v6368 = vld [vmem:[%s6352 + $0x3c] sm:$0xf]
        %v6385 = vunpack.c.l.b16 %v6353
        %v6386 = vunpack.c.l.b16 %v6354
        %v6387 = vunpack.c.l.b16 %v6355
        %v6388 = vunpack.c.l.b16 %v6356
        %v6389 = vunpack.c.l.b16 %v6357
        %v6390 = vunpack.c.l.b16 %v6358
        %v6391 = vunpack.c.l.b16 %v6359
        %v6392 = vunpack.c.l.b16 %v6360
        %v6393 = vunpack.c.l.b16 %v6361
        %v6394 = vunpack.c.l.b16 %v6362
        %v6395 = vunpack.c.l.b16 %v6363
        %v6396 = vunpack.c.l.b16 %v6364
        %v6397 = vunpack.c.l.b16 %v6365
        %v6398 = vunpack.c.l.b16 %v6366
        %v6399 = vunpack.c.l.b16 %v6367
        %v6400 = vunpack.c.l.b16 %v6368
        %v6401 = vpack.c.b16 %v6386, %v6385
        %v6402 = vpack.c.b16 %v6388, %v6387
        %v6403 = vpack.c.b16 %v6390, %v6389
        %v6404 = vpack.c.b16 %v6392, %v6391
        %v6405 = vpack.c.b16 %v6394, %v6393
        %v6406 = vpack.c.b16 %v6396, %v6395
        %v6407 = vpack.c.b16 %v6398, %v6397
        %v6408 = vpack.c.b16 %v6400, %v6399
        %6417 = vmatprep.subr.bf16.mxu0 0
        %6418 = vmatpush1.bf16.msra.mxu0 %v6401
        %6419 = vmatprep.subr.bf16.mxu0 0
        %6420 = vmatpush1.bf16.msra.mxu0 %v6402
        %6421 = vmatprep.subr.bf16.mxu0 0
        %6422 = vmatpush1.bf16.msra.mxu0 %v6403
        %6423 = vmatprep.subr.bf16.mxu0 0
        %6424 = vmatpush1.bf16.msra.mxu0 %v6404
        %6425 = vmatprep.subr.bf16.mxu0 0
        %6426 = vmatpush1.bf16.msra.mxu0 %v6405
        %6427 = vmatprep.subr.bf16.mxu0 0
        %6428 = vmatpush1.bf16.msra.mxu0 %v6406
        %6429 = vmatprep.subr.bf16.mxu0 0
        %6430 = vmatpush1.bf16.msra.mxu0 %v6407
        %6431 = vmatprep.subr.bf16.mxu0 0
        %6432 = vmatpush1.bf16.msra.mxu0 %v6408
        %6433 = vmatprep.subr.bf16.mxu0 0
        %6434 = vmatpush1.bf16.msra.mxu0 0
        %6435 = vmatprep.subr.bf16.mxu0 0
        %6436 = vmatpush1.bf16.msra.mxu0 0
        %6437 = vmatprep.subr.bf16.mxu0 0
        %6438 = vmatpush1.bf16.msra.mxu0 0
        %6439 = vmatprep.subr.bf16.mxu0 0
        %6440 = vmatpush1.bf16.msra.mxu0 0
        %6441 = vmatprep.subr.bf16.mxu0 0
        %6442 = vmatpush1.bf16.msra.mxu0 0
        %6443 = vmatprep.subr.bf16.mxu0 0
        %6444 = vmatpush1.bf16.msra.mxu0 0
        %6445 = vmatprep.subr.bf16.mxu0 0
        %6446 = vmatpush1.bf16.msra.mxu0 0
        %6447 = vmatprep.subr.bf16.mxu0 0
        %6448 = vmatpush1.bf16.msra.mxu0 0
        %6449 = vmatprep.mubr.bf16.mxu0 0
        %6450 = vmatmul.mubr.bf16.gmra.mrb[0].mxu0 %v6351
        %v6451 = vpop.f32.mrb[0].mxu0
        %v6452 = vadd.f32 0.0, %v6451
        %v6453 = vpop.f32.mrb[0].mxu0
        %v6454 = vpop.f32.mrb[0].mxu0
        %v6455 = vpop.f32.mrb[0].mxu0
        %6456 = vdwg.mxu0
        %v6457 = vadd.f32 %v6349, %v6452
        %v6458 = vld [vmem:[%s6133 + $0x3] sm:$0x1]
        %v6459 = vpack.c.bf16 %v6458, %v6458
        %s6460 = scalar_lea.vmem [#allocation5], 832
        %v6461 = vld [vmem:[%s6460] sm:$0xf]
        %v6462 = vld [vmem:[%s6460 + $0x4] sm:$0xf]
        %v6463 = vld [vmem:[%s6460 + $0x8] sm:$0xf]
        %v6464 = vld [vmem:[%s6460 + $0xc] sm:$0xf]
        %v6465 = vld [vmem:[%s6460 + $0x10] sm:$0xf]
        %v6466 = vld [vmem:[%s6460 + $0x14] sm:$0xf]
        %v6467 = vld [vmem:[%s6460 + $0x18] sm:$0xf]
        %v6468 = vld [vmem:[%s6460 + $0x1c] sm:$0xf]
        %v6469 = vld [vmem:[%s6460 + $0x20] sm:$0xf]
        %v6470 = vld [vmem:[%s6460 + $0x24] sm:$0xf]
        %v6471 = vld [vmem:[%s6460 + $0x28] sm:$0xf]
        %v6472 = vld [vmem:[%s6460 + $0x2c] sm:$0xf]
        %v6473 = vld [vmem:[%s6460 + $0x30] sm:$0xf]
        %v6474 = vld [vmem:[%s6460 + $0x34] sm:$0xf]
        %v6475 = vld [vmem:[%s6460 + $0x38] sm:$0xf]
        %v6476 = vld [vmem:[%s6460 + $0x3c] sm:$0xf]
        %v6493 = vunpack.c.l.b16 %v6461
        %v6494 = vunpack.c.l.b16 %v6462
        %v6495 = vunpack.c.l.b16 %v6463
        %v6496 = vunpack.c.l.b16 %v6464
        %v6497 = vunpack.c.l.b16 %v6465
        %v6498 = vunpack.c.l.b16 %v6466
        %v6499 = vunpack.c.l.b16 %v6467
        %v6500 = vunpack.c.l.b16 %v6468
        %v6501 = vunpack.c.l.b16 %v6469
        %v6502 = vunpack.c.l.b16 %v6470
        %v6503 = vunpack.c.l.b16 %v6471
        %v6504 = vunpack.c.l.b16 %v6472
        %v6505 = vunpack.c.l.b16 %v6473
        %v6506 = vunpack.c.l.b16 %v6474
        %v6507 = vunpack.c.l.b16 %v6475
        %v6508 = vunpack.c.l.b16 %v6476
        %v6509 = vpack.c.b16 %v6494, %v6493
        %v6510 = vpack.c.b16 %v6496, %v6495
        %v6511 = vpack.c.b16 %v6498, %v6497
        %v6512 = vpack.c.b16 %v6500, %v6499
        %v6513 = vpack.c.b16 %v6502, %v6501
        %v6514 = vpack.c.b16 %v6504, %v6503
        %v6515 = vpack.c.b16 %v6506, %v6505
        %v6516 = vpack.c.b16 %v6508, %v6507
        %6525 = vmatprep.subr.bf16.mxu0 0
        %6526 = vmatpush1.bf16.msra.mxu0 %v6509
        %6527 = vmatprep.subr.bf16.mxu0 0
        %6528 = vmatpush1.bf16.msra.mxu0 %v6510
        %6529 = vmatprep.subr.bf16.mxu0 0
        %6530 = vmatpush1.bf16.msra.mxu0 %v6511
        %6531 = vmatprep.subr.bf16.mxu0 0
        %6532 = vmatpush1.bf16.msra.mxu0 %v6512
        %6533 = vmatprep.subr.bf16.mxu0 0
        %6534 = vmatpush1.bf16.msra.mxu0 %v6513
        %6535 = vmatprep.subr.bf16.mxu0 0
        %6536 = vmatpush1.bf16.msra.mxu0 %v6514
        %6537 = vmatprep.subr.bf16.mxu0 0
        %6538 = vmatpush1.bf16.msra.mxu0 %v6515
        %6539 = vmatprep.subr.bf16.mxu0 0
        %6540 = vmatpush1.bf16.msra.mxu0 %v6516
        %6541 = vmatprep.subr.bf16.mxu0 0
        %6542 = vmatpush1.bf16.msra.mxu0 0
        %6543 = vmatprep.subr.bf16.mxu0 0
        %6544 = vmatpush1.bf16.msra.mxu0 0
        %6545 = vmatprep.subr.bf16.mxu0 0
        %6546 = vmatpush1.bf16.msra.mxu0 0
        %6547 = vmatprep.subr.bf16.mxu0 0
        %6548 = vmatpush1.bf16.msra.mxu0 0
        %6549 = vmatprep.subr.bf16.mxu0 0
        %6550 = vmatpush1.bf16.msra.mxu0 0
        %6551 = vmatprep.subr.bf16.mxu0 0
        %6552 = vmatpush1.bf16.msra.mxu0 0
        %6553 = vmatprep.subr.bf16.mxu0 0
        %6554 = vmatpush1.bf16.msra.mxu0 0
        %6555 = vmatprep.subr.bf16.mxu0 0
        %6556 = vmatpush1.bf16.msra.mxu0 0
        %6557 = vmatprep.mubr.bf16.mxu0 0
        %6558 = vmatmul.mubr.bf16.gmra.mrb[0].mxu0 %v6459
        %v6559 = vpop.f32.mrb[0].mxu0
        %v6560 = vadd.f32 0.0, %v6559
        %v6561 = vpop.f32.mrb[0].mxu0
        %v6562 = vpop.f32.mrb[0].mxu0
        %v6563 = vpop.f32.mrb[0].mxu0
        %6564 = vdwg.mxu0
        %v6565 = vadd.f32 %v6457, %v6560
        %v6566 = vld [vmem:[%s6133 + $0x4] sm:$0x1]
        %v6567 = vpack.c.bf16 %v6566, %v6566
        %s6568 = scalar_lea.vmem [#allocation5], 896
        %v6569 = vld [vmem:[%s6568] sm:$0xf]
        %v6570 = vld [vmem:[%s6568 + $0x4] sm:$0xf]
        %v6571 = vld [vmem:[%s6568 + $0x8] sm:$0xf]
        %v6572 = vld [vmem:[%s6568 + $0xc] sm:$0xf]
        %v6573 = vld [vmem:[%s6568 + $0x10] sm:$0xf]
        %v6574 = vld [vmem:[%s6568 + $0x14] sm:$0xf]
        %v6575 = vld [vmem:[%s6568 + $0x18] sm:$0xf]
        %v6576 = vld [vmem:[%s6568 + $0x1c] sm:$0xf]
        %v6577 = vld [vmem:[%s6568 + $0x20] sm:$0xf]
        %v6578 = vld [vmem:[%s6568 + $0x24] sm:$0xf]
        %v6579 = vld [vmem:[%s6568 + $0x28] sm:$0xf]
        %v6580 = vld [vmem:[%s6568 + $0x2c] sm:$0xf]
        %v6581 = vld [vmem:[%s6568 + $0x30] sm:$0xf]
        %v6582 = vld [vmem:[%s6568 + $0x34] sm:$0xf]
        %v6583 = vld [vmem:[%s6568 + $0x38] sm:$0xf]
        %v6584 = vld [vmem:[%s6568 + $0x3c] sm:$0xf]
        %v6601 = vunpack.c.l.b16 %v6569
        %v6602 = vunpack.c.l.b16 %v6570
        %v6603 = vunpack.c.l.b16 %v6571
        %v6604 = vunpack.c.l.b16 %v6572
        %v6605 = vunpack.c.l.b16 %v6573
        %v6606 = vunpack.c.l.b16 %v6574
        %v6607 = vunpack.c.l.b16 %v6575
        %v6608 = vunpack.c.l.b16 %v6576
        %v6609 = vunpack.c.l.b16 %v6577
        %v6610 = vunpack.c.l.b16 %v6578
        %v6611 = vunpack.c.l.b16 %v6579
        %v6612 = vunpack.c.l.b16 %v6580
        %v6613 = vunpack.c.l.b16 %v6581
        %v6614 = vunpack.c.l.b16 %v6582
        %v6615 = vunpack.c.l.b16 %v6583
        %v6616 = vunpack.c.l.b16 %v6584
        %v6617 = vpack.c.b16 %v6602, %v6601
        %v6618 = vpack.c.b16 %v6604, %v6603
        %v6619 = vpack.c.b16 %v6606, %v6605
        %v6620 = vpack.c.b16 %v6608, %v6607
        %v6621 = vpack.c.b16 %v6610, %v6609
        %v6622 = vpack.c.b16 %v6612, %v6611
        %v6623 = vpack.c.b16 %v6614, %v6613
        %v6624 = vpack.c.b16 %v6616, %v6615
        %6633 = vmatprep.subr.bf16.mxu0 0
        %6634 = vmatpush1.bf16.msra.mxu0 %v6617
        %6635 = vmatprep.subr.bf16.mxu0 0
        %6636 = vmatpush1.bf16.msra.mxu0 %v6618
        %6637 = vmatprep.subr.bf16.mxu0 0
        %6638 = vmatpush1.bf16.msra.mxu0 %v6619
        %6639 = vmatprep.subr.bf16.mxu0 0
        %6640 = vmatpush1.bf16.msra.mxu0 %v6620
        %6641 = vmatprep.subr.bf16.mxu0 0
        %6642 = vmatpush1.bf16.msra.mxu0 %v6621
        %6643 = vmatprep.subr.bf16.mxu0 0
        %6644 = vmatpush1.bf16.msra.mxu0 %v6622
        %6645 = vmatprep.subr.bf16.mxu0 0
        %6646 = vmatpush1.bf16.msra.mxu0 %v6623
        %6647 = vmatprep.subr.bf16.mxu0 0
        %6648 = vmatpush1.bf16.msra.mxu0 %v6624
        %6649 = vmatprep.subr.bf16.mxu0 0
        %6650 = vmatpush1.bf16.msra.mxu0 0
        %6651 = vmatprep.subr.bf16.mxu0 0
        %6652 = vmatpush1.bf16.msra.mxu0 0
        %6653 = vmatprep.subr.bf16.mxu0 0
        %6654 = vmatpush1.bf16.msra.mxu0 0
        %6655 = vmatprep.subr.bf16.mxu0 0
        %6656 = vmatpush1.bf16.msra.mxu0 0
        %6657 = vmatprep.subr.bf16.mxu0 0
        %6658 = vmatpush1.bf16.msra.mxu0 0
        %6659 = vmatprep.subr.bf16.mxu0 0
        %6660 = vmatpush1.bf16.msra.mxu0 0
        %6661 = vmatprep.subr.bf16.mxu0 0
        %6662 = vmatpush1.bf16.msra.mxu0 0
        %6663 = vmatprep.subr.bf16.mxu0 0
        %6664 = vmatpush1.bf16.msra.mxu0 0
        %6665 = vmatprep.mubr.bf16.mxu0 0
        %6666 = vmatmul.mubr.bf16.gmra.mrb[0].mxu0 %v6567
        %v6667 = vpop.f32.mrb[0].mxu0
        %v6668 = vadd.f32 0.0, %v6667
        %v6669 = vpop.f32.mrb[0].mxu0
        %v6670 = vpop.f32.mrb[0].mxu0
        %v6671 = vpop.f32.mrb[0].mxu0
        %6672 = vdwg.mxu0
        %v6673 = vadd.f32 %v6565, %v6668
        %s6674 = scalar_lea.vmem [#allocation3], 24
        %v6675 = vld [vmem:[%s6674] sm:$0x1]
        %v6676 = vpack.c.bf16 %v6675, %v6675
        %s6677 = scalar_lea.vmem [#allocation5], 960
        %v6678 = vld [vmem:[%s6677] sm:$0xf]
        %v6679 = vld [vmem:[%s6677 + $0x4] sm:$0xf]
        %v6680 = vld [vmem:[%s6677 + $0x8] sm:$0xf]
        %v6681 = vld [vmem:[%s6677 + $0xc] sm:$0xf]
        %v6682 = vld [vmem:[%s6677 + $0x10] sm:$0xf]
        %v6683 = vld [vmem:[%s6677 + $0x14] sm:$0xf]
        %v6684 = vld [vmem:[%s6677 + $0x18] sm:$0xf]
        %v6685 = vld [vmem:[%s6677 + $0x1c] sm:$0xf]
        %v6686 = vld [vmem:[%s6677 + $0x20] sm:$0xf]
        %v6687 = vld [vmem:[%s6677 + $0x24] sm:$0xf]
        %v6688 = vld [vmem:[%s6677 + $0x28] sm:$0xf]
        %v6689 = vld [vmem:[%s6677 + $0x2c] sm:$0xf]
        %v6690 = vld [vmem:[%s6677 + $0x30] sm:$0xf]
        %v6691 = vld [vmem:[%s6677 + $0x34] sm:$0xf]
        %v6692 = vld [vmem:[%s6677 + $0x38] sm:$0xf]
        %v6693 = vld [vmem:[%s6677 + $0x3c] sm:$0xf]
        %v6710 = vunpack.c.l.b16 %v6678
        %v6711 = vunpack.c.l.b16 %v6679
        %v6712 = vunpack.c.l.b16 %v6680
        %v6713 = vunpack.c.l.b16 %v6681
        %v6714 = vunpack.c.l.b16 %v6682
        %v6715 = vunpack.c.l.b16 %v6683
        %v6716 = vunpack.c.l.b16 %v6684
        %v6717 = vunpack.c.l.b16 %v6685
        %v6718 = vunpack.c.l.b16 %v6686
        %v6719 = vunpack.c.l.b16 %v6687
        %v6720 = vunpack.c.l.b16 %v6688
        %v6721 = vunpack.c.l.b16 %v6689
        %v6722 = vunpack.c.l.b16 %v6690
        %v6723 = vunpack.c.l.b16 %v6691
        %v6724 = vunpack.c.l.b16 %v6692
        %v6725 = vunpack.c.l.b16 %v6693
        %v6726 = vpack.c.b16 %v6711, %v6710
        %v6727 = vpack.c.b16 %v6713, %v6712
        %v6728 = vpack.c.b16 %v6715, %v6714
        %v6729 = vpack.c.b16 %v6717, %v6716
        %v6730 = vpack.c.b16 %v6719, %v6718
        %v6731 = vpack.c.b16 %v6721, %v6720
        %v6732 = vpack.c.b16 %v6723, %v6722
        %v6733 = vpack.c.b16 %v6725, %v6724
        %6742 = vmatprep.subr.bf16.mxu0 0
        %6743 = vmatpush1.bf16.msra.mxu0 %v6726
        %6744 = vmatprep.subr.bf16.mxu0 0
        %6745 = vmatpush1.bf16.msra.mxu0 %v6727
        %6746 = vmatprep.subr.bf16.mxu0 0
        %6747 = vmatpush1.bf16.msra.mxu0 %v6728
        %6748 = vmatprep.subr.bf16.mxu0 0
        %6749 = vmatpush1.bf16.msra.mxu0 %v6729
        %6750 = vmatprep.subr.bf16.mxu0 0
        %6751 = vmatpush1.bf16.msra.mxu0 %v6730
        %6752 = vmatprep.subr.bf16.mxu0 0
        %6753 = vmatpush1.bf16.msra.mxu0 %v6731
        %6754 = vmatprep.subr.bf16.mxu0 0
        %6755 = vmatpush1.bf16.msra.mxu0 %v6732
        %6756 = vmatprep.subr.bf16.mxu0 0
        %6757 = vmatpush1.bf16.msra.mxu0 %v6733
        %6758 = vmatprep.subr.bf16.mxu0 0
        %6759 = vmatpush1.bf16.msra.mxu0 0
        %6760 = vmatprep.subr.bf16.mxu0 0
        %6761 = vmatpush1.bf16.msra.mxu0 0
        %6762 = vmatprep.subr.bf16.mxu0 0
        %6763 = vmatpush1.bf16.msra.mxu0 0
        %6764 = vmatprep.subr.bf16.mxu0 0
        %6765 = vmatpush1.bf16.msra.mxu0 0
        %6766 = vmatprep.subr.bf16.mxu0 0
        %6767 = vmatpush1.bf16.msra.mxu0 0
        %6768 = vmatprep.subr.bf16.mxu0 0
        %6769 = vmatpush1.bf16.msra.mxu0 0
        %6770 = vmatprep.subr.bf16.mxu0 0
        %6771 = vmatpush1.bf16.msra.mxu0 0
        %6772 = vmatprep.subr.bf16.mxu0 0
        %6773 = vmatpush1.bf16.msra.mxu0 0
        %6774 = vmatprep.mubr.bf16.mxu0 0
        %6775 = vmatmul.mubr.bf16.gmra.mrb[0].mxu0 %v6676
        %v6776 = vpop.f32.mrb[0].mxu0
        %v6777 = vadd.f32 0.0, %v6776
        %v6778 = vpop.f32.mrb[0].mxu0
        %v6779 = vpop.f32.mrb[0].mxu0
        %v6780 = vpop.f32.mrb[0].mxu0
        %6781 = vdwg.mxu0
        %v6782 = vadd.f32 %v6673, %v6777
        %v6783 = vld [vmem:[%s6674 + $0x1] sm:$0x1]
        %v6784 = vpack.c.bf16 %v6783, %v6783
        %s6785 = scalar_lea.vmem [#allocation5], 1024
        %v6786 = vld [vmem:[%s6785] sm:$0xf]
        %v6787 = vld [vmem:[%s6785 + $0x4] sm:$0xf]
        %v6788 = vld [vmem:[%s6785 + $0x8] sm:$0xf]
        %v6789 = vld [vmem:[%s6785 + $0xc] sm:$0xf]
        %v6790 = vld [vmem:[%s6785 + $0x10] sm:$0xf]
        %v6791 = vld [vmem:[%s6785 + $0x14] sm:$0xf]
        %v6792 = vld [vmem:[%s6785 + $0x18] sm:$0xf]
        %v6793 = vld [vmem:[%s6785 + $0x1c] sm:$0xf]
        %v6794 = vld [vmem:[%s6785 + $0x20] sm:$0xf]
        %v6795 = vld [vmem:[%s6785 + $0x24] sm:$0xf]
        %v6796 = vld [vmem:[%s6785 + $0x28] sm:$0xf]
        %v6797 = vld [vmem:[%s6785 + $0x2c] sm:$0xf]
        %v6798 = vld [vmem:[%s6785 + $0x30] sm:$0xf]
        %v6799 = vld [vmem:[%s6785 + $0x34] sm:$0xf]
        %v6800 = vld [vmem:[%s6785 + $0x38] sm:$0xf]
        %v6801 = vld [vmem:[%s6785 + $0x3c] sm:$0xf]
        %v6818 = vunpack.c.l.b16 %v6786
        %v6819 = vunpack.c.l.b16 %v6787
        %v6820 = vunpack.c.l.b16 %v6788
        %v6821 = vunpack.c.l.b16 %v6789
        %v6822 = vunpack.c.l.b16 %v6790
        %v6823 = vunpack.c.l.b16 %v6791
        %v6824 = vunpack.c.l.b16 %v6792
        %v6825 = vunpack.c.l.b16 %v6793
        %v6826 = vunpack.c.l.b16 %v6794
        %v6827 = vunpack.c.l.b16 %v6795
        %v6828 = vunpack.c.l.b16 %v6796
        %v6829 = vunpack.c.l.b16 %v6797
        %v6830 = vunpack.c.l.b16 %v6798
        %v6831 = vunpack.c.l.b16 %v6799
        %v6832 = vunpack.c.l.b16 %v6800
        %v6833 = vunpack.c.l.b16 %v6801
        %v6834 = vpack.c.b16 %v6819, %v6818
        %v6835 = vpack.c.b16 %v6821, %v6820
        %v6836 = vpack.c.b16 %v6823, %v6822
        %v6837 = vpack.c.b16 %v6825, %v6824
        %v6838 = vpack.c.b16 %v6827, %v6826
        %v6839 = vpack.c.b16 %v6829, %v6828
        %v6840 = vpack.c.b16 %v6831, %v6830
        %v6841 = vpack.c.b16 %v6833, %v6832
        %6850 = vmatprep.subr.bf16.mxu0 0
        %6851 = vmatpush1.bf16.msra.mxu0 %v6834
        %6852 = vmatprep.subr.bf16.mxu0 0
        %6853 = vmatpush1.bf16.msra.mxu0 %v6835
        %6854 = vmatprep.subr.bf16.mxu0 0
        %6855 = vmatpush1.bf16.msra.mxu0 %v6836
        %6856 = vmatprep.subr.bf16.mxu0 0
        %6857 = vmatpush1.bf16.msra.mxu0 %v6837
        %6858 = vmatprep.subr.bf16.mxu0 0
        %6859 = vmatpush1.bf16.msra.mxu0 %v6838
        %6860 = vmatprep.subr.bf16.mxu0 0
        %6861 = vmatpush1.bf16.msra.mxu0 %v6839
        %6862 = vmatprep.subr.bf16.mxu0 0
        %6863 = vmatpush1.bf16.msra.mxu0 %v6840
        %6864 = vmatprep.subr.bf16.mxu0 0
        %6865 = vmatpush1.bf16.msra.mxu0 %v6841
        %6866 = vmatprep.subr.bf16.mxu0 0
        %6867 = vmatpush1.bf16.msra.mxu0 0
        %6868 = vmatprep.subr.bf16.mxu0 0
        %6869 = vmatpush1.bf16.msra.mxu0 0
        %6870 = vmatprep.subr.bf16.mxu0 0
        %6871 = vmatpush1.bf16.msra.mxu0 0
        %6872 = vmatprep.subr.bf16.mxu0 0
        %6873 = vmatpush1.bf16.msra.mxu0 0
        %6874 = vmatprep.subr.bf16.mxu0 0
        %6875 = vmatpush1.bf16.msra.mxu0 0
        %6876 = vmatprep.subr.bf16.mxu0 0
        %6877 = vmatpush1.bf16.msra.mxu0 0
        %6878 = vmatprep.subr.bf16.mxu0 0
        %6879 = vmatpush1.bf16.msra.mxu0 0
        %6880 = vmatprep.subr.bf16.mxu0 0
        %6881 = vmatpush1.bf16.msra.mxu0 0
        %6882 = vmatprep.mubr.bf16.mxu0 0
        %6883 = vmatmul.mubr.bf16.gmra.mrb[0].mxu0 %v6784
        %v6884 = vpop.f32.mrb[0].mxu0
        %v6885 = vadd.f32 0.0, %v6884
        %v6886 = vpop.f32.mrb[0].mxu0
        %v6887 = vpop.f32.mrb[0].mxu0
        %v6888 = vpop.f32.mrb[0].mxu0
        %6889 = vdwg.mxu0
        %v6890 = vadd.f32 %v6782, %v6885
        %v6891 = vld [vmem:[%s6674 + $0x2] sm:$0x1]
        %v6892 = vpack.c.bf16 %v6891, %v6891
        %s6893 = scalar_lea.vmem [#allocation5], 1088
        %v6894 = vld [vmem:[%s6893] sm:$0xf]
        %v6895 = vld [vmem:[%s6893 + $0x4] sm:$0xf]
        %v6896 = vld [vmem:[%s6893 + $0x8] sm:$0xf]
        %v6897 = vld [vmem:[%s6893 + $0xc] sm:$0xf]
        %v6898 = vld [vmem:[%s6893 + $0x10] sm:$0xf]
        %v6899 = vld [vmem:[%s6893 + $0x14] sm:$0xf]
        %v6900 = vld [vmem:[%s6893 + $0x18] sm:$0xf]
        %v6901 = vld [vmem:[%s6893 + $0x1c] sm:$0xf]
        %v6902 = vld [vmem:[%s6893 + $0x20] sm:$0xf]
        %v6903 = vld [vmem:[%s6893 + $0x24] sm:$0xf]
        %v6904 = vld [vmem:[%s6893 + $0x28] sm:$0xf]
        %v6905 = vld [vmem:[%s6893 + $0x2c] sm:$0xf]
        %v6906 = vld [vmem:[%s6893 + $0x30] sm:$0xf]
        %v6907 = vld [vmem:[%s6893 + $0x34] sm:$0xf]
        %v6908 = vld [vmem:[%s6893 + $0x38] sm:$0xf]
        %v6909 = vld [vmem:[%s6893 + $0x3c] sm:$0xf]
        %v6926 = vunpack.c.l.b16 %v6894
        %v6927 = vunpack.c.l.b16 %v6895
        %v6928 = vunpack.c.l.b16 %v6896
        %v6929 = vunpack.c.l.b16 %v6897
        %v6930 = vunpack.c.l.b16 %v6898
        %v6931 = vunpack.c.l.b16 %v6899
        %v6932 = vunpack.c.l.b16 %v6900
        %v6933 = vunpack.c.l.b16 %v6901
        %v6934 = vunpack.c.l.b16 %v6902
        %v6935 = vunpack.c.l.b16 %v6903
        %v6936 = vunpack.c.l.b16 %v6904
        %v6937 = vunpack.c.l.b16 %v6905
        %v6938 = vunpack.c.l.b16 %v6906
        %v6939 = vunpack.c.l.b16 %v6907
        %v6940 = vunpack.c.l.b16 %v6908
        %v6941 = vunpack.c.l.b16 %v6909
        %v6942 = vpack.c.b16 %v6927, %v6926
        %v6943 = vpack.c.b16 %v6929, %v6928
        %v6944 = vpack.c.b16 %v6931, %v6930
        %v6945 = vpack.c.b16 %v6933, %v6932
        %v6946 = vpack.c.b16 %v6935, %v6934
        %v6947 = vpack.c.b16 %v6937, %v6936
        %v6948 = vpack.c.b16 %v6939, %v6938
        %v6949 = vpack.c.b16 %v6941, %v6940
        %6958 = vmatprep.subr.bf16.mxu0 0
        %6959 = vmatpush1.bf16.msra.mxu0 %v6942
        %6960 = vmatprep.subr.bf16.mxu0 0
        %6961 = vmatpush1.bf16.msra.mxu0 %v6943
        %6962 = vmatprep.subr.bf16.mxu0 0
        %6963 = vmatpush1.bf16.msra.mxu0 %v6944
        %6964 = vmatprep.subr.bf16.mxu0 0
        %6965 = vmatpush1.bf16.msra.mxu0 %v6945
        %6966 = vmatprep.subr.bf16.mxu0 0
        %6967 = vmatpush1.bf16.msra.mxu0 %v6946
        %6968 = vmatprep.subr.bf16.mxu0 0
        %6969 = vmatpush1.bf16.msra.mxu0 %v6947
        %6970 = vmatprep.subr.bf16.mxu0 0
        %6971 = vmatpush1.bf16.msra.mxu0 %v6948
        %6972 = vmatprep.subr.bf16.mxu0 0
        %6973 = vmatpush1.bf16.msra.mxu0 %v6949
        %6974 = vmatprep.subr.bf16.mxu0 0
        %6975 = vmatpush1.bf16.msra.mxu0 0
        %6976 = vmatprep.subr.bf16.mxu0 0
        %6977 = vmatpush1.bf16.msra.mxu0 0
        %6978 = vmatprep.subr.bf16.mxu0 0
        %6979 = vmatpush1.bf16.msra.mxu0 0
        %6980 = vmatprep.subr.bf16.mxu0 0
        %6981 = vmatpush1.bf16.msra.mxu0 0
        %6982 = vmatprep.subr.bf16.mxu0 0
        %6983 = vmatpush1.bf16.msra.mxu0 0
        %6984 = vmatprep.subr.bf16.mxu0 0
        %6985 = vmatpush1.bf16.msra.mxu0 0
        %6986 = vmatprep.subr.bf16.mxu0 0
        %6987 = vmatpush1.bf16.msra.mxu0 0
        %6988 = vmatprep.subr.bf16.mxu0 0
        %6989 = vmatpush1.bf16.msra.mxu0 0
        %6990 = vmatprep.mubr.bf16.mxu0 0
        %6991 = vmatmul.mubr.bf16.gmra.mrb[0].mxu0 %v6892
        %v6992 = vpop.f32.mrb[0].mxu0
        %v6993 = vadd.f32 0.0, %v6992
        %v6994 = vpop.f32.mrb[0].mxu0
        %v6995 = vpop.f32.mrb[0].mxu0
        %v6996 = vpop.f32.mrb[0].mxu0
        %6997 = vdwg.mxu0
        %v6998 = vadd.f32 %v6890, %v6993
        %v6999 = vld [vmem:[%s6674 + $0x3] sm:$0x1]
        %v7000 = vpack.c.bf16 %v6999, %v6999
        %s7001 = scalar_lea.vmem [#allocation5], 1152
        %v7002 = vld [vmem:[%s7001] sm:$0xf]
        %v7003 = vld [vmem:[%s7001 + $0x4] sm:$0xf]
        %v7004 = vld [vmem:[%s7001 + $0x8] sm:$0xf]
        %v7005 = vld [vmem:[%s7001 + $0xc] sm:$0xf]
        %v7006 = vld [vmem:[%s7001 + $0x10] sm:$0xf]
        %v7007 = vld [vmem:[%s7001 + $0x14] sm:$0xf]
        %v7008 = vld [vmem:[%s7001 + $0x18] sm:$0xf]
        %v7009 = vld [vmem:[%s7001 + $0x1c] sm:$0xf]
        %v7010 = vld [vmem:[%s7001 + $0x20] sm:$0xf]
        %v7011 = vld [vmem:[%s7001 + $0x24] sm:$0xf]
        %v7012 = vld [vmem:[%s7001 + $0x28] sm:$0xf]
        %v7013 = vld [vmem:[%s7001 + $0x2c] sm:$0xf]
        %v7014 = vld [vmem:[%s7001 + $0x30] sm:$0xf]
        %v7015 = vld [vmem:[%s7001 + $0x34] sm:$0xf]
        %v7016 = vld [vmem:[%s7001 + $0x38] sm:$0xf]
        %v7017 = vld [vmem:[%s7001 + $0x3c] sm:$0xf]
        %v7034 = vunpack.c.l.b16 %v7002
        %v7035 = vunpack.c.l.b16 %v7003
        %v7036 = vunpack.c.l.b16 %v7004
        %v7037 = vunpack.c.l.b16 %v7005
        %v7038 = vunpack.c.l.b16 %v7006
        %v7039 = vunpack.c.l.b16 %v7007
        %v7040 = vunpack.c.l.b16 %v7008
        %v7041 = vunpack.c.l.b16 %v7009
        %v7042 = vunpack.c.l.b16 %v7010
        %v7043 = vunpack.c.l.b16 %v7011
        %v7044 = vunpack.c.l.b16 %v7012
        %v7045 = vunpack.c.l.b16 %v7013
        %v7046 = vunpack.c.l.b16 %v7014
        %v7047 = vunpack.c.l.b16 %v7015
        %v7048 = vunpack.c.l.b16 %v7016
        %v7049 = vunpack.c.l.b16 %v7017
        %v7050 = vpack.c.b16 %v7035, %v7034
        %v7051 = vpack.c.b16 %v7037, %v7036
        %v7052 = vpack.c.b16 %v7039, %v7038
        %v7053 = vpack.c.b16 %v7041, %v7040
        %v7054 = vpack.c.b16 %v7043, %v7042
        %v7055 = vpack.c.b16 %v7045, %v7044
        %v7056 = vpack.c.b16 %v7047, %v7046
        %v7057 = vpack.c.b16 %v7049, %v7048
        %7066 = vmatprep.subr.bf16.mxu0 0
        %7067 = vmatpush1.bf16.msra.mxu0 %v7050
        %7068 = vmatprep.subr.bf16.mxu0 0
        %7069 = vmatpush1.bf16.msra.mxu0 %v7051
        %7070 = vmatprep.subr.bf16.mxu0 0
        %7071 = vmatpush1.bf16.msra.mxu0 %v7052
        %7072 = vmatprep.subr.bf16.mxu0 0
        %7073 = vmatpush1.bf16.msra.mxu0 %v7053
        %7074 = vmatprep.subr.bf16.mxu0 0
        %7075 = vmatpush1.bf16.msra.mxu0 %v7054
        %7076 = vmatprep.subr.bf16.mxu0 0
        %7077 = vmatpush1.bf16.msra.mxu0 %v7055
        %7078 = vmatprep.subr.bf16.mxu0 0
        %7079 = vmatpush1.bf16.msra.mxu0 %v7056
        %7080 = vmatprep.subr.bf16.mxu0 0
        %7081 = vmatpush1.bf16.msra.mxu0 %v7057
        %7082 = vmatprep.subr.bf16.mxu0 0
        %7083 = vmatpush1.bf16.msra.mxu0 0
        %7084 = vmatprep.subr.bf16.mxu0 0
        %7085 = vmatpush1.bf16.msra.mxu0 0
        %7086 = vmatprep.subr.bf16.mxu0 0
        %7087 = vmatpush1.bf16.msra.mxu0 0
        %7088 = vmatprep.subr.bf16.mxu0 0
        %7089 = vmatpush1.bf16.msra.mxu0 0
        %7090 = vmatprep.subr.bf16.mxu0 0
        %7091 = vmatpush1.bf16.msra.mxu0 0
        %7092 = vmatprep.subr.bf16.mxu0 0
        %7093 = vmatpush1.bf16.msra.mxu0 0
        %7094 = vmatprep.subr.bf16.mxu0 0
        %7095 = vmatpush1.bf16.msra.mxu0 0
        %7096 = vmatprep.subr.bf16.mxu0 0
        %7097 = vmatpush1.bf16.msra.mxu0 0
        %7098 = vmatprep.mubr.bf16.mxu0 0
        %7099 = vmatmul.mubr.bf16.gmra.mrb[0].mxu0 %v7000
        %v7100 = vpop.f32.mrb[0].mxu0
        %v7101 = vadd.f32 0.0, %v7100
        %v7102 = vpop.f32.mrb[0].mxu0
        %v7103 = vpop.f32.mrb[0].mxu0
        %v7104 = vpop.f32.mrb[0].mxu0
        %7105 = vdwg.mxu0
        %v7106 = vadd.f32 %v6998, %v7101
        %v7107 = vld [vmem:[%s6674 + $0x4] sm:$0x1]
        %v7108 = vpack.c.bf16 %v7107, %v7107
        %s7109 = scalar_lea.vmem [#allocation5], 1216
        %v7110 = vld [vmem:[%s7109] sm:$0xf]
        %v7111 = vld [vmem:[%s7109 + $0x4] sm:$0xf]
        %v7112 = vld [vmem:[%s7109 + $0x8] sm:$0xf]
        %v7113 = vld [vmem:[%s7109 + $0xc] sm:$0xf]
        %v7114 = vld [vmem:[%s7109 + $0x10] sm:$0xf]
        %v7115 = vld [vmem:[%s7109 + $0x14] sm:$0xf]
        %v7116 = vld [vmem:[%s7109 + $0x18] sm:$0xf]
        %v7117 = vld [vmem:[%s7109 + $0x1c] sm:$0xf]
        %v7118 = vld [vmem:[%s7109 + $0x20] sm:$0xf]
        %v7119 = vld [vmem:[%s7109 + $0x24] sm:$0xf]
        %v7120 = vld [vmem:[%s7109 + $0x28] sm:$0xf]
        %v7121 = vld [vmem:[%s7109 + $0x2c] sm:$0xf]
        %v7122 = vld [vmem:[%s7109 + $0x30] sm:$0xf]
        %v7123 = vld [vmem:[%s7109 + $0x34] sm:$0xf]
        %v7124 = vld [vmem:[%s7109 + $0x38] sm:$0xf]
        %v7125 = vld [vmem:[%s7109 + $0x3c] sm:$0xf]
        %v7142 = vunpack.c.l.b16 %v7110
        %v7143 = vunpack.c.l.b16 %v7111
        %v7144 = vunpack.c.l.b16 %v7112
        %v7145 = vunpack.c.l.b16 %v7113
        %v7146 = vunpack.c.l.b16 %v7114
        %v7147 = vunpack.c.l.b16 %v7115
        %v7148 = vunpack.c.l.b16 %v7116
        %v7149 = vunpack.c.l.b16 %v7117
        %v7150 = vunpack.c.l.b16 %v7118
        %v7151 = vunpack.c.l.b16 %v7119
        %v7152 = vunpack.c.l.b16 %v7120
        %v7153 = vunpack.c.l.b16 %v7121
        %v7154 = vunpack.c.l.b16 %v7122
        %v7155 = vunpack.c.l.b16 %v7123
        %v7156 = vunpack.c.l.b16 %v7124
        %v7157 = vunpack.c.l.b16 %v7125
        %v7158 = vpack.c.b16 %v7143, %v7142
        %v7159 = vpack.c.b16 %v7145, %v7144
        %v7160 = vpack.c.b16 %v7147, %v7146
        %v7161 = vpack.c.b16 %v7149, %v7148
        %v7162 = vpack.c.b16 %v7151, %v7150
        %v7163 = vpack.c.b16 %v7153, %v7152
        %v7164 = vpack.c.b16 %v7155, %v7154
        %v7165 = vpack.c.b16 %v7157, %v7156
        %7174 = vmatprep.subr.bf16.mxu0 0
        %7175 = vmatpush1.bf16.msra.mxu0 %v7158
        %7176 = vmatprep.subr.bf16.mxu0 0
        %7177 = vmatpush1.bf16.msra.mxu0 %v7159
        %7178 = vmatprep.subr.bf16.mxu0 0
        %7179 = vmatpush1.bf16.msra.mxu0 %v7160
        %7180 = vmatprep.subr.bf16.mxu0 0
        %7181 = vmatpush1.bf16.msra.mxu0 %v7161
        %7182 = vmatprep.subr.bf16.mxu0 0
        %7183 = vmatpush1.bf16.msra.mxu0 %v7162
        %7184 = vmatprep.subr.bf16.mxu0 0
        %7185 = vmatpush1.bf16.msra.mxu0 %v7163
        %7186 = vmatprep.subr.bf16.mxu0 0
        %7187 = vmatpush1.bf16.msra.mxu0 %v7164
        %7188 = vmatprep.subr.bf16.mxu0 0
        %7189 = vmatpush1.bf16.msra.mxu0 %v7165
        %7190 = vmatprep.subr.bf16.mxu0 0
        %7191 = vmatpush1.bf16.msra.mxu0 0
        %7192 = vmatprep.subr.bf16.mxu0 0
        %7193 = vmatpush1.bf16.msra.mxu0 0
        %7194 = vmatprep.subr.bf16.mxu0 0
        %7195 = vmatpush1.bf16.msra.mxu0 0
        %7196 = vmatprep.subr.bf16.mxu0 0
        %7197 = vmatpush1.bf16.msra.mxu0 0
        %7198 = vmatprep.subr.bf16.mxu0 0
        %7199 = vmatpush1.bf16.msra.mxu0 0
        %7200 = vmatprep.subr.bf16.mxu0 0
        %7201 = vmatpush1.bf16.msra.mxu0 0
        %7202 = vmatprep.subr.bf16.mxu0 0
        %7203 = vmatpush1.bf16.msra.mxu0 0
        %7204 = vmatprep.subr.bf16.mxu0 0
        %7205 = vmatpush1.bf16.msra.mxu0 0
        %7206 = vmatprep.mubr.bf16.mxu0 0
        %7207 = vmatmul.mubr.bf16.gmra.mrb[0].mxu0 %v7108
        %v7208 = vpop.f32.mrb[0].mxu0
        %v7209 = vadd.f32 0.0, %v7208
        %v7210 = vpop.f32.mrb[0].mxu0
        %v7211 = vpop.f32.mrb[0].mxu0
        %v7212 = vpop.f32.mrb[0].mxu0
        %7213 = vdwg.mxu0
        %v7214 = vadd.f32 %v7106, %v7209
        %s7215 = scalar_lea.vmem [#allocation3], 32
        %v7216 = vld [vmem:[%s7215] sm:$0x1]
        %v7217 = vpack.c.bf16 %v7216, %v7216
        %s7218 = scalar_lea.vmem [#allocation5], 1280
        %v7219 = vld [vmem:[%s7218] sm:$0xf]
        %v7220 = vld [vmem:[%s7218 + $0x4] sm:$0xf]
        %v7221 = vld [vmem:[%s7218 + $0x8] sm:$0xf]
        %v7222 = vld [vmem:[%s7218 + $0xc] sm:$0xf]
        %v7223 = vld [vmem:[%s7218 + $0x10] sm:$0xf]
        %v7224 = vld [vmem:[%s7218 + $0x14] sm:$0xf]
        %v7225 = vld [vmem:[%s7218 + $0x18] sm:$0xf]
        %v7226 = vld [vmem:[%s7218 + $0x1c] sm:$0xf]
        %v7227 = vld [vmem:[%s7218 + $0x20] sm:$0xf]
        %v7228 = vld [vmem:[%s7218 + $0x24] sm:$0xf]
        %v7229 = vld [vmem:[%s7218 + $0x28] sm:$0xf]
        %v7230 = vld [vmem:[%s7218 + $0x2c] sm:$0xf]
        %v7231 = vld [vmem:[%s7218 + $0x30] sm:$0xf]
        %v7232 = vld [vmem:[%s7218 + $0x34] sm:$0xf]
        %v7233 = vld [vmem:[%s7218 + $0x38] sm:$0xf]
        %v7234 = vld [vmem:[%s7218 + $0x3c] sm:$0xf]
        %v7251 = vunpack.c.l.b16 %v7219
        %v7252 = vunpack.c.l.b16 %v7220
        %v7253 = vunpack.c.l.b16 %v7221
        %v7254 = vunpack.c.l.b16 %v7222
        %v7255 = vunpack.c.l.b16 %v7223
        %v7256 = vunpack.c.l.b16 %v7224
        %v7257 = vunpack.c.l.b16 %v7225
        %v7258 = vunpack.c.l.b16 %v7226
        %v7259 = vunpack.c.l.b16 %v7227
        %v7260 = vunpack.c.l.b16 %v7228
        %v7261 = vunpack.c.l.b16 %v7229
        %v7262 = vunpack.c.l.b16 %v7230
        %v7263 = vunpack.c.l.b16 %v7231
        %v7264 = vunpack.c.l.b16 %v7232
        %v7265 = vunpack.c.l.b16 %v7233
        %v7266 = vunpack.c.l.b16 %v7234
        %v7267 = vpack.c.b16 %v7252, %v7251
        %v7268 = vpack.c.b16 %v7254, %v7253
        %v7269 = vpack.c.b16 %v7256, %v7255
        %v7270 = vpack.c.b16 %v7258, %v7257
        %v7271 = vpack.c.b16 %v7260, %v7259
        %v7272 = vpack.c.b16 %v7262, %v7261
        %v7273 = vpack.c.b16 %v7264, %v7263
        %v7274 = vpack.c.b16 %v7266, %v7265
        %7283 = vmatprep.subr.bf16.mxu0 0
        %7284 = vmatpush1.bf16.msra.mxu0 %v7267
        %7285 = vmatprep.subr.bf16.mxu0 0
        %7286 = vmatpush1.bf16.msra.mxu0 %v7268
        %7287 = vmatprep.subr.bf16.mxu0 0
        %7288 = vmatpush1.bf16.msra.mxu0 %v7269
        %7289 = vmatprep.subr.bf16.mxu0 0
        %7290 = vmatpush1.bf16.msra.mxu0 %v7270
        %7291 = vmatprep.subr.bf16.mxu0 0
        %7292 = vmatpush1.bf16.msra.mxu0 %v7271
        %7293 = vmatprep.subr.bf16.mxu0 0
        %7294 = vmatpush1.bf16.msra.mxu0 %v7272
        %7295 = vmatprep.subr.bf16.mxu0 0
        %7296 = vmatpush1.bf16.msra.mxu0 %v7273
        %7297 = vmatprep.subr.bf16.mxu0 0
        %7298 = vmatpush1.bf16.msra.mxu0 %v7274
        %7299 = vmatprep.subr.bf16.mxu0 0
        %7300 = vmatpush1.bf16.msra.mxu0 0
        %7301 = vmatprep.subr.bf16.mxu0 0
        %7302 = vmatpush1.bf16.msra.mxu0 0
        %7303 = vmatprep.subr.bf16.mxu0 0
        %7304 = vmatpush1.bf16.msra.mxu0 0
        %7305 = vmatprep.subr.bf16.mxu0 0
        %7306 = vmatpush1.bf16.msra.mxu0 0
        %7307 = vmatprep.subr.bf16.mxu0 0
        %7308 = vmatpush1.bf16.msra.mxu0 0
        %7309 = vmatprep.subr.bf16.mxu0 0
        %7310 = vmatpush1.bf16.msra.mxu0 0
        %7311 = vmatprep.subr.bf16.mxu0 0
        %7312 = vmatpush1.bf16.msra.mxu0 0
        %7313 = vmatprep.subr.bf16.mxu0 0
        %7314 = vmatpush1.bf16.msra.mxu0 0
        %7315 = vmatprep.mubr.bf16.mxu0 0
        %7316 = vmatmul.mubr.bf16.gmra.mrb[0].mxu0 %v7217
        %v7317 = vpop.f32.mrb[0].mxu0
        %v7318 = vadd.f32 0.0, %v7317
        %v7319 = vpop.f32.mrb[0].mxu0
        %v7320 = vpop.f32.mrb[0].mxu0
        %v7321 = vpop.f32.mrb[0].mxu0
        %7322 = vdwg.mxu0
        %v7323 = vadd.f32 %v7214, %v7318
        %v7324 = vld [vmem:[%s7215 + $0x1] sm:$0x1]
        %v7325 = vpack.c.bf16 %v7324, %v7324
        %s7326 = scalar_lea.vmem [#allocation5], 1344
        %v7327 = vld [vmem:[%s7326] sm:$0xf]
        %v7328 = vld [vmem:[%s7326 + $0x4] sm:$0xf]
        %v7329 = vld [vmem:[%s7326 + $0x8] sm:$0xf]
        %v7330 = vld [vmem:[%s7326 + $0xc] sm:$0xf]
        %v7331 = vld [vmem:[%s7326 + $0x10] sm:$0xf]
        %v7332 = vld [vmem:[%s7326 + $0x14] sm:$0xf]
        %v7333 = vld [vmem:[%s7326 + $0x18] sm:$0xf]
        %v7334 = vld [vmem:[%s7326 + $0x1c] sm:$0xf]
        %v7335 = vld [vmem:[%s7326 + $0x20] sm:$0xf]
        %v7336 = vld [vmem:[%s7326 + $0x24] sm:$0xf]
        %v7337 = vld [vmem:[%s7326 + $0x28] sm:$0xf]
        %v7338 = vld [vmem:[%s7326 + $0x2c] sm:$0xf]
        %v7339 = vld [vmem:[%s7326 + $0x30] sm:$0xf]
        %v7340 = vld [vmem:[%s7326 + $0x34] sm:$0xf]
        %v7341 = vld [vmem:[%s7326 + $0x38] sm:$0xf]
        %v7342 = vld [vmem:[%s7326 + $0x3c] sm:$0xf]
        %v7359 = vunpack.c.l.b16 %v7327
        %v7360 = vunpack.c.l.b16 %v7328
        %v7361 = vunpack.c.l.b16 %v7329
        %v7362 = vunpack.c.l.b16 %v7330
        %v7363 = vunpack.c.l.b16 %v7331
        %v7364 = vunpack.c.l.b16 %v7332
        %v7365 = vunpack.c.l.b16 %v7333
        %v7366 = vunpack.c.l.b16 %v7334
        %v7367 = vunpack.c.l.b16 %v7335
        %v7368 = vunpack.c.l.b16 %v7336
        %v7369 = vunpack.c.l.b16 %v7337
        %v7370 = vunpack.c.l.b16 %v7338
        %v7371 = vunpack.c.l.b16 %v7339
        %v7372 = vunpack.c.l.b16 %v7340
        %v7373 = vunpack.c.l.b16 %v7341
        %v7374 = vunpack.c.l.b16 %v7342
        %v7375 = vpack.c.b16 %v7360, %v7359
        %v7376 = vpack.c.b16 %v7362, %v7361
        %v7377 = vpack.c.b16 %v7364, %v7363
        %v7378 = vpack.c.b16 %v7366, %v7365
        %v7379 = vpack.c.b16 %v7368, %v7367
        %v7380 = vpack.c.b16 %v7370, %v7369
        %v7381 = vpack.c.b16 %v7372, %v7371
        %v7382 = vpack.c.b16 %v7374, %v7373
        %7391 = vmatprep.subr.bf16.mxu0 0
        %7392 = vmatpush1.bf16.msra.mxu0 %v7375
        %7393 = vmatprep.subr.bf16.mxu0 0
        %7394 = vmatpush1.bf16.msra.mxu0 %v7376
        %7395 = vmatprep.subr.bf16.mxu0 0
        %7396 = vmatpush1.bf16.msra.mxu0 %v7377
        %7397 = vmatprep.subr.bf16.mxu0 0
        %7398 = vmatpush1.bf16.msra.mxu0 %v7378
        %7399 = vmatprep.subr.bf16.mxu0 0
        %7400 = vmatpush1.bf16.msra.mxu0 %v7379
        %7401 = vmatprep.subr.bf16.mxu0 0
        %7402 = vmatpush1.bf16.msra.mxu0 %v7380
        %7403 = vmatprep.subr.bf16.mxu0 0
        %7404 = vmatpush1.bf16.msra.mxu0 %v7381
        %7405 = vmatprep.subr.bf16.mxu0 0
        %7406 = vmatpush1.bf16.msra.mxu0 %v7382
        %7407 = vmatprep.subr.bf16.mxu0 0
        %7408 = vmatpush1.bf16.msra.mxu0 0
        %7409 = vmatprep.subr.bf16.mxu0 0
        %7410 = vmatpush1.bf16.msra.mxu0 0
        %7411 = vmatprep.subr.bf16.mxu0 0
        %7412 = vmatpush1.bf16.msra.mxu0 0
        %7413 = vmatprep.subr.bf16.mxu0 0
        %7414 = vmatpush1.bf16.msra.mxu0 0
        %7415 = vmatprep.subr.bf16.mxu0 0
        %7416 = vmatpush1.bf16.msra.mxu0 0
        %7417 = vmatprep.subr.bf16.mxu0 0
        %7418 = vmatpush1.bf16.msra.mxu0 0
        %7419 = vmatprep.subr.bf16.mxu0 0
        %7420 = vmatpush1.bf16.msra.mxu0 0
        %7421 = vmatprep.subr.bf16.mxu0 0
        %7422 = vmatpush1.bf16.msra.mxu0 0
        %7423 = vmatprep.mubr.bf16.mxu0 0
        %7424 = vmatmul.mubr.bf16.gmra.mrb[0].mxu0 %v7325
        %v7425 = vpop.f32.mrb[0].mxu0
        %v7426 = vadd.f32 0.0, %v7425
        %v7427 = vpop.f32.mrb[0].mxu0
        %v7428 = vpop.f32.mrb[0].mxu0
        %v7429 = vpop.f32.mrb[0].mxu0
        %7430 = vdwg.mxu0
        %v7431 = vadd.f32 %v7323, %v7426
        %v7432 = vld [vmem:[%s7215 + $0x2] sm:$0x1]
        %v7433 = vpack.c.bf16 %v7432, %v7432
        %s7434 = scalar_lea.vmem [#allocation5], 1408
        %v7435 = vld [vmem:[%s7434] sm:$0xf]
        %v7436 = vld [vmem:[%s7434 + $0x4] sm:$0xf]
        %v7437 = vld [vmem:[%s7434 + $0x8] sm:$0xf]
        %v7438 = vld [vmem:[%s7434 + $0xc] sm:$0xf]
        %v7439 = vld [vmem:[%s7434 + $0x10] sm:$0xf]
        %v7440 = vld [vmem:[%s7434 + $0x14] sm:$0xf]
        %v7441 = vld [vmem:[%s7434 + $0x18] sm:$0xf]
        %v7442 = vld [vmem:[%s7434 + $0x1c] sm:$0xf]
        %v7443 = vld [vmem:[%s7434 + $0x20] sm:$0xf]
        %v7444 = vld [vmem:[%s7434 + $0x24] sm:$0xf]
        %v7445 = vld [vmem:[%s7434 + $0x28] sm:$0xf]
        %v7446 = vld [vmem:[%s7434 + $0x2c] sm:$0xf]
        %v7447 = vld [vmem:[%s7434 + $0x30] sm:$0xf]
        %v7448 = vld [vmem:[%s7434 + $0x34] sm:$0xf]
        %v7449 = vld [vmem:[%s7434 + $0x38] sm:$0xf]
        %v7450 = vld [vmem:[%s7434 + $0x3c] sm:$0xf]
        %v7467 = vunpack.c.l.b16 %v7435
        %v7468 = vunpack.c.l.b16 %v7436
        %v7469 = vunpack.c.l.b16 %v7437
        %v7470 = vunpack.c.l.b16 %v7438
        %v7471 = vunpack.c.l.b16 %v7439
        %v7472 = vunpack.c.l.b16 %v7440
        %v7473 = vunpack.c.l.b16 %v7441
        %v7474 = vunpack.c.l.b16 %v7442
        %v7475 = vunpack.c.l.b16 %v7443
        %v7476 = vunpack.c.l.b16 %v7444
        %v7477 = vunpack.c.l.b16 %v7445
        %v7478 = vunpack.c.l.b16 %v7446
        %v7479 = vunpack.c.l.b16 %v7447
        %v7480 = vunpack.c.l.b16 %v7448
        %v7481 = vunpack.c.l.b16 %v7449
        %v7482 = vunpack.c.l.b16 %v7450
        %v7483 = vpack.c.b16 %v7468, %v7467
        %v7484 = vpack.c.b16 %v7470, %v7469
        %v7485 = vpack.c.b16 %v7472, %v7471
        %v7486 = vpack.c.b16 %v7474, %v7473
        %v7487 = vpack.c.b16 %v7476, %v7475
        %v7488 = vpack.c.b16 %v7478, %v7477
        %v7489 = vpack.c.b16 %v7480, %v7479
        %v7490 = vpack.c.b16 %v7482, %v7481
        %7499 = vmatprep.subr.bf16.mxu0 0
        %7500 = vmatpush1.bf16.msra.mxu0 %v7483
        %7501 = vmatprep.subr.bf16.mxu0 0
        %7502 = vmatpush1.bf16.msra.mxu0 %v7484
        %7503 = vmatprep.subr.bf16.mxu0 0
        %7504 = vmatpush1.bf16.msra.mxu0 %v7485
        %7505 = vmatprep.subr.bf16.mxu0 0
        %7506 = vmatpush1.bf16.msra.mxu0 %v7486
        %7507 = vmatprep.subr.bf16.mxu0 0
        %7508 = vmatpush1.bf16.msra.mxu0 %v7487
        %7509 = vmatprep.subr.bf16.mxu0 0
        %7510 = vmatpush1.bf16.msra.mxu0 %v7488
        %7511 = vmatprep.subr.bf16.mxu0 0
        %7512 = vmatpush1.bf16.msra.mxu0 %v7489
        %7513 = vmatprep.subr.bf16.mxu0 0
        %7514 = vmatpush1.bf16.msra.mxu0 %v7490
        %7515 = vmatprep.subr.bf16.mxu0 0
        %7516 = vmatpush1.bf16.msra.mxu0 0
        %7517 = vmatprep.subr.bf16.mxu0 0
        %7518 = vmatpush1.bf16.msra.mxu0 0
        %7519 = vmatprep.subr.bf16.mxu0 0
        %7520 = vmatpush1.bf16.msra.mxu0 0
        %7521 = vmatprep.subr.bf16.mxu0 0
        %7522 = vmatpush1.bf16.msra.mxu0 0
        %7523 = vmatprep.subr.bf16.mxu0 0
        %7524 = vmatpush1.bf16.msra.mxu0 0
        %7525 = vmatprep.subr.bf16.mxu0 0
        %7526 = vmatpush1.bf16.msra.mxu0 0
        %7527 = vmatprep.subr.bf16.mxu0 0
        %7528 = vmatpush1.bf16.msra.mxu0 0
        %7529 = vmatprep.subr.bf16.mxu0 0
        %7530 = vmatpush1.bf16.msra.mxu0 0
        %7531 = vmatprep.mubr.bf16.mxu0 0
        %7532 = vmatmul.mubr.bf16.gmra.mrb[0].mxu0 %v7433
        %v7533 = vpop.f32.mrb[0].mxu0
        %v7534 = vadd.f32 0.0, %v7533
        %v7535 = vpop.f32.mrb[0].mxu0
        %v7536 = vpop.f32.mrb[0].mxu0
        %v7537 = vpop.f32.mrb[0].mxu0
        %7538 = vdwg.mxu0
        %v7539 = vadd.f32 %v7431, %v7534
        %v7540 = vld [vmem:[%s7215 + $0x3] sm:$0x1]
        %v7541 = vpack.c.bf16 %v7540, %v7540
        %s7542 = scalar_lea.vmem [#allocation5], 1472
        %v7543 = vld [vmem:[%s7542] sm:$0xf]
        %v7544 = vld [vmem:[%s7542 + $0x4] sm:$0xf]
        %v7545 = vld [vmem:[%s7542 + $0x8] sm:$0xf]
        %v7546 = vld [vmem:[%s7542 + $0xc] sm:$0xf]
        %v7547 = vld [vmem:[%s7542 + $0x10] sm:$0xf]
        %v7548 = vld [vmem:[%s7542 + $0x14] sm:$0xf]
        %v7549 = vld [vmem:[%s7542 + $0x18] sm:$0xf]
        %v7550 = vld [vmem:[%s7542 + $0x1c] sm:$0xf]
        %v7551 = vld [vmem:[%s7542 + $0x20] sm:$0xf]
        %v7552 = vld [vmem:[%s7542 + $0x24] sm:$0xf]
        %v7553 = vld [vmem:[%s7542 + $0x28] sm:$0xf]
        %v7554 = vld [vmem:[%s7542 + $0x2c] sm:$0xf]
        %v7555 = vld [vmem:[%s7542 + $0x30] sm:$0xf]
        %v7556 = vld [vmem:[%s7542 + $0x34] sm:$0xf]
        %v7557 = vld [vmem:[%s7542 + $0x38] sm:$0xf]
        %v7558 = vld [vmem:[%s7542 + $0x3c] sm:$0xf]
        %v7575 = vunpack.c.l.b16 %v7543
        %v7576 = vunpack.c.l.b16 %v7544
        %v7577 = vunpack.c.l.b16 %v7545
        %v7578 = vunpack.c.l.b16 %v7546
        %v7579 = vunpack.c.l.b16 %v7547
        %v7580 = vunpack.c.l.b16 %v7548
        %v7581 = vunpack.c.l.b16 %v7549
        %v7582 = vunpack.c.l.b16 %v7550
        %v7583 = vunpack.c.l.b16 %v7551
        %v7584 = vunpack.c.l.b16 %v7552
        %v7585 = vunpack.c.l.b16 %v7553
        %v7586 = vunpack.c.l.b16 %v7554
        %v7587 = vunpack.c.l.b16 %v7555
        %v7588 = vunpack.c.l.b16 %v7556
        %v7589 = vunpack.c.l.b16 %v7557
        %v7590 = vunpack.c.l.b16 %v7558
        %v7591 = vpack.c.b16 %v7576, %v7575
        %v7592 = vpack.c.b16 %v7578, %v7577
        %v7593 = vpack.c.b16 %v7580, %v7579
        %v7594 = vpack.c.b16 %v7582, %v7581
        %v7595 = vpack.c.b16 %v7584, %v7583
        %v7596 = vpack.c.b16 %v7586, %v7585
        %v7597 = vpack.c.b16 %v7588, %v7587
        %v7598 = vpack.c.b16 %v7590, %v7589
        %7607 = vmatprep.subr.bf16.mxu0 0
        %7608 = vmatpush1.bf16.msra.mxu0 %v7591
        %7609 = vmatprep.subr.bf16.mxu0 0
        %7610 = vmatpush1.bf16.msra.mxu0 %v7592
        %7611 = vmatprep.subr.bf16.mxu0 0
        %7612 = vmatpush1.bf16.msra.mxu0 %v7593
        %7613 = vmatprep.subr.bf16.mxu0 0
        %7614 = vmatpush1.bf16.msra.mxu0 %v7594
        %7615 = vmatprep.subr.bf16.mxu0 0
        %7616 = vmatpush1.bf16.msra.mxu0 %v7595
        %7617 = vmatprep.subr.bf16.mxu0 0
        %7618 = vmatpush1.bf16.msra.mxu0 %v7596
        %7619 = vmatprep.subr.bf16.mxu0 0
        %7620 = vmatpush1.bf16.msra.mxu0 %v7597
        %7621 = vmatprep.subr.bf16.mxu0 0
        %7622 = vmatpush1.bf16.msra.mxu0 %v7598
        %7623 = vmatprep.subr.bf16.mxu0 0
        %7624 = vmatpush1.bf16.msra.mxu0 0
        %7625 = vmatprep.subr.bf16.mxu0 0
        %7626 = vmatpush1.bf16.msra.mxu0 0
        %7627 = vmatprep.subr.bf16.mxu0 0
        %7628 = vmatpush1.bf16.msra.mxu0 0
        %7629 = vmatprep.subr.bf16.mxu0 0
        %7630 = vmatpush1.bf16.msra.mxu0 0
        %7631 = vmatprep.subr.bf16.mxu0 0
        %7632 = vmatpush1.bf16.msra.mxu0 0
        %7633 = vmatprep.subr.bf16.mxu0 0
        %7634 = vmatpush1.bf16.msra.mxu0 0
        %7635 = vmatprep.subr.bf16.mxu0 0
        %7636 = vmatpush1.bf16.msra.mxu0 0
        %7637 = vmatprep.subr.bf16.mxu0 0
        %7638 = vmatpush1.bf16.msra.mxu0 0
        %7639 = vmatprep.mubr.bf16.mxu0 0
        %7640 = vmatmul.mubr.bf16.gmra.mrb[0].mxu0 %v7541
        %v7641 = vpop.f32.mrb[0].mxu0
        %v7642 = vadd.f32 0.0, %v7641
        %v7643 = vpop.f32.mrb[0].mxu0
        %v7644 = vpop.f32.mrb[0].mxu0
        %v7645 = vpop.f32.mrb[0].mxu0
        %7646 = vdwg.mxu0
        %v7647 = vadd.f32 %v7539, %v7642
        %v7648 = vld [vmem:[%s7215 + $0x4] sm:$0x1]
        %v7649 = vpack.c.bf16 %v7648, %v7648
        %s7650 = scalar_lea.vmem [#allocation5], 1536
        %v7651 = vld [vmem:[%s7650] sm:$0xf]
        %v7652 = vld [vmem:[%s7650 + $0x4] sm:$0xf]
        %v7653 = vld [vmem:[%s7650 + $0x8] sm:$0xf]
        %v7654 = vld [vmem:[%s7650 + $0xc] sm:$0xf]
        %v7655 = vld [vmem:[%s7650 + $0x10] sm:$0xf]
        %v7656 = vld [vmem:[%s7650 + $0x14] sm:$0xf]
        %v7657 = vld [vmem:[%s7650 + $0x18] sm:$0xf]
        %v7658 = vld [vmem:[%s7650 + $0x1c] sm:$0xf]
        %v7659 = vld [vmem:[%s7650 + $0x20] sm:$0xf]
        %v7660 = vld [vmem:[%s7650 + $0x24] sm:$0xf]
        %v7661 = vld [vmem:[%s7650 + $0x28] sm:$0xf]
        %v7662 = vld [vmem:[%s7650 + $0x2c] sm:$0xf]
        %v7663 = vld [vmem:[%s7650 + $0x30] sm:$0xf]
        %v7664 = vld [vmem:[%s7650 + $0x34] sm:$0xf]
        %v7665 = vld [vmem:[%s7650 + $0x38] sm:$0xf]
        %v7666 = vld [vmem:[%s7650 + $0x3c] sm:$0xf]
        %v7683 = vunpack.c.l.b16 %v7651
        %v7684 = vunpack.c.l.b16 %v7652
        %v7685 = vunpack.c.l.b16 %v7653
        %v7686 = vunpack.c.l.b16 %v7654
        %v7687 = vunpack.c.l.b16 %v7655
        %v7688 = vunpack.c.l.b16 %v7656
        %v7689 = vunpack.c.l.b16 %v7657
        %v7690 = vunpack.c.l.b16 %v7658
        %v7691 = vunpack.c.l.b16 %v7659
        %v7692 = vunpack.c.l.b16 %v7660
        %v7693 = vunpack.c.l.b16 %v7661
        %v7694 = vunpack.c.l.b16 %v7662
        %v7695 = vunpack.c.l.b16 %v7663
        %v7696 = vunpack.c.l.b16 %v7664
        %v7697 = vunpack.c.l.b16 %v7665
        %v7698 = vunpack.c.l.b16 %v7666
        %v7699 = vpack.c.b16 %v7684, %v7683
        %v7700 = vpack.c.b16 %v7686, %v7685
        %v7701 = vpack.c.b16 %v7688, %v7687
        %v7702 = vpack.c.b16 %v7690, %v7689
        %v7703 = vpack.c.b16 %v7692, %v7691
        %v7704 = vpack.c.b16 %v7694, %v7693
        %v7705 = vpack.c.b16 %v7696, %v7695
        %v7706 = vpack.c.b16 %v7698, %v7697
        %7715 = vmatprep.subr.bf16.mxu0 0
        %7716 = vmatpush1.bf16.msra.mxu0 %v7699
        %7717 = vmatprep.subr.bf16.mxu0 0
        %7718 = vmatpush1.bf16.msra.mxu0 %v7700
        %7719 = vmatprep.subr.bf16.mxu0 0
        %7720 = vmatpush1.bf16.msra.mxu0 %v7701
        %7721 = vmatprep.subr.bf16.mxu0 0
        %7722 = vmatpush1.bf16.msra.mxu0 %v7702
        %7723 = vmatprep.subr.bf16.mxu0 0
        %7724 = vmatpush1.bf16.msra.mxu0 %v7703
        %7725 = vmatprep.subr.bf16.mxu0 0
        %7726 = vmatpush1.bf16.msra.mxu0 %v7704
        %7727 = vmatprep.subr.bf16.mxu0 0
        %7728 = vmatpush1.bf16.msra.mxu0 %v7705
        %7729 = vmatprep.subr.bf16.mxu0 0
        %7730 = vmatpush1.bf16.msra.mxu0 %v7706
        %7731 = vmatprep.subr.bf16.mxu0 0
        %7732 = vmatpush1.bf16.msra.mxu0 0
        %7733 = vmatprep.subr.bf16.mxu0 0
        %7734 = vmatpush1.bf16.msra.mxu0 0
        %7735 = vmatprep.subr.bf16.mxu0 0
        %7736 = vmatpush1.bf16.msra.mxu0 0
        %7737 = vmatprep.subr.bf16.mxu0 0
        %7738 = vmatpush1.bf16.msra.mxu0 0
        %7739 = vmatprep.subr.bf16.mxu0 0
        %7740 = vmatpush1.bf16.msra.mxu0 0
        %7741 = vmatprep.subr.bf16.mxu0 0
        %7742 = vmatpush1.bf16.msra.mxu0 0
        %7743 = vmatprep.subr.bf16.mxu0 0
        %7744 = vmatpush1.bf16.msra.mxu0 0
        %7745 = vmatprep.subr.bf16.mxu0 0
        %7746 = vmatpush1.bf16.msra.mxu0 0
        %7747 = vmatprep.mubr.bf16.mxu0 0
        %7748 = vmatmul.mubr.bf16.gmra.mrb[0].mxu0 %v7649
        %v7749 = vpop.f32.mrb[0].mxu0
        %v7750 = vadd.f32 0.0, %v7749
        %v7751 = vpop.f32.mrb[0].mxu0
        %v7752 = vpop.f32.mrb[0].mxu0
        %v7753 = vpop.f32.mrb[0].mxu0
        %7754 = vdwg.mxu0
        %v7755 = vadd.f32 %v7647, %v7750
        %v7756 = vld [vmem:[%s6] sm:$0x1]
        %v7757 = vadd.f32 %v7755, %v7756
        %v7758 = vmax.f32 %v7757, 0.0
        %v7759 = vpack.c.bf16 %v7758, %v7758
        %v7760 = vld [vmem:[%s7] sm:$0xf]
        %v7761 = vld [vmem:[%s7 + $0x4] sm:$0xf]
        %v7762 = vld [vmem:[%s7 + $0x8] sm:$0xf]
        %v7763 = vld [vmem:[%s7 + $0xc] sm:$0xf]
        %v7764 = vld [vmem:[%s7 + $0x10] sm:$0xf]
        %v7765 = vld [vmem:[%s7 + $0x14] sm:$0xf]
        %v7766 = vld [vmem:[%s7 + $0x18] sm:$0xf]
        %v7767 = vld [vmem:[%s7 + $0x1c] sm:$0xf]
        %v7768 = vld [vmem:[%s7 + $0x20] sm:$0xf]
        %v7769 = vld [vmem:[%s7 + $0x24] sm:$0xf]
        %v7770 = vld [vmem:[%s7 + $0x28] sm:$0xf]
        %v7771 = vld [vmem:[%s7 + $0x2c] sm:$0xf]
        %v7772 = vld [vmem:[%s7 + $0x30] sm:$0xf]
        %v7773 = vld [vmem:[%s7 + $0x34] sm:$0xf]
        %v7774 = vld [vmem:[%s7 + $0x38] sm:$0xf]
        %v7775 = vld [vmem:[%s7 + $0x3c] sm:$0xf]
        %v7776 = vld [vmem:[%s8] sm:$0x1]
        %v7793 = vunpack.c.l.b16 %v7760
        %v7794 = vunpack.c.l.b16 %v7761
        %v7795 = vunpack.c.l.b16 %v7762
        %v7796 = vunpack.c.l.b16 %v7763
        %v7797 = vunpack.c.l.b16 %v7764
        %v7798 = vunpack.c.l.b16 %v7765
        %v7799 = vunpack.c.l.b16 %v7766
        %v7800 = vunpack.c.l.b16 %v7767
        %v7801 = vunpack.c.l.b16 %v7768
        %v7802 = vunpack.c.l.b16 %v7769
        %v7803 = vunpack.c.l.b16 %v7770
        %v7804 = vunpack.c.l.b16 %v7771
        %v7805 = vunpack.c.l.b16 %v7772
        %v7806 = vunpack.c.l.b16 %v7773
        %v7807 = vunpack.c.l.b16 %v7774
        %v7808 = vunpack.c.l.b16 %v7775
        %v7809 = vpack.c.b16 %v7794, %v7793
        %v7810 = vpack.c.b16 %v7796, %v7795
        %v7811 = vpack.c.b16 %v7798, %v7797
        %v7812 = vpack.c.b16 %v7800, %v7799
        %v7813 = vpack.c.b16 %v7802, %v7801
        %v7814 = vpack.c.b16 %v7804, %v7803
        %v7815 = vpack.c.b16 %v7806, %v7805
        %v7816 = vpack.c.b16 %v7808, %v7807
        %7825 = vmatprep.subr.bf16.mxu0 0
        %7826 = vmatpush1.bf16.msra.mxu0 %v7809
        %7827 = vmatprep.subr.bf16.mxu0 0
        %7828 = vmatpush1.bf16.msra.mxu0 %v7810
        %7829 = vmatprep.subr.bf16.mxu0 0
        %7830 = vmatpush1.bf16.msra.mxu0 %v7811
        %7831 = vmatprep.subr.bf16.mxu0 0
        %7832 = vmatpush1.bf16.msra.mxu0 %v7812
        %7833 = vmatprep.subr.bf16.mxu0 0
        %7834 = vmatpush1.bf16.msra.mxu0 %v7813
        %7835 = vmatprep.subr.bf16.mxu0 0
        %7836 = vmatpush1.bf16.msra.mxu0 %v7814
        %7837 = vmatprep.subr.bf16.mxu0 0
        %7838 = vmatpush1.bf16.msra.mxu0 %v7815
        %7839 = vmatprep.subr.bf16.mxu0 0
        %7840 = vmatpush1.bf16.msra.mxu0 %v7816
        %7841 = vmatprep.subr.bf16.mxu0 0
        %7842 = vmatpush1.bf16.msra.mxu0 0
        %7843 = vmatprep.subr.bf16.mxu0 0
        %7844 = vmatpush1.bf16.msra.mxu0 0
        %7845 = vmatprep.subr.bf16.mxu0 0
        %7846 = vmatpush1.bf16.msra.mxu0 0
        %7847 = vmatprep.subr.bf16.mxu0 0
        %7848 = vmatpush1.bf16.msra.mxu0 0
        %7849 = vmatprep.subr.bf16.mxu0 0
        %7850 = vmatpush1.bf16.msra.mxu0 0
        %7851 = vmatprep.subr.bf16.mxu0 0
        %7852 = vmatpush1.bf16.msra.mxu0 0
        %7853 = vmatprep.subr.bf16.mxu0 0
        %7854 = vmatpush1.bf16.msra.mxu0 0
        %7855 = vmatprep.subr.bf16.mxu0 0
        %7856 = vmatpush1.bf16.msra.mxu0 0
        %7857 = vmatprep.mubr.bf16.mxu0 0
        %7858 = vmatmul.mubr.bf16.gmra.mrb[0].mxu0 %v7759
        %v7859 = vpop.f32.mrb[0].mxu0
        %v7860 = vadd.f32 %v7776, %v7859
        %v7861 = vpop.f32.mrb[0].mxu0
        %v7862 = vpop.f32.mrb[0].mxu0
        %v7863 = vpop.f32.mrb[0].mxu0
        %7864 = vdwg.mxu0
        %v7865 = vmax.f32 %v7860, 0.0
        %v7866 = vpack.c.bf16 %v7865, %v7865
        %v7867 = vld [vmem:[%s9] sm:$0xf]
        %v7868 = vld [vmem:[%s9 + $0x4] sm:$0xf]
        %v7869 = vld [vmem:[%s9 + $0x8] sm:$0xf]
        %v7870 = vld [vmem:[%s9 + $0xc] sm:$0xf]
        %v7871 = vld [vmem:[%s9 + $0x10] sm:$0xf]
        %v7872 = vld [vmem:[%s9 + $0x14] sm:$0xf]
        %v7873 = vld [vmem:[%s9 + $0x18] sm:$0xf]
        %v7874 = vld [vmem:[%s9 + $0x1c] sm:$0xf]
        %v7875 = vld [vmem:[%s9 + $0x20] sm:$0xf]
        %v7876 = vld [vmem:[%s9 + $0x24] sm:$0xf]
        %v7877 = vld [vmem:[%s9 + $0x28] sm:$0xf]
        %v7878 = vld [vmem:[%s9 + $0x2c] sm:$0xf]
        %v7879 = vld [vmem:[%s9 + $0x30] sm:$0xf]
        %v7880 = vld [vmem:[%s9 + $0x34] sm:$0xf]
        %v7881 = vld [vmem:[%s9 + $0x38] sm:$0xf]
        %v7882 = vld [vmem:[%s9 + $0x3c] sm:$0xf]
        %v7883 = vld [vmem:[%s10] sm:$0x1]
        %v7900 = vunpack.c.l.b16 %v7867
        %v7901 = vunpack.c.l.b16 %v7868
        %v7902 = vunpack.c.l.b16 %v7869
        %v7903 = vunpack.c.l.b16 %v7870
        %v7904 = vunpack.c.l.b16 %v7871
        %v7905 = vunpack.c.l.b16 %v7872
        %v7906 = vunpack.c.l.b16 %v7873
        %v7907 = vunpack.c.l.b16 %v7874
        %v7908 = vunpack.c.l.b16 %v7875
        %v7909 = vunpack.c.l.b16 %v7876
        %v7910 = vunpack.c.l.b16 %v7877
        %v7911 = vunpack.c.l.b16 %v7878
        %v7912 = vunpack.c.l.b16 %v7879
        %v7913 = vunpack.c.l.b16 %v7880
        %v7914 = vunpack.c.l.b16 %v7881
        %v7915 = vunpack.c.l.b16 %v7882
        %v7916 = vpack.c.b16 %v7901, %v7900
        %v7917 = vpack.c.b16 %v7903, %v7902
        %v7918 = vpack.c.b16 %v7905, %v7904
        %v7919 = vpack.c.b16 %v7907, %v7906
        %v7920 = vpack.c.b16 %v7909, %v7908
        %v7921 = vpack.c.b16 %v7911, %v7910
        %v7922 = vpack.c.b16 %v7913, %v7912
        %v7923 = vpack.c.b16 %v7915, %v7914
        %7932 = vmatprep.subr.bf16.mxu0 0
        %7933 = vmatpush1.bf16.msra.mxu0 %v7916
        %7934 = vmatprep.subr.bf16.mxu0 0
        %7935 = vmatpush1.bf16.msra.mxu0 %v7917
        %7936 = vmatprep.subr.bf16.mxu0 0
        %7937 = vmatpush1.bf16.msra.mxu0 %v7918
        %7938 = vmatprep.subr.bf16.mxu0 0
        %7939 = vmatpush1.bf16.msra.mxu0 %v7919
        %7940 = vmatprep.subr.bf16.mxu0 0
        %7941 = vmatpush1.bf16.msra.mxu0 %v7920
        %7942 = vmatprep.subr.bf16.mxu0 0
        %7943 = vmatpush1.bf16.msra.mxu0 %v7921
        %7944 = vmatprep.subr.bf16.mxu0 0
        %7945 = vmatpush1.bf16.msra.mxu0 %v7922
        %7946 = vmatprep.subr.bf16.mxu0 0
        %7947 = vmatpush1.bf16.msra.mxu0 %v7923
        %7948 = vmatprep.subr.bf16.mxu0 0
        %7949 = vmatpush1.bf16.msra.mxu0 0
        %7950 = vmatprep.subr.bf16.mxu0 0
        %7951 = vmatpush1.bf16.msra.mxu0 0
        %7952 = vmatprep.subr.bf16.mxu0 0
        %7953 = vmatpush1.bf16.msra.mxu0 0
        %7954 = vmatprep.subr.bf16.mxu0 0
        %7955 = vmatpush1.bf16.msra.mxu0 0
        %7956 = vmatprep.subr.bf16.mxu0 0
        %7957 = vmatpush1.bf16.msra.mxu0 0
        %7958 = vmatprep.subr.bf16.mxu0 0
        %7959 = vmatpush1.bf16.msra.mxu0 0
        %7960 = vmatprep.subr.bf16.mxu0 0
        %7961 = vmatpush1.bf16.msra.mxu0 0
        %7962 = vmatprep.subr.bf16.mxu0 0
        %7963 = vmatpush1.bf16.msra.mxu0 0
        %7964 = vmatprep.mubr.bf16.mxu0 0
        %7965 = vmatmul.mubr.bf16.gmra.mrb[0].mxu0 %v7866
        %v7966 = vpop.f32.mrb[0].mxu0
        %v7967 = vadd.f32 %v7883, %v7966
        %v7968 = vpop.f32.mrb[0].mxu0
        %v7969 = vpop.f32.mrb[0].mxu0
        %v7970 = vpop.f32.mrb[0].mxu0
        %7971 = vdwg.mxu0
        %7972 = vst [vmem:[%s393] sm:$0x1] %v7967
        %s7973 = sand.u32 %s270, 1
        %s7974 = scalar_lea.sflag [#allocation7], %s7973
        %s7975 = sand.u32 %s270, 1
        %s7976 = scalar_lea.vmem [#allocation8], %s7975
        // Predicated region
        $region83: #{convnet_forward.1} parent=63 // pred_check
          %p7977 = pneg %p280
        $region84: #{convnet_forward.1} parent=63 // pred_check_branch
          %7979 = sbr.rel (%p7977) target = $region86
        $region85: #{convnet_forward.1} parent=63 // pred_region
          %s7981 = ssub.s32 16, 16
          %7982 = vsyncadd %s7974, %s7981
          %s7983 = smul.addr %s26, 16
          %s7984 = scalar_lea.hbm %s11, %s7983
          %s7986 = sshll.u32 %s7976, 4
          %s7987 = int_to_ptr.vmem [resolvable:$true] %s7986
          %7989 = dma.vmem_to_hbm [thread:$0]  %s7987, 16, %s7984, %s7974
        $region86: #{convnet_forward.1} parent=63 // pred_fallthru
          _
      $region64: #{convnet_forward.1} parent=5 // pred_fallthru
        _
      %p7990 = scmp.le.s32.totalorder 2, %s21
      // Predicated region
      $region87: #{convnet_forward.1} parent=5 // pred_check
        %p7991 = pneg %p7990
      $region88: #{convnet_forward.1} parent=5 // pred_check_branch
        %7993 = sbr.rel (%p7991) target = $region90
      $region89: #{convnet_forward.1} parent=5 // pred_region
        %s7994 = ssub.s32 %s21, 2
        // Predicated region
        $region91: #{convnet_forward.1} parent=89 // pred_check
          %p7995 = pneg %p286
        $region92: #{convnet_forward.1} parent=89 // pred_check_branch
          %7997 = sbr.rel (%p7995) target = $region94
        $region93: #{convnet_forward.1} parent=89 // pred_region
          %s7998 = sand.u32 %s271, 1
          %s7999 = scalar_lea.sflag [#allocation7], %s7998
          %s8000 = sand.u32 %s271, 1
          %s8001 = scalar_lea.vmem [#allocation8], %s8000
          %8002 = dma.done %s7999, 16
        $region94: #{convnet_forward.1} parent=89 // pred_fallthru
          _
      $region90: #{convnet_forward.1} parent=5 // pred_fallthru
        _
    $region6: #{convnet_forward.1} parent=1 // loop_footer
      %s25 = sadd.s32 1, %s21
    $region7: #{convnet_forward.1} parent=1 // loop_footer_branch
      %20 = sbr.rel target = $region3
    $region8: #{convnet_forward.1} parent=1 // loop_exit
      _
    %8003 = vsyncpa [#allocation6], 1
    %s8004 = scalar_lea.sflag [#allocation6], 1
    %8005 = vsyncpa %s8004, 1
    %8006 = vsyncpa [#allocation7], 1
    %s8007 = scalar_lea.sflag [#allocation7], 1
    %8008 = vsyncpa %s8007, 1

</llo_original>
